<compile_context>
chip_gen: v7x
topology: tpu7x:2x2x1
jax: 0.10.0
libtpu: 0.0.40
codegen_flags: <defaults>
</compile_context>

<pallas_src>
import functools
import math

import numpy as np
import jax
import jax.numpy as jnp
from jax.experimental import pallas as pl
from jax.experimental.pallas import tpu as pltpu


# Matmul operand dtype: float32 preserves exact parity with the f32 PyTorch
# reference; switch to jnp.bfloat16 on v6e/v7x for ~2x MXU throughput and half
# the weight DMA bytes (accumulation stays f32 via preferred_element_type).
_MM_DTYPE = jnp.float32
_LN_EPS = 1e-5


# ----------------------------------------------------------------------------
# Tiling heuristics
# ----------------------------------------------------------------------------
def _row_tile(M, target=256):
    """Row tile for token-parallel kernels: big tiles for HBM roofline, but
    keep >= 2 grid steps when possible (v7x megacore)."""
    if M <= 16:
        return M
    if M <= 2 * target:
        return max(8, (M // 2) // 8 * 8)
    return target          # ragged tail handled by pl.cdiv + masked stores


def _window_chunk(nW, N, max_rows=1024):
    """Windows per attention grid step: largest divisor of nW whose token
    count (Wb*N) stays under max_rows, so QKV/proj matmuls see many rows."""
    wb = 1
    for d in range(1, nW + 1):
        if nW % d == 0 and d * N <= max(max_rows, N):
            wb = d
    return wb


# ----------------------------------------------------------------------------
# In-kernel helpers
# ----------------------------------------------------------------------------
def _ln(x, g, b):
    mean = jnp.mean(x, axis=-1, keepdims=True)
    xc = x - mean
    var = jnp.mean(xc * xc, axis=-1, keepdims=True)
    return xc * jax.lax.rsqrt(var + _LN_EPS) * g + b


def _gelu_erf(x):
    # Exact-erf GELU (PyTorch nn.GELU default).  erf is evaluated with the
    # Abramowitz & Stegun 7.1.26 rational approximation (max abs err ~1.5e-7)
    # using exp (EUP) so the whole MLP stays fused inside the Pallas kernel.
    # TODO(synk): switch to lax.erf once its Mosaic lowering is guaranteed.
    z = x * 0.7071067811865476
    az = jnp.abs(z)
    t = 1.0 / (1.0 + 0.3275911 * az)
    poly = t * (0.254829592 + t * (-0.284496736 + t * (1.421413741
             + t * (-1.453152027 + t * 1.061405429))))
    erf_abs = 1.0 - poly * jnp.exp(-az * az)
    erf = jnp.where(z >= 0.0, erf_abs, -erf_abs)
    return 0.5 * x * (1.0 + erf)


# ----------------------------------------------------------------------------
# Pallas kernels
# ----------------------------------------------------------------------------
def _layernorm_kernel(x_ref, g_ref, b_ref, o_ref):
    o_ref[...] = _ln(x_ref[...], g_ref[...], b_ref[...]).astype(o_ref.dtype)


def layernorm(x, g, b):
    """Standalone norm1 (only used when H/W need window padding; otherwise LN
    is fused into the attention kernel)."""
    M, C = x.shape
    tm = _row_tile(M)
    return pl.pallas_call(
        _layernorm_kernel,
        out_shape=jax.ShapeDtypeStruct((M, C), x.dtype),
        grid=(pl.cdiv(M, tm),),
        in_specs=[pl.BlockSpec((tm, C), lambda i: (i, 0)),
                  pl.BlockSpec((1, C), lambda i: (0, 0)),
                  pl.BlockSpec((1, C), lambda i: (0, 0))],
        out_specs=pl.BlockSpec((tm, C), lambda i: (i, 0)),
        compiler_params=pltpu.CompilerParams(dimension_semantics=("parallel",)),
    )(x, g, b)


def _window_attn_kernel(*refs, num_heads, scale, fuse_ln, has_mask):
    if has_mask:
        (x_ref, mask_ref, bias_ref, g_ref, b_ref,
         wqkv_ref, bqkv_ref, wproj_ref, bproj_ref, o_ref) = refs
    else:
        (x_ref, bias_ref, g_ref, b_ref,
         wqkv_ref, bqkv_ref, wproj_ref, bproj_ref, o_ref) = refs
        mask_ref = None

    xw = x_ref[0]                                   # (Wb, N, C) window chunk
    Wb, N, C = xw.shape
    hd = C // num_heads

    xf = xw.reshape(Wb * N, C)                      # all tokens of the chunk
    if fuse_ln:                                     # fused norm1 (row-wise LN)
        xf = _ln(xf, g_ref[...], b_ref[...])

    # QKV projection for the whole chunk: one (Wb*N, C) x (C, 3C) matmul.
    qkv = jnp.dot(xf.astype(_MM_DTYPE), wqkv_ref[...].astype(_MM_DTYPE),
                  preferred_element_type=jnp.float32) + bqkv_ref[...]

    wproj = wproj_ref[...]                          # (C, C), resident
    out = None
    for h in range(num_heads):                      # static; batched over Wb windows
        q = qkv[:, h * hd:(h + 1) * hd].reshape(Wb, N, hd) * scale
        k = qkv[:, C + h * hd:C + (h + 1) * hd].reshape(Wb, N, hd)
        v = qkv[:, 2 * C + h * hd:2 * C + (h + 1) * hd].reshape(Wb, N, hd)

        s = jnp.einsum('wnd,wmd->wnm', q.astype(_MM_DTYPE), k.astype(_MM_DTYPE),
                       preferred_element_type=jnp.float32)
        s = s + bias_ref[h][None]                   # relative position bias
        if has_mask:
            s = s + mask_ref[...]                   # shift mask (shifted blocks only)
        # f32 softmax
        s = s - jnp.max(s, axis=-1, keepdims=True)
        p = jnp.exp(s)
        p = p / jnp.sum(p, axis=-1, keepdims=True)

        oh = jnp.einsum('wnm,wmd->wnd', p.astype(_MM_DTYPE), v.astype(_MM_DTYPE),
                        preferred_element_type=jnp.float32)
        # Fold this head straight through its rows of the output projection,
        # so no per-head concatenate / lane shuffle is needed.
        contrib = jnp.dot(oh.reshape(Wb * N, hd).astype(_MM_DTYPE),
                          wproj[h * hd:(h + 1) * hd, :].astype(_MM_DTYPE),
                          preferred_element_type=jnp.float32)
        out = contrib if out is None else out + contrib

    out = out + bproj_ref[...]
    o_ref[0] = out.reshape(Wb, N, C).astype(o_ref.dtype)


def window_attention(xw, mask, rel_bias, ln_g, ln_b, wqkv, bqkv, wproj, bproj,
                     num_heads, scale, fuse_ln):
    B, nW, N, C = xw.shape
    wb = _window_chunk(nW, N)
    n_chunks = nW // wb
    has_mask = mask is not None

    kernel = functools.partial(_window_attn_kernel, num_heads=num_heads,
                               scale=scale, fuse_ln=fuse_ln, has_mask=has_mask)

    args = [xw]
    in_specs = [pl.BlockSpec((1, wb, N, C), lambda b, c: (b, c, 0, 0))]
    if has_mask:
        args.append(mask)
        in_specs.append(pl.BlockSpec((wb, N, N), lambda b, c: (c, 0, 0)))
    args += [rel_bias, ln_g, ln_b, wqkv, bqkv, wproj, bproj]
    in_specs += [
        pl.BlockSpec((num_heads, N, N), lambda b, c: (0, 0, 0)),
        pl.BlockSpec((1, C), lambda b, c: (0, 0)),
        pl.BlockSpec((1, C), lambda b, c: (0, 0)),
        pl.BlockSpec((C, 3 * C), lambda b, c: (0, 0)),
        pl.BlockSpec((1, 3 * C), lambda b, c: (0, 0)),
        pl.BlockSpec((C, C), lambda b, c: (0, 0)),
        pl.BlockSpec((1, C), lambda b, c: (0, 0)),
    ]
    return pl.pallas_call(
        kernel,
        out_shape=jax.ShapeDtypeStruct((B, nW, N, C), xw.dtype),
        grid=(B, n_chunks),
        in_specs=in_specs,
        out_specs=pl.BlockSpec((1, wb, N, C), lambda b, c: (b, c, 0, 0)),
        compiler_params=pltpu.CompilerParams(
            dimension_semantics=("parallel", "parallel")),
    )(*args)


def _mlp_block_kernel(x_ref, attn_ref, g_ref, b_ref, w1_ref, b1_ref,
                      w2_ref, b2_ref, o_ref):
    y = x_ref[...] + attn_ref[...]                  # residual 1: shortcut + attn
    yn = _ln(y, g_ref[...], b_ref[...])             # norm2 (f32 statistics)
    h = jnp.dot(yn.astype(_MM_DTYPE), w1_ref[...].astype(_MM_DTYPE),
                preferred_element_type=jnp.float32) + b1_ref[...]
    h = _gelu_erf(h)                                # fused GELU, no HBM bounce
    o = jnp.dot(h.astype(_MM_DTYPE), w2_ref[...].astype(_MM_DTYPE),
                preferred_element_type=jnp.float32) + b2_ref[...]
    o_ref[...] = (y + o).astype(o_ref.dtype)        # residual 2


def mlp_block(x, attn_out, g, b, w1, b1, w2, b2):
    M, C = x.shape
    Hd = w1.shape[1]
    tm = _row_tile(M)
    return pl.pallas_call(
        _mlp_block_kernel,
        out_shape=jax.ShapeDtypeStruct((M, C), x.dtype),
        grid=(pl.cdiv(M, tm),),
        in_specs=[pl.BlockSpec((tm, C), lambda i: (i, 0)),
                  pl.BlockSpec((tm, C), lambda i: (i, 0)),
                  pl.BlockSpec((1, C), lambda i: (0, 0)),
                  pl.BlockSpec((1, C), lambda i: (0, 0)),
                  pl.BlockSpec((C, Hd), lambda i: (0, 0)),
                  pl.BlockSpec((1, Hd), lambda i: (0, 0)),
                  pl.BlockSpec((Hd, C), lambda i: (0, 0)),
                  pl.BlockSpec((1, C), lambda i: (0, 0))],
        out_specs=pl.BlockSpec((tm, C), lambda i: (i, 0)),
        input_output_aliases={0: 0},                # output reuses shortcut buffer
        compiler_params=pltpu.CompilerParams(dimension_semantics=("parallel",)),
    )(x, attn_out, g, b, w1, b1, w2, b2)


# ----------------------------------------------------------------------------
# Glue (plain JAX / numpy): windowing, masks, relative position bias
# ----------------------------------------------------------------------------
# TODO(synk): fold window partition/reverse (and the interior of the cyclic
#             roll) into the attention kernel's BlockSpec index_map to remove
#             the remaining HBM transposes.
def window_partition_j(x, ws):
    B, H, W, C = x.shape
    x = x.reshape(B, H // ws, ws, W // ws, ws, C)
    x = jnp.transpose(x, (0, 1, 3, 2, 4, 5))
    return x.reshape(B, (H // ws) * (W // ws), ws * ws, C)


def window_reverse_j(win, ws, H, W):
    B, nW, N, C = win.shape
    x = win.reshape(B, H // ws, W // ws, ws, ws, C)
    x = jnp.transpose(x, (0, 1, 3, 2, 4, 5))
    return x.reshape(B, H, W, C)


def _relative_position_index(ws):
    coords = np.stack(np.meshgrid(np.arange(ws), np.arange(ws), indexing="ij"))
    coords_flatten = coords.reshape(2, -1)
    rel = coords_flatten[:, :, None] - coords_flatten[:, None, :]
    rel = rel.transpose(1, 2, 0).astype(np.int64)
    rel[:, :, 0] += ws - 1
    rel[:, :, 1] += ws - 1
    rel[:, :, 0] *= 2 * ws - 1
    return rel.sum(-1)                              # (N, N)


def _build_attn_mask(H, W, ws, ss):
    Hp = int(math.ceil(H / ws)) * ws
    Wp = int(math.ceil(W / ws)) * ws
    img_mask = np.zeros((1, Hp, Wp, 1), np.float32)
    slices = (slice(0, -ws), slice(-ws, -ss), slice(-ss, None))
    cnt = 0
    for hsl in slices:
        for wsl in slices:
            img_mask[:, hsl, wsl, :] = cnt
            cnt += 1
    mw = img_mask.reshape(1, Hp // ws, ws, Wp // ws, ws, 1)
    mw = mw.transpose(0, 1, 3, 2, 4, 5).reshape(-1, ws * ws)
    am = mw[:, None, :] - mw[:, :, None]
    am = np.where(am != 0, -100.0, 0.0).astype(np.float32)
    return jnp.asarray(am)                          # (nW, N, N)


# ----------------------------------------------------------------------------
# Swin block / BasicLayer forward
# ----------------------------------------------------------------------------
def swin_block_forward(x, H, W, prm, shift, ws, mask, num_heads, rel_index):
    B, L, C = x.shape
    M = B * L
    N = ws * ws
    scale = (C // num_heads) ** (-0.5)

    x2 = x.reshape(M, C)                            # shortcut

    pad_b = (ws - H % ws) % ws
    pad_r = (ws - W % ws) % ws
    fuse_ln = (pad_b == 0 and pad_r == 0)           # LN1 fused when no padding

    if fuse_ln:
        xn = x2.reshape(B, H, W, C)                 # LN applied inside the kernel
    else:
        # Padded tokens must be zeros *after* LN (matches the reference),
        # so apply norm1 standalone on this (rare) path.
        xn = layernorm(x2, prm["ln1_g"], prm["ln1_b"]).reshape(B, H, W, C)
        xn = jnp.pad(xn, ((0, 0), (0, pad_b), (0, pad_r), (0, 0)))
    Hp, Wp = H + pad_b, W + pad_r

    xs = jnp.roll(xn, shift=(-shift, -shift), axis=(1, 2)) if shift > 0 else xn
    xw = window_partition_j(xs, ws)                 # (B, nW, N, C)

    rel_bias = prm["rel_table"][rel_index.reshape(-1)]
    rel_bias = jnp.transpose(rel_bias.reshape(N, N, num_heads), (2, 0, 1))

    aw = window_attention(xw, mask, rel_bias,
                          prm["ln1_g"], prm["ln1_b"],
                          prm["wqkv"], prm["bqkv"],
                          prm["wproj"], prm["bproj"],
                          num_heads, scale, fuse_ln)      # (fused LN1 +) W-MSA

    xs = window_reverse_j(aw, ws, Hp, Wp)
    if shift > 0:
        xs = jnp.roll(xs, shift=(shift, shift), axis=(1, 2))
    if pad_b or pad_r:
        xs = xs[:, :H, :W, :]
    attn_out = xs.reshape(M, C)

    # residual + norm2 + fc1 + GELU + fc2 + residual in one fused kernel
    out = mlp_block(x2, attn_out, prm["ln2_g"], prm["ln2_b"],
                    prm["w1"], prm["b1"], prm["w2"], prm["b2"])
    return out.reshape(B, L, C)


def basic_layer_forward(x, H, W, params, ws, num_heads):
    ss = ws // 2
    attn_mask = _build_attn_mask(H, W, ws, ss)      # only used by shifted blocks
    rel_index = _relative_position_index(ws)
    for i, prm in enumerate(params):
        shift = 0 if i % 2 == 0 else ss
        mask = attn_mask if shift > 0 else None     # no zero-mask DMA/adds
        x = swin_block_forward(x, H, W, prm, shift, ws, mask,
                               num_heads, rel_index)
    # downsample is None -> return (x, H, W, x, H, W)
    return x, H, W, x, H, W


# ----------------------------------------------------------------------------
# Deterministic parameter initialization (synthetic; no checkpoint load)
# ----------------------------------------------------------------------------
def _init_block_params(key, dim, num_heads, hidden, ws):
    ks = jax.random.split(key, 12)
    n = lambda k, shape: (0.02 * jax.random.normal(k, shape)).astype(jnp.float32)
    return dict(
        ln1_g=jnp.ones((1, dim), jnp.float32) + n(ks[0], (1, dim)),
        ln1_b=n(ks[1], (1, dim)),
        wqkv=n(ks[2], (dim, 3 * dim)),              # (in, out) = torch weight.T
        bqkv=n(ks[3], (1, 3 * dim)),
        rel_table=n(ks[4], ((2 * ws - 1) * (2 * ws - 1), num_heads)),
        wproj=n(ks[5], (dim, dim)),
        bproj=n(ks[6], (1, dim)),
        ln2_g=jnp.ones((1, dim), jnp.float32) + n(ks[7], (1, dim)),
        ln2_b=n(ks[8], (1, dim)),
        w1=n(ks[9], (dim, hidden)),
        b1=n(ks[10], (1, hidden)),
        w2=n(ks[11], (hidden, dim)),
        b2=jnp.zeros((1, dim), jnp.float32),
    )


# ----------------------------------------------------------------------------
if __name__ == "__main__":
    B = 2
    H = W = 8
    dim = 32
    num_heads = 4
    window_size = 4
    depth = 2
    mlp_ratio = 4.0
    hidden = int(dim * mlp_ratio)

    key = jax.random.PRNGKey(0)
    kx, kp = jax.random.split(key)
    x = jax.random.normal(kx, (B, H * W, dim), jnp.float32)

    pkeys = jax.random.split(kp, depth)
    params = [_init_block_params(pkeys[i], dim, num_heads, hidden, window_size)
              for i in range(depth)]

    fwd = jax.jit(lambda xx, pp: basic_layer_forward(xx, H, W, pp,
                                                     window_size, num_heads))
    out, oH, oW, out_down, dH, dW = fwd(x, params)
    jax.block_until_ready(out)
    jax.block_until_ready(out_down)
    assert out.shape == (B, H * W, dim) and out_down.shape == (B, H * W, dim)
    assert (int(oH), int(oW), int(dH), int(dW)) == (H, W, H, W)
    print("KERNEL_OK")
</pallas_src>

<mosaic_0001>
module attributes {stable_mosaic.version = 11 : i64} {
  func.func @_window_attn_kernel(%arg0: i32, %arg1: i32, %arg2: memref<1x4x16x32xf32, #tpu.memory_space<vmem>>, %arg3: memref<4x16x16xf32, #tpu.memory_space<vmem>>, %arg4: memref<1x32xf32, #tpu.memory_space<vmem>>, %arg5: memref<1x32xf32, #tpu.memory_space<vmem>>, %arg6: memref<32x96xf32, #tpu.memory_space<vmem>>, %arg7: memref<1x96xf32, #tpu.memory_space<vmem>>, %arg8: memref<32x32xf32, #tpu.memory_space<vmem>>, %arg9: memref<1x32xf32, #tpu.memory_space<vmem>>, %arg10: memref<1x4x16x32xf32, #tpu.memory_space<vmem>>) attributes {dimension_semantics = [#tpu.dimension_semantics<parallel>, #tpu.dimension_semantics<parallel>], iteration_bounds = array<i64: 2, 1>, scalar_prefetch = 0 : i64, scratch_operands = 0 : i64, tpu.core_type = #tpu.core_type<tc>, window_params = [{transform_indices = @transform_0, window_bounds = array<i64: 1, 4, 16, 32>}, {pipeline_mode = #tpu.pipeline_mode<synchronous>, transform_indices = @transform_1, window_bounds = array<i64: 4, 16, 16>}, {pipeline_mode = #tpu.pipeline_mode<synchronous>, transform_indices = @transform_2, window_bounds = array<i64: 1, 32>}, {pipeline_mode = #tpu.pipeline_mode<synchronous>, transform_indices = @transform_3, window_bounds = array<i64: 1, 32>}, {pipeline_mode = #tpu.pipeline_mode<synchronous>, transform_indices = @transform_4, window_bounds = array<i64: 32, 96>}, {pipeline_mode = #tpu.pipeline_mode<synchronous>, transform_indices = @transform_5, window_bounds = array<i64: 1, 96>}, {pipeline_mode = #tpu.pipeline_mode<synchronous>, transform_indices = @transform_6, window_bounds = array<i64: 32, 32>}, {pipeline_mode = #tpu.pipeline_mode<synchronous>, transform_indices = @transform_7, window_bounds = array<i64: 1, 32>}, {transform_indices = @transform_8, window_bounds = array<i64: 1, 4, 16, 32>}]} {
    %c0 = arith.constant 0 : index
    %c0_0 = arith.constant 0 : index
    %c0_1 = arith.constant 0 : index
    %c0_2 = arith.constant 0 : index
    %0 = vector.load %arg2[%c0, %c0_0, %c0_1, %c0_2] : memref<1x4x16x32xf32, #tpu.memory_space<vmem>>, vector<1x4x16x32xf32>
    %1 = vector.shape_cast %0 : vector<1x4x16x32xf32> to vector<4x16x32xf32>
    %2 = vector.shape_cast %1 : vector<4x16x32xf32> to vector<64x32xf32>
    %c0_3 = arith.constant 0 : index
    %c0_4 = arith.constant 0 : index
    %3 = vector.load %arg4[%c0_3, %c0_4] : memref<1x32xf32, #tpu.memory_space<vmem>>, vector<1x32xf32>
    %c0_5 = arith.constant 0 : index
    %c0_6 = arith.constant 0 : index
    %4 = vector.load %arg5[%c0_5, %c0_6] : memref<1x32xf32, #tpu.memory_space<vmem>>, vector<1x32xf32>
    %cst = arith.constant dense<0.000000e+00> : vector<64xf32>
    %5 = vector.multi_reduction <add>, %2, %cst [1] : vector<64x32xf32> to vector<64xf32>
    %6 = vector.shape_cast %5 : vector<64xf32> to vector<64x1xf32>
    %cst_7 = arith.constant 3.200000e+01 : f32
    %7 = vector.broadcast %cst_7 : f32 to vector<64x1xf32>
    %8 = arith.divf %6, %7 : vector<64x1xf32>
    %9 = vector.broadcast %8 : vector<64x1xf32> to vector<64x32xf32>
    %10 = arith.subf %2, %9 : vector<64x32xf32>
    %11 = arith.mulf %10, %10 : vector<64x32xf32>
    %cst_8 = arith.constant dense<0.000000e+00> : vector<64xf32>
    %12 = vector.multi_reduction <add>, %11, %cst_8 [1] : vector<64x32xf32> to vector<64xf32>
    %13 = vector.shape_cast %12 : vector<64xf32> to vector<64x1xf32>
    %cst_9 = arith.constant 3.200000e+01 : f32
    %14 = vector.broadcast %cst_9 : f32 to vector<64x1xf32>
    %15 = arith.divf %13, %14 : vector<64x1xf32>
    %cst_10 = arith.constant 9.99999974E-6 : f32
    %16 = vector.broadcast %cst_10 : f32 to vector<64x1xf32>
    %17 = arith.addf %15, %16 : vector<64x1xf32>
    %18 = math.rsqrt %17 : vector<64x1xf32>
    %19 = vector.broadcast %18 : vector<64x1xf32> to vector<64x32xf32>
    %20 = arith.mulf %10, %19 : vector<64x32xf32>
    %21 = vector.broadcast %3 : vector<1x32xf32> to vector<64x32xf32>
    %22 = arith.mulf %20, %21 : vector<64x32xf32>
    %23 = vector.broadcast %4 : vector<1x32xf32> to vector<64x32xf32>
    %24 = arith.addf %22, %23 : vector<64x32xf32>
    %c0_11 = arith.constant 0 : index
    %c0_12 = arith.constant 0 : index
    %25 = vector.load %arg6[%c0_11, %c0_12] : memref<32x96xf32, #tpu.memory_space<vmem>>, vector<32x96xf32>
    %cst_13 = arith.constant dense<0.000000e+00> : vector<64x96xf32>
    %26 = tpu.matmul %24, %25, %cst_13 {dimension_numbers = #tpu.dot_dimension_numbers<[1], [0], [0], [1], [0, 0, 1, 1], [], []>} : vector<64x32xf32>, vector<32x96xf32>, vector<64x96xf32> -> vector<64x96xf32>
    %c0_14 = arith.constant 0 : index
    %c0_15 = arith.constant 0 : index
    %27 = vector.load %arg7[%c0_14, %c0_15] : memref<1x96xf32, #tpu.memory_space<vmem>>, vector<1x96xf32>
    %28 = vector.broadcast %27 : vector<1x96xf32> to vector<64x96xf32>
    %29 = arith.addf %26, %28 : vector<64x96xf32>
    %c0_16 = arith.constant 0 : index
    %c0_17 = arith.constant 0 : index
    %30 = vector.load %arg8[%c0_16, %c0_17] : memref<32x32xf32, #tpu.memory_space<vmem>>, vector<32x32xf32>
    %31 = vector.extract_strided_slice %29 {offsets = [0, 0], sizes = [64, 8], strides = [1, 1]} : vector<64x96xf32> to vector<64x8xf32>
    %32 = vector.shape_cast %31 : vector<64x8xf32> to vector<4x16x8xf32>
    %cst_18 = arith.constant 0.353553385 : f32
    %33 = vector.broadcast %cst_18 : f32 to vector<4x16x8xf32>
    %34 = arith.mulf %32, %33 : vector<4x16x8xf32>
    %35 = vector.extract_strided_slice %29 {offsets = [0, 32], sizes = [64, 8], strides = [1, 1]} : vector<64x96xf32> to vector<64x8xf32>
    %36 = vector.shape_cast %35 : vector<64x8xf32> to vector<4x16x8xf32>
    %37 = vector.extract_strided_slice %29 {offsets = [0, 64], sizes = [64, 8], strides = [1, 1]} : vector<64x96xf32> to vector<64x8xf32>
    %38 = vector.shape_cast %37 : vector<64x8xf32> to vector<4x16x8xf32>
    "tpu.trace_start"() <{level = 10 : i32, message = "wnd,wmd->wnm"}> : () -> ()
    %cst_19 = arith.constant dense<0.000000e+00> : vector<4x16x16xf32>
    %39 = tpu.matmul %34, %36, %cst_19 {dimension_numbers = #tpu.dot_dimension_numbers<[2], [2], [1], [1], [0, 0, 0, 1, 1, 1], [0], [0]>} : vector<4x16x8xf32>, vector<4x16x8xf32>, vector<4x16x16xf32> -> vector<4x16x16xf32>
    "tpu.trace_stop"() : () -> ()
    %c0_20 = arith.constant 0 : index
    %c0_21 = arith.constant 0 : index
    %c0_22 = arith.constant 0 : index
    %40 = vector.load %arg3[%c0_20, %c0_21, %c0_22] : memref<4x16x16xf32, #tpu.memory_space<vmem>>, vector<1x16x16xf32>
    %41 = vector.shape_cast %40 : vector<1x16x16xf32> to vector<16x16xf32>
    %42 = vector.shape_cast %41 : vector<16x16xf32> to vector<1x16x16xf32>
    %43 = vector.broadcast %42 : vector<1x16x16xf32> to vector<4x16x16xf32>
    %44 = arith.addf %39, %43 : vector<4x16x16xf32>
    %cst_23 = arith.constant dense<0xFF800000> : vector<4x16xf32>
    %45 = vector.multi_reduction <maximumf>, %44, %cst_23 [2] : vector<4x16x16xf32> to vector<4x16xf32>
    %46 = vector.shape_cast %45 : vector<4x16xf32> to vector<4x16x1xf32>
    %47 = vector.broadcast %46 : vector<4x16x1xf32> to vector<4x16x16xf32>
    %48 = arith.subf %44, %47 : vector<4x16x16xf32>
    %49 = math.exp %48 : vector<4x16x16xf32>
    %cst_24 = arith.constant dense<0.000000e+00> : vector<4x16xf32>
    %50 = vector.multi_reduction <add>, %49, %cst_24 [2] : vector<4x16x16xf32> to vector<4x16xf32>
    %51 = vector.shape_cast %50 : vector<4x16xf32> to vector<4x16x1xf32>
    %52 = vector.broadcast %51 : vector<4x16x1xf32> to vector<4x16x16xf32>
    %53 = arith.divf %49, %52 : vector<4x16x16xf32>
    "tpu.trace_start"() <{level = 10 : i32, message = "wnm,wmd->wnd"}> : () -> ()
    %cst_25 = arith.constant dense<0.000000e+00> : vector<4x16x8xf32>
    %54 = tpu.matmul %53, %38, %cst_25 {dimension_numbers = #tpu.dot_dimension_numbers<[2], [1], [1], [2], [0, 0, 0, 1, 1, 2], [0], [0]>} : vector<4x16x16xf32>, vector<4x16x8xf32>, vector<4x16x8xf32> -> vector<4x16x8xf32>
    "tpu.trace_stop"() : () -> ()
    %55 = vector.shape_cast %54 : vector<4x16x8xf32> to vector<64x8xf32>
    %56 = vector.extract_strided_slice %30 {offsets = [0, 0], sizes = [8, 32], strides = [1, 1]} : vector<32x32xf32> to vector<8x32xf32>
    %cst_26 = arith.constant dense<0.000000e+00> : vector<64x32xf32>
    %57 = tpu.matmul %55, %56, %cst_26 {dimension_numbers = #tpu.dot_dimension_numbers<[1], [0], [0], [1], [0, 0, 1, 1], [], []>} : vector<64x8xf32>, vector<8x32xf32>, vector<64x32xf32> -> vector<64x32xf32>
    %58 = vector.extract_strided_slice %29 {offsets = [0, 8], sizes = [64, 8], strides = [1, 1]} : vector<64x96xf32> to vector<64x8xf32>
    %59 = vector.shape_cast %58 : vector<64x8xf32> to vector<4x16x8xf32>
    %cst_27 = arith.constant 0.353553385 : f32
    %60 = vector.broadcast %cst_27 : f32 to vector<4x16x8xf32>
    %61 = arith.mulf %59, %60 : vector<4x16x8xf32>
    %62 = vector.extract_strided_slice %29 {offsets = [0, 40], sizes = [64, 8], strides = [1, 1]} : vector<64x96xf32> to vector<64x8xf32>
    %63 = vector.shape_cast %62 : vector<64x8xf32> to vector<4x16x8xf32>
    %64 = vector.extract_strided_slice %29 {offsets = [0, 72], sizes = [64, 8], strides = [1, 1]} : vector<64x96xf32> to vector<64x8xf32>
    %65 = vector.shape_cast %64 : vector<64x8xf32> to vector<4x16x8xf32>
    "tpu.trace_start"() <{level = 10 : i32, message = "wnd,wmd->wnm"}> : () -> ()
    %cst_28 = arith.constant dense<0.000000e+00> : vector<4x16x16xf32>
    %66 = tpu.matmul %61, %63, %cst_28 {dimension_numbers = #tpu.dot_dimension_numbers<[2], [2], [1], [1], [0, 0, 0, 1, 1, 1], [0], [0]>} : vector<4x16x8xf32>, vector<4x16x8xf32>, vector<4x16x16xf32> -> vector<4x16x16xf32>
    "tpu.trace_stop"() : () -> ()
    %c1 = arith.constant 1 : index
    %c0_29 = arith.constant 0 : index
    %c0_30 = arith.constant 0 : index
    %67 = vector.load %arg3[%c1, %c0_29, %c0_30] : memref<4x16x16xf32, #tpu.memory_space<vmem>>, vector<1x16x16xf32>
    %68 = vector.shape_cast %67 : vector<1x16x16xf32> to vector<16x16xf32>
    %69 = vector.shape_cast %68 : vector<16x16xf32> to vector<1x16x16xf32>
    %70 = vector.broadcast %69 : vector<1x16x16xf32> to vector<4x16x16xf32>
    %71 = arith.addf %66, %70 : vector<4x16x16xf32>
    %cst_31 = arith.constant dense<0xFF800000> : vector<4x16xf32>
    %72 = vector.multi_reduction <maximumf>, %71, %cst_31 [2] : vector<4x16x16xf32> to vector<4x16xf32>
    %73 = vector.shape_cast %72 : vector<4x16xf32> to vector<4x16x1xf32>
    %74 = vector.broadcast %73 : vector<4x16x1xf32> to vector<4x16x16xf32>
    %75 = arith.subf %71, %74 : vector<4x16x16xf32>
    %76 = math.exp %75 : vector<4x16x16xf32>
    %cst_32 = arith.constant dense<0.000000e+00> : vector<4x16xf32>
    %77 = vector.multi_reduction <add>, %76, %cst_32 [2] : vector<4x16x16xf32> to vector<4x16xf32>
    %78 = vector.shape_cast %77 : vector<4x16xf32> to vector<4x16x1xf32>
    %79 = vector.broadcast %78 : vector<4x16x1xf32> to vector<4x16x16xf32>
    %80 = arith.divf %76, %79 : vector<4x16x16xf32>
    "tpu.trace_start"() <{level = 10 : i32, message = "wnm,wmd->wnd"}> : () -> ()
    %cst_33 = arith.constant dense<0.000000e+00> : vector<4x16x8xf32>
    %81 = tpu.matmul %80, %65, %cst_33 {dimension_numbers = #tpu.dot_dimension_numbers<[2], [1], [1], [2], [0, 0, 0, 1, 1, 2], [0], [0]>} : vector<4x16x16xf32>, vector<4x16x8xf32>, vector<4x16x8xf32> -> vector<4x16x8xf32>
    "tpu.trace_stop"() : () -> ()
    %82 = vector.shape_cast %81 : vector<4x16x8xf32> to vector<64x8xf32>
    %83 = vector.extract_strided_slice %30 {offsets = [8, 0], sizes = [8, 32], strides = [1, 1]} : vector<32x32xf32> to vector<8x32xf32>
    %cst_34 = arith.constant dense<0.000000e+00> : vector<64x32xf32>
    %84 = tpu.matmul %82, %83, %cst_34 {dimension_numbers = #tpu.dot_dimension_numbers<[1], [0], [0], [1], [0, 0, 1, 1], [], []>} : vector<64x8xf32>, vector<8x32xf32>, vector<64x32xf32> -> vector<64x32xf32>
    %85 = arith.addf %57, %84 : vector<64x32xf32>
    %86 = vector.extract_strided_slice %29 {offsets = [0, 16], sizes = [64, 8], strides = [1, 1]} : vector<64x96xf32> to vector<64x8xf32>
    %87 = vector.shape_cast %86 : vector<64x8xf32> to vector<4x16x8xf32>
    %cst_35 = arith.constant 0.353553385 : f32
    %88 = vector.broadcast %cst_35 : f32 to vector<4x16x8xf32>
    %89 = arith.mulf %87, %88 : vector<4x16x8xf32>
    %90 = vector.extract_strided_slice %29 {offsets = [0, 48], sizes = [64, 8], strides = [1, 1]} : vector<64x96xf32> to vector<64x8xf32>
    %91 = vector.shape_cast %90 : vector<64x8xf32> to vector<4x16x8xf32>
    %92 = vector.extract_strided_slice %29 {offsets = [0, 80], sizes = [64, 8], strides = [1, 1]} : vector<64x96xf32> to vector<64x8xf32>
    %93 = vector.shape_cast %92 : vector<64x8xf32> to vector<4x16x8xf32>
    "tpu.trace_start"() <{level = 10 : i32, message = "wnd,wmd->wnm"}> : () -> ()
    %cst_36 = arith.constant dense<0.000000e+00> : vector<4x16x16xf32>
    %94 = tpu.matmul %89, %91, %cst_36 {dimension_numbers = #tpu.dot_dimension_numbers<[2], [2], [1], [1], [0, 0, 0, 1, 1, 1], [0], [0]>} : vector<4x16x8xf32>, vector<4x16x8xf32>, vector<4x16x16xf32> -> vector<4x16x16xf32>
    "tpu.trace_stop"() : () -> ()
    %c2 = arith.constant 2 : index
    %c0_37 = arith.constant 0 : index
    %c0_38 = arith.constant 0 : index
    %95 = vector.load %arg3[%c2, %c0_37, %c0_38] : memref<4x16x16xf32, #tpu.memory_space<vmem>>, vector<1x16x16xf32>
    %96 = vector.shape_cast %95 : vector<1x16x16xf32> to vector<16x16xf32>
    %97 = vector.shape_cast %96 : vector<16x16xf32> to vector<1x16x16xf32>
    %98 = vector.broadcast %97 : vector<1x16x16xf32> to vector<4x16x16xf32>
    %99 = arith.addf %94, %98 : vector<4x16x16xf32>
    %cst_39 = arith.constant dense<0xFF800000> : vector<4x16xf32>
    %100 = vector.multi_reduction <maximumf>, %99, %cst_39 [2] : vector<4x16x16xf32> to vector<4x16xf32>
    %101 = vector.shape_cast %100 : vector<4x16xf32> to vector<4x16x1xf32>
    %102 = vector.broadcast %101 : vector<4x16x1xf32> to vector<4x16x16xf32>
    %103 = arith.subf %99, %102 : vector<4x16x16xf32>
    %104 = math.exp %103 : vector<4x16x16xf32>
    %cst_40 = arith.constant dense<0.000000e+00> : vector<4x16xf32>
    %105 = vector.multi_reduction <add>, %104, %cst_40 [2] : vector<4x16x16xf32> to vector<4x16xf32>
    %106 = vector.shape_cast %105 : vector<4x16xf32> to vector<4x16x1xf32>
    %107 = vector.broadcast %106 : vector<4x16x1xf32> to vector<4x16x16xf32>
    %108 = arith.divf %104, %107 : vector<4x16x16xf32>
    "tpu.trace_start"() <{level = 10 : i32, message = "wnm,wmd->wnd"}> : () -> ()
    %cst_41 = arith.constant dense<0.000000e+00> : vector<4x16x8xf32>
    %109 = tpu.matmul %108, %93, %cst_41 {dimension_numbers = #tpu.dot_dimension_numbers<[2], [1], [1], [2], [0, 0, 0, 1, 1, 2], [0], [0]>} : vector<4x16x16xf32>, vector<4x16x8xf32>, vector<4x16x8xf32> -> vector<4x16x8xf32>
    "tpu.trace_stop"() : () -> ()
    %110 = vector.shape_cast %109 : vector<4x16x8xf32> to vector<64x8xf32>
    %111 = vector.extract_strided_slice %30 {offsets = [16, 0], sizes = [8, 32], strides = [1, 1]} : vector<32x32xf32> to vector<8x32xf32>
    %cst_42 = arith.constant dense<0.000000e+00> : vector<64x32xf32>
    %112 = tpu.matmul %110, %111, %cst_42 {dimension_numbers = #tpu.dot_dimension_numbers<[1], [0], [0], [1], [0, 0, 1, 1], [], []>} : vector<64x8xf32>, vector<8x32xf32>, vector<64x32xf32> -> vector<64x32xf32>
    %113 = arith.addf %85, %112 : vector<64x32xf32>
    %114 = vector.extract_strided_slice %29 {offsets = [0, 24], sizes = [64, 8], strides = [1, 1]} : vector<64x96xf32> to vector<64x8xf32>
    %115 = vector.shape_cast %114 : vector<64x8xf32> to vector<4x16x8xf32>
    %cst_43 = arith.constant 0.353553385 : f32
    %116 = vector.broadcast %cst_43 : f32 to vector<4x16x8xf32>
    %117 = arith.mulf %115, %116 : vector<4x16x8xf32>
    %118 = vector.extract_strided_slice %29 {offsets = [0, 56], sizes = [64, 8], strides = [1, 1]} : vector<64x96xf32> to vector<64x8xf32>
    %119 = vector.shape_cast %118 : vector<64x8xf32> to vector<4x16x8xf32>
    %120 = vector.extract_strided_slice %29 {offsets = [0, 88], sizes = [64, 8], strides = [1, 1]} : vector<64x96xf32> to vector<64x8xf32>
    %121 = vector.shape_cast %120 : vector<64x8xf32> to vector<4x16x8xf32>
    "tpu.trace_start"() <{level = 10 : i32, message = "wnd,wmd->wnm"}> : () -> ()
    %cst_44 = arith.constant dense<0.000000e+00> : vector<4x16x16xf32>
    %122 = tpu.matmul %117, %119, %cst_44 {dimension_numbers = #tpu.dot_dimension_numbers<[2], [2], [1], [1], [0, 0, 0, 1, 1, 1], [0], [0]>} : vector<4x16x8xf32>, vector<4x16x8xf32>, vector<4x16x16xf32> -> vector<4x16x16xf32>
    "tpu.trace_stop"() : () -> ()
    %c3 = arith.constant 3 : index
    %c0_45 = arith.constant 0 : index
    %c0_46 = arith.constant 0 : index
    %123 = vector.load %arg3[%c3, %c0_45, %c0_46] : memref<4x16x16xf32, #tpu.memory_space<vmem>>, vector<1x16x16xf32>
    %124 = vector.shape_cast %123 : vector<1x16x16xf32> to vector<16x16xf32>
    %125 = vector.shape_cast %124 : vector<16x16xf32> to vector<1x16x16xf32>
    %126 = vector.broadcast %125 : vector<1x16x16xf32> to vector<4x16x16xf32>
    %127 = arith.addf %122, %126 : vector<4x16x16xf32>
    %cst_47 = arith.constant dense<0xFF800000> : vector<4x16xf32>
    %128 = vector.multi_reduction <maximumf>, %127, %cst_47 [2] : vector<4x16x16xf32> to vector<4x16xf32>
    %129 = vector.shape_cast %128 : vector<4x16xf32> to vector<4x16x1xf32>
    %130 = vector.broadcast %129 : vector<4x16x1xf32> to vector<4x16x16xf32>
    %131 = arith.subf %127, %130 : vector<4x16x16xf32>
    %132 = math.exp %131 : vector<4x16x16xf32>
    %cst_48 = arith.constant dense<0.000000e+00> : vector<4x16xf32>
    %133 = vector.multi_reduction <add>, %132, %cst_48 [2] : vector<4x16x16xf32> to vector<4x16xf32>
    %134 = vector.shape_cast %133 : vector<4x16xf32> to vector<4x16x1xf32>
    %135 = vector.broadcast %134 : vector<4x16x1xf32> to vector<4x16x16xf32>
    %136 = arith.divf %132, %135 : vector<4x16x16xf32>
    "tpu.trace_start"() <{level = 10 : i32, message = "wnm,wmd->wnd"}> : () -> ()
    %cst_49 = arith.constant dense<0.000000e+00> : vector<4x16x8xf32>
    %137 = tpu.matmul %136, %121, %cst_49 {dimension_numbers = #tpu.dot_dimension_numbers<[2], [1], [1], [2], [0, 0, 0, 1, 1, 2], [0], [0]>} : vector<4x16x16xf32>, vector<4x16x8xf32>, vector<4x16x8xf32> -> vector<4x16x8xf32>
    "tpu.trace_stop"() : () -> ()
    %138 = vector.shape_cast %137 : vector<4x16x8xf32> to vector<64x8xf32>
    %139 = vector.extract_strided_slice %30 {offsets = [24, 0], sizes = [8, 32], strides = [1, 1]} : vector<32x32xf32> to vector<8x32xf32>
    %cst_50 = arith.constant dense<0.000000e+00> : vector<64x32xf32>
    %140 = tpu.matmul %138, %139, %cst_50 {dimension_numbers = #tpu.dot_dimension_numbers<[1], [0], [0], [1], [0, 0, 1, 1], [], []>} : vector<64x8xf32>, vector<8x32xf32>, vector<64x32xf32> -> vector<64x32xf32>
    %141 = arith.addf %113, %140 : vector<64x32xf32>
    %c0_51 = arith.constant 0 : index
    %c0_52 = arith.constant 0 : index
    %142 = vector.load %arg9[%c0_51, %c0_52] : memref<1x32xf32, #tpu.memory_space<vmem>>, vector<1x32xf32>
    %143 = vector.broadcast %142 : vector<1x32xf32> to vector<64x32xf32>
    %144 = arith.addf %141, %143 : vector<64x32xf32>
    %145 = vector.shape_cast %144 : vector<64x32xf32> to vector<4x16x32xf32>
    %c0_53 = arith.constant 0 : index
    %c0_54 = arith.constant 0 : index
    %c0_55 = arith.constant 0 : index
    %c0_56 = arith.constant 0 : index
    %146 = vector.load %arg10[%c0_53, %c0_54, %c0_55, %c0_56] : memref<1x4x16x32xf32, #tpu.memory_space<vmem>>, vector<1x4x16x32xf32>
    %147 = vector.shape_cast %146 : vector<1x4x16x32xf32> to vector<4x16x32xf32>
    %148 = vector.shape_cast %145 : vector<4x16x32xf32> to vector<1x4x16x32xf32>
    tpu.vector_store %arg10[%c0_53, %c0_54, %c0_55, %c0_56], %148 {strides = array<i32>} : memref<1x4x16x32xf32, #tpu.memory_space<vmem>>, vector<1x4x16x32xf32>,
    return
  }
  func.func @transform_0(%arg0: i32, %arg1: i32) -> (i32, i32, i32, i32) {
    %c0_i32 = arith.constant 0 : i32
    %c0_i32_0 = arith.constant 0 : i32
    %c0_i32_1 = arith.constant 0 : i32
    return %arg0, %arg1, %c0_i32, %c0_i32_0 : i32, i32, i32, i32
  }
  func.func @transform_1(%arg0: i32, %arg1: i32) -> (i32, i32, i32) {
    %c0_i32 = arith.constant 0 : i32
    %c0_i32_0 = arith.constant 0 : i32
    %c0_i32_1 = arith.constant 0 : i32
    %c0_i32_2 = arith.constant 0 : i32
    return %c0_i32, %c0_i32_0, %c0_i32_1 : i32, i32, i32
  }
  func.func @transform_2(%arg0: i32, %arg1: i32) -> (i32, i32) {
    %c0_i32 = arith.constant 0 : i32
    %c0_i32_0 = arith.constant 0 : i32
    %c0_i32_1 = arith.constant 0 : i32
    return %c0_i32, %c0_i32_0 : i32, i32
  }
  func.func @transform_3(%arg0: i32, %arg1: i32) -> (i32, i32) {
    %c0_i32 = arith.constant 0 : i32
    %c0_i32_0 = arith.constant 0 : i32
    %c0_i32_1 = arith.constant 0 : i32
    return %c0_i32, %c0_i32_0 : i32, i32
  }
  func.func @transform_4(%arg0: i32, %arg1: i32) -> (i32, i32) {
    %c0_i32 = arith.constant 0 : i32
    %c0_i32_0 = arith.constant 0 : i32
    %c0_i32_1 = arith.constant 0 : i32
    return %c0_i32, %c0_i32_0 : i32, i32
  }
  func.func @transform_5(%arg0: i32, %arg1: i32) -> (i32, i32) {
    %c0_i32 = arith.constant 0 : i32
    %c0_i32_0 = arith.constant 0 : i32
    %c0_i32_1 = arith.constant 0 : i32
    return %c0_i32, %c0_i32_0 : i32, i32
  }
  func.func @transform_6(%arg0: i32, %arg1: i32) -> (i32, i32) {
    %c0_i32 = arith.constant 0 : i32
    %c0_i32_0 = arith.constant 0 : i32
    %c0_i32_1 = arith.constant 0 : i32
    return %c0_i32, %c0_i32_0 : i32, i32
  }
  func.func @transform_7(%arg0: i32, %arg1: i32) -> (i32, i32) {
    %c0_i32 = arith.constant 0 : i32
    %c0_i32_0 = arith.constant 0 : i32
    %c0_i32_1 = arith.constant 0 : i32
    return %c0_i32, %c0_i32_0 : i32, i32
  }
  func.func @transform_8(%arg0: i32, %arg1: i32) -> (i32, i32, i32, i32) {
    %c0_i32 = arith.constant 0 : i32
    %c0_i32_0 = arith.constant 0 : i32
    %c0_i32_1 = arith.constant 0 : i32
    return %arg0, %arg1, %c0_i32, %c0_i32_0 : i32, i32, i32, i32
  }
}

module attributes {stable_mosaic.version = 11 : i64} {
  func.func @_mlp_block_kernel(%arg0: i32, %arg1: memref<64x32xf32, #tpu.memory_space<vmem>>, %arg2: memref<64x32xf32, #tpu.memory_space<vmem>>, %arg3: memref<1x32xf32, #tpu.memory_space<vmem>>, %arg4: memref<1x32xf32, #tpu.memory_space<vmem>>, %arg5: memref<32x128xf32, #tpu.memory_space<vmem>>, %arg6: memref<1x128xf32, #tpu.memory_space<vmem>>, %arg7: memref<128x32xf32, #tpu.memory_space<vmem>>, %arg8: memref<1x32xf32, #tpu.memory_space<vmem>>, %arg9: memref<64x32xf32, #tpu.memory_space<vmem>>) attributes {dimension_semantics = [#tpu.dimension_semantics<parallel>], iteration_bounds = array<i64: 2>, scalar_prefetch = 0 : i64, scratch_operands = 0 : i64, tpu.core_type = #tpu.core_type<tc>, window_params = [{transform_indices = @transform_0, window_bounds = array<i64: 64, 32>}, {transform_indices = @transform_1, window_bounds = array<i64: 64, 32>}, {pipeline_mode = #tpu.pipeline_mode<synchronous>, transform_indices = @transform_2, window_bounds = array<i64: 1, 32>}, {pipeline_mode = #tpu.pipeline_mode<synchronous>, transform_indices = @transform_3, window_bounds = array<i64: 1, 32>}, {pipeline_mode = #tpu.pipeline_mode<synchronous>, transform_indices = @transform_4, window_bounds = array<i64: 32, 128>}, {pipeline_mode = #tpu.pipeline_mode<synchronous>, transform_indices = @transform_5, window_bounds = array<i64: 1, 128>}, {pipeline_mode = #tpu.pipeline_mode<synchronous>, transform_indices = @transform_6, window_bounds = array<i64: 128, 32>}, {pipeline_mode = #tpu.pipeline_mode<synchronous>, transform_indices = @transform_7, window_bounds = array<i64: 1, 32>}, {transform_indices = @transform_8, window_bounds = array<i64: 64, 32>}]} {
    %c0 = arith.constant 0 : index
    %c0_0 = arith.constant 0 : index
    %0 = vector.load %arg1[%c0, %c0_0] : memref<64x32xf32, #tpu.memory_space<vmem>>, vector<64x32xf32>
    %c0_1 = arith.constant 0 : index
    %c0_2 = arith.constant 0 : index
    %1 = vector.load %arg2[%c0_1, %c0_2] : memref<64x32xf32, #tpu.memory_space<vmem>>, vector<64x32xf32>
    %2 = arith.addf %0, %1 : vector<64x32xf32>
    %c0_3 = arith.constant 0 : index
    %c0_4 = arith.constant 0 : index
    %3 = vector.load %arg3[%c0_3, %c0_4] : memref<1x32xf32, #tpu.memory_space<vmem>>, vector<1x32xf32>
    %c0_5 = arith.constant 0 : index
    %c0_6 = arith.constant 0 : index
    %4 = vector.load %arg4[%c0_5, %c0_6] : memref<1x32xf32, #tpu.memory_space<vmem>>, vector<1x32xf32>
    %cst = arith.constant dense<0.000000e+00> : vector<64xf32>
    %5 = vector.multi_reduction <add>, %2, %cst [1] : vector<64x32xf32> to vector<64xf32>
    %6 = vector.shape_cast %5 : vector<64xf32> to vector<64x1xf32>
    %cst_7 = arith.constant 3.200000e+01 : f32
    %7 = vector.broadcast %cst_7 : f32 to vector<64x1xf32>
    %8 = arith.divf %6, %7 : vector<64x1xf32>
    %9 = vector.broadcast %8 : vector<64x1xf32> to vector<64x32xf32>
    %10 = arith.subf %2, %9 : vector<64x32xf32>
    %11 = arith.mulf %10, %10 : vector<64x32xf32>
    %cst_8 = arith.constant dense<0.000000e+00> : vector<64xf32>
    %12 = vector.multi_reduction <add>, %11, %cst_8 [1] : vector<64x32xf32> to vector<64xf32>
    %13 = vector.shape_cast %12 : vector<64xf32> to vector<64x1xf32>
    %cst_9 = arith.constant 3.200000e+01 : f32
    %14 = vector.broadcast %cst_9 : f32 to vector<64x1xf32>
    %15 = arith.divf %13, %14 : vector<64x1xf32>
    %cst_10 = arith.constant 9.99999974E-6 : f32
    %16 = vector.broadcast %cst_10 : f32 to vector<64x1xf32>
    %17 = arith.addf %15, %16 : vector<64x1xf32>
    %18 = math.rsqrt %17 : vector<64x1xf32>
    %19 = vector.broadcast %18 : vector<64x1xf32> to vector<64x32xf32>
    %20 = arith.mulf %10, %19 : vector<64x32xf32>
    %21 = vector.broadcast %3 : vector<1x32xf32> to vector<64x32xf32>
    %22 = arith.mulf %20, %21 : vector<64x32xf32>
    %23 = vector.broadcast %4 : vector<1x32xf32> to vector<64x32xf32>
    %24 = arith.addf %22, %23 : vector<64x32xf32>
    %c0_11 = arith.constant 0 : index
    %c0_12 = arith.constant 0 : index
    %25 = vector.load %arg5[%c0_11, %c0_12] : memref<32x128xf32, #tpu.memory_space<vmem>>, vector<32x128xf32>
    %cst_13 = arith.constant dense<0.000000e+00> : vector<64x128xf32>
    %26 = tpu.matmul %24, %25, %cst_13 {dimension_numbers = #tpu.dot_dimension_numbers<[1], [0], [0], [1], [0, 0, 1, 1], [], []>} : vector<64x32xf32>, vector<32x128xf32>, vector<64x128xf32> -> vector<64x128xf32>
    %c0_14 = arith.constant 0 : index
    %c0_15 = arith.constant 0 : index
    %27 = vector.load %arg6[%c0_14, %c0_15] : memref<1x128xf32, #tpu.memory_space<vmem>>, vector<1x128xf32>
    %28 = vector.broadcast %27 : vector<1x128xf32> to vector<64x128xf32>
    %29 = arith.addf %26, %28 : vector<64x128xf32>
    %cst_16 = arith.constant 0.707106769 : f32
    %30 = vector.broadcast %cst_16 : f32 to vector<64x128xf32>
    %31 = arith.mulf %29, %30 : vector<64x128xf32>
    %32 = math.absf %31 : vector<64x128xf32>
    %cst_17 = arith.constant 0.327591091 : f32
    %33 = vector.broadcast %cst_17 : f32 to vector<64x128xf32>
    %34 = arith.mulf %33, %32 : vector<64x128xf32>
    %cst_18 = arith.constant 1.000000e+00 : f32
    %35 = vector.broadcast %cst_18 : f32 to vector<64x128xf32>
    %36 = arith.addf %35, %34 : vector<64x128xf32>
    %cst_19 = arith.constant 1.000000e+00 : f32
    %37 = vector.broadcast %cst_19 : f32 to vector<64x128xf32>
    %38 = arith.divf %37, %36 : vector<64x128xf32>
    %cst_20 = arith.constant 1.06140542 : f32
    %39 = vector.broadcast %cst_20 : f32 to vector<64x128xf32>
    %40 = arith.mulf %38, %39 : vector<64x128xf32>
    %cst_21 = arith.constant -1.45315206 : f32
    %41 = vector.broadcast %cst_21 : f32 to vector<64x128xf32>
    %42 = arith.addf %41, %40 : vector<64x128xf32>
    %43 = arith.mulf %38, %42 : vector<64x128xf32>
    %cst_22 = arith.constant 1.42141378 : f32
    %44 = vector.broadcast %cst_22 : f32 to vector<64x128xf32>
    %45 = arith.addf %44, %43 : vector<64x128xf32>
    %46 = arith.mulf %38, %45 : vector<64x128xf32>
    %cst_23 = arith.constant -0.284496725 : f32
    %47 = vector.broadcast %cst_23 : f32 to vector<64x128xf32>
    %48 = arith.addf %47, %46 : vector<64x128xf32>
    %49 = arith.mulf %38, %48 : vector<64x128xf32>
    %cst_24 = arith.constant 0.254829586 : f32
    %50 = vector.broadcast %cst_24 : f32 to vector<64x128xf32>
    %51 = arith.addf %50, %49 : vector<64x128xf32>
    %52 = arith.mulf %38, %51 : vector<64x128xf32>
    %cst_25 = arith.constant 0.000000e+00 : f32
    %53 = vector.broadcast %cst_25 : f32 to vector<64x128xf32>
    %54 = arith.subf %53, %32 : vector<64x128xf32>
    %55 = arith.mulf %54, %32 : vector<64x128xf32>
    %56 = math.exp %55 : vector<64x128xf32>
    %57 = arith.mulf %52, %56 : vector<64x128xf32>
    %cst_26 = arith.constant 1.000000e+00 : f32
    %58 = vector.broadcast %cst_26 : f32 to vector<64x128xf32>
    %59 = arith.subf %58, %57 : vector<64x128xf32>
    %cst_27 = arith.constant 0.000000e+00 : f32
    %60 = vector.broadcast %cst_27 : f32 to vector<64x128xf32>
    %61 = arith.cmpf oge, %31, %60 : vector<64x128xf32>
    %cst_28 = arith.constant 0.000000e+00 : f32
    %62 = vector.broadcast %cst_28 : f32 to vector<64x128xf32>
    %63 = arith.subf %62, %59 : vector<64x128xf32>
    %64 = arith.select %61, %59, %63 : vector<64x128xi1>, vector<64x128xf32>
    %cst_29 = arith.constant 5.000000e-01 : f32
    %65 = vector.broadcast %cst_29 : f32 to vector<64x128xf32>
    %66 = arith.mulf %65, %29 : vector<64x128xf32>
    %cst_30 = arith.constant 1.000000e+00 : f32
    %67 = vector.broadcast %cst_30 : f32 to vector<64x128xf32>
    %68 = arith.addf %67, %64 : vector<64x128xf32>
    %69 = arith.mulf %66, %68 : vector<64x128xf32>
    %c0_31 = arith.constant 0 : index
    %c0_32 = arith.constant 0 : index
    %70 = vector.load %arg7[%c0_31, %c0_32] : memref<128x32xf32, #tpu.memory_space<vmem>>, vector<128x32xf32>
    %cst_33 = arith.constant dense<0.000000e+00> : vector<64x32xf32>
    %71 = tpu.matmul %69, %70, %cst_33 {dimension_numbers = #tpu.dot_dimension_numbers<[1], [0], [0], [1], [0, 0, 1, 1], [], []>} : vector<64x128xf32>, vector<128x32xf32>, vector<64x32xf32> -> vector<64x32xf32>
    %c0_34 = arith.constant 0 : index
    %c0_35 = arith.constant 0 : index
    %72 = vector.load %arg8[%c0_34, %c0_35] : memref<1x32xf32, #tpu.memory_space<vmem>>, vector<1x32xf32>
    %73 = vector.broadcast %72 : vector<1x32xf32> to vector<64x32xf32>
    %74 = arith.addf %71, %73 : vector<64x32xf32>
    %75 = arith.addf %2, %74 : vector<64x32xf32>
    %c0_36 = arith.constant 0 : index
    %c0_37 = arith.constant 0 : index
    %76 = vector.load %arg9[%c0_36, %c0_37] : memref<64x32xf32, #tpu.memory_space<vmem>>, vector<64x32xf32>
    tpu.vector_store %arg9[%c0_36, %c0_37], %75 {strides = array<i32>} : memref<64x32xf32, #tpu.memory_space<vmem>>, vector<64x32xf32>,
    return
  }
  func.func @transform_0(%arg0: i32) -> (i32, i32) {
    %c0_i32 = arith.constant 0 : i32
    %c0_i32_0 = arith.constant 0 : i32
    return %arg0, %c0_i32 : i32, i32
  }
  func.func @transform_1(%arg0: i32) -> (i32, i32) {
    %c0_i32 = arith.constant 0 : i32
    %c0_i32_0 = arith.constant 0 : i32
    return %arg0, %c0_i32 : i32, i32
  }
  func.func @transform_2(%arg0: i32) -> (i32, i32) {
    %c0_i32 = arith.constant 0 : i32
    %c0_i32_0 = arith.constant 0 : i32
    %c0_i32_1 = arith.constant 0 : i32
    return %c0_i32, %c0_i32_0 : i32, i32
  }
  func.func @transform_3(%arg0: i32) -> (i32, i32) {
    %c0_i32 = arith.constant 0 : i32
    %c0_i32_0 = arith.constant 0 : i32
    %c0_i32_1 = arith.constant 0 : i32
    return %c0_i32, %c0_i32_0 : i32, i32
  }
  func.func @transform_4(%arg0: i32) -> (i32, i32) {
    %c0_i32 = arith.constant 0 : i32
    %c0_i32_0 = arith.constant 0 : i32
    %c0_i32_1 = arith.constant 0 : i32
    return %c0_i32, %c0_i32_0 : i32, i32
  }
  func.func @transform_5(%arg0: i32) -> (i32, i32) {
    %c0_i32 = arith.constant 0 : i32
    %c0_i32_0 = arith.constant 0 : i32
    %c0_i32_1 = arith.constant 0 : i32
    return %c0_i32, %c0_i32_0 : i32, i32
  }
  func.func @transform_6(%arg0: i32) -> (i32, i32) {
    %c0_i32 = arith.constant 0 : i32
    %c0_i32_0 = arith.constant 0 : i32
    %c0_i32_1 = arith.constant 0 : i32
    return %c0_i32, %c0_i32_0 : i32, i32
  }
  func.func @transform_7(%arg0: i32) -> (i32, i32) {
    %c0_i32 = arith.constant 0 : i32
    %c0_i32_0 = arith.constant 0 : i32
    %c0_i32_1 = arith.constant 0 : i32
    return %c0_i32, %c0_i32_0 : i32, i32
  }
  func.func @transform_8(%arg0: i32) -> (i32, i32) {
    %c0_i32 = arith.constant 0 : i32
    %c0_i32_0 = arith.constant 0 : i32
    return %arg0, %c0_i32 : i32, i32
  }
}

module attributes {stable_mosaic.version = 11 : i64} {
  func.func @_window_attn_kernel(%arg0: i32, %arg1: i32, %arg2: memref<1x4x16x32xf32, #tpu.memory_space<vmem>>, %arg3: memref<4x16x16xf32, #tpu.memory_space<vmem>>, %arg4: memref<4x16x16xf32, #tpu.memory_space<vmem>>, %arg5: memref<1x32xf32, #tpu.memory_space<vmem>>, %arg6: memref<1x32xf32, #tpu.memory_space<vmem>>, %arg7: memref<32x96xf32, #tpu.memory_space<vmem>>, %arg8: memref<1x96xf32, #tpu.memory_space<vmem>>, %arg9: memref<32x32xf32, #tpu.memory_space<vmem>>, %arg10: memref<1x32xf32, #tpu.memory_space<vmem>>, %arg11: memref<1x4x16x32xf32, #tpu.memory_space<vmem>>) attributes {dimension_semantics = [#tpu.dimension_semantics<parallel>, #tpu.dimension_semantics<parallel>], iteration_bounds = array<i64: 2, 1>, scalar_prefetch = 0 : i64, scratch_operands = 0 : i64, tpu.core_type = #tpu.core_type<tc>, window_params = [{transform_indices = @transform_0, window_bounds = array<i64: 1, 4, 16, 32>}, {transform_indices = @transform_1, window_bounds = array<i64: 4, 16, 16>}, {pipeline_mode = #tpu.pipeline_mode<synchronous>, transform_indices = @transform_2, window_bounds = array<i64: 4, 16, 16>}, {pipeline_mode = #tpu.pipeline_mode<synchronous>, transform_indices = @transform_3, window_bounds = array<i64: 1, 32>}, {pipeline_mode = #tpu.pipeline_mode<synchronous>, transform_indices = @transform_4, window_bounds = array<i64: 1, 32>}, {pipeline_mode = #tpu.pipeline_mode<synchronous>, transform_indices = @transform_5, window_bounds = array<i64: 32, 96>}, {pipeline_mode = #tpu.pipeline_mode<synchronous>, transform_indices = @transform_6, window_bounds = array<i64: 1, 96>}, {pipeline_mode = #tpu.pipeline_mode<synchronous>, transform_indices = @transform_7, window_bounds = array<i64: 32, 32>}, {pipeline_mode = #tpu.pipeline_mode<synchronous>, transform_indices = @transform_8, window_bounds = array<i64: 1, 32>}, {transform_indices = @transform_9, window_bounds = array<i64: 1, 4, 16, 32>}]} {
    %c0 = arith.constant 0 : index
    %c0_0 = arith.constant 0 : index
    %c0_1 = arith.constant 0 : index
    %c0_2 = arith.constant 0 : index
    %0 = vector.load %arg2[%c0, %c0_0, %c0_1, %c0_2] : memref<1x4x16x32xf32, #tpu.memory_space<vmem>>, vector<1x4x16x32xf32>
    %1 = vector.shape_cast %0 : vector<1x4x16x32xf32> to vector<4x16x32xf32>
    %2 = vector.shape_cast %1 : vector<4x16x32xf32> to vector<64x32xf32>
    %c0_3 = arith.constant 0 : index
    %c0_4 = arith.constant 0 : index
    %3 = vector.load %arg5[%c0_3, %c0_4] : memref<1x32xf32, #tpu.memory_space<vmem>>, vector<1x32xf32>
    %c0_5 = arith.constant 0 : index
    %c0_6 = arith.constant 0 : index
    %4 = vector.load %arg6[%c0_5, %c0_6] : memref<1x32xf32, #tpu.memory_space<vmem>>, vector<1x32xf32>
    %cst = arith.constant dense<0.000000e+00> : vector<64xf32>
    %5 = vector.multi_reduction <add>, %2, %cst [1] : vector<64x32xf32> to vector<64xf32>
    %6 = vector.shape_cast %5 : vector<64xf32> to vector<64x1xf32>
    %cst_7 = arith.constant 3.200000e+01 : f32
    %7 = vector.broadcast %cst_7 : f32 to vector<64x1xf32>
    %8 = arith.divf %6, %7 : vector<64x1xf32>
    %9 = vector.broadcast %8 : vector<64x1xf32> to vector<64x32xf32>
    %10 = arith.subf %2, %9 : vector<64x32xf32>
    %11 = arith.mulf %10, %10 : vector<64x32xf32>
    %cst_8 = arith.constant dense<0.000000e+00> : vector<64xf32>
    %12 = vector.multi_reduction <add>, %11, %cst_8 [1] : vector<64x32xf32> to vector<64xf32>
    %13 = vector.shape_cast %12 : vector<64xf32> to vector<64x1xf32>
    %cst_9 = arith.constant 3.200000e+01 : f32
    %14 = vector.broadcast %cst_9 : f32 to vector<64x1xf32>
    %15 = arith.divf %13, %14 : vector<64x1xf32>
    %cst_10 = arith.constant 9.99999974E-6 : f32
    %16 = vector.broadcast %cst_10 : f32 to vector<64x1xf32>
    %17 = arith.addf %15, %16 : vector<64x1xf32>
    %18 = math.rsqrt %17 : vector<64x1xf32>
    %19 = vector.broadcast %18 : vector<64x1xf32> to vector<64x32xf32>
    %20 = arith.mulf %10, %19 : vector<64x32xf32>
    %21 = vector.broadcast %3 : vector<1x32xf32> to vector<64x32xf32>
    %22 = arith.mulf %20, %21 : vector<64x32xf32>
    %23 = vector.broadcast %4 : vector<1x32xf32> to vector<64x32xf32>
    %24 = arith.addf %22, %23 : vector<64x32xf32>
    %c0_11 = arith.constant 0 : index
    %c0_12 = arith.constant 0 : index
    %25 = vector.load %arg7[%c0_11, %c0_12] : memref<32x96xf32, #tpu.memory_space<vmem>>, vector<32x96xf32>
    %cst_13 = arith.constant dense<0.000000e+00> : vector<64x96xf32>
    %26 = tpu.matmul %24, %25, %cst_13 {dimension_numbers = #tpu.dot_dimension_numbers<[1], [0], [0], [1], [0, 0, 1, 1], [], []>} : vector<64x32xf32>, vector<32x96xf32>, vector<64x96xf32> -> vector<64x96xf32>
    %c0_14 = arith.constant 0 : index
    %c0_15 = arith.constant 0 : index
    %27 = vector.load %arg8[%c0_14, %c0_15] : memref<1x96xf32, #tpu.memory_space<vmem>>, vector<1x96xf32>
    %28 = vector.broadcast %27 : vector<1x96xf32> to vector<64x96xf32>
    %29 = arith.addf %26, %28 : vector<64x96xf32>
    %c0_16 = arith.constant 0 : index
    %c0_17 = arith.constant 0 : index
    %30 = vector.load %arg9[%c0_16, %c0_17] : memref<32x32xf32, #tpu.memory_space<vmem>>, vector<32x32xf32>
    %31 = vector.extract_strided_slice %29 {offsets = [0, 0], sizes = [64, 8], strides = [1, 1]} : vector<64x96xf32> to vector<64x8xf32>
    %32 = vector.shape_cast %31 : vector<64x8xf32> to vector<4x16x8xf32>
    %cst_18 = arith.constant 0.353553385 : f32
    %33 = vector.broadcast %cst_18 : f32 to vector<4x16x8xf32>
    %34 = arith.mulf %32, %33 : vector<4x16x8xf32>
    %35 = vector.extract_strided_slice %29 {offsets = [0, 32], sizes = [64, 8], strides = [1, 1]} : vector<64x96xf32> to vector<64x8xf32>
    %36 = vector.shape_cast %35 : vector<64x8xf32> to vector<4x16x8xf32>
    %37 = vector.extract_strided_slice %29 {offsets = [0, 64], sizes = [64, 8], strides = [1, 1]} : vector<64x96xf32> to vector<64x8xf32>
    %38 = vector.shape_cast %37 : vector<64x8xf32> to vector<4x16x8xf32>
    "tpu.trace_start"() <{level = 10 : i32, message = "wnd,wmd->wnm"}> : () -> ()
    %cst_19 = arith.constant dense<0.000000e+00> : vector<4x16x16xf32>
    %39 = tpu.matmul %34, %36, %cst_19 {dimension_numbers = #tpu.dot_dimension_numbers<[2], [2], [1], [1], [0, 0, 0, 1, 1, 1], [0], [0]>} : vector<4x16x8xf32>, vector<4x16x8xf32>, vector<4x16x16xf32> -> vector<4x16x16xf32>
    "tpu.trace_stop"() : () -> ()
    %c0_20 = arith.constant 0 : index
    %c0_21 = arith.constant 0 : index
    %c0_22 = arith.constant 0 : index
    %40 = vector.load %arg4[%c0_20, %c0_21, %c0_22] : memref<4x16x16xf32, #tpu.memory_space<vmem>>, vector<1x16x16xf32>
    %41 = vector.shape_cast %40 : vector<1x16x16xf32> to vector<16x16xf32>
    %42 = vector.shape_cast %41 : vector<16x16xf32> to vector<1x16x16xf32>
    %43 = vector.broadcast %42 : vector<1x16x16xf32> to vector<4x16x16xf32>
    %44 = arith.addf %39, %43 : vector<4x16x16xf32>
    %c0_23 = arith.constant 0 : index
    %c0_24 = arith.constant 0 : index
    %c0_25 = arith.constant 0 : index
    %45 = vector.load %arg3[%c0_23, %c0_24, %c0_25] : memref<4x16x16xf32, #tpu.memory_space<vmem>>, vector<4x16x16xf32>
    %46 = arith.addf %44, %45 : vector<4x16x16xf32>
    %cst_26 = arith.constant dense<0xFF800000> : vector<4x16xf32>
    %47 = vector.multi_reduction <maximumf>, %46, %cst_26 [2] : vector<4x16x16xf32> to vector<4x16xf32>
    %48 = vector.shape_cast %47 : vector<4x16xf32> to vector<4x16x1xf32>
    %49 = vector.broadcast %48 : vector<4x16x1xf32> to vector<4x16x16xf32>
    %50 = arith.subf %46, %49 : vector<4x16x16xf32>
    %51 = math.exp %50 : vector<4x16x16xf32>
    %cst_27 = arith.constant dense<0.000000e+00> : vector<4x16xf32>
    %52 = vector.multi_reduction <add>, %51, %cst_27 [2] : vector<4x16x16xf32> to vector<4x16xf32>
    %53 = vector.shape_cast %52 : vector<4x16xf32> to vector<4x16x1xf32>
    %54 = vector.broadcast %53 : vector<4x16x1xf32> to vector<4x16x16xf32>
    %55 = arith.divf %51, %54 : vector<4x16x16xf32>
    "tpu.trace_start"() <{level = 10 : i32, message = "wnm,wmd->wnd"}> : () -> ()
    %cst_28 = arith.constant dense<0.000000e+00> : vector<4x16x8xf32>
    %56 = tpu.matmul %55, %38, %cst_28 {dimension_numbers = #tpu.dot_dimension_numbers<[2], [1], [1], [2], [0, 0, 0, 1, 1, 2], [0], [0]>} : vector<4x16x16xf32>, vector<4x16x8xf32>, vector<4x16x8xf32> -> vector<4x16x8xf32>
    "tpu.trace_stop"() : () -> ()
    %57 = vector.shape_cast %56 : vector<4x16x8xf32> to vector<64x8xf32>
    %58 = vector.extract_strided_slice %30 {offsets = [0, 0], sizes = [8, 32], strides = [1, 1]} : vector<32x32xf32> to vector<8x32xf32>
    %cst_29 = arith.constant dense<0.000000e+00> : vector<64x32xf32>
    %59 = tpu.matmul %57, %58, %cst_29 {dimension_numbers = #tpu.dot_dimension_numbers<[1], [0], [0], [1], [0, 0, 1, 1], [], []>} : vector<64x8xf32>, vector<8x32xf32>, vector<64x32xf32> -> vector<64x32xf32>
    %60 = vector.extract_strided_slice %29 {offsets = [0, 8], sizes = [64, 8], strides = [1, 1]} : vector<64x96xf32> to vector<64x8xf32>
    %61 = vector.shape_cast %60 : vector<64x8xf32> to vector<4x16x8xf32>
    %cst_30 = arith.constant 0.353553385 : f32
    %62 = vector.broadcast %cst_30 : f32 to vector<4x16x8xf32>
    %63 = arith.mulf %61, %62 : vector<4x16x8xf32>
    %64 = vector.extract_strided_slice %29 {offsets = [0, 40], sizes = [64, 8], strides = [1, 1]} : vector<64x96xf32> to vector<64x8xf32>
    %65 = vector.shape_cast %64 : vector<64x8xf32> to vector<4x16x8xf32>
    %66 = vector.extract_strided_slice %29 {offsets = [0, 72], sizes = [64, 8], strides = [1, 1]} : vector<64x96xf32> to vector<64x8xf32>
    %67 = vector.shape_cast %66 : vector<64x8xf32> to vector<4x16x8xf32>
    "tpu.trace_start"() <{level = 10 : i32, message = "wnd,wmd->wnm"}> : () -> ()
    %cst_31 = arith.constant dense<0.000000e+00> : vector<4x16x16xf32>
    %68 = tpu.matmul %63, %65, %cst_31 {dimension_numbers = #tpu.dot_dimension_numbers<[2], [2], [1], [1], [0, 0, 0, 1, 1, 1], [0], [0]>} : vector<4x16x8xf32>, vector<4x16x8xf32>, vector<4x16x16xf32> -> vector<4x16x16xf32>
    "tpu.trace_stop"() : () -> ()
    %c1 = arith.constant 1 : index
    %c0_32 = arith.constant 0 : index
    %c0_33 = arith.constant 0 : index
    %69 = vector.load %arg4[%c1, %c0_32, %c0_33] : memref<4x16x16xf32, #tpu.memory_space<vmem>>, vector<1x16x16xf32>
    %70 = vector.shape_cast %69 : vector<1x16x16xf32> to vector<16x16xf32>
    %71 = vector.shape_cast %70 : vector<16x16xf32> to vector<1x16x16xf32>
    %72 = vector.broadcast %71 : vector<1x16x16xf32> to vector<4x16x16xf32>
    %73 = arith.addf %68, %72 : vector<4x16x16xf32>
    %c0_34 = arith.constant 0 : index
    %c0_35 = arith.constant 0 : index
    %c0_36 = arith.constant 0 : index
    %74 = vector.load %arg3[%c0_34, %c0_35, %c0_36] : memref<4x16x16xf32, #tpu.memory_space<vmem>>, vector<4x16x16xf32>
    %75 = arith.addf %73, %74 : vector<4x16x16xf32>
    %cst_37 = arith.constant dense<0xFF800000> : vector<4x16xf32>
    %76 = vector.multi_reduction <maximumf>, %75, %cst_37 [2] : vector<4x16x16xf32> to vector<4x16xf32>
    %77 = vector.shape_cast %76 : vector<4x16xf32> to vector<4x16x1xf32>
    %78 = vector.broadcast %77 : vector<4x16x1xf32> to vector<4x16x16xf32>
    %79 = arith.subf %75, %78 : vector<4x16x16xf32>
    %80 = math.exp %79 : vector<4x16x16xf32>
    %cst_38 = arith.constant dense<0.000000e+00> : vector<4x16xf32>
    %81 = vector.multi_reduction <add>, %80, %cst_38 [2] : vector<4x16x16xf32> to vector<4x16xf32>
    %82 = vector.shape_cast %81 : vector<4x16xf32> to vector<4x16x1xf32>
    %83 = vector.broadcast %82 : vector<4x16x1xf32> to vector<4x16x16xf32>
    %84 = arith.divf %80, %83 : vector<4x16x16xf32>
    "tpu.trace_start"() <{level = 10 : i32, message = "wnm,wmd->wnd"}> : () -> ()
    %cst_39 = arith.constant dense<0.000000e+00> : vector<4x16x8xf32>
    %85 = tpu.matmul %84, %67, %cst_39 {dimension_numbers = #tpu.dot_dimension_numbers<[2], [1], [1], [2], [0, 0, 0, 1, 1, 2], [0], [0]>} : vector<4x16x16xf32>, vector<4x16x8xf32>, vector<4x16x8xf32> -> vector<4x16x8xf32>
    "tpu.trace_stop"() : () -> ()
    %86 = vector.shape_cast %85 : vector<4x16x8xf32> to vector<64x8xf32>
    %87 = vector.extract_strided_slice %30 {offsets = [8, 0], sizes = [8, 32], strides = [1, 1]} : vector<32x32xf32> to vector<8x32xf32>
    %cst_40 = arith.constant dense<0.000000e+00> : vector<64x32xf32>
    %88 = tpu.matmul %86, %87, %cst_40 {dimension_numbers = #tpu.dot_dimension_numbers<[1], [0], [0], [1], [0, 0, 1, 1], [], []>} : vector<64x8xf32>, vector<8x32xf32>, vector<64x32xf32> -> vector<64x32xf32>
    %89 = arith.addf %59, %88 : vector<64x32xf32>
    %90 = vector.extract_strided_slice %29 {offsets = [0, 16], sizes = [64, 8], strides = [1, 1]} : vector<64x96xf32> to vector<64x8xf32>
    %91 = vector.shape_cast %90 : vector<64x8xf32> to vector<4x16x8xf32>
    %cst_41 = arith.constant 0.353553385 : f32
    %92 = vector.broadcast %cst_41 : f32 to vector<4x16x8xf32>
    %93 = arith.mulf %91, %92 : vector<4x16x8xf32>
    %94 = vector.extract_strided_slice %29 {offsets = [0, 48], sizes = [64, 8], strides = [1, 1]} : vector<64x96xf32> to vector<64x8xf32>
    %95 = vector.shape_cast %94 : vector<64x8xf32> to vector<4x16x8xf32>
    %96 = vector.extract_strided_slice %29 {offsets = [0, 80], sizes = [64, 8], strides = [1, 1]} : vector<64x96xf32> to vector<64x8xf32>
    %97 = vector.shape_cast %96 : vector<64x8xf32> to vector<4x16x8xf32>
    "tpu.trace_start"() <{level = 10 : i32, message = "wnd,wmd->wnm"}> : () -> ()
    %cst_42 = arith.constant dense<0.000000e+00> : vector<4x16x16xf32>
    %98 = tpu.matmul %93, %95, %cst_42 {dimension_numbers = #tpu.dot_dimension_numbers<[2], [2], [1], [1], [0, 0, 0, 1, 1, 1], [0], [0]>} : vector<4x16x8xf32>, vector<4x16x8xf32>, vector<4x16x16xf32> -> vector<4x16x16xf32>
    "tpu.trace_stop"() : () -> ()
    %c2 = arith.constant 2 : index
    %c0_43 = arith.constant 0 : index
    %c0_44 = arith.constant 0 : index
    %99 = vector.load %arg4[%c2, %c0_43, %c0_44] : memref<4x16x16xf32, #tpu.memory_space<vmem>>, vector<1x16x16xf32>
    %100 = vector.shape_cast %99 : vector<1x16x16xf32> to vector<16x16xf32>
    %101 = vector.shape_cast %100 : vector<16x16xf32> to vector<1x16x16xf32>
    %102 = vector.broadcast %101 : vector<1x16x16xf32> to vector<4x16x16xf32>
    %103 = arith.addf %98, %102 : vector<4x16x16xf32>
    %c0_45 = arith.constant 0 : index
    %c0_46 = arith.constant 0 : index
    %c0_47 = arith.constant 0 : index
    %104 = vector.load %arg3[%c0_45, %c0_46, %c0_47] : memref<4x16x16xf32, #tpu.memory_space<vmem>>, vector<4x16x16xf32>
    %105 = arith.addf %103, %104 : vector<4x16x16xf32>
    %cst_48 = arith.constant dense<0xFF800000> : vector<4x16xf32>
    %106 = vector.multi_reduction <maximumf>, %105, %cst_48 [2] : vector<4x16x16xf32> to vector<4x16xf32>
    %107 = vector.shape_cast %106 : vector<4x16xf32> to vector<4x16x1xf32>
    %108 = vector.broadcast %107 : vector<4x16x1xf32> to vector<4x16x16xf32>
    %109 = arith.subf %105, %108 : vector<4x16x16xf32>
    %110 = math.exp %109 : vector<4x16x16xf32>
    %cst_49 = arith.constant dense<0.000000e+00> : vector<4x16xf32>
    %111 = vector.multi_reduction <add>, %110, %cst_49 [2] : vector<4x16x16xf32> to vector<4x16xf32>
    %112 = vector.shape_cast %111 : vector<4x16xf32> to vector<4x16x1xf32>
    %113 = vector.broadcast %112 : vector<4x16x1xf32> to vector<4x16x16xf32>
    %114 = arith.divf %110, %113 : vector<4x16x16xf32>
    "tpu.trace_start"() <{level = 10 : i32, message = "wnm,wmd->wnd"}> : () -> ()
    %cst_50 = arith.constant dense<0.000000e+00> : vector<4x16x8xf32>
    %115 = tpu.matmul %114, %97, %cst_50 {dimension_numbers = #tpu.dot_dimension_numbers<[2], [1], [1], [2], [0, 0, 0, 1, 1, 2], [0], [0]>} : vector<4x16x16xf32>, vector<4x16x8xf32>, vector<4x16x8xf32> -> vector<4x16x8xf32>
    "tpu.trace_stop"() : () -> ()
    %116 = vector.shape_cast %115 : vector<4x16x8xf32> to vector<64x8xf32>
    %117 = vector.extract_strided_slice %30 {offsets = [16, 0], sizes = [8, 32], strides = [1, 1]} : vector<32x32xf32> to vector<8x32xf32>
    %cst_51 = arith.constant dense<0.000000e+00> : vector<64x32xf32>
    %118 = tpu.matmul %116, %117, %cst_51 {dimension_numbers = #tpu.dot_dimension_numbers<[1], [0], [0], [1], [0, 0, 1, 1], [], []>} : vector<64x8xf32>, vector<8x32xf32>, vector<64x32xf32> -> vector<64x32xf32>
    %119 = arith.addf %89, %118 : vector<64x32xf32>
    %120 = vector.extract_strided_slice %29 {offsets = [0, 24], sizes = [64, 8], strides = [1, 1]} : vector<64x96xf32> to vector<64x8xf32>
    %121 = vector.shape_cast %120 : vector<64x8xf32> to vector<4x16x8xf32>
    %cst_52 = arith.constant 0.353553385 : f32
    %122 = vector.broadcast %cst_52 : f32 to vector<4x16x8xf32>
    %123 = arith.mulf %121, %122 : vector<4x16x8xf32>
    %124 = vector.extract_strided_slice %29 {offsets = [0, 56], sizes = [64, 8], strides = [1, 1]} : vector<64x96xf32> to vector<64x8xf32>
    %125 = vector.shape_cast %124 : vector<64x8xf32> to vector<4x16x8xf32>
    %126 = vector.extract_strided_slice %29 {offsets = [0, 88], sizes = [64, 8], strides = [1, 1]} : vector<64x96xf32> to vector<64x8xf32>
    %127 = vector.shape_cast %126 : vector<64x8xf32> to vector<4x16x8xf32>
    "tpu.trace_start"() <{level = 10 : i32, message = "wnd,wmd->wnm"}> : () -> ()
    %cst_53 = arith.constant dense<0.000000e+00> : vector<4x16x16xf32>
    %128 = tpu.matmul %123, %125, %cst_53 {dimension_numbers = #tpu.dot_dimension_numbers<[2], [2], [1], [1], [0, 0, 0, 1, 1, 1], [0], [0]>} : vector<4x16x8xf32>, vector<4x16x8xf32>, vector<4x16x16xf32> -> vector<4x16x16xf32>
    "tpu.trace_stop"() : () -> ()
    %c3 = arith.constant 3 : index
    %c0_54 = arith.constant 0 : index
    %c0_55 = arith.constant 0 : index
    %129 = vector.load %arg4[%c3, %c0_54, %c0_55] : memref<4x16x16xf32, #tpu.memory_space<vmem>>, vector<1x16x16xf32>
    %130 = vector.shape_cast %129 : vector<1x16x16xf32> to vector<16x16xf32>
    %131 = vector.shape_cast %130 : vector<16x16xf32> to vector<1x16x16xf32>
    %132 = vector.broadcast %131 : vector<1x16x16xf32> to vector<4x16x16xf32>
    %133 = arith.addf %128, %132 : vector<4x16x16xf32>
    %c0_56 = arith.constant 0 : index
    %c0_57 = arith.constant 0 : index
    %c0_58 = arith.constant 0 : index
    %134 = vector.load %arg3[%c0_56, %c0_57, %c0_58] : memref<4x16x16xf32, #tpu.memory_space<vmem>>, vector<4x16x16xf32>
    %135 = arith.addf %133, %134 : vector<4x16x16xf32>
    %cst_59 = arith.constant dense<0xFF800000> : vector<4x16xf32>
    %136 = vector.multi_reduction <maximumf>, %135, %cst_59 [2] : vector<4x16x16xf32> to vector<4x16xf32>
    %137 = vector.shape_cast %136 : vector<4x16xf32> to vector<4x16x1xf32>
    %138 = vector.broadcast %137 : vector<4x16x1xf32> to vector<4x16x16xf32>
    %139 = arith.subf %135, %138 : vector<4x16x16xf32>
    %140 = math.exp %139 : vector<4x16x16xf32>
    %cst_60 = arith.constant dense<0.000000e+00> : vector<4x16xf32>
    %141 = vector.multi_reduction <add>, %140, %cst_60 [2] : vector<4x16x16xf32> to vector<4x16xf32>
    %142 = vector.shape_cast %141 : vector<4x16xf32> to vector<4x16x1xf32>
    %143 = vector.broadcast %142 : vector<4x16x1xf32> to vector<4x16x16xf32>
    %144 = arith.divf %140, %143 : vector<4x16x16xf32>
    "tpu.trace_start"() <{level = 10 : i32, message = "wnm,wmd->wnd"}> : () -> ()
    %cst_61 = arith.constant dense<0.000000e+00> : vector<4x16x8xf32>
    %145 = tpu.matmul %144, %127, %cst_61 {dimension_numbers = #tpu.dot_dimension_numbers<[2], [1], [1], [2], [0, 0, 0, 1, 1, 2], [0], [0]>} : vector<4x16x16xf32>, vector<4x16x8xf32>, vector<4x16x8xf32> -> vector<4x16x8xf32>
    "tpu.trace_stop"() : () -> ()
    %146 = vector.shape_cast %145 : vector<4x16x8xf32> to vector<64x8xf32>
    %147 = vector.extract_strided_slice %30 {offsets = [24, 0], sizes = [8, 32], strides = [1, 1]} : vector<32x32xf32> to vector<8x32xf32>
    %cst_62 = arith.constant dense<0.000000e+00> : vector<64x32xf32>
    %148 = tpu.matmul %146, %147, %cst_62 {dimension_numbers = #tpu.dot_dimension_numbers<[1], [0], [0], [1], [0, 0, 1, 1], [], []>} : vector<64x8xf32>, vector<8x32xf32>, vector<64x32xf32> -> vector<64x32xf32>
    %149 = arith.addf %119, %148 : vector<64x32xf32>
    %c0_63 = arith.constant 0 : index
    %c0_64 = arith.constant 0 : index
    %150 = vector.load %arg10[%c0_63, %c0_64] : memref<1x32xf32, #tpu.memory_space<vmem>>, vector<1x32xf32>
    %151 = vector.broadcast %150 : vector<1x32xf32> to vector<64x32xf32>
    %152 = arith.addf %149, %151 : vector<64x32xf32>
    %153 = vector.shape_cast %152 : vector<64x32xf32> to vector<4x16x32xf32>
    %c0_65 = arith.constant 0 : index
    %c0_66 = arith.constant 0 : index
    %c0_67 = arith.constant 0 : index
    %c0_68 = arith.constant 0 : index
    %154 = vector.load %arg11[%c0_65, %c0_66, %c0_67, %c0_68] : memref<1x4x16x32xf32, #tpu.memory_space<vmem>>, vector<1x4x16x32xf32>
    %155 = vector.shape_cast %154 : vector<1x4x16x32xf32> to vector<4x16x32xf32>
    %156 = vector.shape_cast %153 : vector<4x16x32xf32> to vector<1x4x16x32xf32>
    tpu.vector_store %arg11[%c0_65, %c0_66, %c0_67, %c0_68], %156 {strides = array<i32>} : memref<1x4x16x32xf32, #tpu.memory_space<vmem>>, vector<1x4x16x32xf32>,
    return
  }
  func.func @transform_0(%arg0: i32, %arg1: i32) -> (i32, i32, i32, i32) {
    %c0_i32 = arith.constant 0 : i32
    %c0_i32_0 = arith.constant 0 : i32
    %c0_i32_1 = arith.constant 0 : i32
    return %arg0, %arg1, %c0_i32, %c0_i32_0 : i32, i32, i32, i32
  }
  func.func @transform_1(%arg0: i32, %arg1: i32) -> (i32, i32, i32) {
    %c0_i32 = arith.constant 0 : i32
    %c0_i32_0 = arith.constant 0 : i32
    %c0_i32_1 = arith.constant 0 : i32
    return %arg1, %c0_i32, %c0_i32_0 : i32, i32, i32
  }
  func.func @transform_2(%arg0: i32, %arg1: i32) -> (i32, i32, i32) {
    %c0_i32 = arith.constant 0 : i32
    %c0_i32_0 = arith.constant 0 : i32
    %c0_i32_1 = arith.constant 0 : i32
    %c0_i32_2 = arith.constant 0 : i32
    return %c0_i32, %c0_i32_0, %c0_i32_1 : i32, i32, i32
  }
  func.func @transform_3(%arg0: i32, %arg1: i32) -> (i32, i32) {
    %c0_i32 = arith.constant 0 : i32
    %c0_i32_0 = arith.constant 0 : i32
    %c0_i32_1 = arith.constant 0 : i32
    return %c0_i32, %c0_i32_0 : i32, i32
  }
  func.func @transform_4(%arg0: i32, %arg1: i32) -> (i32, i32) {
    %c0_i32 = arith.constant 0 : i32
    %c0_i32_0 = arith.constant 0 : i32
    %c0_i32_1 = arith.constant 0 : i32
    return %c0_i32, %c0_i32_0 : i32, i32
  }
  func.func @transform_5(%arg0: i32, %arg1: i32) -> (i32, i32) {
    %c0_i32 = arith.constant 0 : i32
    %c0_i32_0 = arith.constant 0 : i32
    %c0_i32_1 = arith.constant 0 : i32
    return %c0_i32, %c0_i32_0 : i32, i32
  }
  func.func @transform_6(%arg0: i32, %arg1: i32) -> (i32, i32) {
    %c0_i32 = arith.constant 0 : i32
    %c0_i32_0 = arith.constant 0 : i32
    %c0_i32_1 = arith.constant 0 : i32
    return %c0_i32, %c0_i32_0 : i32, i32
  }
  func.func @transform_7(%arg0: i32, %arg1: i32) -> (i32, i32) {
    %c0_i32 = arith.constant 0 : i32
    %c0_i32_0 = arith.constant 0 : i32
    %c0_i32_1 = arith.constant 0 : i32
    return %c0_i32, %c0_i32_0 : i32, i32
  }
  func.func @transform_8(%arg0: i32, %arg1: i32) -> (i32, i32) {
    %c0_i32 = arith.constant 0 : i32
    %c0_i32_0 = arith.constant 0 : i32
    %c0_i32_1 = arith.constant 0 : i32
    return %c0_i32, %c0_i32_0 : i32, i32
  }
  func.func @transform_9(%arg0: i32, %arg1: i32) -> (i32, i32, i32, i32) {
    %c0_i32 = arith.constant 0 : i32
    %c0_i32_0 = arith.constant 0 : i32
    %c0_i32_1 = arith.constant 0 : i32
    return %arg0, %arg1, %c0_i32, %c0_i32_0 : i32, i32, i32, i32
  }
}

</mosaic_0001>

<llo_original>
// kernel: _lambda_.5
$region0: #{_lambda_.5}
  #allocation0 [shape = 'u32[]', space=smem, size = 0x4, offset = 0x4, fixed_abs, tag = 'smem constant byte address 0x4 - core index']
  #allocation1 [shape = 'u32[144,128]{1,0:T(1,128)}', space=vmem, size = 0x12000, scoped, tag = 'internal scratch']
  %s0 = inlined_call_operand.vmem [shape: f32[128,32], index: 0, kind: input, shape index: {}, may-alias: {0,8}]
  %s1 = inlined_call_operand.vmem [shape: f32[128,32], index: 1, kind: input, shape index: {}]
  %s2 = inlined_call_operand.vmem [shape: f32[1,32], index: 2, kind: input, shape index: {}]
  %s3 = inlined_call_operand.vmem [shape: f32[1,32], index: 3, kind: input, shape index: {}]
  %s4 = inlined_call_operand.vmem [shape: f32[32,128], index: 4, kind: input, shape index: {}]
  %s5 = inlined_call_operand.vmem [shape: f32[1,128], index: 5, kind: input, shape index: {}]
  %s6 = inlined_call_operand.vmem [shape: f32[128,32], index: 6, kind: input, shape index: {}]
  %s7 = inlined_call_operand.vmem [shape: f32[1,32], index: 7, kind: input, shape index: {}]
  %s8 = inlined_call_operand.vmem [shape: f32[128,32], index: 8, kind: output, shape index: {}, may-alias: {0,8}]
  %s9 = sld [smem:[#allocation0]]
  $region65: #{_lambda_.5} parent=0
    _
  %s11 = ssub.s32 1, %s9
  %s12 = scalar_select 0, %s11, %s9
  loop: start=0, step=1, limit=4
  $region2: #{_lambda_.5} parent=0 // loop_pre_header
    _
  $region3: #{_lambda_.5} parent=0 // loop_header
    %s14 = sphi 0, %s18
    %p15 = scmp.ge.s32.totalorder %s14, 4
    %s24 = sphi 0, %s26
    %s27 = sphi 0, %s24
    %s28 = sphi 0, %s27
    %s44 = sphi 0, %s28
    %s50 = sphi 0, %s52
    %s53 = sphi 0, %s50
    %s54 = sphi 0, %s53
    %s70 = sphi 0, %s54
    %s74 = sphi 0, %s74
    %s76 = sphi 0, %s74
    %s77 = sphi 0, %s76
    %s91 = sphi 0, %s77
    %s95 = sphi 0, %s95
    %s97 = sphi 0, %s95
    %s98 = sphi 0, %s97
    %s112 = sphi 0, %s98
    %s116 = sphi 0, %s116
    %s118 = sphi 0, %s116
    %s119 = sphi 0, %s118
    %s133 = sphi 0, %s119
    %s137 = sphi 0, %s137
    %s139 = sphi 0, %s137
    %s140 = sphi 0, %s139
    %s154 = sphi 0, %s140
    %s158 = sphi 0, %s158
    %s160 = sphi 0, %s158
    %s161 = sphi 0, %s160
    %s175 = sphi 0, %s161
    %s179 = sphi 0, %s179
    %s181 = sphi 0, %s179
    %s182 = sphi 0, %s181
    %s196 = sphi 0, %s182
    %s202 = sphi 0, %s204
    %s205 = sphi 0, %s202
    %s206 = sphi 0, %s205
    %s222 = sphi 0, %s206
  $region4: #{_lambda_.5} parent=0 // loop_header_branch
    %17 = sbr.rel (%p15) target = $region8
  $region5: #{_lambda_.5} parent=0 // loop_body
    %s19 = ssub.s32 %s14, 1
    %s20 = ssub.s32 %s14, 2
    %s21 = sadd.s32 %s14, 1
    %s22 = ssub.s32 %s14, %s21
    %p23 = scmp.eq.s32.totalorder %s22, 0
    %s25 = sadd.s32 %s24, 1
    %s26 = scalar_select %p23, %s24, %s25
    %p29 = pneg %p23
    %p30 = scmp.eq.s32.totalorder %s14, 1
    %p31 = por %p29, %p30
    %p32 = scmp.ne.s32.totalorder %s24, %s27
    %p33 = scmp.eq.s32.totalorder %s14, 0
    %p34 = por %p32, %p33
    %p35 = scmp.ne.s32.totalorder %s24, %s27
    %p36 = scmp.eq.s32.totalorder %s19, 1
    %p37 = por %p35, %p36
    %p38 = scmp.ne.s32.totalorder %s27, %s28
    %p39 = scmp.eq.s32.totalorder %s19, 0
    %p40 = por %p38, %p39
    %p41 = scmp.ne.s32.totalorder %s27, %s28
    %p42 = scmp.eq.s32.totalorder %s20, 1
    %p43 = por %p41, %p42
    %p45 = scmp.ne.s32.totalorder %s28, %s44
    %p46 = scmp.eq.s32.totalorder %s20, 0
    %p47 = por %p45, %p46
    %s48 = ssub.s32 %s14, %s21
    %p49 = scmp.eq.s32.totalorder %s48, 0
    %s51 = sadd.s32 %s50, 1
    %s52 = scalar_select %p49, %s50, %s51
    %p55 = pneg %p49
    %p56 = scmp.eq.s32.totalorder %s14, 1
    %p57 = por %p55, %p56
    %p58 = scmp.ne.s32.totalorder %s50, %s53
    %p59 = scmp.eq.s32.totalorder %s14, 0
    %p60 = por %p58, %p59
    %p61 = scmp.ne.s32.totalorder %s50, %s53
    %p62 = scmp.eq.s32.totalorder %s19, 1
    %p63 = por %p61, %p62
    %p64 = scmp.ne.s32.totalorder %s53, %s54
    %p65 = scmp.eq.s32.totalorder %s19, 0
    %p66 = por %p64, %p65
    %p67 = scmp.ne.s32.totalorder %s53, %s54
    %p68 = scmp.eq.s32.totalorder %s20, 1
    %p69 = por %p67, %p68
    %p71 = scmp.ne.s32.totalorder %s54, %s70
    %p72 = scmp.eq.s32.totalorder %s20, 0
    %p73 = por %p71, %p72
    %s75 = sadd.s32 %s74, 1
    %p78 = scmp.eq.s32.totalorder %s14, 1
    %p79 = scmp.ne.s32.totalorder %s74, %s76
    %p80 = scmp.eq.s32.totalorder %s14, 0
    %p81 = por %p79, %p80
    %p82 = scmp.ne.s32.totalorder %s74, %s76
    %p83 = scmp.eq.s32.totalorder %s19, 1
    %p84 = por %p82, %p83
    %p85 = scmp.ne.s32.totalorder %s76, %s77
    %p86 = scmp.eq.s32.totalorder %s19, 0
    %p87 = por %p85, %p86
    %p88 = scmp.ne.s32.totalorder %s76, %s77
    %p89 = scmp.eq.s32.totalorder %s20, 1
    %p90 = por %p88, %p89
    %p92 = scmp.ne.s32.totalorder %s77, %s91
    %p93 = scmp.eq.s32.totalorder %s20, 0
    %p94 = por %p92, %p93
    %s96 = sadd.s32 %s95, 1
    %p99 = scmp.eq.s32.totalorder %s14, 1
    %p100 = scmp.ne.s32.totalorder %s95, %s97
    %p101 = scmp.eq.s32.totalorder %s14, 0
    %p102 = por %p100, %p101
    %p103 = scmp.ne.s32.totalorder %s95, %s97
    %p104 = scmp.eq.s32.totalorder %s19, 1
    %p105 = por %p103, %p104
    %p106 = scmp.ne.s32.totalorder %s97, %s98
    %p107 = scmp.eq.s32.totalorder %s19, 0
    %p108 = por %p106, %p107
    %p109 = scmp.ne.s32.totalorder %s97, %s98
    %p110 = scmp.eq.s32.totalorder %s20, 1
    %p111 = por %p109, %p110
    %p113 = scmp.ne.s32.totalorder %s98, %s112
    %p114 = scmp.eq.s32.totalorder %s20, 0
    %p115 = por %p113, %p114
    %s117 = sadd.s32 %s116, 1
    %p120 = scmp.eq.s32.totalorder %s14, 1
    %p121 = scmp.ne.s32.totalorder %s116, %s118
    %p122 = scmp.eq.s32.totalorder %s14, 0
    %p123 = por %p121, %p122
    %p124 = scmp.ne.s32.totalorder %s116, %s118
    %p125 = scmp.eq.s32.totalorder %s19, 1
    %p126 = por %p124, %p125
    %p127 = scmp.ne.s32.totalorder %s118, %s119
    %p128 = scmp.eq.s32.totalorder %s19, 0
    %p129 = por %p127, %p128
    %p130 = scmp.ne.s32.totalorder %s118, %s119
    %p131 = scmp.eq.s32.totalorder %s20, 1
    %p132 = por %p130, %p131
    %p134 = scmp.ne.s32.totalorder %s119, %s133
    %p135 = scmp.eq.s32.totalorder %s20, 0
    %p136 = por %p134, %p135
    %s138 = sadd.s32 %s137, 1
    %p141 = scmp.eq.s32.totalorder %s14, 1
    %p142 = scmp.ne.s32.totalorder %s137, %s139
    %p143 = scmp.eq.s32.totalorder %s14, 0
    %p144 = por %p142, %p143
    %p145 = scmp.ne.s32.totalorder %s137, %s139
    %p146 = scmp.eq.s32.totalorder %s19, 1
    %p147 = por %p145, %p146
    %p148 = scmp.ne.s32.totalorder %s139, %s140
    %p149 = scmp.eq.s32.totalorder %s19, 0
    %p150 = por %p148, %p149
    %p151 = scmp.ne.s32.totalorder %s139, %s140
    %p152 = scmp.eq.s32.totalorder %s20, 1
    %p153 = por %p151, %p152
    %p155 = scmp.ne.s32.totalorder %s140, %s154
    %p156 = scmp.eq.s32.totalorder %s20, 0
    %p157 = por %p155, %p156
    %s159 = sadd.s32 %s158, 1
    %p162 = scmp.eq.s32.totalorder %s14, 1
    %p163 = scmp.ne.s32.totalorder %s158, %s160
    %p164 = scmp.eq.s32.totalorder %s14, 0
    %p165 = por %p163, %p164
    %p166 = scmp.ne.s32.totalorder %s158, %s160
    %p167 = scmp.eq.s32.totalorder %s19, 1
    %p168 = por %p166, %p167
    %p169 = scmp.ne.s32.totalorder %s160, %s161
    %p170 = scmp.eq.s32.totalorder %s19, 0
    %p171 = por %p169, %p170
    %p172 = scmp.ne.s32.totalorder %s160, %s161
    %p173 = scmp.eq.s32.totalorder %s20, 1
    %p174 = por %p172, %p173
    %p176 = scmp.ne.s32.totalorder %s161, %s175
    %p177 = scmp.eq.s32.totalorder %s20, 0
    %p178 = por %p176, %p177
    %s180 = sadd.s32 %s179, 1
    %p183 = scmp.eq.s32.totalorder %s14, 1
    %p184 = scmp.ne.s32.totalorder %s179, %s181
    %p185 = scmp.eq.s32.totalorder %s14, 0
    %p186 = por %p184, %p185
    %p187 = scmp.ne.s32.totalorder %s179, %s181
    %p188 = scmp.eq.s32.totalorder %s19, 1
    %p189 = por %p187, %p188
    %p190 = scmp.ne.s32.totalorder %s181, %s182
    %p191 = scmp.eq.s32.totalorder %s19, 0
    %p192 = por %p190, %p191
    %p193 = scmp.ne.s32.totalorder %s181, %s182
    %p194 = scmp.eq.s32.totalorder %s20, 1
    %p195 = por %p193, %p194
    %p197 = scmp.ne.s32.totalorder %s182, %s196
    %p198 = scmp.eq.s32.totalorder %s20, 0
    %p199 = por %p197, %p198
    %s200 = ssub.s32 %s14, %s21
    %p201 = scmp.eq.s32.totalorder %s200, 0
    %s203 = sadd.s32 %s202, 1
    %s204 = scalar_select %p201, %s202, %s203
    %p207 = pneg %p201
    %p208 = scmp.eq.s32.totalorder %s14, 1
    %p209 = por %p207, %p208
    %p210 = scmp.ne.s32.totalorder %s202, %s205
    %p211 = scmp.eq.s32.totalorder %s14, 0
    %p212 = por %p210, %p211
    %p213 = scmp.ne.s32.totalorder %s202, %s205
    %p214 = scmp.eq.s32.totalorder %s19, 1
    %p215 = por %p213, %p214
    %p216 = scmp.ne.s32.totalorder %s205, %s206
    %p217 = scmp.eq.s32.totalorder %s19, 0
    %p218 = por %p216, %p217
    %p219 = scmp.ne.s32.totalorder %s205, %s206
    %p220 = scmp.eq.s32.totalorder %s20, 1
    %p221 = por %p219, %p220
    %p223 = scmp.ne.s32.totalorder %s206, %s222
    %p224 = scmp.eq.s32.totalorder %s20, 0
    %p225 = por %p223, %p224
    %p226 = scmp.le.s32.totalorder 1, %s14
    %p227 = scmp.lt.s32.totalorder %s14, 3
    %p228 = pnand %p226, %p227
    %p229 = pneg %p228
    // Predicated region
    $region9: #{_lambda_.5} parent=5 // pred_check
      _
    $region10: #{_lambda_.5} parent=5 // pred_check_branch
      %231 = sbr.rel (%p228) target = $region12
    $region11: #{_lambda_.5} parent=5 // pred_region
      %s232 = ssub.s32 %s14, 1
      // Predicated region
      $region13: #{_lambda_.5} parent=11 // pred_check
        %p233 = pneg %p87
      $region14: #{_lambda_.5} parent=11 // pred_check_branch
        %235 = sbr.rel (%p233) target = $region16
      $region15: #{_lambda_.5} parent=11 // pred_region
        _
      $region16: #{_lambda_.5} parent=11 // pred_fallthru
        _
      // Predicated region
      $region17: #{_lambda_.5} parent=11 // pred_check
        %p236 = pneg %p108
      $region18: #{_lambda_.5} parent=11 // pred_check_branch
        %238 = sbr.rel (%p236) target = $region20
      $region19: #{_lambda_.5} parent=11 // pred_region
        _
      $region20: #{_lambda_.5} parent=11 // pred_fallthru
        _
      // Predicated region
      $region21: #{_lambda_.5} parent=11 // pred_check
        %p239 = pneg %p129
      $region22: #{_lambda_.5} parent=11 // pred_check_branch
        %241 = sbr.rel (%p239) target = $region24
      $region23: #{_lambda_.5} parent=11 // pred_region
        _
      $region24: #{_lambda_.5} parent=11 // pred_fallthru
        _
      // Predicated region
      $region25: #{_lambda_.5} parent=11 // pred_check
        %p242 = pneg %p150
      $region26: #{_lambda_.5} parent=11 // pred_check_branch
        %244 = sbr.rel (%p242) target = $region28
      $region27: #{_lambda_.5} parent=11 // pred_region
        _
      $region28: #{_lambda_.5} parent=11 // pred_fallthru
        _
      // Predicated region
      $region29: #{_lambda_.5} parent=11 // pred_check
        %p245 = pneg %p171
      $region30: #{_lambda_.5} parent=11 // pred_check_branch
        %247 = sbr.rel (%p245) target = $region32
      $region31: #{_lambda_.5} parent=11 // pred_region
        _
      $region32: #{_lambda_.5} parent=11 // pred_fallthru
        _
      // Predicated region
      $region33: #{_lambda_.5} parent=11 // pred_check
        %p248 = pneg %p192
      $region34: #{_lambda_.5} parent=11 // pred_check_branch
        %250 = sbr.rel (%p248) target = $region36
      $region35: #{_lambda_.5} parent=11 // pred_region
        _
      $region36: #{_lambda_.5} parent=11 // pred_fallthru
        _
    $region12: #{_lambda_.5} parent=5 // pred_fallthru
      _
    %p251 = scmp.lt.s32.totalorder %s14, 2
    // Predicated region
    $region37: #{_lambda_.5} parent=5 // pred_check
      %p252 = pneg %p251
    $region38: #{_lambda_.5} parent=5 // pred_check_branch
      %254 = sbr.rel (%p252) target = $region40
    $region39: #{_lambda_.5} parent=5 // pred_region
      // Predicated region
      $region41: #{_lambda_.5} parent=39 // pred_check
        %p255 = pneg %p34
      $region42: #{_lambda_.5} parent=39 // pred_check_branch
        %257 = sbr.rel (%p255) target = $region44
      $region43: #{_lambda_.5} parent=39 // pred_region
        %s258 = smul.u32 8, %s14
        %p259 = scmp.lt.s32.totalorder %s258, 15
        %s260 = scalar_select %p259, %s258, 15
        %s261 = smul.addr %s260, 8
        %s262 = scalar_lea.vmem %s0, %s261
        %s263 = smul.u32 8, %s14
      $region44: #{_lambda_.5} parent=39 // pred_fallthru
        _
      // Predicated region
      $region45: #{_lambda_.5} parent=39 // pred_check
        %p264 = pneg %p60
      $region46: #{_lambda_.5} parent=39 // pred_check_branch
        %266 = sbr.rel (%p264) target = $region48
      $region47: #{_lambda_.5} parent=39 // pred_region
        %s267 = smul.u32 8, %s14
        %p268 = scmp.lt.s32.totalorder %s267, 15
        %s269 = scalar_select %p268, %s267, 15
        %s270 = smul.addr %s269, 8
        %s271 = scalar_lea.vmem %s1, %s270
        %s272 = smul.u32 8, %s14
      $region48: #{_lambda_.5} parent=39 // pred_fallthru
        _
    $region40: #{_lambda_.5} parent=5 // pred_fallthru
      _
    %p273 = scmp.le.s32.totalorder 1, %s14
    %p274 = scmp.lt.s32.totalorder %s14, 3
    %p275 = pnand %p273, %p274
    %p276 = pneg %p275
    // Predicated region
    $region49: #{_lambda_.5} parent=5 // pred_check
      _
    $region50: #{_lambda_.5} parent=5 // pred_check_branch
      %278 = sbr.rel (%p275) target = $region52
    $region51: #{_lambda_.5} parent=5 // pred_region
      %s279 = ssub.s32 %s14, 1
      %s280 = smul.u32 8, %s19
      %p281 = scmp.lt.s32.totalorder %s280, 15
      %s282 = scalar_select %p281, %s280, 15
      %s283 = smul.addr %s282, 8
      %s284 = scalar_lea.vmem %s0, %s283
      %p285 = pneg %p40
      %p286 = pneg %p37
      %s287 = smul.u32 8, %s19
      %p288 = scmp.lt.s32.totalorder %s287, 15
      %s289 = scalar_select %p288, %s287, 15
      %s290 = smul.addr %s289, 8
      %s291 = scalar_lea.vmem %s1, %s290
      %p292 = pneg %p66
      %p293 = pneg %p63
      %p294 = pneg %p87
      %p295 = pneg %p84
      %p296 = pneg %p108
      %p297 = pneg %p105
      %p298 = pneg %p129
      %p299 = pneg %p126
      %p300 = pneg %p150
      %p301 = pneg %p147
      %p302 = pneg %p171
      %p303 = pneg %p168
      %p304 = pneg %p192
      %p305 = pneg %p189
      %p306 = pneg %p218
      %p307 = pneg %p215
      %s308 = smul.u32 8, %s19
      %p309 = scmp.lt.s32.totalorder %s308, 15
      %s310 = scalar_select %p309, %s308, 15
      %s311 = smul.addr %s310, 8
      %s312 = scalar_lea.vmem %s8, %s311
      %s313 = smul.u32 8, %s19
      %p314 = scmp.lt.s32.totalorder %s313, 15
      %s315 = scalar_select %p314, %s313, 15
      %s316 = smul.addr %s315, 8
      %s317 = scalar_lea.vmem %s0, %s316
      %s318 = smul.u32 8, %s19
      %s319 = smul.u32 8, %s19
      %p320 = scmp.lt.s32.totalorder %s319, 15
      %s321 = scalar_select %p320, %s319, 15
      %s322 = smul.addr %s321, 8
      %s323 = scalar_lea.vmem %s1, %s322
      %s324 = smul.u32 8, %s19
      %s325 = smul.u32 8, %s19
      %p326 = scmp.lt.s32.totalorder %s325, 15
      %s327 = scalar_select %p326, %s325, 15
      %s328 = smul.addr %s327, 8
      %s329 = scalar_lea.vmem %s8, %s328
      %s330 = smul.u32 8, %s19
      %v331 = vld [vmem:[%s317] sm:$0xff]
      %v332 = vld [vmem:[%s317 + $0x8] sm:$0xff]
      %v333 = vld [vmem:[%s317 + $0x10] sm:$0xff]
      %v334 = vld [vmem:[%s317 + $0x18] sm:$0xff]
      %v335 = vld [vmem:[%s317 + $0x20] sm:$0xff]
      %v336 = vld [vmem:[%s317 + $0x28] sm:$0xff]
      %v337 = vld [vmem:[%s317 + $0x30] sm:$0xff]
      %v338 = vld [vmem:[%s317 + $0x38] sm:$0xff]
      %v339 = vld [vmem:[%s323] sm:$0xff]
      %v340 = vld [vmem:[%s323 + $0x8] sm:$0xff]
      %v341 = vld [vmem:[%s323 + $0x10] sm:$0xff]
      %v342 = vld [vmem:[%s323 + $0x18] sm:$0xff]
      %v343 = vld [vmem:[%s323 + $0x20] sm:$0xff]
      %v344 = vld [vmem:[%s323 + $0x28] sm:$0xff]
      %v345 = vld [vmem:[%s323 + $0x30] sm:$0xff]
      %v346 = vld [vmem:[%s323 + $0x38] sm:$0xff]
      %v347 = vadd.f32 %v331, %v339
      %v348 = vadd.f32 %v332, %v340
      %v349 = vadd.f32 %v333, %v341
      %v350 = vadd.f32 %v334, %v342
      %v351 = vadd.f32 %v335, %v343
      %v352 = vadd.f32 %v336, %v344
      %v353 = vadd.f32 %v337, %v345
      %v354 = vadd.f32 %v338, %v346
      %v355 = vld [vmem:[%s2] sm:$0x1]
      %v356 = vld [vmem:[%s3] sm:$0x1]
      %vm357 = vcmask 261120
      %v358 = vsel %vm357, %v347, 0.0
      %359 = vadd.xlane.f32.xlu0 %v358
      %v360 = vpop.xlane.xlu0 %359
      %v361 = vsel %vm357, %v348, 0.0
      %362 = vadd.xlane.f32.xlu0 %v361
      %v363 = vpop.xlane.xlu0 %362
      %v364 = vsel %vm357, %v349, 0.0
      %365 = vadd.xlane.f32.xlu0 %v364
      %v366 = vpop.xlane.xlu0 %365
      %v367 = vsel %vm357, %v350, 0.0
      %368 = vadd.xlane.f32.xlu0 %v367
      %v369 = vpop.xlane.xlu0 %368
      %v370 = vsel %vm357, %v351, 0.0
      %371 = vadd.xlane.f32.xlu0 %v370
      %v372 = vpop.xlane.xlu0 %371
      %v373 = vsel %vm357, %v352, 0.0
      %374 = vadd.xlane.f32.xlu0 %v373
      %v375 = vpop.xlane.xlu0 %374
      %v376 = vsel %vm357, %v353, 0.0
      %377 = vadd.xlane.f32.xlu0 %v376
      %v378 = vpop.xlane.xlu0 %377
      %v379 = vsel %vm357, %v354, 0.0
      %380 = vadd.xlane.f32.xlu0 %v379
      %v381 = vpop.xlane.xlu0 %380
      %v382 = vrcp.pop 32.0
      %v383 = vmul.f32 %v360, %v382
      %v384 = vmul.f32 %v363, %v382
      %v385 = vmul.f32 %v366, %v382
      %v386 = vmul.f32 %v369, %v382
      %v387 = vmul.f32 %v372, %v382
      %v388 = vmul.f32 %v375, %v382
      %v389 = vmul.f32 %v378, %v382
      %v390 = vmul.f32 %v381, %v382
      %v391 = vsub.f32 %v347, %v383
      %v392 = vsub.f32 %v348, %v384
      %v393 = vsub.f32 %v349, %v385
      %v394 = vsub.f32 %v350, %v386
      %v395 = vsub.f32 %v351, %v387
      %v396 = vsub.f32 %v352, %v388
      %v397 = vsub.f32 %v353, %v389
      %v398 = vsub.f32 %v354, %v390
      %v399 = vmul.f32 %v391, %v391
      %v400 = vmul.f32 %v392, %v392
      %v401 = vmul.f32 %v393, %v393
      %v402 = vmul.f32 %v394, %v394
      %v403 = vmul.f32 %v395, %v395
      %v404 = vmul.f32 %v396, %v396
      %v405 = vmul.f32 %v397, %v397
      %v406 = vmul.f32 %v398, %v398
      %v407 = vsel %vm357, %v399, 0.0
      %408 = vadd.xlane.f32.xlu0 %v407
      %v409 = vpop.xlane.xlu0 %408
      %v410 = vsel %vm357, %v400, 0.0
      %411 = vadd.xlane.f32.xlu0 %v410
      %v412 = vpop.xlane.xlu0 %411
      %v413 = vsel %vm357, %v401, 0.0
      %414 = vadd.xlane.f32.xlu0 %v413
      %v415 = vpop.xlane.xlu0 %414
      %v416 = vsel %vm357, %v402, 0.0
      %417 = vadd.xlane.f32.xlu0 %v416
      %v418 = vpop.xlane.xlu0 %417
      %v419 = vsel %vm357, %v403, 0.0
      %420 = vadd.xlane.f32.xlu0 %v419
      %v421 = vpop.xlane.xlu0 %420
      %v422 = vsel %vm357, %v404, 0.0
      %423 = vadd.xlane.f32.xlu0 %v422
      %v424 = vpop.xlane.xlu0 %423
      %v425 = vsel %vm357, %v405, 0.0
      %426 = vadd.xlane.f32.xlu0 %v425
      %v427 = vpop.xlane.xlu0 %426
      %v428 = vsel %vm357, %v406, 0.0
      %429 = vadd.xlane.f32.xlu0 %v428
      %v430 = vpop.xlane.xlu0 %429
      %v431 = vmul.f32 %v409, %v382
      %v432 = vmul.f32 %v412, %v382
      %v433 = vmul.f32 %v415, %v382
      %v434 = vmul.f32 %v418, %v382
      %v435 = vmul.f32 %v421, %v382
      %v436 = vmul.f32 %v424, %v382
      %v437 = vmul.f32 %v427, %v382
      %v438 = vmul.f32 %v430, %v382
      %v439 = vadd.f32 %v431, 1e-05
      %v440 = vadd.f32 %v432, 1e-05
      %v441 = vadd.f32 %v433, 1e-05
      %v442 = vadd.f32 %v434, 1e-05
      %v443 = vadd.f32 %v435, 1e-05
      %v444 = vadd.f32 %v436, 1e-05
      %v445 = vadd.f32 %v437, 1e-05
      %v446 = vadd.f32 %v438, 1e-05
      %v447 = vrsqrt.pop %v439
      %v448 = vrsqrt.pop %v440
      %v449 = vrsqrt.pop %v441
      %v450 = vrsqrt.pop %v442
      %v451 = vrsqrt.pop %v443
      %v452 = vrsqrt.pop %v444
      %v453 = vrsqrt.pop %v445
      %v454 = vrsqrt.pop %v446
      %v455 = vmul.f32 %v391, %v447
      %v456 = vmul.f32 %v392, %v448
      %v457 = vmul.f32 %v393, %v449
      %v458 = vmul.f32 %v394, %v450
      %v459 = vmul.f32 %v395, %v451
      %v460 = vmul.f32 %v396, %v452
      %v461 = vmul.f32 %v397, %v453
      %v462 = vmul.f32 %v398, %v454
      %v464 = vlaneseq
      %v465 = vshrl.u32 %v464, 7
      %v466 = vsub.s32 0, %v465
      %v467 = vrot.slane %v355, %v466
      %v469 = vmul.f32 %v455, %v467
      %v470 = vmul.f32 %v456, %v467
      %v471 = vmul.f32 %v457, %v467
      %v472 = vmul.f32 %v458, %v467
      %v473 = vmul.f32 %v459, %v467
      %v474 = vmul.f32 %v460, %v467
      %v475 = vmul.f32 %v461, %v467
      %v476 = vmul.f32 %v462, %v467
      %v478 = vlaneseq
      %v479 = vshrl.u32 %v478, 7
      %v480 = vsub.s32 0, %v479
      %v481 = vrot.slane %v356, %v480
      %v483 = vadd.f32 %v469, %v481
      %v484 = vadd.f32 %v470, %v481
      %v485 = vadd.f32 %v471, %v481
      %v486 = vadd.f32 %v472, %v481
      %v487 = vadd.f32 %v473, %v481
      %v488 = vadd.f32 %v474, %v481
      %v489 = vadd.f32 %v475, %v481
      %v490 = vadd.f32 %v476, %v481
      %v491 = vld [vmem:[%s4] sm:$0xff]
      %v492 = vld [vmem:[%s4 + $0x8] sm:$0xff]
      %v493 = vld [vmem:[%s4 + $0x10] sm:$0xff]
      %v494 = vld [vmem:[%s4 + $0x18] sm:$0xff]
      %v495 = vld [vmem:[%s5] sm:$0x1]
      %v497 = vlaneseq
      %v498 = vshrl.u32 %v497, 7
      %v499 = vsub.s32 0, %v498
      %v500 = vrot.slane %v495, %v499
      %v503 = vsel %vm357, %v483, 0
      %v506 = vsel %vm357, %v484, 0
      %v509 = vsel %vm357, %v485, 0
      %v512 = vsel %vm357, %v486, 0
      %v515 = vsel %vm357, %v487, 0
      %v518 = vsel %vm357, %v488, 0
      %v521 = vsel %vm357, %v489, 0
      %v524 = vsel %vm357, %v490, 0
      %526 = vmatprep.subr.mxu0 0.0
      %527 = vmatpush1.msra.mxu0 %v491
      %528 = vmatprep.subr.mxu0 0.0
      %529 = vmatpush1.msra.mxu0 %v492
      %530 = vmatprep.subr.mxu0 0.0
      %531 = vmatpush1.msra.mxu0 %v493
      %532 = vmatprep.subr.mxu0 0.0
      %533 = vmatpush1.msra.mxu0 %v494
      %534 = vmatprep.subr.mxu0 0.0
      %535 = vmatpush1.msra.mxu0 0.0
      %536 = vmatprep.subr.mxu0 0.0
      %537 = vmatpush1.msra.mxu0 0.0
      %538 = vmatprep.subr.mxu0 0.0
      %539 = vmatpush1.msra.mxu0 0.0
      %540 = vmatprep.subr.mxu0 0.0
      %541 = vmatpush1.msra.mxu0 0.0
      %542 = vmatprep.subr.mxu0 0.0
      %543 = vmatpush1.msra.mxu0 0.0
      %544 = vmatprep.subr.mxu0 0.0
      %545 = vmatpush1.msra.mxu0 0.0
      %546 = vmatprep.subr.mxu0 0.0
      %547 = vmatpush1.msra.mxu0 0.0
      %548 = vmatprep.subr.mxu0 0.0
      %549 = vmatpush1.msra.mxu0 0.0
      %550 = vmatprep.subr.mxu0 0.0
      %551 = vmatpush1.msra.mxu0 0.0
      %552 = vmatprep.subr.mxu0 0.0
      %553 = vmatpush1.msra.mxu0 0.0
      %554 = vmatprep.subr.mxu0 0.0
      %555 = vmatpush1.msra.mxu0 0.0
      %556 = vmatprep.subr.mxu0 0.0
      %557 = vmatpush1.msra.mxu0 0.0
      %558 = vmatprep.subr.mxu0 0.0
      %559 = vmatpush1.msra.mxu0 0.0
      %560 = vmatprep.subr.mxu0 0.0
      %561 = vmatpush1.msra.mxu0 0.0
      %562 = vmatprep.subr.mxu0 0.0
      %563 = vmatpush1.msra.mxu0 0.0
      %564 = vmatprep.subr.mxu0 0.0
      %565 = vmatpush1.msra.mxu0 0.0
      %566 = vmatprep.subr.mxu0 0.0
      %567 = vmatpush1.msra.mxu0 0.0
      %568 = vmatprep.subr.mxu0 0.0
      %569 = vmatpush1.msra.mxu0 0.0
      %570 = vmatprep.subr.mxu0 0.0
      %571 = vmatpush1.msra.mxu0 0.0
      %572 = vmatprep.subr.mxu0 0.0
      %573 = vmatpush1.msra.mxu0 0.0
      %574 = vmatprep.subr.mxu0 0.0
      %575 = vmatpush1.msra.mxu0 0.0
      %576 = vmatprep.subr.mxu0 0.0
      %577 = vmatpush1.msra.mxu0 0.0
      %578 = vmatprep.subr.mxu0 0.0
      %579 = vmatpush1.msra.mxu0 0.0
      %580 = vmatprep.subr.mxu0 0.0
      %581 = vmatpush1.msra.mxu0 0.0
      %582 = vmatprep.subr.mxu0 0.0
      %583 = vmatpush1.msra.mxu0 0.0
      %584 = vmatprep.subr.mxu0 0.0
      %585 = vmatpush1.msra.mxu0 0.0
      %586 = vmatprep.subr.mxu0 0.0
      %587 = vmatpush1.msra.mxu0 0.0
      %588 = vmatprep.subr.mxu0 0.0
      %589 = vmatpush1.msra.mxu0 0.0
      %590 = vmatprep.mubr.f32.mxu0 0.0
      %591 = vmatmul.mubr.f32.gmra.mrb[0].mxu0 %v503
      %v592 = vpop.f32.mrb[0].mxu0
      %v593 = vadd.f32 %v500, %v592
      %v594 = vpop.f32.mrb[0].mxu0
      %595 = vmatprep.mubr.f32.mxu0 0.0
      %596 = vmatmul.mubr.f32.gmra.mrb[0].mxu0 %v506
      %v597 = vpop.f32.mrb[0].mxu0
      %v598 = vadd.f32 %v500, %v597
      %v599 = vpop.f32.mrb[0].mxu0
      %600 = vmatprep.mubr.f32.mxu0 0.0
      %601 = vmatmul.mubr.f32.gmra.mrb[0].mxu0 %v509
      %v602 = vpop.f32.mrb[0].mxu0
      %v603 = vadd.f32 %v500, %v602
      %v604 = vpop.f32.mrb[0].mxu0
      %605 = vmatprep.mubr.f32.mxu0 0.0
      %606 = vmatmul.mubr.f32.gmra.mrb[0].mxu0 %v512
      %v607 = vpop.f32.mrb[0].mxu0
      %v608 = vadd.f32 %v500, %v607
      %v609 = vpop.f32.mrb[0].mxu0
      %610 = vmatprep.mubr.f32.mxu0 0.0
      %611 = vmatmul.mubr.f32.gmra.mrb[0].mxu0 %v515
      %v612 = vpop.f32.mrb[0].mxu0
      %v613 = vadd.f32 %v500, %v612
      %v614 = vpop.f32.mrb[0].mxu0
      %615 = vmatprep.mubr.f32.mxu0 0.0
      %616 = vmatmul.mubr.f32.gmra.mrb[0].mxu0 %v518
      %v617 = vpop.f32.mrb[0].mxu0
      %v618 = vadd.f32 %v500, %v617
      %v619 = vpop.f32.mrb[0].mxu0
      %620 = vmatprep.mubr.f32.mxu0 0.0
      %621 = vmatmul.mubr.f32.gmra.mrb[0].mxu0 %v521
      %v622 = vpop.f32.mrb[0].mxu0
      %v623 = vadd.f32 %v500, %v622
      %v624 = vpop.f32.mrb[0].mxu0
      %625 = vmatprep.mubr.f32.mxu0 0.0
      %626 = vmatmul.mubr.f32.gmra.mrb[0].mxu0 %v524
      %v627 = vpop.f32.mrb[0].mxu0
      %v628 = vadd.f32 %v500, %v627
      %v629 = vpop.f32.mrb[0].mxu0
      %630 = vdwg.mxu0
      %v631 = vmul.f32 %v593, 0.70710677
      %v632 = vmul.f32 %v598, 0.70710677
      %v633 = vmul.f32 %v603, 0.70710677
      %v634 = vmul.f32 %v608, 0.70710677
      %v635 = vmul.f32 %v613, 0.70710677
      %v636 = vmul.f32 %v618, 0.70710677
      %v637 = vmul.f32 %v623, 0.70710677
      %v638 = vmul.f32 %v628, 0.70710677
      %v639 = vand.u32 2147483647, %v631
      %v640 = vand.u32 2147483647, %v632
      %v641 = vand.u32 2147483647, %v633
      %v642 = vand.u32 2147483647, %v634
      %v643 = vand.u32 2147483647, %v635
      %v644 = vand.u32 2147483647, %v636
      %v645 = vand.u32 2147483647, %v637
      %v646 = vand.u32 2147483647, %v638
      %v647 = vmul.f32 %v639, 0.3275911
      %v648 = vmul.f32 %v640, 0.3275911
      %v649 = vmul.f32 %v641, 0.3275911
      %v650 = vmul.f32 %v642, 0.3275911
      %v651 = vmul.f32 %v643, 0.3275911
      %v652 = vmul.f32 %v644, 0.3275911
      %v653 = vmul.f32 %v645, 0.3275911
      %v654 = vmul.f32 %v646, 0.3275911
      %v655 = vadd.f32 %v647, 1.0
      %v656 = vadd.f32 %v648, 1.0
      %v657 = vadd.f32 %v649, 1.0
      %v658 = vadd.f32 %v650, 1.0
      %v659 = vadd.f32 %v651, 1.0
      %v660 = vadd.f32 %v652, 1.0
      %v661 = vadd.f32 %v653, 1.0
      %v662 = vadd.f32 %v654, 1.0
      %v663 = vrcp.pop %v655
      %v664 = vmul.f32 1.0, %v663
      %v665 = vrcp.pop %v656
      %v666 = vmul.f32 1.0, %v665
      %v667 = vrcp.pop %v657
      %v668 = vmul.f32 1.0, %v667
      %v669 = vrcp.pop %v658
      %v670 = vmul.f32 1.0, %v669
      %v671 = vrcp.pop %v659
      %v672 = vmul.f32 1.0, %v671
      %v673 = vrcp.pop %v660
      %v674 = vmul.f32 1.0, %v673
      %v675 = vrcp.pop %v661
      %v676 = vmul.f32 1.0, %v675
      %v677 = vrcp.pop %v662
      %v678 = vmul.f32 1.0, %v677
      %v679 = vmul.f32 %v664, 1.0614054
      %v680 = vmul.f32 %v666, 1.0614054
      %v681 = vmul.f32 %v668, 1.0614054
      %v682 = vmul.f32 %v670, 1.0614054
      %v683 = vmul.f32 %v672, 1.0614054
      %v684 = vmul.f32 %v674, 1.0614054
      %v685 = vmul.f32 %v676, 1.0614054
      %v686 = vmul.f32 %v678, 1.0614054
      %v687 = vadd.f32 %v679, -1.4531521
      %v688 = vadd.f32 %v680, -1.4531521
      %v689 = vadd.f32 %v681, -1.4531521
      %v690 = vadd.f32 %v682, -1.4531521
      %v691 = vadd.f32 %v683, -1.4531521
      %v692 = vadd.f32 %v684, -1.4531521
      %v693 = vadd.f32 %v685, -1.4531521
      %v694 = vadd.f32 %v686, -1.4531521
      %v695 = vmul.f32 %v664, %v687
      %v696 = vmul.f32 %v666, %v688
      %v697 = vmul.f32 %v668, %v689
      %v698 = vmul.f32 %v670, %v690
      %v699 = vmul.f32 %v672, %v691
      %v700 = vmul.f32 %v674, %v692
      %v701 = vmul.f32 %v676, %v693
      %v702 = vmul.f32 %v678, %v694
      %v703 = vadd.f32 %v695, 1.4214138
      %v704 = vadd.f32 %v696, 1.4214138
      %v705 = vadd.f32 %v697, 1.4214138
      %v706 = vadd.f32 %v698, 1.4214138
      %v707 = vadd.f32 %v699, 1.4214138
      %v708 = vadd.f32 %v700, 1.4214138
      %v709 = vadd.f32 %v701, 1.4214138
      %v710 = vadd.f32 %v702, 1.4214138
      %v711 = vmul.f32 %v664, %v703
      %v712 = vmul.f32 %v666, %v704
      %v713 = vmul.f32 %v668, %v705
      %v714 = vmul.f32 %v670, %v706
      %v715 = vmul.f32 %v672, %v707
      %v716 = vmul.f32 %v674, %v708
      %v717 = vmul.f32 %v676, %v709
      %v718 = vmul.f32 %v678, %v710
      %v719 = vadd.f32 %v711, -0.28449672
      %v720 = vadd.f32 %v712, -0.28449672
      %v721 = vadd.f32 %v713, -0.28449672
      %v722 = vadd.f32 %v714, -0.28449672
      %v723 = vadd.f32 %v715, -0.28449672
      %v724 = vadd.f32 %v716, -0.28449672
      %v725 = vadd.f32 %v717, -0.28449672
      %v726 = vadd.f32 %v718, -0.28449672
      %v727 = vmul.f32 %v664, %v719
      %v728 = vmul.f32 %v666, %v720
      %v729 = vmul.f32 %v668, %v721
      %v730 = vmul.f32 %v670, %v722
      %v731 = vmul.f32 %v672, %v723
      %v732 = vmul.f32 %v674, %v724
      %v733 = vmul.f32 %v676, %v725
      %v734 = vmul.f32 %v678, %v726
      %v735 = vadd.f32 %v727, 0.2548296
      %v736 = vadd.f32 %v728, 0.2548296
      %v737 = vadd.f32 %v729, 0.2548296
      %v738 = vadd.f32 %v730, 0.2548296
      %v739 = vadd.f32 %v731, 0.2548296
      %v740 = vadd.f32 %v732, 0.2548296
      %v741 = vadd.f32 %v733, 0.2548296
      %v742 = vadd.f32 %v734, 0.2548296
      %v743 = vmul.f32 %v664, %v735
      %v744 = vmul.f32 %v666, %v736
      %v745 = vmul.f32 %v668, %v737
      %v746 = vmul.f32 %v670, %v738
      %v747 = vmul.f32 %v672, %v739
      %v748 = vmul.f32 %v674, %v740
      %v749 = vmul.f32 %v676, %v741
      %v750 = vmul.f32 %v678, %v742
      %v751 = vsub.f32 0.0, %v639
      %v752 = vsub.f32 0.0, %v640
      %v753 = vsub.f32 0.0, %v641
      %v754 = vsub.f32 0.0, %v642
      %v755 = vsub.f32 0.0, %v643
      %v756 = vsub.f32 0.0, %v644
      %v757 = vsub.f32 0.0, %v645
      %v758 = vsub.f32 0.0, %v646
      %v759 = vmul.f32 %v751, %v639
      %v760 = vmul.f32 %v752, %v640
      %v761 = vmul.f32 %v753, %v641
      %v762 = vmul.f32 %v754, %v642
      %v763 = vmul.f32 %v755, %v643
      %v764 = vmul.f32 %v756, %v644
      %v765 = vmul.f32 %v757, %v645
      %v766 = vmul.f32 %v758, %v646
      %v767 = vmul.f32 %v759, 1.442695
      %v768 = vpow.pop %v767
      %v769 = vmul.f32 %v760, 1.442695
      %v770 = vpow.pop %v769
      %v771 = vmul.f32 %v761, 1.442695
      %v772 = vpow.pop %v771
      %v773 = vmul.f32 %v762, 1.442695
      %v774 = vpow.pop %v773
      %v775 = vmul.f32 %v763, 1.442695
      %v776 = vpow.pop %v775
      %v777 = vmul.f32 %v764, 1.442695
      %v778 = vpow.pop %v777
      %v779 = vmul.f32 %v765, 1.442695
      %v780 = vpow.pop %v779
      %v781 = vmul.f32 %v766, 1.442695
      %v782 = vpow.pop %v781
      %v783 = vmul.f32 %v743, %v768
      %v784 = vmul.f32 %v744, %v770
      %v785 = vmul.f32 %v745, %v772
      %v786 = vmul.f32 %v746, %v774
      %v787 = vmul.f32 %v747, %v776
      %v788 = vmul.f32 %v748, %v778
      %v789 = vmul.f32 %v749, %v780
      %v790 = vmul.f32 %v750, %v782
      %v791 = vsub.f32 1.0, %v783
      %v792 = vsub.f32 1.0, %v784
      %v793 = vsub.f32 1.0, %v785
      %v794 = vsub.f32 1.0, %v786
      %v795 = vsub.f32 1.0, %v787
      %v796 = vsub.f32 1.0, %v788
      %v797 = vsub.f32 1.0, %v789
      %v798 = vsub.f32 1.0, %v790
      %vm799 = vcmp.ge.f32.partialorder %v631, 0.0
      %vm800 = vcmp.ge.f32.partialorder %v632, 0.0
      %vm801 = vcmp.ge.f32.partialorder %v633, 0.0
      %vm802 = vcmp.ge.f32.partialorder %v634, 0.0
      %vm803 = vcmp.ge.f32.partialorder %v635, 0.0
      %vm804 = vcmp.ge.f32.partialorder %v636, 0.0
      %vm805 = vcmp.ge.f32.partialorder %v637, 0.0
      %vm806 = vcmp.ge.f32.partialorder %v638, 0.0
      %v807 = vsub.f32 0.0, %v791
      %v808 = vsub.f32 0.0, %v792
      %v809 = vsub.f32 0.0, %v793
      %v810 = vsub.f32 0.0, %v794
      %v811 = vsub.f32 0.0, %v795
      %v812 = vsub.f32 0.0, %v796
      %v813 = vsub.f32 0.0, %v797
      %v814 = vsub.f32 0.0, %v798
      %v815 = vsel %vm799, %v791, %v807
      %v816 = vsel %vm800, %v792, %v808
      %v817 = vsel %vm801, %v793, %v809
      %v818 = vsel %vm802, %v794, %v810
      %v819 = vsel %vm803, %v795, %v811
      %v820 = vsel %vm804, %v796, %v812
      %v821 = vsel %vm805, %v797, %v813
      %v822 = vsel %vm806, %v798, %v814
      %v823 = vmul.f32 %v593, 0.5
      %v824 = vmul.f32 %v598, 0.5
      %v825 = vmul.f32 %v603, 0.5
      %v826 = vmul.f32 %v608, 0.5
      %v827 = vmul.f32 %v613, 0.5
      %v828 = vmul.f32 %v618, 0.5
      %v829 = vmul.f32 %v623, 0.5
      %v830 = vmul.f32 %v628, 0.5
      %v831 = vadd.f32 %v815, 1.0
      %v832 = vadd.f32 %v816, 1.0
      %v833 = vadd.f32 %v817, 1.0
      %v834 = vadd.f32 %v818, 1.0
      %v835 = vadd.f32 %v819, 1.0
      %v836 = vadd.f32 %v820, 1.0
      %v837 = vadd.f32 %v821, 1.0
      %v838 = vadd.f32 %v822, 1.0
      %v839 = vmul.f32 %v823, %v831
      %v840 = vmul.f32 %v824, %v832
      %v841 = vmul.f32 %v825, %v833
      %v842 = vmul.f32 %v826, %v834
      %v843 = vmul.f32 %v827, %v835
      %v844 = vmul.f32 %v828, %v836
      %v845 = vmul.f32 %v829, %v837
      %v846 = vmul.f32 %v830, %v838
      %v847 = vld [vmem:[%s6] sm:$0xff]
      %v848 = vld [vmem:[%s6 + $0x8] sm:$0xff]
      %v849 = vld [vmem:[%s6 + $0x10] sm:$0xff]
      %v850 = vld [vmem:[%s6 + $0x18] sm:$0xff]
      %v851 = vld [vmem:[%s6 + $0x20] sm:$0xff]
      %v852 = vld [vmem:[%s6 + $0x28] sm:$0xff]
      %v853 = vld [vmem:[%s6 + $0x30] sm:$0xff]
      %v854 = vld [vmem:[%s6 + $0x38] sm:$0xff]
      %v855 = vld [vmem:[%s6 + $0x40] sm:$0xff]
      %v856 = vld [vmem:[%s6 + $0x48] sm:$0xff]
      %v857 = vld [vmem:[%s6 + $0x50] sm:$0xff]
      %v858 = vld [vmem:[%s6 + $0x58] sm:$0xff]
      %v859 = vld [vmem:[%s6 + $0x60] sm:$0xff]
      %v860 = vld [vmem:[%s6 + $0x68] sm:$0xff]
      %v861 = vld [vmem:[%s6 + $0x70] sm:$0xff]
      %v862 = vld [vmem:[%s6 + $0x78] sm:$0xff]
      %v863 = vld [vmem:[%s7] sm:$0x1]
      %v865 = vlaneseq
      %v866 = vshrl.u32 %v865, 7
      %v867 = vsub.s32 0, %v866
      %v868 = vrot.slane %v863, %v867
      %870 = vmatprep.subr.mxu0 0.0
      %871 = vmatpush1.msra.mxu0 %v847
      %872 = vmatprep.subr.mxu0 0.0
      %873 = vmatpush1.msra.mxu0 %v848
      %874 = vmatprep.subr.mxu0 0.0
      %875 = vmatpush1.msra.mxu0 %v849
      %876 = vmatprep.subr.mxu0 0.0
      %877 = vmatpush1.msra.mxu0 %v850
      %878 = vmatprep.subr.mxu0 0.0
      %879 = vmatpush1.msra.mxu0 %v851
      %880 = vmatprep.subr.mxu0 0.0
      %881 = vmatpush1.msra.mxu0 %v852
      %882 = vmatprep.subr.mxu0 0.0
      %883 = vmatpush1.msra.mxu0 %v853
      %884 = vmatprep.subr.mxu0 0.0
      %885 = vmatpush1.msra.mxu0 %v854
      %886 = vmatprep.subr.mxu0 0.0
      %887 = vmatpush1.msra.mxu0 %v855
      %888 = vmatprep.subr.mxu0 0.0
      %889 = vmatpush1.msra.mxu0 %v856
      %890 = vmatprep.subr.mxu0 0.0
      %891 = vmatpush1.msra.mxu0 %v857
      %892 = vmatprep.subr.mxu0 0.0
      %893 = vmatpush1.msra.mxu0 %v858
      %894 = vmatprep.subr.mxu0 0.0
      %895 = vmatpush1.msra.mxu0 %v859
      %896 = vmatprep.subr.mxu0 0.0
      %897 = vmatpush1.msra.mxu0 %v860
      %898 = vmatprep.subr.mxu0 0.0
      %899 = vmatpush1.msra.mxu0 %v861
      %900 = vmatprep.subr.mxu0 0.0
      %901 = vmatpush1.msra.mxu0 %v862
      %902 = vmatprep.subr.mxu0 0.0
      %903 = vmatpush1.msra.mxu0 0.0
      %904 = vmatprep.subr.mxu0 0.0
      %905 = vmatpush1.msra.mxu0 0.0
      %906 = vmatprep.subr.mxu0 0.0
      %907 = vmatpush1.msra.mxu0 0.0
      %908 = vmatprep.subr.mxu0 0.0
      %909 = vmatpush1.msra.mxu0 0.0
      %910 = vmatprep.subr.mxu0 0.0
      %911 = vmatpush1.msra.mxu0 0.0
      %912 = vmatprep.subr.mxu0 0.0
      %913 = vmatpush1.msra.mxu0 0.0
      %914 = vmatprep.subr.mxu0 0.0
      %915 = vmatpush1.msra.mxu0 0.0
      %916 = vmatprep.subr.mxu0 0.0
      %917 = vmatpush1.msra.mxu0 0.0
      %918 = vmatprep.subr.mxu0 0.0
      %919 = vmatpush1.msra.mxu0 0.0
      %920 = vmatprep.subr.mxu0 0.0
      %921 = vmatpush1.msra.mxu0 0.0
      %922 = vmatprep.subr.mxu0 0.0
      %923 = vmatpush1.msra.mxu0 0.0
      %924 = vmatprep.subr.mxu0 0.0
      %925 = vmatpush1.msra.mxu0 0.0
      %926 = vmatprep.subr.mxu0 0.0
      %927 = vmatpush1.msra.mxu0 0.0
      %928 = vmatprep.subr.mxu0 0.0
      %929 = vmatpush1.msra.mxu0 0.0
      %930 = vmatprep.subr.mxu0 0.0
      %931 = vmatpush1.msra.mxu0 0.0
      %932 = vmatprep.subr.mxu0 0.0
      %933 = vmatpush1.msra.mxu0 0.0
      %934 = vmatprep.mubr.f32.mxu0 0.0
      %935 = vmatmul.mubr.f32.gmra.mrb[0].mxu0 %v839
      %v936 = vpop.f32.mrb[0].mxu0
      %v937 = vadd.f32 %v868, %v936
      %v938 = vpop.f32.mrb[0].mxu0
      %939 = vmatprep.mubr.f32.mxu0 0.0
      %940 = vmatmul.mubr.f32.gmra.mrb[0].mxu0 %v840
      %v941 = vpop.f32.mrb[0].mxu0
      %v942 = vadd.f32 %v868, %v941
      %v943 = vpop.f32.mrb[0].mxu0
      %944 = vmatprep.mubr.f32.mxu0 0.0
      %945 = vmatmul.mubr.f32.gmra.mrb[0].mxu0 %v841
      %v946 = vpop.f32.mrb[0].mxu0
      %v947 = vadd.f32 %v868, %v946
      %v948 = vpop.f32.mrb[0].mxu0
      %949 = vmatprep.mubr.f32.mxu0 0.0
      %950 = vmatmul.mubr.f32.gmra.mrb[0].mxu0 %v842
      %v951 = vpop.f32.mrb[0].mxu0
      %v952 = vadd.f32 %v868, %v951
      %v953 = vpop.f32.mrb[0].mxu0
      %954 = vmatprep.mubr.f32.mxu0 0.0
      %955 = vmatmul.mubr.f32.gmra.mrb[0].mxu0 %v843
      %v956 = vpop.f32.mrb[0].mxu0
      %v957 = vadd.f32 %v868, %v956
      %v958 = vpop.f32.mrb[0].mxu0
      %959 = vmatprep.mubr.f32.mxu0 0.0
      %960 = vmatmul.mubr.f32.gmra.mrb[0].mxu0 %v844
      %v961 = vpop.f32.mrb[0].mxu0
      %v962 = vadd.f32 %v868, %v961
      %v963 = vpop.f32.mrb[0].mxu0
      %964 = vmatprep.mubr.f32.mxu0 0.0
      %965 = vmatmul.mubr.f32.gmra.mrb[0].mxu0 %v845
      %v966 = vpop.f32.mrb[0].mxu0
      %v967 = vadd.f32 %v868, %v966
      %v968 = vpop.f32.mrb[0].mxu0
      %969 = vmatprep.mubr.f32.mxu0 0.0
      %970 = vmatmul.mubr.f32.gmra.mrb[0].mxu0 %v846
      %v971 = vpop.f32.mrb[0].mxu0
      %v972 = vadd.f32 %v868, %v971
      %v973 = vpop.f32.mrb[0].mxu0
      %974 = vdwg.mxu0
      %v975 = vadd.f32 %v347, %v937
      %v976 = vadd.f32 %v348, %v942
      %v977 = vadd.f32 %v349, %v947
      %v978 = vadd.f32 %v350, %v952
      %v979 = vadd.f32 %v351, %v957
      %v980 = vadd.f32 %v352, %v962
      %v981 = vadd.f32 %v353, %v967
      %v982 = vadd.f32 %v354, %v972
      %983 = vst.msk [vmem:[%s329] sm:$0xff] %vm357, %v975
      %984 = vst.msk [vmem:[%s329 + $0x8] sm:$0xff] %vm357, %v976
      %985 = vst.msk [vmem:[%s329 + $0x10] sm:$0xff] %vm357, %v977
      %986 = vst.msk [vmem:[%s329 + $0x18] sm:$0xff] %vm357, %v978
      %987 = vst.msk [vmem:[%s329 + $0x20] sm:$0xff] %vm357, %v979
      %988 = vst.msk [vmem:[%s329 + $0x28] sm:$0xff] %vm357, %v980
      %989 = vst.msk [vmem:[%s329 + $0x30] sm:$0xff] %vm357, %v981
      %990 = vst.msk [vmem:[%s329 + $0x38] sm:$0xff] %vm357, %v982
      %s991 = smul.u32 8, %s19
      %p992 = scmp.lt.s32.totalorder %s991, 15
      %s993 = scalar_select %p992, %s991, 15
      %s994 = smul.addr %s993, 8
      %s995 = scalar_lea.vmem %s8, %s994
      // Predicated region
      $region53: #{_lambda_.5} parent=51 // pred_check
        %p996 = pneg %p215
      $region54: #{_lambda_.5} parent=51 // pred_check_branch
        %998 = sbr.rel (%p996) target = $region56
      $region55: #{_lambda_.5} parent=51 // pred_region
        %s999 = smul.u32 8, %s19
      $region56: #{_lambda_.5} parent=51 // pred_fallthru
        _
    $region52: #{_lambda_.5} parent=5 // pred_fallthru
      _
    %p1000 = scmp.le.s32.totalorder 2, %s14
    // Predicated region
    $region57: #{_lambda_.5} parent=5 // pred_check
      %p1001 = pneg %p1000
    $region58: #{_lambda_.5} parent=5 // pred_check_branch
      %1003 = sbr.rel (%p1001) target = $region60
    $region59: #{_lambda_.5} parent=5 // pred_region
      %s1004 = ssub.s32 %s14, 2
      // Predicated region
      $region61: #{_lambda_.5} parent=59 // pred_check
        %p1005 = pneg %p221
      $region62: #{_lambda_.5} parent=59 // pred_check_branch
        %1007 = sbr.rel (%p1005) target = $region64
      $region63: #{_lambda_.5} parent=59 // pred_region
        %s1008 = smul.u32 8, %s20
        %p1009 = scmp.lt.s32.totalorder %s1008, 15
        %s1010 = scalar_select %p1009, %s1008, 15
        %s1011 = smul.addr %s1010, 8
        %s1012 = scalar_lea.vmem %s8, %s1011
      $region64: #{_lambda_.5} parent=59 // pred_fallthru
        _
    $region60: #{_lambda_.5} parent=5 // pred_fallthru
      _
  $region6: #{_lambda_.5} parent=0 // loop_footer
    %s18 = sadd.s32 1, %s14
  $region7: #{_lambda_.5} parent=0 // loop_footer_branch
    %13 = sbr.rel target = $region3
  $region8: #{_lambda_.5} parent=0 // loop_exit
    _

// kernel: _lambda_.4
$region0: #{_lambda_.4}
  #allocation0 [shape = 'u32[]', space=smem, size = 0x4, offset = 0x4, fixed_abs, tag = 'smem constant byte address 0x4 - core index']
  #allocation1 [shape = 'u32[144,128]{1,0:T(1,128)}', space=vmem, size = 0x12000, scoped, tag = 'internal scratch']
  %s0 = inlined_call_operand.vmem [shape: f32[2,4,16,32], index: 0, kind: input, shape index: {}]
  %s1 = inlined_call_operand.vmem [shape: f32[4,16,16], index: 1, kind: input, shape index: {}]
  %s2 = inlined_call_operand.vmem [shape: f32[1,32], index: 2, kind: input, shape index: {}]
  %s3 = inlined_call_operand.vmem [shape: f32[1,32], index: 3, kind: input, shape index: {}]
  %s4 = inlined_call_operand.vmem [shape: f32[32,96], index: 4, kind: input, shape index: {}]
  %s5 = inlined_call_operand.vmem [shape: f32[1,96], index: 5, kind: input, shape index: {}]
  %s6 = inlined_call_operand.vmem [shape: f32[32,32], index: 6, kind: input, shape index: {}]
  %s7 = inlined_call_operand.vmem [shape: f32[1,32], index: 7, kind: input, shape index: {}]
  %s8 = inlined_call_operand.vmem [shape: f32[2,4,16,32], index: 8, kind: output, shape index: {}]
  %s9 = sld [smem:[#allocation0]]
  $region65: #{_lambda_.4} parent=0
    _
  %s11 = ssub.s32 1, %s9
  %s12 = scalar_select 0, %s11, %s9
  loop: start=0, step=1, limit=4
  $region2: #{_lambda_.4} parent=0 // loop_pre_header
    _
  $region3: #{_lambda_.4} parent=0 // loop_header
    %s14 = sphi 0, %s18
    %p15 = scmp.ge.s32.totalorder %s14, 4
    %s21 = sphi 0, %s33
    %s22 = sphi 0, %s29
    %s23 = sphi 0, %s21
    %s24 = sphi 0, %s22
    %s25 = sphi 0, %s23
    %s26 = sphi 0, %s24
    %s38 = sphi 0, %s40
    %s41 = sphi 0, %s38
    %s42 = sphi 0, %s41
    %s58 = sphi 0, %s42
    %s62 = sphi 0, %s62
    %s64 = sphi 0, %s62
    %s65 = sphi 0, %s64
    %s79 = sphi 0, %s65
    %s83 = sphi 0, %s83
    %s85 = sphi 0, %s83
    %s86 = sphi 0, %s85
    %s100 = sphi 0, %s86
    %s104 = sphi 0, %s104
    %s106 = sphi 0, %s104
    %s107 = sphi 0, %s106
    %s121 = sphi 0, %s107
    %s125 = sphi 0, %s125
    %s127 = sphi 0, %s125
    %s128 = sphi 0, %s127
    %s142 = sphi 0, %s128
    %s146 = sphi 0, %s146
    %s148 = sphi 0, %s146
    %s149 = sphi 0, %s148
    %s163 = sphi 0, %s149
    %s167 = sphi 0, %s167
    %s169 = sphi 0, %s167
    %s170 = sphi 0, %s169
    %s184 = sphi 0, %s170
    %s188 = sphi 0, %s188
    %s190 = sphi 0, %s188
    %s191 = sphi 0, %s190
    %s205 = sphi 0, %s191
    %s213 = sphi 0, %s215
    %s216 = sphi 0, %s213
    %s217 = sphi 0, %s216
    %s233 = sphi 0, %s217
  $region4: #{_lambda_.4} parent=0 // loop_header_branch
    %17 = sbr.rel (%p15) target = $region8
  $region5: #{_lambda_.4} parent=0 // loop_body
    %s19 = ssub.s32 %s14, 1
    %s20 = ssub.s32 %s14, 2
    %s27 = sadd.s32 1, %s22
    %p28 = scmp.ge.s32.totalorder %s27, 1
    %s29 = scalar_select %p28, 0, %s27
    %s30 = sadd.s32 1, %s21
    %s31 = scalar_select %p28, %s30, %s21
    %p32 = scmp.ge.s32.totalorder %s31, 2
    %s33 = scalar_select %p32, 0, %s31
    %s34 = ssub.s32 %s21, %s33
    %s35 = ssub.s32 %s22, %s29
    %s36 = sor.u32 %s34, %s35
    %p37 = scmp.eq.s32.totalorder %s36, 0
    %s39 = sadd.s32 %s38, 1
    %s40 = scalar_select %p37, %s38, %s39
    %p43 = pneg %p37
    %p44 = scmp.eq.s32.totalorder %s14, 1
    %p45 = por %p43, %p44
    %p46 = scmp.ne.s32.totalorder %s38, %s41
    %p47 = scmp.eq.s32.totalorder %s14, 0
    %p48 = por %p46, %p47
    %p49 = scmp.ne.s32.totalorder %s38, %s41
    %p50 = scmp.eq.s32.totalorder %s19, 1
    %p51 = por %p49, %p50
    %p52 = scmp.ne.s32.totalorder %s41, %s42
    %p53 = scmp.eq.s32.totalorder %s19, 0
    %p54 = por %p52, %p53
    %p55 = scmp.ne.s32.totalorder %s41, %s42
    %p56 = scmp.eq.s32.totalorder %s20, 1
    %p57 = por %p55, %p56
    %p59 = scmp.ne.s32.totalorder %s42, %s58
    %p60 = scmp.eq.s32.totalorder %s20, 0
    %p61 = por %p59, %p60
    %s63 = sadd.s32 %s62, 1
    %p66 = scmp.eq.s32.totalorder %s14, 1
    %p67 = scmp.ne.s32.totalorder %s62, %s64
    %p68 = scmp.eq.s32.totalorder %s14, 0
    %p69 = por %p67, %p68
    %p70 = scmp.ne.s32.totalorder %s62, %s64
    %p71 = scmp.eq.s32.totalorder %s19, 1
    %p72 = por %p70, %p71
    %p73 = scmp.ne.s32.totalorder %s64, %s65
    %p74 = scmp.eq.s32.totalorder %s19, 0
    %p75 = por %p73, %p74
    %p76 = scmp.ne.s32.totalorder %s64, %s65
    %p77 = scmp.eq.s32.totalorder %s20, 1
    %p78 = por %p76, %p77
    %p80 = scmp.ne.s32.totalorder %s65, %s79
    %p81 = scmp.eq.s32.totalorder %s20, 0
    %p82 = por %p80, %p81
    %s84 = sadd.s32 %s83, 1
    %p87 = scmp.eq.s32.totalorder %s14, 1
    %p88 = scmp.ne.s32.totalorder %s83, %s85
    %p89 = scmp.eq.s32.totalorder %s14, 0
    %p90 = por %p88, %p89
    %p91 = scmp.ne.s32.totalorder %s83, %s85
    %p92 = scmp.eq.s32.totalorder %s19, 1
    %p93 = por %p91, %p92
    %p94 = scmp.ne.s32.totalorder %s85, %s86
    %p95 = scmp.eq.s32.totalorder %s19, 0
    %p96 = por %p94, %p95
    %p97 = scmp.ne.s32.totalorder %s85, %s86
    %p98 = scmp.eq.s32.totalorder %s20, 1
    %p99 = por %p97, %p98
    %p101 = scmp.ne.s32.totalorder %s86, %s100
    %p102 = scmp.eq.s32.totalorder %s20, 0
    %p103 = por %p101, %p102
    %s105 = sadd.s32 %s104, 1
    %p108 = scmp.eq.s32.totalorder %s14, 1
    %p109 = scmp.ne.s32.totalorder %s104, %s106
    %p110 = scmp.eq.s32.totalorder %s14, 0
    %p111 = por %p109, %p110
    %p112 = scmp.ne.s32.totalorder %s104, %s106
    %p113 = scmp.eq.s32.totalorder %s19, 1
    %p114 = por %p112, %p113
    %p115 = scmp.ne.s32.totalorder %s106, %s107
    %p116 = scmp.eq.s32.totalorder %s19, 0
    %p117 = por %p115, %p116
    %p118 = scmp.ne.s32.totalorder %s106, %s107
    %p119 = scmp.eq.s32.totalorder %s20, 1
    %p120 = por %p118, %p119
    %p122 = scmp.ne.s32.totalorder %s107, %s121
    %p123 = scmp.eq.s32.totalorder %s20, 0
    %p124 = por %p122, %p123
    %s126 = sadd.s32 %s125, 1
    %p129 = scmp.eq.s32.totalorder %s14, 1
    %p130 = scmp.ne.s32.totalorder %s125, %s127
    %p131 = scmp.eq.s32.totalorder %s14, 0
    %p132 = por %p130, %p131
    %p133 = scmp.ne.s32.totalorder %s125, %s127
    %p134 = scmp.eq.s32.totalorder %s19, 1
    %p135 = por %p133, %p134
    %p136 = scmp.ne.s32.totalorder %s127, %s128
    %p137 = scmp.eq.s32.totalorder %s19, 0
    %p138 = por %p136, %p137
    %p139 = scmp.ne.s32.totalorder %s127, %s128
    %p140 = scmp.eq.s32.totalorder %s20, 1
    %p141 = por %p139, %p140
    %p143 = scmp.ne.s32.totalorder %s128, %s142
    %p144 = scmp.eq.s32.totalorder %s20, 0
    %p145 = por %p143, %p144
    %s147 = sadd.s32 %s146, 1
    %p150 = scmp.eq.s32.totalorder %s14, 1
    %p151 = scmp.ne.s32.totalorder %s146, %s148
    %p152 = scmp.eq.s32.totalorder %s14, 0
    %p153 = por %p151, %p152
    %p154 = scmp.ne.s32.totalorder %s146, %s148
    %p155 = scmp.eq.s32.totalorder %s19, 1
    %p156 = por %p154, %p155
    %p157 = scmp.ne.s32.totalorder %s148, %s149
    %p158 = scmp.eq.s32.totalorder %s19, 0
    %p159 = por %p157, %p158
    %p160 = scmp.ne.s32.totalorder %s148, %s149
    %p161 = scmp.eq.s32.totalorder %s20, 1
    %p162 = por %p160, %p161
    %p164 = scmp.ne.s32.totalorder %s149, %s163
    %p165 = scmp.eq.s32.totalorder %s20, 0
    %p166 = por %p164, %p165
    %s168 = sadd.s32 %s167, 1
    %p171 = scmp.eq.s32.totalorder %s14, 1
    %p172 = scmp.ne.s32.totalorder %s167, %s169
    %p173 = scmp.eq.s32.totalorder %s14, 0
    %p174 = por %p172, %p173
    %p175 = scmp.ne.s32.totalorder %s167, %s169
    %p176 = scmp.eq.s32.totalorder %s19, 1
    %p177 = por %p175, %p176
    %p178 = scmp.ne.s32.totalorder %s169, %s170
    %p179 = scmp.eq.s32.totalorder %s19, 0
    %p180 = por %p178, %p179
    %p181 = scmp.ne.s32.totalorder %s169, %s170
    %p182 = scmp.eq.s32.totalorder %s20, 1
    %p183 = por %p181, %p182
    %p185 = scmp.ne.s32.totalorder %s170, %s184
    %p186 = scmp.eq.s32.totalorder %s20, 0
    %p187 = por %p185, %p186
    %s189 = sadd.s32 %s188, 1
    %p192 = scmp.eq.s32.totalorder %s14, 1
    %p193 = scmp.ne.s32.totalorder %s188, %s190
    %p194 = scmp.eq.s32.totalorder %s14, 0
    %p195 = por %p193, %p194
    %p196 = scmp.ne.s32.totalorder %s188, %s190
    %p197 = scmp.eq.s32.totalorder %s19, 1
    %p198 = por %p196, %p197
    %p199 = scmp.ne.s32.totalorder %s190, %s191
    %p200 = scmp.eq.s32.totalorder %s19, 0
    %p201 = por %p199, %p200
    %p202 = scmp.ne.s32.totalorder %s190, %s191
    %p203 = scmp.eq.s32.totalorder %s20, 1
    %p204 = por %p202, %p203
    %p206 = scmp.ne.s32.totalorder %s191, %s205
    %p207 = scmp.eq.s32.totalorder %s20, 0
    %p208 = por %p206, %p207
    %s209 = ssub.s32 %s21, %s33
    %s210 = ssub.s32 %s22, %s29
    %s211 = sor.u32 %s209, %s210
    %p212 = scmp.eq.s32.totalorder %s211, 0
    %s214 = sadd.s32 %s213, 1
    %s215 = scalar_select %p212, %s213, %s214
    %p218 = pneg %p212
    %p219 = scmp.eq.s32.totalorder %s14, 1
    %p220 = por %p218, %p219
    %p221 = scmp.ne.s32.totalorder %s213, %s216
    %p222 = scmp.eq.s32.totalorder %s14, 0
    %p223 = por %p221, %p222
    %p224 = scmp.ne.s32.totalorder %s213, %s216
    %p225 = scmp.eq.s32.totalorder %s19, 1
    %p226 = por %p224, %p225
    %p227 = scmp.ne.s32.totalorder %s216, %s217
    %p228 = scmp.eq.s32.totalorder %s19, 0
    %p229 = por %p227, %p228
    %p230 = scmp.ne.s32.totalorder %s216, %s217
    %p231 = scmp.eq.s32.totalorder %s20, 1
    %p232 = por %p230, %p231
    %p234 = scmp.ne.s32.totalorder %s217, %s233
    %p235 = scmp.eq.s32.totalorder %s20, 0
    %p236 = por %p234, %p235
    %p237 = scmp.le.s32.totalorder 1, %s14
    %p238 = scmp.lt.s32.totalorder %s14, 3
    %p239 = pnand %p237, %p238
    %p240 = pneg %p239
    // Predicated region
    $region9: #{_lambda_.4} parent=5 // pred_check
      _
    $region10: #{_lambda_.4} parent=5 // pred_check_branch
      %242 = sbr.rel (%p239) target = $region12
    $region11: #{_lambda_.4} parent=5 // pred_region
      %s243 = ssub.s32 %s14, 1
      // Predicated region
      $region13: #{_lambda_.4} parent=11 // pred_check
        %p244 = pneg %p75
      $region14: #{_lambda_.4} parent=11 // pred_check_branch
        %246 = sbr.rel (%p244) target = $region16
      $region15: #{_lambda_.4} parent=11 // pred_region
        _
      $region16: #{_lambda_.4} parent=11 // pred_fallthru
        _
      // Predicated region
      $region17: #{_lambda_.4} parent=11 // pred_check
        %p247 = pneg %p96
      $region18: #{_lambda_.4} parent=11 // pred_check_branch
        %249 = sbr.rel (%p247) target = $region20
      $region19: #{_lambda_.4} parent=11 // pred_region
        _
      $region20: #{_lambda_.4} parent=11 // pred_fallthru
        _
      // Predicated region
      $region21: #{_lambda_.4} parent=11 // pred_check
        %p250 = pneg %p117
      $region22: #{_lambda_.4} parent=11 // pred_check_branch
        %252 = sbr.rel (%p250) target = $region24
      $region23: #{_lambda_.4} parent=11 // pred_region
        _
      $region24: #{_lambda_.4} parent=11 // pred_fallthru
        _
      // Predicated region
      $region25: #{_lambda_.4} parent=11 // pred_check
        %p253 = pneg %p138
      $region26: #{_lambda_.4} parent=11 // pred_check_branch
        %255 = sbr.rel (%p253) target = $region28
      $region27: #{_lambda_.4} parent=11 // pred_region
        _
      $region28: #{_lambda_.4} parent=11 // pred_fallthru
        _
      // Predicated region
      $region29: #{_lambda_.4} parent=11 // pred_check
        %p256 = pneg %p159
      $region30: #{_lambda_.4} parent=11 // pred_check_branch
        %258 = sbr.rel (%p256) target = $region32
      $region31: #{_lambda_.4} parent=11 // pred_region
        _
      $region32: #{_lambda_.4} parent=11 // pred_fallthru
        _
      // Predicated region
      $region33: #{_lambda_.4} parent=11 // pred_check
        %p259 = pneg %p180
      $region34: #{_lambda_.4} parent=11 // pred_check_branch
        %261 = sbr.rel (%p259) target = $region36
      $region35: #{_lambda_.4} parent=11 // pred_region
        _
      $region36: #{_lambda_.4} parent=11 // pred_fallthru
        _
      // Predicated region
      $region37: #{_lambda_.4} parent=11 // pred_check
        %p262 = pneg %p201
      $region38: #{_lambda_.4} parent=11 // pred_check_branch
        %264 = sbr.rel (%p262) target = $region40
      $region39: #{_lambda_.4} parent=11 // pred_region
        _
      $region40: #{_lambda_.4} parent=11 // pred_fallthru
        _
    $region12: #{_lambda_.4} parent=5 // pred_fallthru
      _
    %p265 = scmp.lt.s32.totalorder %s14, 2
    // Predicated region
    $region41: #{_lambda_.4} parent=5 // pred_check
      %p266 = pneg %p265
    $region42: #{_lambda_.4} parent=5 // pred_check_branch
      %268 = sbr.rel (%p266) target = $region44
    $region43: #{_lambda_.4} parent=5 // pred_region
      // Predicated region
      $region45: #{_lambda_.4} parent=43 // pred_check
        %p269 = pneg %p48
      $region46: #{_lambda_.4} parent=43 // pred_check_branch
        %271 = sbr.rel (%p269) target = $region48
      $region47: #{_lambda_.4} parent=43 // pred_region
        %s272 = smul.u32 4, %s22
        %p273 = scmp.lt.s32.totalorder %s21, 1
        %s274 = scalar_select %p273, %s21, 1
        %p275 = scmp.lt.s32.totalorder %s272, 3
        %s276 = scalar_select %p275, %s272, 3
        %s277 = smul.addr %s276, 2
        %s278 = smul.addr %s274, 8
        %s279 = sadd.s32 %s277, %s278
        %s280 = smul.addr %s279, 8
        %s281 = scalar_lea.vmem %s0, %s280
        %s282 = smul.u32 4, %s22
      $region48: #{_lambda_.4} parent=43 // pred_fallthru
        _
    $region44: #{_lambda_.4} parent=5 // pred_fallthru
      _
    %p283 = scmp.le.s32.totalorder 1, %s14
    %p284 = scmp.lt.s32.totalorder %s14, 3
    %p285 = pnand %p283, %p284
    %p286 = pneg %p285
    // Predicated region
    $region49: #{_lambda_.4} parent=5 // pred_check
      _
    $region50: #{_lambda_.4} parent=5 // pred_check_branch
      %288 = sbr.rel (%p285) target = $region52
    $region51: #{_lambda_.4} parent=5 // pred_region
      %s289 = ssub.s32 %s14, 1
      %s290 = smul.u32 4, %s24
      %p291 = scmp.lt.s32.totalorder %s23, 1
      %s292 = scalar_select %p291, %s23, 1
      %p293 = scmp.lt.s32.totalorder %s290, 3
      %s294 = scalar_select %p293, %s290, 3
      %s295 = smul.addr %s294, 2
      %s296 = smul.addr %s292, 8
      %s297 = sadd.s32 %s295, %s296
      %s298 = smul.addr %s297, 8
      %s299 = scalar_lea.vmem %s0, %s298
      %p300 = pneg %p54
      %p301 = pneg %p51
      %p302 = pneg %p75
      %p303 = pneg %p72
      %p304 = pneg %p96
      %p305 = pneg %p93
      %p306 = pneg %p117
      %p307 = pneg %p114
      %p308 = pneg %p138
      %p309 = pneg %p135
      %p310 = pneg %p159
      %p311 = pneg %p156
      %p312 = pneg %p180
      %p313 = pneg %p177
      %p314 = pneg %p201
      %p315 = pneg %p198
      %p316 = pneg %p229
      %p317 = pneg %p226
      %s318 = smul.u32 4, %s24
      %p319 = scmp.lt.s32.totalorder %s23, 1
      %s320 = scalar_select %p319, %s23, 1
      %p321 = scmp.lt.s32.totalorder %s318, 3
      %s322 = scalar_select %p321, %s318, 3
      %s323 = smul.addr %s322, 2
      %s324 = smul.addr %s320, 8
      %s325 = sadd.s32 %s323, %s324
      %s326 = smul.addr %s325, 8
      %s327 = scalar_lea.vmem %s8, %s326
      %s328 = smul.u32 4, %s24
      %p329 = scmp.lt.s32.totalorder %s23, 1
      %s330 = scalar_select %p329, %s23, 1
      %p331 = scmp.lt.s32.totalorder %s328, 3
      %s332 = scalar_select %p331, %s328, 3
      %s333 = smul.addr %s332, 2
      %s334 = smul.addr %s330, 8
      %s335 = sadd.s32 %s333, %s334
      %s336 = smul.addr %s335, 8
      %s337 = scalar_lea.vmem %s0, %s336
      %s338 = smul.u32 4, %s24
      %s339 = smul.u32 4, %s24
      %p340 = scmp.lt.s32.totalorder %s23, 1
      %s341 = scalar_select %p340, %s23, 1
      %p342 = scmp.lt.s32.totalorder %s339, 3
      %s343 = scalar_select %p342, %s339, 3
      %s344 = smul.addr %s343, 2
      %s345 = smul.addr %s341, 8
      %s346 = sadd.s32 %s344, %s345
      %s347 = smul.addr %s346, 8
      %s348 = scalar_lea.vmem %s8, %s347
      %s349 = smul.u32 4, %s24
      %v350 = vld [vmem:[%s337] sm:$0xff]
      %v351 = vld [vmem:[%s337 + $0x8] sm:$0xff]
      %v352 = vld [vmem:[%s337 + $0x10] sm:$0xff]
      %v353 = vld [vmem:[%s337 + $0x18] sm:$0xff]
      %v354 = vld [vmem:[%s337 + $0x20] sm:$0xff]
      %v355 = vld [vmem:[%s337 + $0x28] sm:$0xff]
      %v356 = vld [vmem:[%s337 + $0x30] sm:$0xff]
      %v357 = vld [vmem:[%s337 + $0x38] sm:$0xff]
      %v358 = vld [vmem:[%s2] sm:$0x1]
      %v359 = vld [vmem:[%s3] sm:$0x1]
      %vm360 = vcmask 261120
      %v361 = vsel %vm360, %v350, 0.0
      %362 = vadd.xlane.f32.xlu0 %v361
      %v363 = vpop.xlane.xlu0 %362
      %v364 = vsel %vm360, %v351, 0.0
      %365 = vadd.xlane.f32.xlu0 %v364
      %v366 = vpop.xlane.xlu0 %365
      %v367 = vsel %vm360, %v352, 0.0
      %368 = vadd.xlane.f32.xlu0 %v367
      %v369 = vpop.xlane.xlu0 %368
      %v370 = vsel %vm360, %v353, 0.0
      %371 = vadd.xlane.f32.xlu0 %v370
      %v372 = vpop.xlane.xlu0 %371
      %v373 = vsel %vm360, %v354, 0.0
      %374 = vadd.xlane.f32.xlu0 %v373
      %v375 = vpop.xlane.xlu0 %374
      %v376 = vsel %vm360, %v355, 0.0
      %377 = vadd.xlane.f32.xlu0 %v376
      %v378 = vpop.xlane.xlu0 %377
      %v379 = vsel %vm360, %v356, 0.0
      %380 = vadd.xlane.f32.xlu0 %v379
      %v381 = vpop.xlane.xlu0 %380
      %v382 = vsel %vm360, %v357, 0.0
      %383 = vadd.xlane.f32.xlu0 %v382
      %v384 = vpop.xlane.xlu0 %383
      %v385 = vrcp.pop 32.0
      %v386 = vmul.f32 %v363, %v385
      %v387 = vmul.f32 %v366, %v385
      %v388 = vmul.f32 %v369, %v385
      %v389 = vmul.f32 %v372, %v385
      %v390 = vmul.f32 %v375, %v385
      %v391 = vmul.f32 %v378, %v385
      %v392 = vmul.f32 %v381, %v385
      %v393 = vmul.f32 %v384, %v385
      %v394 = vsub.f32 %v350, %v386
      %v395 = vsub.f32 %v351, %v387
      %v396 = vsub.f32 %v352, %v388
      %v397 = vsub.f32 %v353, %v389
      %v398 = vsub.f32 %v354, %v390
      %v399 = vsub.f32 %v355, %v391
      %v400 = vsub.f32 %v356, %v392
      %v401 = vsub.f32 %v357, %v393
      %v402 = vmul.f32 %v394, %v394
      %v403 = vmul.f32 %v395, %v395
      %v404 = vmul.f32 %v396, %v396
      %v405 = vmul.f32 %v397, %v397
      %v406 = vmul.f32 %v398, %v398
      %v407 = vmul.f32 %v399, %v399
      %v408 = vmul.f32 %v400, %v400
      %v409 = vmul.f32 %v401, %v401
      %v410 = vsel %vm360, %v402, 0.0
      %411 = vadd.xlane.f32.xlu0 %v410
      %v412 = vpop.xlane.xlu0 %411
      %v413 = vsel %vm360, %v403, 0.0
      %414 = vadd.xlane.f32.xlu0 %v413
      %v415 = vpop.xlane.xlu0 %414
      %v416 = vsel %vm360, %v404, 0.0
      %417 = vadd.xlane.f32.xlu0 %v416
      %v418 = vpop.xlane.xlu0 %417
      %v419 = vsel %vm360, %v405, 0.0
      %420 = vadd.xlane.f32.xlu0 %v419
      %v421 = vpop.xlane.xlu0 %420
      %v422 = vsel %vm360, %v406, 0.0
      %423 = vadd.xlane.f32.xlu0 %v422
      %v424 = vpop.xlane.xlu0 %423
      %v425 = vsel %vm360, %v407, 0.0
      %426 = vadd.xlane.f32.xlu0 %v425
      %v427 = vpop.xlane.xlu0 %426
      %v428 = vsel %vm360, %v408, 0.0
      %429 = vadd.xlane.f32.xlu0 %v428
      %v430 = vpop.xlane.xlu0 %429
      %v431 = vsel %vm360, %v409, 0.0
      %432 = vadd.xlane.f32.xlu0 %v431
      %v433 = vpop.xlane.xlu0 %432
      %v434 = vmul.f32 %v412, %v385
      %v435 = vmul.f32 %v415, %v385
      %v436 = vmul.f32 %v418, %v385
      %v437 = vmul.f32 %v421, %v385
      %v438 = vmul.f32 %v424, %v385
      %v439 = vmul.f32 %v427, %v385
      %v440 = vmul.f32 %v430, %v385
      %v441 = vmul.f32 %v433, %v385
      %v442 = vadd.f32 %v434, 1e-05
      %v443 = vadd.f32 %v435, 1e-05
      %v444 = vadd.f32 %v436, 1e-05
      %v445 = vadd.f32 %v437, 1e-05
      %v446 = vadd.f32 %v438, 1e-05
      %v447 = vadd.f32 %v439, 1e-05
      %v448 = vadd.f32 %v440, 1e-05
      %v449 = vadd.f32 %v441, 1e-05
      %v450 = vrsqrt.pop %v442
      %v451 = vrsqrt.pop %v443
      %v452 = vrsqrt.pop %v444
      %v453 = vrsqrt.pop %v445
      %v454 = vrsqrt.pop %v446
      %v455 = vrsqrt.pop %v447
      %v456 = vrsqrt.pop %v448
      %v457 = vrsqrt.pop %v449
      %v458 = vmul.f32 %v394, %v450
      %v459 = vmul.f32 %v395, %v451
      %v460 = vmul.f32 %v396, %v452
      %v461 = vmul.f32 %v397, %v453
      %v462 = vmul.f32 %v398, %v454
      %v463 = vmul.f32 %v399, %v455
      %v464 = vmul.f32 %v400, %v456
      %v465 = vmul.f32 %v401, %v457
      %v467 = vlaneseq
      %v468 = vshrl.u32 %v467, 7
      %v469 = vsub.s32 0, %v468
      %v470 = vrot.slane %v358, %v469
      %v472 = vmul.f32 %v458, %v470
      %v473 = vmul.f32 %v459, %v470
      %v474 = vmul.f32 %v460, %v470
      %v475 = vmul.f32 %v461, %v470
      %v476 = vmul.f32 %v462, %v470
      %v477 = vmul.f32 %v463, %v470
      %v478 = vmul.f32 %v464, %v470
      %v479 = vmul.f32 %v465, %v470
      %v481 = vlaneseq
      %v482 = vshrl.u32 %v481, 7
      %v483 = vsub.s32 0, %v482
      %v484 = vrot.slane %v359, %v483
      %v486 = vadd.f32 %v472, %v484
      %v487 = vadd.f32 %v473, %v484
      %v488 = vadd.f32 %v474, %v484
      %v489 = vadd.f32 %v475, %v484
      %v490 = vadd.f32 %v476, %v484
      %v491 = vadd.f32 %v477, %v484
      %v492 = vadd.f32 %v478, %v484
      %v493 = vadd.f32 %v479, %v484
      %v494 = vld [vmem:[%s4] sm:$0xff]
      %v495 = vld [vmem:[%s4 + $0x8] sm:$0xff]
      %v496 = vld [vmem:[%s4 + $0x10] sm:$0xff]
      %v497 = vld [vmem:[%s4 + $0x18] sm:$0xff]
      %v498 = vld [vmem:[%s5] sm:$0x1]
      %v500 = vlaneseq
      %v501 = vshrl.u32 %v500, 7
      %v502 = vsub.s32 0, %v501
      %v503 = vrot.slane %v498, %v502
      %v506 = vsel %vm360, %v486, 0
      %v509 = vsel %vm360, %v487, 0
      %v512 = vsel %vm360, %v488, 0
      %v515 = vsel %vm360, %v489, 0
      %v518 = vsel %vm360, %v490, 0
      %v521 = vsel %vm360, %v491, 0
      %v524 = vsel %vm360, %v492, 0
      %v527 = vsel %vm360, %v493, 0
      %529 = vmatprep.subr.mxu0 0.0
      %530 = vmatpush1.msra.mxu0 %v494
      %531 = vmatprep.subr.mxu0 0.0
      %532 = vmatpush1.msra.mxu0 %v495
      %533 = vmatprep.subr.mxu0 0.0
      %534 = vmatpush1.msra.mxu0 %v496
      %535 = vmatprep.subr.mxu0 0.0
      %536 = vmatpush1.msra.mxu0 %v497
      %537 = vmatprep.subr.mxu0 0.0
      %538 = vmatpush1.msra.mxu0 0.0
      %539 = vmatprep.subr.mxu0 0.0
      %540 = vmatpush1.msra.mxu0 0.0
      %541 = vmatprep.subr.mxu0 0.0
      %542 = vmatpush1.msra.mxu0 0.0
      %543 = vmatprep.subr.mxu0 0.0
      %544 = vmatpush1.msra.mxu0 0.0
      %545 = vmatprep.subr.mxu0 0.0
      %546 = vmatpush1.msra.mxu0 0.0
      %547 = vmatprep.subr.mxu0 0.0
      %548 = vmatpush1.msra.mxu0 0.0
      %549 = vmatprep.subr.mxu0 0.0
      %550 = vmatpush1.msra.mxu0 0.0
      %551 = vmatprep.subr.mxu0 0.0
      %552 = vmatpush1.msra.mxu0 0.0
      %553 = vmatprep.subr.mxu0 0.0
      %554 = vmatpush1.msra.mxu0 0.0
      %555 = vmatprep.subr.mxu0 0.0
      %556 = vmatpush1.msra.mxu0 0.0
      %557 = vmatprep.subr.mxu0 0.0
      %558 = vmatpush1.msra.mxu0 0.0
      %559 = vmatprep.subr.mxu0 0.0
      %560 = vmatpush1.msra.mxu0 0.0
      %561 = vmatprep.subr.mxu0 0.0
      %562 = vmatpush1.msra.mxu0 0.0
      %563 = vmatprep.subr.mxu0 0.0
      %564 = vmatpush1.msra.mxu0 0.0
      %565 = vmatprep.subr.mxu0 0.0
      %566 = vmatpush1.msra.mxu0 0.0
      %567 = vmatprep.subr.mxu0 0.0
      %568 = vmatpush1.msra.mxu0 0.0
      %569 = vmatprep.subr.mxu0 0.0
      %570 = vmatpush1.msra.mxu0 0.0
      %571 = vmatprep.subr.mxu0 0.0
      %572 = vmatpush1.msra.mxu0 0.0
      %573 = vmatprep.subr.mxu0 0.0
      %574 = vmatpush1.msra.mxu0 0.0
      %575 = vmatprep.subr.mxu0 0.0
      %576 = vmatpush1.msra.mxu0 0.0
      %577 = vmatprep.subr.mxu0 0.0
      %578 = vmatpush1.msra.mxu0 0.0
      %579 = vmatprep.subr.mxu0 0.0
      %580 = vmatpush1.msra.mxu0 0.0
      %581 = vmatprep.subr.mxu0 0.0
      %582 = vmatpush1.msra.mxu0 0.0
      %583 = vmatprep.subr.mxu0 0.0
      %584 = vmatpush1.msra.mxu0 0.0
      %585 = vmatprep.subr.mxu0 0.0
      %586 = vmatpush1.msra.mxu0 0.0
      %587 = vmatprep.subr.mxu0 0.0
      %588 = vmatpush1.msra.mxu0 0.0
      %589 = vmatprep.subr.mxu0 0.0
      %590 = vmatpush1.msra.mxu0 0.0
      %591 = vmatprep.subr.mxu0 0.0
      %592 = vmatpush1.msra.mxu0 0.0
      %593 = vmatprep.mubr.f32.mxu0 0.0
      %594 = vmatmul.mubr.f32.gmra.mrb[0].mxu0 %v506
      %v595 = vpop.f32.mrb[0].mxu0
      %v596 = vadd.f32 %v503, %v595
      %v597 = vpop.f32.mrb[0].mxu0
      %598 = vmatprep.mubr.f32.mxu0 0.0
      %599 = vmatmul.mubr.f32.gmra.mrb[0].mxu0 %v509
      %v600 = vpop.f32.mrb[0].mxu0
      %v601 = vadd.f32 %v503, %v600
      %v602 = vpop.f32.mrb[0].mxu0
      %603 = vmatprep.mubr.f32.mxu0 0.0
      %604 = vmatmul.mubr.f32.gmra.mrb[0].mxu0 %v512
      %v605 = vpop.f32.mrb[0].mxu0
      %v606 = vadd.f32 %v503, %v605
      %v607 = vpop.f32.mrb[0].mxu0
      %608 = vmatprep.mubr.f32.mxu0 0.0
      %609 = vmatmul.mubr.f32.gmra.mrb[0].mxu0 %v515
      %v610 = vpop.f32.mrb[0].mxu0
      %v611 = vadd.f32 %v503, %v610
      %v612 = vpop.f32.mrb[0].mxu0
      %613 = vmatprep.mubr.f32.mxu0 0.0
      %614 = vmatmul.mubr.f32.gmra.mrb[0].mxu0 %v518
      %v615 = vpop.f32.mrb[0].mxu0
      %v616 = vadd.f32 %v503, %v615
      %v617 = vpop.f32.mrb[0].mxu0
      %618 = vmatprep.mubr.f32.mxu0 0.0
      %619 = vmatmul.mubr.f32.gmra.mrb[0].mxu0 %v521
      %v620 = vpop.f32.mrb[0].mxu0
      %v621 = vadd.f32 %v503, %v620
      %v622 = vpop.f32.mrb[0].mxu0
      %623 = vmatprep.mubr.f32.mxu0 0.0
      %624 = vmatmul.mubr.f32.gmra.mrb[0].mxu0 %v524
      %v625 = vpop.f32.mrb[0].mxu0
      %v626 = vadd.f32 %v503, %v625
      %v627 = vpop.f32.mrb[0].mxu0
      %628 = vmatprep.mubr.f32.mxu0 0.0
      %629 = vmatmul.mubr.f32.gmra.mrb[0].mxu0 %v527
      %v630 = vpop.f32.mrb[0].mxu0
      %v631 = vadd.f32 %v503, %v630
      %v632 = vpop.f32.mrb[0].mxu0
      %633 = vdwg.mxu0
      %v634 = vld [vmem:[%s6] sm:$0xff]
      %v635 = vld [vmem:[%s6 + $0x8] sm:$0xff]
      %v636 = vld [vmem:[%s6 + $0x10] sm:$0xff]
      %v637 = vld [vmem:[%s6 + $0x18] sm:$0xff]
      %v638 = vmul.f32 %v596, 0.35355338
      %v639 = vmul.f32 %v601, 0.35355338
      %v640 = vmul.f32 %v606, 0.35355338
      %v641 = vmul.f32 %v611, 0.35355338
      %v642 = vmul.f32 %v616, 0.35355338
      %v643 = vmul.f32 %v621, 0.35355338
      %v644 = vmul.f32 %v626, 0.35355338
      %v645 = vmul.f32 %v631, 0.35355338
      %v646 = vld [vmem:[%s1] sm:$0xff]
      %v647 = vld [vmem:[%s1 + $0x8] sm:$0xff]
      %650 = vrot.lane.b32.xlu0 %v596, 96
      %v651 = vpop.permute.xlu0 %650
      %652 = vrot.lane.b32.xlu0 %v601, 96
      %v653 = vpop.permute.xlu0 %652
      %vm654 = vcmask 64512
      %v656 = vsel %vm654, %v638, 0
      %v659 = vsel %vm654, %v639, 0
      %v661 = vsel %vm654, %v651, 0
      %v663 = vsel %vm654, %v653, 0
      %665 = vmatprep.subr.mxu0 0.0
      %666 = vmatpush1.xpose.msra.mxu0 %v661
      %667 = vmatprep.subr.mxu0 0.0
      %668 = vmatpush1.xpose.msra.mxu0 %v663
      %669 = vmatprep.subr.mxu0 0.0
      %670 = vmatpush1.xpose.msra.mxu0 0.0
      %671 = vmatprep.subr.mxu0 0.0
      %672 = vmatpush1.xpose.msra.mxu0 0.0
      %673 = vmatprep.subr.mxu0 0.0
      %674 = vmatpush1.xpose.msra.mxu0 0.0
      %675 = vmatprep.subr.mxu0 0.0
      %676 = vmatpush1.xpose.msra.mxu0 0.0
      %677 = vmatprep.subr.mxu0 0.0
      %678 = vmatpush1.xpose.msra.mxu0 0.0
      %679 = vmatprep.subr.mxu0 0.0
      %680 = vmatpush1.xpose.msra.mxu0 0.0
      %681 = vmatprep.subr.mxu0 0.0
      %682 = vmatpush1.xpose.msra.mxu0 0.0
      %683 = vmatprep.subr.mxu0 0.0
      %684 = vmatpush1.xpose.msra.mxu0 0.0
      %685 = vmatprep.subr.mxu0 0.0
      %686 = vmatpush1.xpose.msra.mxu0 0.0
      %687 = vmatprep.subr.mxu0 0.0
      %688 = vmatpush1.xpose.msra.mxu0 0.0
      %689 = vmatprep.subr.mxu0 0.0
      %690 = vmatpush1.xpose.msra.mxu0 0.0
      %691 = vmatprep.subr.mxu0 0.0
      %692 = vmatpush1.xpose.msra.mxu0 0.0
      %693 = vmatprep.subr.mxu0 0.0
      %694 = vmatpush1.xpose.msra.mxu0 0.0
      %695 = vmatprep.subr.mxu0 0.0
      %696 = vmatpush1.xpose.msra.mxu0 0.0
      %697 = vmatprep.subr.mxu0 0.0
      %698 = vmatpush1.xpose.msra.mxu0 0.0
      %699 = vmatprep.subr.mxu0 0.0
      %700 = vmatpush1.xpose.msra.mxu0 0.0
      %701 = vmatprep.subr.mxu0 0.0
      %702 = vmatpush1.xpose.msra.mxu0 0.0
      %703 = vmatprep.subr.mxu0 0.0
      %704 = vmatpush1.xpose.msra.mxu0 0.0
      %705 = vmatprep.subr.mxu0 0.0
      %706 = vmatpush1.xpose.msra.mxu0 0.0
      %707 = vmatprep.subr.mxu0 0.0
      %708 = vmatpush1.xpose.msra.mxu0 0.0
      %709 = vmatprep.subr.mxu0 0.0
      %710 = vmatpush1.xpose.msra.mxu0 0.0
      %711 = vmatprep.subr.mxu0 0.0
      %712 = vmatpush1.xpose.msra.mxu0 0.0
      %713 = vmatprep.subr.mxu0 0.0
      %714 = vmatpush1.xpose.msra.mxu0 0.0
      %715 = vmatprep.subr.mxu0 0.0
      %716 = vmatpush1.xpose.msra.mxu0 0.0
      %717 = vmatprep.subr.mxu0 0.0
      %718 = vmatpush1.xpose.msra.mxu0 0.0
      %719 = vmatprep.subr.mxu0 0.0
      %720 = vmatpush1.xpose.msra.mxu0 0.0
      %721 = vmatprep.subr.mxu0 0.0
      %722 = vmatpush1.xpose.msra.mxu0 0.0
      %723 = vmatprep.subr.mxu0 0.0
      %724 = vmatpush1.xpose.msra.mxu0 0.0
      %725 = vmatprep.subr.mxu0 0.0
      %726 = vmatpush1.xpose.msra.mxu0 0.0
      %727 = vmatprep.subr.mxu0 0.0
      %728 = vmatpush1.xpose.msra.mxu0 0.0
      %729 = vmatprep.mubr.f32.mxu0 0.0
      %730 = vmatmul.mubr.f32.gmra.mrb[0].mxu0 %v656
      %v731 = vpop.f32.mrb[0].mxu0
      %v732 = vadd.f32 %v646, %v731
      %v733 = vpop.f32.mrb[0].mxu0
      %734 = vmatprep.mubr.f32.mxu0 0.0
      %735 = vmatmul.mubr.f32.gmra.mrb[0].mxu0 %v659
      %v736 = vpop.f32.mrb[0].mxu0
      %v737 = vadd.f32 %v647, %v736
      %v738 = vpop.f32.mrb[0].mxu0
      %739 = vdwg.mxu0
      %742 = vrot.lane.b32.xlu0 %v606, 96
      %v743 = vpop.permute.xlu0 %742
      %744 = vrot.lane.b32.xlu0 %v611, 96
      %v745 = vpop.permute.xlu0 %744
      %v747 = vsel %vm654, %v640, 0
      %v750 = vsel %vm654, %v641, 0
      %v752 = vsel %vm654, %v743, 0
      %v754 = vsel %vm654, %v745, 0
      %756 = vmatprep.subr.mxu0 0.0
      %757 = vmatpush1.xpose.msra.mxu0 %v752
      %758 = vmatprep.subr.mxu0 0.0
      %759 = vmatpush1.xpose.msra.mxu0 %v754
      %760 = vmatprep.subr.mxu0 0.0
      %761 = vmatpush1.xpose.msra.mxu0 0.0
      %762 = vmatprep.subr.mxu0 0.0
      %763 = vmatpush1.xpose.msra.mxu0 0.0
      %764 = vmatprep.subr.mxu0 0.0
      %765 = vmatpush1.xpose.msra.mxu0 0.0
      %766 = vmatprep.subr.mxu0 0.0
      %767 = vmatpush1.xpose.msra.mxu0 0.0
      %768 = vmatprep.subr.mxu0 0.0
      %769 = vmatpush1.xpose.msra.mxu0 0.0
      %770 = vmatprep.subr.mxu0 0.0
      %771 = vmatpush1.xpose.msra.mxu0 0.0
      %772 = vmatprep.subr.mxu0 0.0
      %773 = vmatpush1.xpose.msra.mxu0 0.0
      %774 = vmatprep.subr.mxu0 0.0
      %775 = vmatpush1.xpose.msra.mxu0 0.0
      %776 = vmatprep.subr.mxu0 0.0
      %777 = vmatpush1.xpose.msra.mxu0 0.0
      %778 = vmatprep.subr.mxu0 0.0
      %779 = vmatpush1.xpose.msra.mxu0 0.0
      %780 = vmatprep.subr.mxu0 0.0
      %781 = vmatpush1.xpose.msra.mxu0 0.0
      %782 = vmatprep.subr.mxu0 0.0
      %783 = vmatpush1.xpose.msra.mxu0 0.0
      %784 = vmatprep.subr.mxu0 0.0
      %785 = vmatpush1.xpose.msra.mxu0 0.0
      %786 = vmatprep.subr.mxu0 0.0
      %787 = vmatpush1.xpose.msra.mxu0 0.0
      %788 = vmatprep.subr.mxu0 0.0
      %789 = vmatpush1.xpose.msra.mxu0 0.0
      %790 = vmatprep.subr.mxu0 0.0
      %791 = vmatpush1.xpose.msra.mxu0 0.0
      %792 = vmatprep.subr.mxu0 0.0
      %793 = vmatpush1.xpose.msra.mxu0 0.0
      %794 = vmatprep.subr.mxu0 0.0
      %795 = vmatpush1.xpose.msra.mxu0 0.0
      %796 = vmatprep.subr.mxu0 0.0
      %797 = vmatpush1.xpose.msra.mxu0 0.0
      %798 = vmatprep.subr.mxu0 0.0
      %799 = vmatpush1.xpose.msra.mxu0 0.0
      %800 = vmatprep.subr.mxu0 0.0
      %801 = vmatpush1.xpose.msra.mxu0 0.0
      %802 = vmatprep.subr.mxu0 0.0
      %803 = vmatpush1.xpose.msra.mxu0 0.0
      %804 = vmatprep.subr.mxu0 0.0
      %805 = vmatpush1.xpose.msra.mxu0 0.0
      %806 = vmatprep.subr.mxu0 0.0
      %807 = vmatpush1.xpose.msra.mxu0 0.0
      %808 = vmatprep.subr.mxu0 0.0
      %809 = vmatpush1.xpose.msra.mxu0 0.0
      %810 = vmatprep.subr.mxu0 0.0
      %811 = vmatpush1.xpose.msra.mxu0 0.0
      %812 = vmatprep.subr.mxu0 0.0
      %813 = vmatpush1.xpose.msra.mxu0 0.0
      %814 = vmatprep.subr.mxu0 0.0
      %815 = vmatpush1.xpose.msra.mxu0 0.0
      %816 = vmatprep.subr.mxu0 0.0
      %817 = vmatpush1.xpose.msra.mxu0 0.0
      %818 = vmatprep.subr.mxu0 0.0
      %819 = vmatpush1.xpose.msra.mxu0 0.0
      %820 = vmatprep.mubr.f32.mxu0 0.0
      %821 = vmatmul.mubr.f32.gmra.mrb[0].mxu0 %v747
      %v822 = vpop.f32.mrb[0].mxu0
      %v823 = vadd.f32 %v646, %v822
      %v824 = vpop.f32.mrb[0].mxu0
      %825 = vmatprep.mubr.f32.mxu0 0.0
      %826 = vmatmul.mubr.f32.gmra.mrb[0].mxu0 %v750
      %v827 = vpop.f32.mrb[0].mxu0
      %v828 = vadd.f32 %v647, %v827
      %v829 = vpop.f32.mrb[0].mxu0
      %830 = vdwg.mxu0
      %833 = vrot.lane.b32.xlu0 %v616, 96
      %v834 = vpop.permute.xlu0 %833
      %835 = vrot.lane.b32.xlu0 %v621, 96
      %v836 = vpop.permute.xlu0 %835
      %v838 = vsel %vm654, %v642, 0
      %v841 = vsel %vm654, %v643, 0
      %v843 = vsel %vm654, %v834, 0
      %v845 = vsel %vm654, %v836, 0
      %847 = vmatprep.subr.mxu0 0.0
      %848 = vmatpush1.xpose.msra.mxu0 %v843
      %849 = vmatprep.subr.mxu0 0.0
      %850 = vmatpush1.xpose.msra.mxu0 %v845
      %851 = vmatprep.subr.mxu0 0.0
      %852 = vmatpush1.xpose.msra.mxu0 0.0
      %853 = vmatprep.subr.mxu0 0.0
      %854 = vmatpush1.xpose.msra.mxu0 0.0
      %855 = vmatprep.subr.mxu0 0.0
      %856 = vmatpush1.xpose.msra.mxu0 0.0
      %857 = vmatprep.subr.mxu0 0.0
      %858 = vmatpush1.xpose.msra.mxu0 0.0
      %859 = vmatprep.subr.mxu0 0.0
      %860 = vmatpush1.xpose.msra.mxu0 0.0
      %861 = vmatprep.subr.mxu0 0.0
      %862 = vmatpush1.xpose.msra.mxu0 0.0
      %863 = vmatprep.subr.mxu0 0.0
      %864 = vmatpush1.xpose.msra.mxu0 0.0
      %865 = vmatprep.subr.mxu0 0.0
      %866 = vmatpush1.xpose.msra.mxu0 0.0
      %867 = vmatprep.subr.mxu0 0.0
      %868 = vmatpush1.xpose.msra.mxu0 0.0
      %869 = vmatprep.subr.mxu0 0.0
      %870 = vmatpush1.xpose.msra.mxu0 0.0
      %871 = vmatprep.subr.mxu0 0.0
      %872 = vmatpush1.xpose.msra.mxu0 0.0
      %873 = vmatprep.subr.mxu0 0.0
      %874 = vmatpush1.xpose.msra.mxu0 0.0
      %875 = vmatprep.subr.mxu0 0.0
      %876 = vmatpush1.xpose.msra.mxu0 0.0
      %877 = vmatprep.subr.mxu0 0.0
      %878 = vmatpush1.xpose.msra.mxu0 0.0
      %879 = vmatprep.subr.mxu0 0.0
      %880 = vmatpush1.xpose.msra.mxu0 0.0
      %881 = vmatprep.subr.mxu0 0.0
      %882 = vmatpush1.xpose.msra.mxu0 0.0
      %883 = vmatprep.subr.mxu0 0.0
      %884 = vmatpush1.xpose.msra.mxu0 0.0
      %885 = vmatprep.subr.mxu0 0.0
      %886 = vmatpush1.xpose.msra.mxu0 0.0
      %887 = vmatprep.subr.mxu0 0.0
      %888 = vmatpush1.xpose.msra.mxu0 0.0
      %889 = vmatprep.subr.mxu0 0.0
      %890 = vmatpush1.xpose.msra.mxu0 0.0
      %891 = vmatprep.subr.mxu0 0.0
      %892 = vmatpush1.xpose.msra.mxu0 0.0
      %893 = vmatprep.subr.mxu0 0.0
      %894 = vmatpush1.xpose.msra.mxu0 0.0
      %895 = vmatprep.subr.mxu0 0.0
      %896 = vmatpush1.xpose.msra.mxu0 0.0
      %897 = vmatprep.subr.mxu0 0.0
      %898 = vmatpush1.xpose.msra.mxu0 0.0
      %899 = vmatprep.subr.mxu0 0.0
      %900 = vmatpush1.xpose.msra.mxu0 0.0
      %901 = vmatprep.subr.mxu0 0.0
      %902 = vmatpush1.xpose.msra.mxu0 0.0
      %903 = vmatprep.subr.mxu0 0.0
      %904 = vmatpush1.xpose.msra.mxu0 0.0
      %905 = vmatprep.subr.mxu0 0.0
      %906 = vmatpush1.xpose.msra.mxu0 0.0
      %907 = vmatprep.subr.mxu0 0.0
      %908 = vmatpush1.xpose.msra.mxu0 0.0
      %909 = vmatprep.subr.mxu0 0.0
      %910 = vmatpush1.xpose.msra.mxu0 0.0
      %911 = vmatprep.mubr.f32.mxu0 0.0
      %912 = vmatmul.mubr.f32.gmra.mrb[0].mxu0 %v838
      %v913 = vpop.f32.mrb[0].mxu0
      %v914 = vadd.f32 %v646, %v913
      %v915 = vpop.f32.mrb[0].mxu0
      %916 = vmatprep.mubr.f32.mxu0 0.0
      %917 = vmatmul.mubr.f32.gmra.mrb[0].mxu0 %v841
      %v918 = vpop.f32.mrb[0].mxu0
      %v919 = vadd.f32 %v647, %v918
      %v920 = vpop.f32.mrb[0].mxu0
      %921 = vdwg.mxu0
      %924 = vrot.lane.b32.xlu0 %v626, 96
      %v925 = vpop.permute.xlu0 %924
      %926 = vrot.lane.b32.xlu0 %v631, 96
      %v927 = vpop.permute.xlu0 %926
      %v929 = vsel %vm654, %v644, 0
      %v932 = vsel %vm654, %v645, 0
      %v934 = vsel %vm654, %v925, 0
      %v936 = vsel %vm654, %v927, 0
      %938 = vmatprep.subr.mxu0 0.0
      %939 = vmatpush1.xpose.msra.mxu0 %v934
      %940 = vmatprep.subr.mxu0 0.0
      %941 = vmatpush1.xpose.msra.mxu0 %v936
      %942 = vmatprep.subr.mxu0 0.0
      %943 = vmatpush1.xpose.msra.mxu0 0.0
      %944 = vmatprep.subr.mxu0 0.0
      %945 = vmatpush1.xpose.msra.mxu0 0.0
      %946 = vmatprep.subr.mxu0 0.0
      %947 = vmatpush1.xpose.msra.mxu0 0.0
      %948 = vmatprep.subr.mxu0 0.0
      %949 = vmatpush1.xpose.msra.mxu0 0.0
      %950 = vmatprep.subr.mxu0 0.0
      %951 = vmatpush1.xpose.msra.mxu0 0.0
      %952 = vmatprep.subr.mxu0 0.0
      %953 = vmatpush1.xpose.msra.mxu0 0.0
      %954 = vmatprep.subr.mxu0 0.0
      %955 = vmatpush1.xpose.msra.mxu0 0.0
      %956 = vmatprep.subr.mxu0 0.0
      %957 = vmatpush1.xpose.msra.mxu0 0.0
      %958 = vmatprep.subr.mxu0 0.0
      %959 = vmatpush1.xpose.msra.mxu0 0.0
      %960 = vmatprep.subr.mxu0 0.0
      %961 = vmatpush1.xpose.msra.mxu0 0.0
      %962 = vmatprep.subr.mxu0 0.0
      %963 = vmatpush1.xpose.msra.mxu0 0.0
      %964 = vmatprep.subr.mxu0 0.0
      %965 = vmatpush1.xpose.msra.mxu0 0.0
      %966 = vmatprep.subr.mxu0 0.0
      %967 = vmatpush1.xpose.msra.mxu0 0.0
      %968 = vmatprep.subr.mxu0 0.0
      %969 = vmatpush1.xpose.msra.mxu0 0.0
      %970 = vmatprep.subr.mxu0 0.0
      %971 = vmatpush1.xpose.msra.mxu0 0.0
      %972 = vmatprep.subr.mxu0 0.0
      %973 = vmatpush1.xpose.msra.mxu0 0.0
      %974 = vmatprep.subr.mxu0 0.0
      %975 = vmatpush1.xpose.msra.mxu0 0.0
      %976 = vmatprep.subr.mxu0 0.0
      %977 = vmatpush1.xpose.msra.mxu0 0.0
      %978 = vmatprep.subr.mxu0 0.0
      %979 = vmatpush1.xpose.msra.mxu0 0.0
      %980 = vmatprep.subr.mxu0 0.0
      %981 = vmatpush1.xpose.msra.mxu0 0.0
      %982 = vmatprep.subr.mxu0 0.0
      %983 = vmatpush1.xpose.msra.mxu0 0.0
      %984 = vmatprep.subr.mxu0 0.0
      %985 = vmatpush1.xpose.msra.mxu0 0.0
      %986 = vmatprep.subr.mxu0 0.0
      %987 = vmatpush1.xpose.msra.mxu0 0.0
      %988 = vmatprep.subr.mxu0 0.0
      %989 = vmatpush1.xpose.msra.mxu0 0.0
      %990 = vmatprep.subr.mxu0 0.0
      %991 = vmatpush1.xpose.msra.mxu0 0.0
      %992 = vmatprep.subr.mxu0 0.0
      %993 = vmatpush1.xpose.msra.mxu0 0.0
      %994 = vmatprep.subr.mxu0 0.0
      %995 = vmatpush1.xpose.msra.mxu0 0.0
      %996 = vmatprep.subr.mxu0 0.0
      %997 = vmatpush1.xpose.msra.mxu0 0.0
      %998 = vmatprep.subr.mxu0 0.0
      %999 = vmatpush1.xpose.msra.mxu0 0.0
      %1000 = vmatprep.subr.mxu0 0.0
      %1001 = vmatpush1.xpose.msra.mxu0 0.0
      %1002 = vmatprep.mubr.f32.mxu0 0.0
      %1003 = vmatmul.mubr.f32.gmra.mrb[0].mxu0 %v929
      %v1004 = vpop.f32.mrb[0].mxu0
      %v1005 = vadd.f32 %v646, %v1004
      %v1006 = vpop.f32.mrb[0].mxu0
      %1007 = vmatprep.mubr.f32.mxu0 0.0
      %1008 = vmatmul.mubr.f32.gmra.mrb[0].mxu0 %v932
      %v1009 = vpop.f32.mrb[0].mxu0
      %v1010 = vadd.f32 %v647, %v1009
      %v1011 = vpop.f32.mrb[0].mxu0
      %1012 = vdwg.mxu0
      %vm1013 = vcmask 130048
      %v1014 = vsel %vm1013, %v732, -inf
      %1015 = vmax.xlane.f32.xlu0 %v1014
      %v1016 = vpop.xlane.xlu0 %1015
      %v1017 = vsel %vm1013, %v737, -inf
      %1018 = vmax.xlane.f32.xlu0 %v1017
      %v1019 = vpop.xlane.xlu0 %1018
      %v1020 = vsel %vm1013, %v823, -inf
      %1021 = vmax.xlane.f32.xlu0 %v1020
      %v1022 = vpop.xlane.xlu0 %1021
      %v1023 = vsel %vm1013, %v828, -inf
      %1024 = vmax.xlane.f32.xlu0 %v1023
      %v1025 = vpop.xlane.xlu0 %1024
      %v1026 = vsel %vm1013, %v914, -inf
      %1027 = vmax.xlane.f32.xlu0 %v1026
      %v1028 = vpop.xlane.xlu0 %1027
      %v1029 = vsel %vm1013, %v919, -inf
      %1030 = vmax.xlane.f32.xlu0 %v1029
      %v1031 = vpop.xlane.xlu0 %1030
      %v1032 = vsel %vm1013, %v1005, -inf
      %1033 = vmax.xlane.f32.xlu0 %v1032
      %v1034 = vpop.xlane.xlu0 %1033
      %v1035 = vsel %vm1013, %v1010, -inf
      %1036 = vmax.xlane.f32.xlu0 %v1035
      %v1037 = vpop.xlane.xlu0 %1036
      %v1038 = vsub.f32 %v732, %v1016
      %v1039 = vsub.f32 %v737, %v1019
      %v1040 = vsub.f32 %v823, %v1022
      %v1041 = vsub.f32 %v828, %v1025
      %v1042 = vsub.f32 %v914, %v1028
      %v1043 = vsub.f32 %v919, %v1031
      %v1044 = vsub.f32 %v1005, %v1034
      %v1045 = vsub.f32 %v1010, %v1037
      %v1046 = vmul.f32 %v1038, 1.442695
      %v1047 = vpow.pop %v1046
      %v1048 = vmul.f32 %v1039, 1.442695
      %v1049 = vpow.pop %v1048
      %v1050 = vmul.f32 %v1040, 1.442695
      %v1051 = vpow.pop %v1050
      %v1052 = vmul.f32 %v1041, 1.442695
      %v1053 = vpow.pop %v1052
      %v1054 = vmul.f32 %v1042, 1.442695
      %v1055 = vpow.pop %v1054
      %v1056 = vmul.f32 %v1043, 1.442695
      %v1057 = vpow.pop %v1056
      %v1058 = vmul.f32 %v1044, 1.442695
      %v1059 = vpow.pop %v1058
      %v1060 = vmul.f32 %v1045, 1.442695
      %v1061 = vpow.pop %v1060
      %v1062 = vsel %vm1013, %v1047, 0.0
      %1063 = vadd.xlane.f32.xlu0 %v1062
      %v1064 = vpop.xlane.xlu0 %1063
      %v1065 = vsel %vm1013, %v1049, 0.0
      %1066 = vadd.xlane.f32.xlu0 %v1065
      %v1067 = vpop.xlane.xlu0 %1066
      %v1068 = vsel %vm1013, %v1051, 0.0
      %1069 = vadd.xlane.f32.xlu0 %v1068
      %v1070 = vpop.xlane.xlu0 %1069
      %v1071 = vsel %vm1013, %v1053, 0.0
      %1072 = vadd.xlane.f32.xlu0 %v1071
      %v1073 = vpop.xlane.xlu0 %1072
      %v1074 = vsel %vm1013, %v1055, 0.0
      %1075 = vadd.xlane.f32.xlu0 %v1074
      %v1076 = vpop.xlane.xlu0 %1075
      %v1077 = vsel %vm1013, %v1057, 0.0
      %1078 = vadd.xlane.f32.xlu0 %v1077
      %v1079 = vpop.xlane.xlu0 %1078
      %v1080 = vsel %vm1013, %v1059, 0.0
      %1081 = vadd.xlane.f32.xlu0 %v1080
      %v1082 = vpop.xlane.xlu0 %1081
      %v1083 = vsel %vm1013, %v1061, 0.0
      %1084 = vadd.xlane.f32.xlu0 %v1083
      %v1085 = vpop.xlane.xlu0 %1084
      %v1086 = vrcp.pop %v1064
      %v1087 = vmul.f32 %v1047, %v1086
      %v1088 = vrcp.pop %v1067
      %v1089 = vmul.f32 %v1049, %v1088
      %v1090 = vrcp.pop %v1070
      %v1091 = vmul.f32 %v1051, %v1090
      %v1092 = vrcp.pop %v1073
      %v1093 = vmul.f32 %v1053, %v1092
      %v1094 = vrcp.pop %v1076
      %v1095 = vmul.f32 %v1055, %v1094
      %v1096 = vrcp.pop %v1079
      %v1097 = vmul.f32 %v1057, %v1096
      %v1098 = vrcp.pop %v1082
      %v1099 = vmul.f32 %v1059, %v1098
      %v1100 = vrcp.pop %v1085
      %v1101 = vmul.f32 %v1061, %v1100
      %1102 = vrot.lane.b32.xlu0 %v596, 64
      %v1103 = vpop.permute.xlu0 %1102
      %1104 = vrot.lane.b32.xlu0 %v601, 64
      %v1105 = vpop.permute.xlu0 %1104
      %v1109 = vsel %vm1013, %v1087, 0
      %v1112 = vsel %vm1013, %v1089, 0
      %1114 = vmatprep.subr.mxu0 0.0
      %1115 = vmatpush1.msra.mxu0 %v1103
      %1116 = vmatprep.subr.mxu0 0.0
      %1117 = vmatpush1.msra.mxu0 %v1105
      %1118 = vmatprep.subr.mxu0 0.0
      %1119 = vmatpush1.msra.mxu0 0.0
      %1120 = vmatprep.subr.mxu0 0.0
      %1121 = vmatpush1.msra.mxu0 0.0
      %1122 = vmatprep.subr.mxu0 0.0
      %1123 = vmatpush1.msra.mxu0 0.0
      %1124 = vmatprep.subr.mxu0 0.0
      %1125 = vmatpush1.msra.mxu0 0.0
      %1126 = vmatprep.subr.mxu0 0.0
      %1127 = vmatpush1.msra.mxu0 0.0
      %1128 = vmatprep.subr.mxu0 0.0
      %1129 = vmatpush1.msra.mxu0 0.0
      %1130 = vmatprep.subr.mxu0 0.0
      %1131 = vmatpush1.msra.mxu0 0.0
      %1132 = vmatprep.subr.mxu0 0.0
      %1133 = vmatpush1.msra.mxu0 0.0
      %1134 = vmatprep.subr.mxu0 0.0
      %1135 = vmatpush1.msra.mxu0 0.0
      %1136 = vmatprep.subr.mxu0 0.0
      %1137 = vmatpush1.msra.mxu0 0.0
      %1138 = vmatprep.subr.mxu0 0.0
      %1139 = vmatpush1.msra.mxu0 0.0
      %1140 = vmatprep.subr.mxu0 0.0
      %1141 = vmatpush1.msra.mxu0 0.0
      %1142 = vmatprep.subr.mxu0 0.0
      %1143 = vmatpush1.msra.mxu0 0.0
      %1144 = vmatprep.subr.mxu0 0.0
      %1145 = vmatpush1.msra.mxu0 0.0
      %1146 = vmatprep.subr.mxu0 0.0
      %1147 = vmatpush1.msra.mxu0 0.0
      %1148 = vmatprep.subr.mxu0 0.0
      %1149 = vmatpush1.msra.mxu0 0.0
      %1150 = vmatprep.subr.mxu0 0.0
      %1151 = vmatpush1.msra.mxu0 0.0
      %1152 = vmatprep.subr.mxu0 0.0
      %1153 = vmatpush1.msra.mxu0 0.0
      %1154 = vmatprep.subr.mxu0 0.0
      %1155 = vmatpush1.msra.mxu0 0.0
      %1156 = vmatprep.subr.mxu0 0.0
      %1157 = vmatpush1.msra.mxu0 0.0
      %1158 = vmatprep.subr.mxu0 0.0
      %1159 = vmatpush1.msra.mxu0 0.0
      %1160 = vmatprep.subr.mxu0 0.0
      %1161 = vmatpush1.msra.mxu0 0.0
      %1162 = vmatprep.subr.mxu0 0.0
      %1163 = vmatpush1.msra.mxu0 0.0
      %1164 = vmatprep.subr.mxu0 0.0
      %1165 = vmatpush1.msra.mxu0 0.0
      %1166 = vmatprep.subr.mxu0 0.0
      %1167 = vmatpush1.msra.mxu0 0.0
      %1168 = vmatprep.subr.mxu0 0.0
      %1169 = vmatpush1.msra.mxu0 0.0
      %1170 = vmatprep.subr.mxu0 0.0
      %1171 = vmatpush1.msra.mxu0 0.0
      %1172 = vmatprep.subr.mxu0 0.0
      %1173 = vmatpush1.msra.mxu0 0.0
      %1174 = vmatprep.subr.mxu0 0.0
      %1175 = vmatpush1.msra.mxu0 0.0
      %1176 = vmatprep.subr.mxu0 0.0
      %1177 = vmatpush1.msra.mxu0 0.0
      %1178 = vmatprep.mubr.f32.mxu0 0.0
      %1179 = vmatmul.mubr.f32.gmra.mrb[0].mxu0 %v1109
      %v1180 = vpop.f32.mrb[0].mxu0
      %v1181 = vadd.f32 0.0, %v1180
      %v1182 = vpop.f32.mrb[0].mxu0
      %1183 = vmatprep.mubr.f32.mxu0 0.0
      %1184 = vmatmul.mubr.f32.gmra.mrb[0].mxu0 %v1112
      %v1185 = vpop.f32.mrb[0].mxu0
      %v1186 = vadd.f32 0.0, %v1185
      %v1187 = vpop.f32.mrb[0].mxu0
      %1188 = vdwg.mxu0
      %1189 = vrot.lane.b32.xlu0 %v606, 64
      %v1190 = vpop.permute.xlu0 %1189
      %1191 = vrot.lane.b32.xlu0 %v611, 64
      %v1192 = vpop.permute.xlu0 %1191
      %v1196 = vsel %vm1013, %v1091, 0
      %v1199 = vsel %vm1013, %v1093, 0
      %1201 = vmatprep.subr.mxu0 0.0
      %1202 = vmatpush1.msra.mxu0 %v1190
      %1203 = vmatprep.subr.mxu0 0.0
      %1204 = vmatpush1.msra.mxu0 %v1192
      %1205 = vmatprep.subr.mxu0 0.0
      %1206 = vmatpush1.msra.mxu0 0.0
      %1207 = vmatprep.subr.mxu0 0.0
      %1208 = vmatpush1.msra.mxu0 0.0
      %1209 = vmatprep.subr.mxu0 0.0
      %1210 = vmatpush1.msra.mxu0 0.0
      %1211 = vmatprep.subr.mxu0 0.0
      %1212 = vmatpush1.msra.mxu0 0.0
      %1213 = vmatprep.subr.mxu0 0.0
      %1214 = vmatpush1.msra.mxu0 0.0
      %1215 = vmatprep.subr.mxu0 0.0
      %1216 = vmatpush1.msra.mxu0 0.0
      %1217 = vmatprep.subr.mxu0 0.0
      %1218 = vmatpush1.msra.mxu0 0.0
      %1219 = vmatprep.subr.mxu0 0.0
      %1220 = vmatpush1.msra.mxu0 0.0
      %1221 = vmatprep.subr.mxu0 0.0
      %1222 = vmatpush1.msra.mxu0 0.0
      %1223 = vmatprep.subr.mxu0 0.0
      %1224 = vmatpush1.msra.mxu0 0.0
      %1225 = vmatprep.subr.mxu0 0.0
      %1226 = vmatpush1.msra.mxu0 0.0
      %1227 = vmatprep.subr.mxu0 0.0
      %1228 = vmatpush1.msra.mxu0 0.0
      %1229 = vmatprep.subr.mxu0 0.0
      %1230 = vmatpush1.msra.mxu0 0.0
      %1231 = vmatprep.subr.mxu0 0.0
      %1232 = vmatpush1.msra.mxu0 0.0
      %1233 = vmatprep.subr.mxu0 0.0
      %1234 = vmatpush1.msra.mxu0 0.0
      %1235 = vmatprep.subr.mxu0 0.0
      %1236 = vmatpush1.msra.mxu0 0.0
      %1237 = vmatprep.subr.mxu0 0.0
      %1238 = vmatpush1.msra.mxu0 0.0
      %1239 = vmatprep.subr.mxu0 0.0
      %1240 = vmatpush1.msra.mxu0 0.0
      %1241 = vmatprep.subr.mxu0 0.0
      %1242 = vmatpush1.msra.mxu0 0.0
      %1243 = vmatprep.subr.mxu0 0.0
      %1244 = vmatpush1.msra.mxu0 0.0
      %1245 = vmatprep.subr.mxu0 0.0
      %1246 = vmatpush1.msra.mxu0 0.0
      %1247 = vmatprep.subr.mxu0 0.0
      %1248 = vmatpush1.msra.mxu0 0.0
      %1249 = vmatprep.subr.mxu0 0.0
      %1250 = vmatpush1.msra.mxu0 0.0
      %1251 = vmatprep.subr.mxu0 0.0
      %1252 = vmatpush1.msra.mxu0 0.0
      %1253 = vmatprep.subr.mxu0 0.0
      %1254 = vmatpush1.msra.mxu0 0.0
      %1255 = vmatprep.subr.mxu0 0.0
      %1256 = vmatpush1.msra.mxu0 0.0
      %1257 = vmatprep.subr.mxu0 0.0
      %1258 = vmatpush1.msra.mxu0 0.0
      %1259 = vmatprep.subr.mxu0 0.0
      %1260 = vmatpush1.msra.mxu0 0.0
      %1261 = vmatprep.subr.mxu0 0.0
      %1262 = vmatpush1.msra.mxu0 0.0
      %1263 = vmatprep.subr.mxu0 0.0
      %1264 = vmatpush1.msra.mxu0 0.0
      %1265 = vmatprep.mubr.f32.mxu0 0.0
      %1266 = vmatmul.mubr.f32.gmra.mrb[0].mxu0 %v1196
      %v1267 = vpop.f32.mrb[0].mxu0
      %v1268 = vadd.f32 0.0, %v1267
      %v1269 = vpop.f32.mrb[0].mxu0
      %1270 = vmatprep.mubr.f32.mxu0 0.0
      %1271 = vmatmul.mubr.f32.gmra.mrb[0].mxu0 %v1199
      %v1272 = vpop.f32.mrb[0].mxu0
      %v1273 = vadd.f32 0.0, %v1272
      %v1274 = vpop.f32.mrb[0].mxu0
      %1275 = vdwg.mxu0
      %1276 = vrot.lane.b32.xlu0 %v616, 64
      %v1277 = vpop.permute.xlu0 %1276
      %1278 = vrot.lane.b32.xlu0 %v621, 64
      %v1279 = vpop.permute.xlu0 %1278
      %v1283 = vsel %vm1013, %v1095, 0
      %v1286 = vsel %vm1013, %v1097, 0
      %1288 = vmatprep.subr.mxu0 0.0
      %1289 = vmatpush1.msra.mxu0 %v1277
      %1290 = vmatprep.subr.mxu0 0.0
      %1291 = vmatpush1.msra.mxu0 %v1279
      %1292 = vmatprep.subr.mxu0 0.0
      %1293 = vmatpush1.msra.mxu0 0.0
      %1294 = vmatprep.subr.mxu0 0.0
      %1295 = vmatpush1.msra.mxu0 0.0
      %1296 = vmatprep.subr.mxu0 0.0
      %1297 = vmatpush1.msra.mxu0 0.0
      %1298 = vmatprep.subr.mxu0 0.0
      %1299 = vmatpush1.msra.mxu0 0.0
      %1300 = vmatprep.subr.mxu0 0.0
      %1301 = vmatpush1.msra.mxu0 0.0
      %1302 = vmatprep.subr.mxu0 0.0
      %1303 = vmatpush1.msra.mxu0 0.0
      %1304 = vmatprep.subr.mxu0 0.0
      %1305 = vmatpush1.msra.mxu0 0.0
      %1306 = vmatprep.subr.mxu0 0.0
      %1307 = vmatpush1.msra.mxu0 0.0
      %1308 = vmatprep.subr.mxu0 0.0
      %1309 = vmatpush1.msra.mxu0 0.0
      %1310 = vmatprep.subr.mxu0 0.0
      %1311 = vmatpush1.msra.mxu0 0.0
      %1312 = vmatprep.subr.mxu0 0.0
      %1313 = vmatpush1.msra.mxu0 0.0
      %1314 = vmatprep.subr.mxu0 0.0
      %1315 = vmatpush1.msra.mxu0 0.0
      %1316 = vmatprep.subr.mxu0 0.0
      %1317 = vmatpush1.msra.mxu0 0.0
      %1318 = vmatprep.subr.mxu0 0.0
      %1319 = vmatpush1.msra.mxu0 0.0
      %1320 = vmatprep.subr.mxu0 0.0
      %1321 = vmatpush1.msra.mxu0 0.0
      %1322 = vmatprep.subr.mxu0 0.0
      %1323 = vmatpush1.msra.mxu0 0.0
      %1324 = vmatprep.subr.mxu0 0.0
      %1325 = vmatpush1.msra.mxu0 0.0
      %1326 = vmatprep.subr.mxu0 0.0
      %1327 = vmatpush1.msra.mxu0 0.0
      %1328 = vmatprep.subr.mxu0 0.0
      %1329 = vmatpush1.msra.mxu0 0.0
      %1330 = vmatprep.subr.mxu0 0.0
      %1331 = vmatpush1.msra.mxu0 0.0
      %1332 = vmatprep.subr.mxu0 0.0
      %1333 = vmatpush1.msra.mxu0 0.0
      %1334 = vmatprep.subr.mxu0 0.0
      %1335 = vmatpush1.msra.mxu0 0.0
      %1336 = vmatprep.subr.mxu0 0.0
      %1337 = vmatpush1.msra.mxu0 0.0
      %1338 = vmatprep.subr.mxu0 0.0
      %1339 = vmatpush1.msra.mxu0 0.0
      %1340 = vmatprep.subr.mxu0 0.0
      %1341 = vmatpush1.msra.mxu0 0.0
      %1342 = vmatprep.subr.mxu0 0.0
      %1343 = vmatpush1.msra.mxu0 0.0
      %1344 = vmatprep.subr.mxu0 0.0
      %1345 = vmatpush1.msra.mxu0 0.0
      %1346 = vmatprep.subr.mxu0 0.0
      %1347 = vmatpush1.msra.mxu0 0.0
      %1348 = vmatprep.subr.mxu0 0.0
      %1349 = vmatpush1.msra.mxu0 0.0
      %1350 = vmatprep.subr.mxu0 0.0
      %1351 = vmatpush1.msra.mxu0 0.0
      %1352 = vmatprep.mubr.f32.mxu0 0.0
      %1353 = vmatmul.mubr.f32.gmra.mrb[0].mxu0 %v1283
      %v1354 = vpop.f32.mrb[0].mxu0
      %v1355 = vadd.f32 0.0, %v1354
      %v1356 = vpop.f32.mrb[0].mxu0
      %1357 = vmatprep.mubr.f32.mxu0 0.0
      %1358 = vmatmul.mubr.f32.gmra.mrb[0].mxu0 %v1286
      %v1359 = vpop.f32.mrb[0].mxu0
      %v1360 = vadd.f32 0.0, %v1359
      %v1361 = vpop.f32.mrb[0].mxu0
      %1362 = vdwg.mxu0
      %1363 = vrot.lane.b32.xlu0 %v626, 64
      %v1364 = vpop.permute.xlu0 %1363
      %1365 = vrot.lane.b32.xlu0 %v631, 64
      %v1366 = vpop.permute.xlu0 %1365
      %v1370 = vsel %vm1013, %v1099, 0
      %v1373 = vsel %vm1013, %v1101, 0
      %1375 = vmatprep.subr.mxu0 0.0
      %1376 = vmatpush1.msra.mxu0 %v1364
      %1377 = vmatprep.subr.mxu0 0.0
      %1378 = vmatpush1.msra.mxu0 %v1366
      %1379 = vmatprep.subr.mxu0 0.0
      %1380 = vmatpush1.msra.mxu0 0.0
      %1381 = vmatprep.subr.mxu0 0.0
      %1382 = vmatpush1.msra.mxu0 0.0
      %1383 = vmatprep.subr.mxu0 0.0
      %1384 = vmatpush1.msra.mxu0 0.0
      %1385 = vmatprep.subr.mxu0 0.0
      %1386 = vmatpush1.msra.mxu0 0.0
      %1387 = vmatprep.subr.mxu0 0.0
      %1388 = vmatpush1.msra.mxu0 0.0
      %1389 = vmatprep.subr.mxu0 0.0
      %1390 = vmatpush1.msra.mxu0 0.0
      %1391 = vmatprep.subr.mxu0 0.0
      %1392 = vmatpush1.msra.mxu0 0.0
      %1393 = vmatprep.subr.mxu0 0.0
      %1394 = vmatpush1.msra.mxu0 0.0
      %1395 = vmatprep.subr.mxu0 0.0
      %1396 = vmatpush1.msra.mxu0 0.0
      %1397 = vmatprep.subr.mxu0 0.0
      %1398 = vmatpush1.msra.mxu0 0.0
      %1399 = vmatprep.subr.mxu0 0.0
      %1400 = vmatpush1.msra.mxu0 0.0
      %1401 = vmatprep.subr.mxu0 0.0
      %1402 = vmatpush1.msra.mxu0 0.0
      %1403 = vmatprep.subr.mxu0 0.0
      %1404 = vmatpush1.msra.mxu0 0.0
      %1405 = vmatprep.subr.mxu0 0.0
      %1406 = vmatpush1.msra.mxu0 0.0
      %1407 = vmatprep.subr.mxu0 0.0
      %1408 = vmatpush1.msra.mxu0 0.0
      %1409 = vmatprep.subr.mxu0 0.0
      %1410 = vmatpush1.msra.mxu0 0.0
      %1411 = vmatprep.subr.mxu0 0.0
      %1412 = vmatpush1.msra.mxu0 0.0
      %1413 = vmatprep.subr.mxu0 0.0
      %1414 = vmatpush1.msra.mxu0 0.0
      %1415 = vmatprep.subr.mxu0 0.0
      %1416 = vmatpush1.msra.mxu0 0.0
      %1417 = vmatprep.subr.mxu0 0.0
      %1418 = vmatpush1.msra.mxu0 0.0
      %1419 = vmatprep.subr.mxu0 0.0
      %1420 = vmatpush1.msra.mxu0 0.0
      %1421 = vmatprep.subr.mxu0 0.0
      %1422 = vmatpush1.msra.mxu0 0.0
      %1423 = vmatprep.subr.mxu0 0.0
      %1424 = vmatpush1.msra.mxu0 0.0
      %1425 = vmatprep.subr.mxu0 0.0
      %1426 = vmatpush1.msra.mxu0 0.0
      %1427 = vmatprep.subr.mxu0 0.0
      %1428 = vmatpush1.msra.mxu0 0.0
      %1429 = vmatprep.subr.mxu0 0.0
      %1430 = vmatpush1.msra.mxu0 0.0
      %1431 = vmatprep.subr.mxu0 0.0
      %1432 = vmatpush1.msra.mxu0 0.0
      %1433 = vmatprep.subr.mxu0 0.0
      %1434 = vmatpush1.msra.mxu0 0.0
      %1435 = vmatprep.subr.mxu0 0.0
      %1436 = vmatpush1.msra.mxu0 0.0
      %1437 = vmatprep.subr.mxu0 0.0
      %1438 = vmatpush1.msra.mxu0 0.0
      %1439 = vmatprep.mubr.f32.mxu0 0.0
      %1440 = vmatmul.mubr.f32.gmra.mrb[0].mxu0 %v1370
      %v1441 = vpop.f32.mrb[0].mxu0
      %v1442 = vadd.f32 0.0, %v1441
      %v1443 = vpop.f32.mrb[0].mxu0
      %1444 = vmatprep.mubr.f32.mxu0 0.0
      %1445 = vmatmul.mubr.f32.gmra.mrb[0].mxu0 %v1373
      %v1446 = vpop.f32.mrb[0].mxu0
      %v1447 = vadd.f32 0.0, %v1446
      %v1448 = vpop.f32.mrb[0].mxu0
      %1449 = vdwg.mxu0
      %s1450 = scalar_lea.vmem %s1, 16
      %v1451 = vld [vmem:[%s1450] sm:$0xff]
      %v1452 = vld [vmem:[%s1450 + $0x8] sm:$0xff]
      %1453 = vrot.lane.b32.xlu0 %v638, 120
      %v1454 = vpop.permute.xlu0 %1453
      %1455 = vrot.lane.b32.xlu0 %v639, 120
      %v1456 = vpop.permute.xlu0 %1455
      %1457 = vrot.lane.b32.xlu0 %v596, 88
      %v1458 = vpop.permute.xlu0 %1457
      %1459 = vrot.lane.b32.xlu0 %v601, 88
      %v1460 = vpop.permute.xlu0 %1459
      %v1461 = vsel %vm654, %v1454, 0
      %v1463 = vsel %vm654, %v1456, 0
      %v1465 = vsel %vm654, %v1458, 0
      %v1467 = vsel %vm654, %v1460, 0
      %1469 = vmatprep.subr.mxu0 0.0
      %1470 = vmatpush1.xpose.msra.mxu0 %v1465
      %1471 = vmatprep.subr.mxu0 0.0
      %1472 = vmatpush1.xpose.msra.mxu0 %v1467
      %1473 = vmatprep.subr.mxu0 0.0
      %1474 = vmatpush1.xpose.msra.mxu0 0.0
      %1475 = vmatprep.subr.mxu0 0.0
      %1476 = vmatpush1.xpose.msra.mxu0 0.0
      %1477 = vmatprep.subr.mxu0 0.0
      %1478 = vmatpush1.xpose.msra.mxu0 0.0
      %1479 = vmatprep.subr.mxu0 0.0
      %1480 = vmatpush1.xpose.msra.mxu0 0.0
      %1481 = vmatprep.subr.mxu0 0.0
      %1482 = vmatpush1.xpose.msra.mxu0 0.0
      %1483 = vmatprep.subr.mxu0 0.0
      %1484 = vmatpush1.xpose.msra.mxu0 0.0
      %1485 = vmatprep.subr.mxu0 0.0
      %1486 = vmatpush1.xpose.msra.mxu0 0.0
      %1487 = vmatprep.subr.mxu0 0.0
      %1488 = vmatpush1.xpose.msra.mxu0 0.0
      %1489 = vmatprep.subr.mxu0 0.0
      %1490 = vmatpush1.xpose.msra.mxu0 0.0
      %1491 = vmatprep.subr.mxu0 0.0
      %1492 = vmatpush1.xpose.msra.mxu0 0.0
      %1493 = vmatprep.subr.mxu0 0.0
      %1494 = vmatpush1.xpose.msra.mxu0 0.0
      %1495 = vmatprep.subr.mxu0 0.0
      %1496 = vmatpush1.xpose.msra.mxu0 0.0
      %1497 = vmatprep.subr.mxu0 0.0
      %1498 = vmatpush1.xpose.msra.mxu0 0.0
      %1499 = vmatprep.subr.mxu0 0.0
      %1500 = vmatpush1.xpose.msra.mxu0 0.0
      %1501 = vmatprep.subr.mxu0 0.0
      %1502 = vmatpush1.xpose.msra.mxu0 0.0
      %1503 = vmatprep.subr.mxu0 0.0
      %1504 = vmatpush1.xpose.msra.mxu0 0.0
      %1505 = vmatprep.subr.mxu0 0.0
      %1506 = vmatpush1.xpose.msra.mxu0 0.0
      %1507 = vmatprep.subr.mxu0 0.0
      %1508 = vmatpush1.xpose.msra.mxu0 0.0
      %1509 = vmatprep.subr.mxu0 0.0
      %1510 = vmatpush1.xpose.msra.mxu0 0.0
      %1511 = vmatprep.subr.mxu0 0.0
      %1512 = vmatpush1.xpose.msra.mxu0 0.0
      %1513 = vmatprep.subr.mxu0 0.0
      %1514 = vmatpush1.xpose.msra.mxu0 0.0
      %1515 = vmatprep.subr.mxu0 0.0
      %1516 = vmatpush1.xpose.msra.mxu0 0.0
      %1517 = vmatprep.subr.mxu0 0.0
      %1518 = vmatpush1.xpose.msra.mxu0 0.0
      %1519 = vmatprep.subr.mxu0 0.0
      %1520 = vmatpush1.xpose.msra.mxu0 0.0
      %1521 = vmatprep.subr.mxu0 0.0
      %1522 = vmatpush1.xpose.msra.mxu0 0.0
      %1523 = vmatprep.subr.mxu0 0.0
      %1524 = vmatpush1.xpose.msra.mxu0 0.0
      %1525 = vmatprep.subr.mxu0 0.0
      %1526 = vmatpush1.xpose.msra.mxu0 0.0
      %1527 = vmatprep.subr.mxu0 0.0
      %1528 = vmatpush1.xpose.msra.mxu0 0.0
      %1529 = vmatprep.subr.mxu0 0.0
      %1530 = vmatpush1.xpose.msra.mxu0 0.0
      %1531 = vmatprep.subr.mxu0 0.0
      %1532 = vmatpush1.xpose.msra.mxu0 0.0
      %1533 = vmatprep.mubr.f32.mxu0 0.0
      %1534 = vmatmul.mubr.f32.gmra.mrb[0].mxu0 %v1461
      %v1535 = vpop.f32.mrb[0].mxu0
      %v1536 = vadd.f32 %v1451, %v1535
      %v1537 = vpop.f32.mrb[0].mxu0
      %1538 = vmatprep.mubr.f32.mxu0 0.0
      %1539 = vmatmul.mubr.f32.gmra.mrb[0].mxu0 %v1463
      %v1540 = vpop.f32.mrb[0].mxu0
      %v1541 = vadd.f32 %v1452, %v1540
      %v1542 = vpop.f32.mrb[0].mxu0
      %1543 = vdwg.mxu0
      %1544 = vrot.lane.b32.xlu0 %v640, 120
      %v1545 = vpop.permute.xlu0 %1544
      %1546 = vrot.lane.b32.xlu0 %v641, 120
      %v1547 = vpop.permute.xlu0 %1546
      %1548 = vrot.lane.b32.xlu0 %v606, 88
      %v1549 = vpop.permute.xlu0 %1548
      %1550 = vrot.lane.b32.xlu0 %v611, 88
      %v1551 = vpop.permute.xlu0 %1550
      %v1552 = vsel %vm654, %v1545, 0
      %v1554 = vsel %vm654, %v1547, 0
      %v1556 = vsel %vm654, %v1549, 0
      %v1558 = vsel %vm654, %v1551, 0
      %1560 = vmatprep.subr.mxu0 0.0
      %1561 = vmatpush1.xpose.msra.mxu0 %v1556
      %1562 = vmatprep.subr.mxu0 0.0
      %1563 = vmatpush1.xpose.msra.mxu0 %v1558
      %1564 = vmatprep.subr.mxu0 0.0
      %1565 = vmatpush1.xpose.msra.mxu0 0.0
      %1566 = vmatprep.subr.mxu0 0.0
      %1567 = vmatpush1.xpose.msra.mxu0 0.0
      %1568 = vmatprep.subr.mxu0 0.0
      %1569 = vmatpush1.xpose.msra.mxu0 0.0
      %1570 = vmatprep.subr.mxu0 0.0
      %1571 = vmatpush1.xpose.msra.mxu0 0.0
      %1572 = vmatprep.subr.mxu0 0.0
      %1573 = vmatpush1.xpose.msra.mxu0 0.0
      %1574 = vmatprep.subr.mxu0 0.0
      %1575 = vmatpush1.xpose.msra.mxu0 0.0
      %1576 = vmatprep.subr.mxu0 0.0
      %1577 = vmatpush1.xpose.msra.mxu0 0.0
      %1578 = vmatprep.subr.mxu0 0.0
      %1579 = vmatpush1.xpose.msra.mxu0 0.0
      %1580 = vmatprep.subr.mxu0 0.0
      %1581 = vmatpush1.xpose.msra.mxu0 0.0
      %1582 = vmatprep.subr.mxu0 0.0
      %1583 = vmatpush1.xpose.msra.mxu0 0.0
      %1584 = vmatprep.subr.mxu0 0.0
      %1585 = vmatpush1.xpose.msra.mxu0 0.0
      %1586 = vmatprep.subr.mxu0 0.0
      %1587 = vmatpush1.xpose.msra.mxu0 0.0
      %1588 = vmatprep.subr.mxu0 0.0
      %1589 = vmatpush1.xpose.msra.mxu0 0.0
      %1590 = vmatprep.subr.mxu0 0.0
      %1591 = vmatpush1.xpose.msra.mxu0 0.0
      %1592 = vmatprep.subr.mxu0 0.0
      %1593 = vmatpush1.xpose.msra.mxu0 0.0
      %1594 = vmatprep.subr.mxu0 0.0
      %1595 = vmatpush1.xpose.msra.mxu0 0.0
      %1596 = vmatprep.subr.mxu0 0.0
      %1597 = vmatpush1.xpose.msra.mxu0 0.0
      %1598 = vmatprep.subr.mxu0 0.0
      %1599 = vmatpush1.xpose.msra.mxu0 0.0
      %1600 = vmatprep.subr.mxu0 0.0
      %1601 = vmatpush1.xpose.msra.mxu0 0.0
      %1602 = vmatprep.subr.mxu0 0.0
      %1603 = vmatpush1.xpose.msra.mxu0 0.0
      %1604 = vmatprep.subr.mxu0 0.0
      %1605 = vmatpush1.xpose.msra.mxu0 0.0
      %1606 = vmatprep.subr.mxu0 0.0
      %1607 = vmatpush1.xpose.msra.mxu0 0.0
      %1608 = vmatprep.subr.mxu0 0.0
      %1609 = vmatpush1.xpose.msra.mxu0 0.0
      %1610 = vmatprep.subr.mxu0 0.0
      %1611 = vmatpush1.xpose.msra.mxu0 0.0
      %1612 = vmatprep.subr.mxu0 0.0
      %1613 = vmatpush1.xpose.msra.mxu0 0.0
      %1614 = vmatprep.subr.mxu0 0.0
      %1615 = vmatpush1.xpose.msra.mxu0 0.0
      %1616 = vmatprep.subr.mxu0 0.0
      %1617 = vmatpush1.xpose.msra.mxu0 0.0
      %1618 = vmatprep.subr.mxu0 0.0
      %1619 = vmatpush1.xpose.msra.mxu0 0.0
      %1620 = vmatprep.subr.mxu0 0.0
      %1621 = vmatpush1.xpose.msra.mxu0 0.0
      %1622 = vmatprep.subr.mxu0 0.0
      %1623 = vmatpush1.xpose.msra.mxu0 0.0
      %1624 = vmatprep.mubr.f32.mxu0 0.0
      %1625 = vmatmul.mubr.f32.gmra.mrb[0].mxu0 %v1552
      %v1626 = vpop.f32.mrb[0].mxu0
      %v1627 = vadd.f32 %v1451, %v1626
      %v1628 = vpop.f32.mrb[0].mxu0
      %1629 = vmatprep.mubr.f32.mxu0 0.0
      %1630 = vmatmul.mubr.f32.gmra.mrb[0].mxu0 %v1554
      %v1631 = vpop.f32.mrb[0].mxu0
      %v1632 = vadd.f32 %v1452, %v1631
      %v1633 = vpop.f32.mrb[0].mxu0
      %1634 = vdwg.mxu0
      %1635 = vrot.lane.b32.xlu0 %v642, 120
      %v1636 = vpop.permute.xlu0 %1635
      %1637 = vrot.lane.b32.xlu0 %v643, 120
      %v1638 = vpop.permute.xlu0 %1637
      %1639 = vrot.lane.b32.xlu0 %v616, 88
      %v1640 = vpop.permute.xlu0 %1639
      %1641 = vrot.lane.b32.xlu0 %v621, 88
      %v1642 = vpop.permute.xlu0 %1641
      %v1643 = vsel %vm654, %v1636, 0
      %v1645 = vsel %vm654, %v1638, 0
      %v1647 = vsel %vm654, %v1640, 0
      %v1649 = vsel %vm654, %v1642, 0
      %1651 = vmatprep.subr.mxu0 0.0
      %1652 = vmatpush1.xpose.msra.mxu0 %v1647
      %1653 = vmatprep.subr.mxu0 0.0
      %1654 = vmatpush1.xpose.msra.mxu0 %v1649
      %1655 = vmatprep.subr.mxu0 0.0
      %1656 = vmatpush1.xpose.msra.mxu0 0.0
      %1657 = vmatprep.subr.mxu0 0.0
      %1658 = vmatpush1.xpose.msra.mxu0 0.0
      %1659 = vmatprep.subr.mxu0 0.0
      %1660 = vmatpush1.xpose.msra.mxu0 0.0
      %1661 = vmatprep.subr.mxu0 0.0
      %1662 = vmatpush1.xpose.msra.mxu0 0.0
      %1663 = vmatprep.subr.mxu0 0.0
      %1664 = vmatpush1.xpose.msra.mxu0 0.0
      %1665 = vmatprep.subr.mxu0 0.0
      %1666 = vmatpush1.xpose.msra.mxu0 0.0
      %1667 = vmatprep.subr.mxu0 0.0
      %1668 = vmatpush1.xpose.msra.mxu0 0.0
      %1669 = vmatprep.subr.mxu0 0.0
      %1670 = vmatpush1.xpose.msra.mxu0 0.0
      %1671 = vmatprep.subr.mxu0 0.0
      %1672 = vmatpush1.xpose.msra.mxu0 0.0
      %1673 = vmatprep.subr.mxu0 0.0
      %1674 = vmatpush1.xpose.msra.mxu0 0.0
      %1675 = vmatprep.subr.mxu0 0.0
      %1676 = vmatpush1.xpose.msra.mxu0 0.0
      %1677 = vmatprep.subr.mxu0 0.0
      %1678 = vmatpush1.xpose.msra.mxu0 0.0
      %1679 = vmatprep.subr.mxu0 0.0
      %1680 = vmatpush1.xpose.msra.mxu0 0.0
      %1681 = vmatprep.subr.mxu0 0.0
      %1682 = vmatpush1.xpose.msra.mxu0 0.0
      %1683 = vmatprep.subr.mxu0 0.0
      %1684 = vmatpush1.xpose.msra.mxu0 0.0
      %1685 = vmatprep.subr.mxu0 0.0
      %1686 = vmatpush1.xpose.msra.mxu0 0.0
      %1687 = vmatprep.subr.mxu0 0.0
      %1688 = vmatpush1.xpose.msra.mxu0 0.0
      %1689 = vmatprep.subr.mxu0 0.0
      %1690 = vmatpush1.xpose.msra.mxu0 0.0
      %1691 = vmatprep.subr.mxu0 0.0
      %1692 = vmatpush1.xpose.msra.mxu0 0.0
      %1693 = vmatprep.subr.mxu0 0.0
      %1694 = vmatpush1.xpose.msra.mxu0 0.0
      %1695 = vmatprep.subr.mxu0 0.0
      %1696 = vmatpush1.xpose.msra.mxu0 0.0
      %1697 = vmatprep.subr.mxu0 0.0
      %1698 = vmatpush1.xpose.msra.mxu0 0.0
      %1699 = vmatprep.subr.mxu0 0.0
      %1700 = vmatpush1.xpose.msra.mxu0 0.0
      %1701 = vmatprep.subr.mxu0 0.0
      %1702 = vmatpush1.xpose.msra.mxu0 0.0
      %1703 = vmatprep.subr.mxu0 0.0
      %1704 = vmatpush1.xpose.msra.mxu0 0.0
      %1705 = vmatprep.subr.mxu0 0.0
      %1706 = vmatpush1.xpose.msra.mxu0 0.0
      %1707 = vmatprep.subr.mxu0 0.0
      %1708 = vmatpush1.xpose.msra.mxu0 0.0
      %1709 = vmatprep.subr.mxu0 0.0
      %1710 = vmatpush1.xpose.msra.mxu0 0.0
      %1711 = vmatprep.subr.mxu0 0.0
      %1712 = vmatpush1.xpose.msra.mxu0 0.0
      %1713 = vmatprep.subr.mxu0 0.0
      %1714 = vmatpush1.xpose.msra.mxu0 0.0
      %1715 = vmatprep.mubr.f32.mxu0 0.0
      %1716 = vmatmul.mubr.f32.gmra.mrb[0].mxu0 %v1643
      %v1717 = vpop.f32.mrb[0].mxu0
      %v1718 = vadd.f32 %v1451, %v1717
      %v1719 = vpop.f32.mrb[0].mxu0
      %1720 = vmatprep.mubr.f32.mxu0 0.0
      %1721 = vmatmul.mubr.f32.gmra.mrb[0].mxu0 %v1645
      %v1722 = vpop.f32.mrb[0].mxu0
      %v1723 = vadd.f32 %v1452, %v1722
      %v1724 = vpop.f32.mrb[0].mxu0
      %1725 = vdwg.mxu0
      %1726 = vrot.lane.b32.xlu0 %v644, 120
      %v1727 = vpop.permute.xlu0 %1726
      %1728 = vrot.lane.b32.xlu0 %v645, 120
      %v1729 = vpop.permute.xlu0 %1728
      %1730 = vrot.lane.b32.xlu0 %v626, 88
      %v1731 = vpop.permute.xlu0 %1730
      %1732 = vrot.lane.b32.xlu0 %v631, 88
      %v1733 = vpop.permute.xlu0 %1732
      %v1734 = vsel %vm654, %v1727, 0
      %v1736 = vsel %vm654, %v1729, 0
      %v1738 = vsel %vm654, %v1731, 0
      %v1740 = vsel %vm654, %v1733, 0
      %1742 = vmatprep.subr.mxu0 0.0
      %1743 = vmatpush1.xpose.msra.mxu0 %v1738
      %1744 = vmatprep.subr.mxu0 0.0
      %1745 = vmatpush1.xpose.msra.mxu0 %v1740
      %1746 = vmatprep.subr.mxu0 0.0
      %1747 = vmatpush1.xpose.msra.mxu0 0.0
      %1748 = vmatprep.subr.mxu0 0.0
      %1749 = vmatpush1.xpose.msra.mxu0 0.0
      %1750 = vmatprep.subr.mxu0 0.0
      %1751 = vmatpush1.xpose.msra.mxu0 0.0
      %1752 = vmatprep.subr.mxu0 0.0
      %1753 = vmatpush1.xpose.msra.mxu0 0.0
      %1754 = vmatprep.subr.mxu0 0.0
      %1755 = vmatpush1.xpose.msra.mxu0 0.0
      %1756 = vmatprep.subr.mxu0 0.0
      %1757 = vmatpush1.xpose.msra.mxu0 0.0
      %1758 = vmatprep.subr.mxu0 0.0
      %1759 = vmatpush1.xpose.msra.mxu0 0.0
      %1760 = vmatprep.subr.mxu0 0.0
      %1761 = vmatpush1.xpose.msra.mxu0 0.0
      %1762 = vmatprep.subr.mxu0 0.0
      %1763 = vmatpush1.xpose.msra.mxu0 0.0
      %1764 = vmatprep.subr.mxu0 0.0
      %1765 = vmatpush1.xpose.msra.mxu0 0.0
      %1766 = vmatprep.subr.mxu0 0.0
      %1767 = vmatpush1.xpose.msra.mxu0 0.0
      %1768 = vmatprep.subr.mxu0 0.0
      %1769 = vmatpush1.xpose.msra.mxu0 0.0
      %1770 = vmatprep.subr.mxu0 0.0
      %1771 = vmatpush1.xpose.msra.mxu0 0.0
      %1772 = vmatprep.subr.mxu0 0.0
      %1773 = vmatpush1.xpose.msra.mxu0 0.0
      %1774 = vmatprep.subr.mxu0 0.0
      %1775 = vmatpush1.xpose.msra.mxu0 0.0
      %1776 = vmatprep.subr.mxu0 0.0
      %1777 = vmatpush1.xpose.msra.mxu0 0.0
      %1778 = vmatprep.subr.mxu0 0.0
      %1779 = vmatpush1.xpose.msra.mxu0 0.0
      %1780 = vmatprep.subr.mxu0 0.0
      %1781 = vmatpush1.xpose.msra.mxu0 0.0
      %1782 = vmatprep.subr.mxu0 0.0
      %1783 = vmatpush1.xpose.msra.mxu0 0.0
      %1784 = vmatprep.subr.mxu0 0.0
      %1785 = vmatpush1.xpose.msra.mxu0 0.0
      %1786 = vmatprep.subr.mxu0 0.0
      %1787 = vmatpush1.xpose.msra.mxu0 0.0
      %1788 = vmatprep.subr.mxu0 0.0
      %1789 = vmatpush1.xpose.msra.mxu0 0.0
      %1790 = vmatprep.subr.mxu0 0.0
      %1791 = vmatpush1.xpose.msra.mxu0 0.0
      %1792 = vmatprep.subr.mxu0 0.0
      %1793 = vmatpush1.xpose.msra.mxu0 0.0
      %1794 = vmatprep.subr.mxu0 0.0
      %1795 = vmatpush1.xpose.msra.mxu0 0.0
      %1796 = vmatprep.subr.mxu0 0.0
      %1797 = vmatpush1.xpose.msra.mxu0 0.0
      %1798 = vmatprep.subr.mxu0 0.0
      %1799 = vmatpush1.xpose.msra.mxu0 0.0
      %1800 = vmatprep.subr.mxu0 0.0
      %1801 = vmatpush1.xpose.msra.mxu0 0.0
      %1802 = vmatprep.subr.mxu0 0.0
      %1803 = vmatpush1.xpose.msra.mxu0 0.0
      %1804 = vmatprep.subr.mxu0 0.0
      %1805 = vmatpush1.xpose.msra.mxu0 0.0
      %1806 = vmatprep.mubr.f32.mxu0 0.0
      %1807 = vmatmul.mubr.f32.gmra.mrb[0].mxu0 %v1734
      %v1808 = vpop.f32.mrb[0].mxu0
      %v1809 = vadd.f32 %v1451, %v1808
      %v1810 = vpop.f32.mrb[0].mxu0
      %1811 = vmatprep.mubr.f32.mxu0 0.0
      %1812 = vmatmul.mubr.f32.gmra.mrb[0].mxu0 %v1736
      %v1813 = vpop.f32.mrb[0].mxu0
      %v1814 = vadd.f32 %v1452, %v1813
      %v1815 = vpop.f32.mrb[0].mxu0
      %1816 = vdwg.mxu0
      %v1817 = vsel %vm1013, %v1536, -inf
      %1818 = vmax.xlane.f32.xlu0 %v1817
      %v1819 = vpop.xlane.xlu0 %1818
      %v1820 = vsel %vm1013, %v1541, -inf
      %1821 = vmax.xlane.f32.xlu0 %v1820
      %v1822 = vpop.xlane.xlu0 %1821
      %v1823 = vsel %vm1013, %v1627, -inf
      %1824 = vmax.xlane.f32.xlu0 %v1823
      %v1825 = vpop.xlane.xlu0 %1824
      %v1826 = vsel %vm1013, %v1632, -inf
      %1827 = vmax.xlane.f32.xlu0 %v1826
      %v1828 = vpop.xlane.xlu0 %1827
      %v1829 = vsel %vm1013, %v1718, -inf
      %1830 = vmax.xlane.f32.xlu0 %v1829
      %v1831 = vpop.xlane.xlu0 %1830
      %v1832 = vsel %vm1013, %v1723, -inf
      %1833 = vmax.xlane.f32.xlu0 %v1832
      %v1834 = vpop.xlane.xlu0 %1833
      %v1835 = vsel %vm1013, %v1809, -inf
      %1836 = vmax.xlane.f32.xlu0 %v1835
      %v1837 = vpop.xlane.xlu0 %1836
      %v1838 = vsel %vm1013, %v1814, -inf
      %1839 = vmax.xlane.f32.xlu0 %v1838
      %v1840 = vpop.xlane.xlu0 %1839
      %v1841 = vsub.f32 %v1536, %v1819
      %v1842 = vsub.f32 %v1541, %v1822
      %v1843 = vsub.f32 %v1627, %v1825
      %v1844 = vsub.f32 %v1632, %v1828
      %v1845 = vsub.f32 %v1718, %v1831
      %v1846 = vsub.f32 %v1723, %v1834
      %v1847 = vsub.f32 %v1809, %v1837
      %v1848 = vsub.f32 %v1814, %v1840
      %v1849 = vmul.f32 %v1841, 1.442695
      %v1850 = vpow.pop %v1849
      %v1851 = vmul.f32 %v1842, 1.442695
      %v1852 = vpow.pop %v1851
      %v1853 = vmul.f32 %v1843, 1.442695
      %v1854 = vpow.pop %v1853
      %v1855 = vmul.f32 %v1844, 1.442695
      %v1856 = vpow.pop %v1855
      %v1857 = vmul.f32 %v1845, 1.442695
      %v1858 = vpow.pop %v1857
      %v1859 = vmul.f32 %v1846, 1.442695
      %v1860 = vpow.pop %v1859
      %v1861 = vmul.f32 %v1847, 1.442695
      %v1862 = vpow.pop %v1861
      %v1863 = vmul.f32 %v1848, 1.442695
      %v1864 = vpow.pop %v1863
      %v1865 = vsel %vm1013, %v1850, 0.0
      %1866 = vadd.xlane.f32.xlu0 %v1865
      %v1867 = vpop.xlane.xlu0 %1866
      %v1868 = vsel %vm1013, %v1852, 0.0
      %1869 = vadd.xlane.f32.xlu0 %v1868
      %v1870 = vpop.xlane.xlu0 %1869
      %v1871 = vsel %vm1013, %v1854, 0.0
      %1872 = vadd.xlane.f32.xlu0 %v1871
      %v1873 = vpop.xlane.xlu0 %1872
      %v1874 = vsel %vm1013, %v1856, 0.0
      %1875 = vadd.xlane.f32.xlu0 %v1874
      %v1876 = vpop.xlane.xlu0 %1875
      %v1877 = vsel %vm1013, %v1858, 0.0
      %1878 = vadd.xlane.f32.xlu0 %v1877
      %v1879 = vpop.xlane.xlu0 %1878
      %v1880 = vsel %vm1013, %v1860, 0.0
      %1881 = vadd.xlane.f32.xlu0 %v1880
      %v1882 = vpop.xlane.xlu0 %1881
      %v1883 = vsel %vm1013, %v1862, 0.0
      %1884 = vadd.xlane.f32.xlu0 %v1883
      %v1885 = vpop.xlane.xlu0 %1884
      %v1886 = vsel %vm1013, %v1864, 0.0
      %1887 = vadd.xlane.f32.xlu0 %v1886
      %v1888 = vpop.xlane.xlu0 %1887
      %v1889 = vrcp.pop %v1867
      %v1890 = vmul.f32 %v1850, %v1889
      %v1891 = vrcp.pop %v1870
      %v1892 = vmul.f32 %v1852, %v1891
      %v1893 = vrcp.pop %v1873
      %v1894 = vmul.f32 %v1854, %v1893
      %v1895 = vrcp.pop %v1876
      %v1896 = vmul.f32 %v1856, %v1895
      %v1897 = vrcp.pop %v1879
      %v1898 = vmul.f32 %v1858, %v1897
      %v1899 = vrcp.pop %v1882
      %v1900 = vmul.f32 %v1860, %v1899
      %v1901 = vrcp.pop %v1885
      %v1902 = vmul.f32 %v1862, %v1901
      %v1903 = vrcp.pop %v1888
      %v1904 = vmul.f32 %v1864, %v1903
      %1905 = vrot.lane.b32.xlu0 %v596, 56
      %v1906 = vpop.permute.xlu0 %1905
      %1907 = vrot.lane.b32.xlu0 %v601, 56
      %v1908 = vpop.permute.xlu0 %1907
      %v1912 = vsel %vm1013, %v1890, 0
      %v1915 = vsel %vm1013, %v1892, 0
      %1917 = vmatprep.subr.mxu0 0.0
      %1918 = vmatpush1.msra.mxu0 %v1906
      %1919 = vmatprep.subr.mxu0 0.0
      %1920 = vmatpush1.msra.mxu0 %v1908
      %1921 = vmatprep.subr.mxu0 0.0
      %1922 = vmatpush1.msra.mxu0 0.0
      %1923 = vmatprep.subr.mxu0 0.0
      %1924 = vmatpush1.msra.mxu0 0.0
      %1925 = vmatprep.subr.mxu0 0.0
      %1926 = vmatpush1.msra.mxu0 0.0
      %1927 = vmatprep.subr.mxu0 0.0
      %1928 = vmatpush1.msra.mxu0 0.0
      %1929 = vmatprep.subr.mxu0 0.0
      %1930 = vmatpush1.msra.mxu0 0.0
      %1931 = vmatprep.subr.mxu0 0.0
      %1932 = vmatpush1.msra.mxu0 0.0
      %1933 = vmatprep.subr.mxu0 0.0
      %1934 = vmatpush1.msra.mxu0 0.0
      %1935 = vmatprep.subr.mxu0 0.0
      %1936 = vmatpush1.msra.mxu0 0.0
      %1937 = vmatprep.subr.mxu0 0.0
      %1938 = vmatpush1.msra.mxu0 0.0
      %1939 = vmatprep.subr.mxu0 0.0
      %1940 = vmatpush1.msra.mxu0 0.0
      %1941 = vmatprep.subr.mxu0 0.0
      %1942 = vmatpush1.msra.mxu0 0.0
      %1943 = vmatprep.subr.mxu0 0.0
      %1944 = vmatpush1.msra.mxu0 0.0
      %1945 = vmatprep.subr.mxu0 0.0
      %1946 = vmatpush1.msra.mxu0 0.0
      %1947 = vmatprep.subr.mxu0 0.0
      %1948 = vmatpush1.msra.mxu0 0.0
      %1949 = vmatprep.subr.mxu0 0.0
      %1950 = vmatpush1.msra.mxu0 0.0
      %1951 = vmatprep.subr.mxu0 0.0
      %1952 = vmatpush1.msra.mxu0 0.0
      %1953 = vmatprep.subr.mxu0 0.0
      %1954 = vmatpush1.msra.mxu0 0.0
      %1955 = vmatprep.subr.mxu0 0.0
      %1956 = vmatpush1.msra.mxu0 0.0
      %1957 = vmatprep.subr.mxu0 0.0
      %1958 = vmatpush1.msra.mxu0 0.0
      %1959 = vmatprep.subr.mxu0 0.0
      %1960 = vmatpush1.msra.mxu0 0.0
      %1961 = vmatprep.subr.mxu0 0.0
      %1962 = vmatpush1.msra.mxu0 0.0
      %1963 = vmatprep.subr.mxu0 0.0
      %1964 = vmatpush1.msra.mxu0 0.0
      %1965 = vmatprep.subr.mxu0 0.0
      %1966 = vmatpush1.msra.mxu0 0.0
      %1967 = vmatprep.subr.mxu0 0.0
      %1968 = vmatpush1.msra.mxu0 0.0
      %1969 = vmatprep.subr.mxu0 0.0
      %1970 = vmatpush1.msra.mxu0 0.0
      %1971 = vmatprep.subr.mxu0 0.0
      %1972 = vmatpush1.msra.mxu0 0.0
      %1973 = vmatprep.subr.mxu0 0.0
      %1974 = vmatpush1.msra.mxu0 0.0
      %1975 = vmatprep.subr.mxu0 0.0
      %1976 = vmatpush1.msra.mxu0 0.0
      %1977 = vmatprep.subr.mxu0 0.0
      %1978 = vmatpush1.msra.mxu0 0.0
      %1979 = vmatprep.subr.mxu0 0.0
      %1980 = vmatpush1.msra.mxu0 0.0
      %1981 = vmatprep.mubr.f32.mxu0 0.0
      %1982 = vmatmul.mubr.f32.gmra.mrb[0].mxu0 %v1912
      %v1983 = vpop.f32.mrb[0].mxu0
      %v1984 = vadd.f32 0.0, %v1983
      %v1985 = vpop.f32.mrb[0].mxu0
      %1986 = vmatprep.mubr.f32.mxu0 0.0
      %1987 = vmatmul.mubr.f32.gmra.mrb[0].mxu0 %v1915
      %v1988 = vpop.f32.mrb[0].mxu0
      %v1989 = vadd.f32 0.0, %v1988
      %v1990 = vpop.f32.mrb[0].mxu0
      %1991 = vdwg.mxu0
      %1992 = vrot.lane.b32.xlu0 %v606, 56
      %v1993 = vpop.permute.xlu0 %1992
      %1994 = vrot.lane.b32.xlu0 %v611, 56
      %v1995 = vpop.permute.xlu0 %1994
      %v1999 = vsel %vm1013, %v1894, 0
      %v2002 = vsel %vm1013, %v1896, 0
      %2004 = vmatprep.subr.mxu0 0.0
      %2005 = vmatpush1.msra.mxu0 %v1993
      %2006 = vmatprep.subr.mxu0 0.0
      %2007 = vmatpush1.msra.mxu0 %v1995
      %2008 = vmatprep.subr.mxu0 0.0
      %2009 = vmatpush1.msra.mxu0 0.0
      %2010 = vmatprep.subr.mxu0 0.0
      %2011 = vmatpush1.msra.mxu0 0.0
      %2012 = vmatprep.subr.mxu0 0.0
      %2013 = vmatpush1.msra.mxu0 0.0
      %2014 = vmatprep.subr.mxu0 0.0
      %2015 = vmatpush1.msra.mxu0 0.0
      %2016 = vmatprep.subr.mxu0 0.0
      %2017 = vmatpush1.msra.mxu0 0.0
      %2018 = vmatprep.subr.mxu0 0.0
      %2019 = vmatpush1.msra.mxu0 0.0
      %2020 = vmatprep.subr.mxu0 0.0
      %2021 = vmatpush1.msra.mxu0 0.0
      %2022 = vmatprep.subr.mxu0 0.0
      %2023 = vmatpush1.msra.mxu0 0.0
      %2024 = vmatprep.subr.mxu0 0.0
      %2025 = vmatpush1.msra.mxu0 0.0
      %2026 = vmatprep.subr.mxu0 0.0
      %2027 = vmatpush1.msra.mxu0 0.0
      %2028 = vmatprep.subr.mxu0 0.0
      %2029 = vmatpush1.msra.mxu0 0.0
      %2030 = vmatprep.subr.mxu0 0.0
      %2031 = vmatpush1.msra.mxu0 0.0
      %2032 = vmatprep.subr.mxu0 0.0
      %2033 = vmatpush1.msra.mxu0 0.0
      %2034 = vmatprep.subr.mxu0 0.0
      %2035 = vmatpush1.msra.mxu0 0.0
      %2036 = vmatprep.subr.mxu0 0.0
      %2037 = vmatpush1.msra.mxu0 0.0
      %2038 = vmatprep.subr.mxu0 0.0
      %2039 = vmatpush1.msra.mxu0 0.0
      %2040 = vmatprep.subr.mxu0 0.0
      %2041 = vmatpush1.msra.mxu0 0.0
      %2042 = vmatprep.subr.mxu0 0.0
      %2043 = vmatpush1.msra.mxu0 0.0
      %2044 = vmatprep.subr.mxu0 0.0
      %2045 = vmatpush1.msra.mxu0 0.0
      %2046 = vmatprep.subr.mxu0 0.0
      %2047 = vmatpush1.msra.mxu0 0.0
      %2048 = vmatprep.subr.mxu0 0.0
      %2049 = vmatpush1.msra.mxu0 0.0
      %2050 = vmatprep.subr.mxu0 0.0
      %2051 = vmatpush1.msra.mxu0 0.0
      %2052 = vmatprep.subr.mxu0 0.0
      %2053 = vmatpush1.msra.mxu0 0.0
      %2054 = vmatprep.subr.mxu0 0.0
      %2055 = vmatpush1.msra.mxu0 0.0
      %2056 = vmatprep.subr.mxu0 0.0
      %2057 = vmatpush1.msra.mxu0 0.0
      %2058 = vmatprep.subr.mxu0 0.0
      %2059 = vmatpush1.msra.mxu0 0.0
      %2060 = vmatprep.subr.mxu0 0.0
      %2061 = vmatpush1.msra.mxu0 0.0
      %2062 = vmatprep.subr.mxu0 0.0
      %2063 = vmatpush1.msra.mxu0 0.0
      %2064 = vmatprep.subr.mxu0 0.0
      %2065 = vmatpush1.msra.mxu0 0.0
      %2066 = vmatprep.subr.mxu0 0.0
      %2067 = vmatpush1.msra.mxu0 0.0
      %2068 = vmatprep.mubr.f32.mxu0 0.0
      %2069 = vmatmul.mubr.f32.gmra.mrb[0].mxu0 %v1999
      %v2070 = vpop.f32.mrb[0].mxu0
      %v2071 = vadd.f32 0.0, %v2070
      %v2072 = vpop.f32.mrb[0].mxu0
      %2073 = vmatprep.mubr.f32.mxu0 0.0
      %2074 = vmatmul.mubr.f32.gmra.mrb[0].mxu0 %v2002
      %v2075 = vpop.f32.mrb[0].mxu0
      %v2076 = vadd.f32 0.0, %v2075
      %v2077 = vpop.f32.mrb[0].mxu0
      %2078 = vdwg.mxu0
      %2079 = vrot.lane.b32.xlu0 %v616, 56
      %v2080 = vpop.permute.xlu0 %2079
      %2081 = vrot.lane.b32.xlu0 %v621, 56
      %v2082 = vpop.permute.xlu0 %2081
      %v2086 = vsel %vm1013, %v1898, 0
      %v2089 = vsel %vm1013, %v1900, 0
      %2091 = vmatprep.subr.mxu0 0.0
      %2092 = vmatpush1.msra.mxu0 %v2080
      %2093 = vmatprep.subr.mxu0 0.0
      %2094 = vmatpush1.msra.mxu0 %v2082
      %2095 = vmatprep.subr.mxu0 0.0
      %2096 = vmatpush1.msra.mxu0 0.0
      %2097 = vmatprep.subr.mxu0 0.0
      %2098 = vmatpush1.msra.mxu0 0.0
      %2099 = vmatprep.subr.mxu0 0.0
      %2100 = vmatpush1.msra.mxu0 0.0
      %2101 = vmatprep.subr.mxu0 0.0
      %2102 = vmatpush1.msra.mxu0 0.0
      %2103 = vmatprep.subr.mxu0 0.0
      %2104 = vmatpush1.msra.mxu0 0.0
      %2105 = vmatprep.subr.mxu0 0.0
      %2106 = vmatpush1.msra.mxu0 0.0
      %2107 = vmatprep.subr.mxu0 0.0
      %2108 = vmatpush1.msra.mxu0 0.0
      %2109 = vmatprep.subr.mxu0 0.0
      %2110 = vmatpush1.msra.mxu0 0.0
      %2111 = vmatprep.subr.mxu0 0.0
      %2112 = vmatpush1.msra.mxu0 0.0
      %2113 = vmatprep.subr.mxu0 0.0
      %2114 = vmatpush1.msra.mxu0 0.0
      %2115 = vmatprep.subr.mxu0 0.0
      %2116 = vmatpush1.msra.mxu0 0.0
      %2117 = vmatprep.subr.mxu0 0.0
      %2118 = vmatpush1.msra.mxu0 0.0
      %2119 = vmatprep.subr.mxu0 0.0
      %2120 = vmatpush1.msra.mxu0 0.0
      %2121 = vmatprep.subr.mxu0 0.0
      %2122 = vmatpush1.msra.mxu0 0.0
      %2123 = vmatprep.subr.mxu0 0.0
      %2124 = vmatpush1.msra.mxu0 0.0
      %2125 = vmatprep.subr.mxu0 0.0
      %2126 = vmatpush1.msra.mxu0 0.0
      %2127 = vmatprep.subr.mxu0 0.0
      %2128 = vmatpush1.msra.mxu0 0.0
      %2129 = vmatprep.subr.mxu0 0.0
      %2130 = vmatpush1.msra.mxu0 0.0
      %2131 = vmatprep.subr.mxu0 0.0
      %2132 = vmatpush1.msra.mxu0 0.0
      %2133 = vmatprep.subr.mxu0 0.0
      %2134 = vmatpush1.msra.mxu0 0.0
      %2135 = vmatprep.subr.mxu0 0.0
      %2136 = vmatpush1.msra.mxu0 0.0
      %2137 = vmatprep.subr.mxu0 0.0
      %2138 = vmatpush1.msra.mxu0 0.0
      %2139 = vmatprep.subr.mxu0 0.0
      %2140 = vmatpush1.msra.mxu0 0.0
      %2141 = vmatprep.subr.mxu0 0.0
      %2142 = vmatpush1.msra.mxu0 0.0
      %2143 = vmatprep.subr.mxu0 0.0
      %2144 = vmatpush1.msra.mxu0 0.0
      %2145 = vmatprep.subr.mxu0 0.0
      %2146 = vmatpush1.msra.mxu0 0.0
      %2147 = vmatprep.subr.mxu0 0.0
      %2148 = vmatpush1.msra.mxu0 0.0
      %2149 = vmatprep.subr.mxu0 0.0
      %2150 = vmatpush1.msra.mxu0 0.0
      %2151 = vmatprep.subr.mxu0 0.0
      %2152 = vmatpush1.msra.mxu0 0.0
      %2153 = vmatprep.subr.mxu0 0.0
      %2154 = vmatpush1.msra.mxu0 0.0
      %2155 = vmatprep.mubr.f32.mxu0 0.0
      %2156 = vmatmul.mubr.f32.gmra.mrb[0].mxu0 %v2086
      %v2157 = vpop.f32.mrb[0].mxu0
      %v2158 = vadd.f32 0.0, %v2157
      %v2159 = vpop.f32.mrb[0].mxu0
      %2160 = vmatprep.mubr.f32.mxu0 0.0
      %2161 = vmatmul.mubr.f32.gmra.mrb[0].mxu0 %v2089
      %v2162 = vpop.f32.mrb[0].mxu0
      %v2163 = vadd.f32 0.0, %v2162
      %v2164 = vpop.f32.mrb[0].mxu0
      %2165 = vdwg.mxu0
      %2166 = vrot.lane.b32.xlu0 %v626, 56
      %v2167 = vpop.permute.xlu0 %2166
      %2168 = vrot.lane.b32.xlu0 %v631, 56
      %v2169 = vpop.permute.xlu0 %2168
      %v2173 = vsel %vm1013, %v1902, 0
      %v2176 = vsel %vm1013, %v1904, 0
      %2178 = vmatprep.subr.mxu0 0.0
      %2179 = vmatpush1.msra.mxu0 %v2167
      %2180 = vmatprep.subr.mxu0 0.0
      %2181 = vmatpush1.msra.mxu0 %v2169
      %2182 = vmatprep.subr.mxu0 0.0
      %2183 = vmatpush1.msra.mxu0 0.0
      %2184 = vmatprep.subr.mxu0 0.0
      %2185 = vmatpush1.msra.mxu0 0.0
      %2186 = vmatprep.subr.mxu0 0.0
      %2187 = vmatpush1.msra.mxu0 0.0
      %2188 = vmatprep.subr.mxu0 0.0
      %2189 = vmatpush1.msra.mxu0 0.0
      %2190 = vmatprep.subr.mxu0 0.0
      %2191 = vmatpush1.msra.mxu0 0.0
      %2192 = vmatprep.subr.mxu0 0.0
      %2193 = vmatpush1.msra.mxu0 0.0
      %2194 = vmatprep.subr.mxu0 0.0
      %2195 = vmatpush1.msra.mxu0 0.0
      %2196 = vmatprep.subr.mxu0 0.0
      %2197 = vmatpush1.msra.mxu0 0.0
      %2198 = vmatprep.subr.mxu0 0.0
      %2199 = vmatpush1.msra.mxu0 0.0
      %2200 = vmatprep.subr.mxu0 0.0
      %2201 = vmatpush1.msra.mxu0 0.0
      %2202 = vmatprep.subr.mxu0 0.0
      %2203 = vmatpush1.msra.mxu0 0.0
      %2204 = vmatprep.subr.mxu0 0.0
      %2205 = vmatpush1.msra.mxu0 0.0
      %2206 = vmatprep.subr.mxu0 0.0
      %2207 = vmatpush1.msra.mxu0 0.0
      %2208 = vmatprep.subr.mxu0 0.0
      %2209 = vmatpush1.msra.mxu0 0.0
      %2210 = vmatprep.subr.mxu0 0.0
      %2211 = vmatpush1.msra.mxu0 0.0
      %2212 = vmatprep.subr.mxu0 0.0
      %2213 = vmatpush1.msra.mxu0 0.0
      %2214 = vmatprep.subr.mxu0 0.0
      %2215 = vmatpush1.msra.mxu0 0.0
      %2216 = vmatprep.subr.mxu0 0.0
      %2217 = vmatpush1.msra.mxu0 0.0
      %2218 = vmatprep.subr.mxu0 0.0
      %2219 = vmatpush1.msra.mxu0 0.0
      %2220 = vmatprep.subr.mxu0 0.0
      %2221 = vmatpush1.msra.mxu0 0.0
      %2222 = vmatprep.subr.mxu0 0.0
      %2223 = vmatpush1.msra.mxu0 0.0
      %2224 = vmatprep.subr.mxu0 0.0
      %2225 = vmatpush1.msra.mxu0 0.0
      %2226 = vmatprep.subr.mxu0 0.0
      %2227 = vmatpush1.msra.mxu0 0.0
      %2228 = vmatprep.subr.mxu0 0.0
      %2229 = vmatpush1.msra.mxu0 0.0
      %2230 = vmatprep.subr.mxu0 0.0
      %2231 = vmatpush1.msra.mxu0 0.0
      %2232 = vmatprep.subr.mxu0 0.0
      %2233 = vmatpush1.msra.mxu0 0.0
      %2234 = vmatprep.subr.mxu0 0.0
      %2235 = vmatpush1.msra.mxu0 0.0
      %2236 = vmatprep.subr.mxu0 0.0
      %2237 = vmatpush1.msra.mxu0 0.0
      %2238 = vmatprep.subr.mxu0 0.0
      %2239 = vmatpush1.msra.mxu0 0.0
      %2240 = vmatprep.subr.mxu0 0.0
      %2241 = vmatpush1.msra.mxu0 0.0
      %2242 = vmatprep.mubr.f32.mxu0 0.0
      %2243 = vmatmul.mubr.f32.gmra.mrb[0].mxu0 %v2173
      %v2244 = vpop.f32.mrb[0].mxu0
      %v2245 = vadd.f32 0.0, %v2244
      %v2246 = vpop.f32.mrb[0].mxu0
      %2247 = vmatprep.mubr.f32.mxu0 0.0
      %2248 = vmatmul.mubr.f32.gmra.mrb[0].mxu0 %v2176
      %v2249 = vpop.f32.mrb[0].mxu0
      %v2250 = vadd.f32 0.0, %v2249
      %v2251 = vpop.f32.mrb[0].mxu0
      %2252 = vdwg.mxu0
      %v2254 = vsel %vm654, %v1984, 0
      %v2257 = vsel %vm654, %v1989, 0
      %v2260 = vsel %vm654, %v2071, 0
      %v2263 = vsel %vm654, %v2076, 0
      %v2266 = vsel %vm654, %v2158, 0
      %v2269 = vsel %vm654, %v2163, 0
      %v2272 = vsel %vm654, %v2245, 0
      %v2275 = vsel %vm654, %v2250, 0
      %2277 = vmatprep.subr.mxu0 0.0
      %2278 = vmatpush1.msra.mxu0 %v635
      %2279 = vmatprep.subr.mxu0 0.0
      %2280 = vmatpush1.msra.mxu0 0.0
      %2281 = vmatprep.subr.mxu0 0.0
      %2282 = vmatpush1.msra.mxu0 0.0
      %2283 = vmatprep.subr.mxu0 0.0
      %2284 = vmatpush1.msra.mxu0 0.0
      %2285 = vmatprep.subr.mxu0 0.0
      %2286 = vmatpush1.msra.mxu0 0.0
      %2287 = vmatprep.subr.mxu0 0.0
      %2288 = vmatpush1.msra.mxu0 0.0
      %2289 = vmatprep.subr.mxu0 0.0
      %2290 = vmatpush1.msra.mxu0 0.0
      %2291 = vmatprep.subr.mxu0 0.0
      %2292 = vmatpush1.msra.mxu0 0.0
      %2293 = vmatprep.subr.mxu0 0.0
      %2294 = vmatpush1.msra.mxu0 0.0
      %2295 = vmatprep.subr.mxu0 0.0
      %2296 = vmatpush1.msra.mxu0 0.0
      %2297 = vmatprep.subr.mxu0 0.0
      %2298 = vmatpush1.msra.mxu0 0.0
      %2299 = vmatprep.subr.mxu0 0.0
      %2300 = vmatpush1.msra.mxu0 0.0
      %2301 = vmatprep.subr.mxu0 0.0
      %2302 = vmatpush1.msra.mxu0 0.0
      %2303 = vmatprep.subr.mxu0 0.0
      %2304 = vmatpush1.msra.mxu0 0.0
      %2305 = vmatprep.subr.mxu0 0.0
      %2306 = vmatpush1.msra.mxu0 0.0
      %2307 = vmatprep.subr.mxu0 0.0
      %2308 = vmatpush1.msra.mxu0 0.0
      %2309 = vmatprep.subr.mxu0 0.0
      %2310 = vmatpush1.msra.mxu0 0.0
      %2311 = vmatprep.subr.mxu0 0.0
      %2312 = vmatpush1.msra.mxu0 0.0
      %2313 = vmatprep.subr.mxu0 0.0
      %2314 = vmatpush1.msra.mxu0 0.0
      %2315 = vmatprep.subr.mxu0 0.0
      %2316 = vmatpush1.msra.mxu0 0.0
      %2317 = vmatprep.subr.mxu0 0.0
      %2318 = vmatpush1.msra.mxu0 0.0
      %2319 = vmatprep.subr.mxu0 0.0
      %2320 = vmatpush1.msra.mxu0 0.0
      %2321 = vmatprep.subr.mxu0 0.0
      %2322 = vmatpush1.msra.mxu0 0.0
      %2323 = vmatprep.subr.mxu0 0.0
      %2324 = vmatpush1.msra.mxu0 0.0
      %2325 = vmatprep.subr.mxu0 0.0
      %2326 = vmatpush1.msra.mxu0 0.0
      %2327 = vmatprep.subr.mxu0 0.0
      %2328 = vmatpush1.msra.mxu0 0.0
      %2329 = vmatprep.subr.mxu0 0.0
      %2330 = vmatpush1.msra.mxu0 0.0
      %2331 = vmatprep.subr.mxu0 0.0
      %2332 = vmatpush1.msra.mxu0 0.0
      %2333 = vmatprep.subr.mxu0 0.0
      %2334 = vmatpush1.msra.mxu0 0.0
      %2335 = vmatprep.subr.mxu0 0.0
      %2336 = vmatpush1.msra.mxu0 0.0
      %2337 = vmatprep.subr.mxu0 0.0
      %2338 = vmatpush1.msra.mxu0 0.0
      %2339 = vmatprep.subr.mxu0 0.0
      %2340 = vmatpush1.msra.mxu0 0.0
      %2341 = vmatprep.mubr.f32.mxu0 0.0
      %2342 = vmatmul.mubr.f32.gmra.mrb[0].mxu0 %v2254
      %v2343 = vpop.f32.mrb[0].mxu0
      %v2344 = vadd.f32 0.0, %v2343
      %v2345 = vpop.f32.mrb[0].mxu0
      %2346 = vmatprep.mubr.f32.mxu0 0.0
      %2347 = vmatmul.mubr.f32.gmra.mrb[0].mxu0 %v2257
      %v2348 = vpop.f32.mrb[0].mxu0
      %v2349 = vadd.f32 0.0, %v2348
      %v2350 = vpop.f32.mrb[0].mxu0
      %2351 = vmatprep.mubr.f32.mxu0 0.0
      %2352 = vmatmul.mubr.f32.gmra.mrb[0].mxu0 %v2260
      %v2353 = vpop.f32.mrb[0].mxu0
      %v2354 = vadd.f32 0.0, %v2353
      %v2355 = vpop.f32.mrb[0].mxu0
      %2356 = vmatprep.mubr.f32.mxu0 0.0
      %2357 = vmatmul.mubr.f32.gmra.mrb[0].mxu0 %v2263
      %v2358 = vpop.f32.mrb[0].mxu0
      %v2359 = vadd.f32 0.0, %v2358
      %v2360 = vpop.f32.mrb[0].mxu0
      %2361 = vmatprep.mubr.f32.mxu0 0.0
      %2362 = vmatmul.mubr.f32.gmra.mrb[0].mxu0 %v2266
      %v2363 = vpop.f32.mrb[0].mxu0
      %v2364 = vadd.f32 0.0, %v2363
      %v2365 = vpop.f32.mrb[0].mxu0
      %2366 = vmatprep.mubr.f32.mxu0 0.0
      %2367 = vmatmul.mubr.f32.gmra.mrb[0].mxu0 %v2269
      %v2368 = vpop.f32.mrb[0].mxu0
      %v2369 = vadd.f32 0.0, %v2368
      %v2370 = vpop.f32.mrb[0].mxu0
      %2371 = vmatprep.mubr.f32.mxu0 0.0
      %2372 = vmatmul.mubr.f32.gmra.mrb[0].mxu0 %v2272
      %v2373 = vpop.f32.mrb[0].mxu0
      %v2374 = vadd.f32 0.0, %v2373
      %v2375 = vpop.f32.mrb[0].mxu0
      %2376 = vmatprep.mubr.f32.mxu0 0.0
      %2377 = vmatmul.mubr.f32.gmra.mrb[0].mxu0 %v2275
      %v2378 = vpop.f32.mrb[0].mxu0
      %v2379 = vadd.f32 0.0, %v2378
      %v2380 = vpop.f32.mrb[0].mxu0
      %2381 = vdwg.mxu0
      %v2383 = vsel %vm654, %v1181, 0
      %v2386 = vsel %vm654, %v1186, 0
      %v2389 = vsel %vm654, %v1268, 0
      %v2392 = vsel %vm654, %v1273, 0
      %v2395 = vsel %vm654, %v1355, 0
      %v2398 = vsel %vm654, %v1360, 0
      %v2401 = vsel %vm654, %v1442, 0
      %v2404 = vsel %vm654, %v1447, 0
      %2406 = vmatprep.subr.mxu0 0.0
      %2407 = vmatpush1.msra.mxu0 %v634
      %2408 = vmatprep.subr.mxu0 0.0
      %2409 = vmatpush1.msra.mxu0 0.0
      %2410 = vmatprep.subr.mxu0 0.0
      %2411 = vmatpush1.msra.mxu0 0.0
      %2412 = vmatprep.subr.mxu0 0.0
      %2413 = vmatpush1.msra.mxu0 0.0
      %2414 = vmatprep.subr.mxu0 0.0
      %2415 = vmatpush1.msra.mxu0 0.0
      %2416 = vmatprep.subr.mxu0 0.0
      %2417 = vmatpush1.msra.mxu0 0.0
      %2418 = vmatprep.subr.mxu0 0.0
      %2419 = vmatpush1.msra.mxu0 0.0
      %2420 = vmatprep.subr.mxu0 0.0
      %2421 = vmatpush1.msra.mxu0 0.0
      %2422 = vmatprep.subr.mxu0 0.0
      %2423 = vmatpush1.msra.mxu0 0.0
      %2424 = vmatprep.subr.mxu0 0.0
      %2425 = vmatpush1.msra.mxu0 0.0
      %2426 = vmatprep.subr.mxu0 0.0
      %2427 = vmatpush1.msra.mxu0 0.0
      %2428 = vmatprep.subr.mxu0 0.0
      %2429 = vmatpush1.msra.mxu0 0.0
      %2430 = vmatprep.subr.mxu0 0.0
      %2431 = vmatpush1.msra.mxu0 0.0
      %2432 = vmatprep.subr.mxu0 0.0
      %2433 = vmatpush1.msra.mxu0 0.0
      %2434 = vmatprep.subr.mxu0 0.0
      %2435 = vmatpush1.msra.mxu0 0.0
      %2436 = vmatprep.subr.mxu0 0.0
      %2437 = vmatpush1.msra.mxu0 0.0
      %2438 = vmatprep.subr.mxu0 0.0
      %2439 = vmatpush1.msra.mxu0 0.0
      %2440 = vmatprep.subr.mxu0 0.0
      %2441 = vmatpush1.msra.mxu0 0.0
      %2442 = vmatprep.subr.mxu0 0.0
      %2443 = vmatpush1.msra.mxu0 0.0
      %2444 = vmatprep.subr.mxu0 0.0
      %2445 = vmatpush1.msra.mxu0 0.0
      %2446 = vmatprep.subr.mxu0 0.0
      %2447 = vmatpush1.msra.mxu0 0.0
      %2448 = vmatprep.subr.mxu0 0.0
      %2449 = vmatpush1.msra.mxu0 0.0
      %2450 = vmatprep.subr.mxu0 0.0
      %2451 = vmatpush1.msra.mxu0 0.0
      %2452 = vmatprep.subr.mxu0 0.0
      %2453 = vmatpush1.msra.mxu0 0.0
      %2454 = vmatprep.subr.mxu0 0.0
      %2455 = vmatpush1.msra.mxu0 0.0
      %2456 = vmatprep.subr.mxu0 0.0
      %2457 = vmatpush1.msra.mxu0 0.0
      %2458 = vmatprep.subr.mxu0 0.0
      %2459 = vmatpush1.msra.mxu0 0.0
      %2460 = vmatprep.subr.mxu0 0.0
      %2461 = vmatpush1.msra.mxu0 0.0
      %2462 = vmatprep.subr.mxu0 0.0
      %2463 = vmatpush1.msra.mxu0 0.0
      %2464 = vmatprep.subr.mxu0 0.0
      %2465 = vmatpush1.msra.mxu0 0.0
      %2466 = vmatprep.subr.mxu0 0.0
      %2467 = vmatpush1.msra.mxu0 0.0
      %2468 = vmatprep.subr.mxu0 0.0
      %2469 = vmatpush1.msra.mxu0 0.0
      %2470 = vmatprep.mubr.f32.mxu0 0.0
      %2471 = vmatmul.mubr.f32.gmra.mrb[0].mxu0 %v2383
      %v2472 = vpop.f32.mrb[0].mxu0
      %v2473 = vadd.f32 %v2344, %v2472
      %v2474 = vpop.f32.mrb[0].mxu0
      %2475 = vmatprep.mubr.f32.mxu0 0.0
      %2476 = vmatmul.mubr.f32.gmra.mrb[0].mxu0 %v2386
      %v2477 = vpop.f32.mrb[0].mxu0
      %v2478 = vadd.f32 %v2349, %v2477
      %v2479 = vpop.f32.mrb[0].mxu0
      %2480 = vmatprep.mubr.f32.mxu0 0.0
      %2481 = vmatmul.mubr.f32.gmra.mrb[0].mxu0 %v2389
      %v2482 = vpop.f32.mrb[0].mxu0
      %v2483 = vadd.f32 %v2354, %v2482
      %v2484 = vpop.f32.mrb[0].mxu0
      %2485 = vmatprep.mubr.f32.mxu0 0.0
      %2486 = vmatmul.mubr.f32.gmra.mrb[0].mxu0 %v2392
      %v2487 = vpop.f32.mrb[0].mxu0
      %v2488 = vadd.f32 %v2359, %v2487
      %v2489 = vpop.f32.mrb[0].mxu0
      %2490 = vmatprep.mubr.f32.mxu0 0.0
      %2491 = vmatmul.mubr.f32.gmra.mrb[0].mxu0 %v2395
      %v2492 = vpop.f32.mrb[0].mxu0
      %v2493 = vadd.f32 %v2364, %v2492
      %v2494 = vpop.f32.mrb[0].mxu0
      %2495 = vmatprep.mubr.f32.mxu0 0.0
      %2496 = vmatmul.mubr.f32.gmra.mrb[0].mxu0 %v2398
      %v2497 = vpop.f32.mrb[0].mxu0
      %v2498 = vadd.f32 %v2369, %v2497
      %v2499 = vpop.f32.mrb[0].mxu0
      %2500 = vmatprep.mubr.f32.mxu0 0.0
      %2501 = vmatmul.mubr.f32.gmra.mrb[0].mxu0 %v2401
      %v2502 = vpop.f32.mrb[0].mxu0
      %v2503 = vadd.f32 %v2374, %v2502
      %v2504 = vpop.f32.mrb[0].mxu0
      %2505 = vmatprep.mubr.f32.mxu0 0.0
      %2506 = vmatmul.mubr.f32.gmra.mrb[0].mxu0 %v2404
      %v2507 = vpop.f32.mrb[0].mxu0
      %v2508 = vadd.f32 %v2379, %v2507
      %v2509 = vpop.f32.mrb[0].mxu0
      %2510 = vdwg.mxu0
      %s2511 = scalar_lea.vmem %s1, 32
      %v2512 = vld [vmem:[%s2511] sm:$0xff]
      %v2513 = vld [vmem:[%s2511 + $0x8] sm:$0xff]
      %2514 = vrot.lane.b32.xlu0 %v638, 112
      %v2515 = vpop.permute.xlu0 %2514
      %2516 = vrot.lane.b32.xlu0 %v639, 112
      %v2517 = vpop.permute.xlu0 %2516
      %2518 = vrot.lane.b32.xlu0 %v596, 80
      %v2519 = vpop.permute.xlu0 %2518
      %2520 = vrot.lane.b32.xlu0 %v601, 80
      %v2521 = vpop.permute.xlu0 %2520
      %v2522 = vsel %vm654, %v2515, 0
      %v2524 = vsel %vm654, %v2517, 0
      %v2526 = vsel %vm654, %v2519, 0
      %v2528 = vsel %vm654, %v2521, 0
      %2530 = vmatprep.subr.mxu0 0.0
      %2531 = vmatpush1.xpose.msra.mxu0 %v2526
      %2532 = vmatprep.subr.mxu0 0.0
      %2533 = vmatpush1.xpose.msra.mxu0 %v2528
      %2534 = vmatprep.subr.mxu0 0.0
      %2535 = vmatpush1.xpose.msra.mxu0 0.0
      %2536 = vmatprep.subr.mxu0 0.0
      %2537 = vmatpush1.xpose.msra.mxu0 0.0
      %2538 = vmatprep.subr.mxu0 0.0
      %2539 = vmatpush1.xpose.msra.mxu0 0.0
      %2540 = vmatprep.subr.mxu0 0.0
      %2541 = vmatpush1.xpose.msra.mxu0 0.0
      %2542 = vmatprep.subr.mxu0 0.0
      %2543 = vmatpush1.xpose.msra.mxu0 0.0
      %2544 = vmatprep.subr.mxu0 0.0
      %2545 = vmatpush1.xpose.msra.mxu0 0.0
      %2546 = vmatprep.subr.mxu0 0.0
      %2547 = vmatpush1.xpose.msra.mxu0 0.0
      %2548 = vmatprep.subr.mxu0 0.0
      %2549 = vmatpush1.xpose.msra.mxu0 0.0
      %2550 = vmatprep.subr.mxu0 0.0
      %2551 = vmatpush1.xpose.msra.mxu0 0.0
      %2552 = vmatprep.subr.mxu0 0.0
      %2553 = vmatpush1.xpose.msra.mxu0 0.0
      %2554 = vmatprep.subr.mxu0 0.0
      %2555 = vmatpush1.xpose.msra.mxu0 0.0
      %2556 = vmatprep.subr.mxu0 0.0
      %2557 = vmatpush1.xpose.msra.mxu0 0.0
      %2558 = vmatprep.subr.mxu0 0.0
      %2559 = vmatpush1.xpose.msra.mxu0 0.0
      %2560 = vmatprep.subr.mxu0 0.0
      %2561 = vmatpush1.xpose.msra.mxu0 0.0
      %2562 = vmatprep.subr.mxu0 0.0
      %2563 = vmatpush1.xpose.msra.mxu0 0.0
      %2564 = vmatprep.subr.mxu0 0.0
      %2565 = vmatpush1.xpose.msra.mxu0 0.0
      %2566 = vmatprep.subr.mxu0 0.0
      %2567 = vmatpush1.xpose.msra.mxu0 0.0
      %2568 = vmatprep.subr.mxu0 0.0
      %2569 = vmatpush1.xpose.msra.mxu0 0.0
      %2570 = vmatprep.subr.mxu0 0.0
      %2571 = vmatpush1.xpose.msra.mxu0 0.0
      %2572 = vmatprep.subr.mxu0 0.0
      %2573 = vmatpush1.xpose.msra.mxu0 0.0
      %2574 = vmatprep.subr.mxu0 0.0
      %2575 = vmatpush1.xpose.msra.mxu0 0.0
      %2576 = vmatprep.subr.mxu0 0.0
      %2577 = vmatpush1.xpose.msra.mxu0 0.0
      %2578 = vmatprep.subr.mxu0 0.0
      %2579 = vmatpush1.xpose.msra.mxu0 0.0
      %2580 = vmatprep.subr.mxu0 0.0
      %2581 = vmatpush1.xpose.msra.mxu0 0.0
      %2582 = vmatprep.subr.mxu0 0.0
      %2583 = vmatpush1.xpose.msra.mxu0 0.0
      %2584 = vmatprep.subr.mxu0 0.0
      %2585 = vmatpush1.xpose.msra.mxu0 0.0
      %2586 = vmatprep.subr.mxu0 0.0
      %2587 = vmatpush1.xpose.msra.mxu0 0.0
      %2588 = vmatprep.subr.mxu0 0.0
      %2589 = vmatpush1.xpose.msra.mxu0 0.0
      %2590 = vmatprep.subr.mxu0 0.0
      %2591 = vmatpush1.xpose.msra.mxu0 0.0
      %2592 = vmatprep.subr.mxu0 0.0
      %2593 = vmatpush1.xpose.msra.mxu0 0.0
      %2594 = vmatprep.mubr.f32.mxu0 0.0
      %2595 = vmatmul.mubr.f32.gmra.mrb[0].mxu0 %v2522
      %v2596 = vpop.f32.mrb[0].mxu0
      %v2597 = vadd.f32 %v2512, %v2596
      %v2598 = vpop.f32.mrb[0].mxu0
      %2599 = vmatprep.mubr.f32.mxu0 0.0
      %2600 = vmatmul.mubr.f32.gmra.mrb[0].mxu0 %v2524
      %v2601 = vpop.f32.mrb[0].mxu0
      %v2602 = vadd.f32 %v2513, %v2601
      %v2603 = vpop.f32.mrb[0].mxu0
      %2604 = vdwg.mxu0
      %2605 = vrot.lane.b32.xlu0 %v640, 112
      %v2606 = vpop.permute.xlu0 %2605
      %2607 = vrot.lane.b32.xlu0 %v641, 112
      %v2608 = vpop.permute.xlu0 %2607
      %2609 = vrot.lane.b32.xlu0 %v606, 80
      %v2610 = vpop.permute.xlu0 %2609
      %2611 = vrot.lane.b32.xlu0 %v611, 80
      %v2612 = vpop.permute.xlu0 %2611
      %v2613 = vsel %vm654, %v2606, 0
      %v2615 = vsel %vm654, %v2608, 0
      %v2617 = vsel %vm654, %v2610, 0
      %v2619 = vsel %vm654, %v2612, 0
      %2621 = vmatprep.subr.mxu0 0.0
      %2622 = vmatpush1.xpose.msra.mxu0 %v2617
      %2623 = vmatprep.subr.mxu0 0.0
      %2624 = vmatpush1.xpose.msra.mxu0 %v2619
      %2625 = vmatprep.subr.mxu0 0.0
      %2626 = vmatpush1.xpose.msra.mxu0 0.0
      %2627 = vmatprep.subr.mxu0 0.0
      %2628 = vmatpush1.xpose.msra.mxu0 0.0
      %2629 = vmatprep.subr.mxu0 0.0
      %2630 = vmatpush1.xpose.msra.mxu0 0.0
      %2631 = vmatprep.subr.mxu0 0.0
      %2632 = vmatpush1.xpose.msra.mxu0 0.0
      %2633 = vmatprep.subr.mxu0 0.0
      %2634 = vmatpush1.xpose.msra.mxu0 0.0
      %2635 = vmatprep.subr.mxu0 0.0
      %2636 = vmatpush1.xpose.msra.mxu0 0.0
      %2637 = vmatprep.subr.mxu0 0.0
      %2638 = vmatpush1.xpose.msra.mxu0 0.0
      %2639 = vmatprep.subr.mxu0 0.0
      %2640 = vmatpush1.xpose.msra.mxu0 0.0
      %2641 = vmatprep.subr.mxu0 0.0
      %2642 = vmatpush1.xpose.msra.mxu0 0.0
      %2643 = vmatprep.subr.mxu0 0.0
      %2644 = vmatpush1.xpose.msra.mxu0 0.0
      %2645 = vmatprep.subr.mxu0 0.0
      %2646 = vmatpush1.xpose.msra.mxu0 0.0
      %2647 = vmatprep.subr.mxu0 0.0
      %2648 = vmatpush1.xpose.msra.mxu0 0.0
      %2649 = vmatprep.subr.mxu0 0.0
      %2650 = vmatpush1.xpose.msra.mxu0 0.0
      %2651 = vmatprep.subr.mxu0 0.0
      %2652 = vmatpush1.xpose.msra.mxu0 0.0
      %2653 = vmatprep.subr.mxu0 0.0
      %2654 = vmatpush1.xpose.msra.mxu0 0.0
      %2655 = vmatprep.subr.mxu0 0.0
      %2656 = vmatpush1.xpose.msra.mxu0 0.0
      %2657 = vmatprep.subr.mxu0 0.0
      %2658 = vmatpush1.xpose.msra.mxu0 0.0
      %2659 = vmatprep.subr.mxu0 0.0
      %2660 = vmatpush1.xpose.msra.mxu0 0.0
      %2661 = vmatprep.subr.mxu0 0.0
      %2662 = vmatpush1.xpose.msra.mxu0 0.0
      %2663 = vmatprep.subr.mxu0 0.0
      %2664 = vmatpush1.xpose.msra.mxu0 0.0
      %2665 = vmatprep.subr.mxu0 0.0
      %2666 = vmatpush1.xpose.msra.mxu0 0.0
      %2667 = vmatprep.subr.mxu0 0.0
      %2668 = vmatpush1.xpose.msra.mxu0 0.0
      %2669 = vmatprep.subr.mxu0 0.0
      %2670 = vmatpush1.xpose.msra.mxu0 0.0
      %2671 = vmatprep.subr.mxu0 0.0
      %2672 = vmatpush1.xpose.msra.mxu0 0.0
      %2673 = vmatprep.subr.mxu0 0.0
      %2674 = vmatpush1.xpose.msra.mxu0 0.0
      %2675 = vmatprep.subr.mxu0 0.0
      %2676 = vmatpush1.xpose.msra.mxu0 0.0
      %2677 = vmatprep.subr.mxu0 0.0
      %2678 = vmatpush1.xpose.msra.mxu0 0.0
      %2679 = vmatprep.subr.mxu0 0.0
      %2680 = vmatpush1.xpose.msra.mxu0 0.0
      %2681 = vmatprep.subr.mxu0 0.0
      %2682 = vmatpush1.xpose.msra.mxu0 0.0
      %2683 = vmatprep.subr.mxu0 0.0
      %2684 = vmatpush1.xpose.msra.mxu0 0.0
      %2685 = vmatprep.mubr.f32.mxu0 0.0
      %2686 = vmatmul.mubr.f32.gmra.mrb[0].mxu0 %v2613
      %v2687 = vpop.f32.mrb[0].mxu0
      %v2688 = vadd.f32 %v2512, %v2687
      %v2689 = vpop.f32.mrb[0].mxu0
      %2690 = vmatprep.mubr.f32.mxu0 0.0
      %2691 = vmatmul.mubr.f32.gmra.mrb[0].mxu0 %v2615
      %v2692 = vpop.f32.mrb[0].mxu0
      %v2693 = vadd.f32 %v2513, %v2692
      %v2694 = vpop.f32.mrb[0].mxu0
      %2695 = vdwg.mxu0
      %2696 = vrot.lane.b32.xlu0 %v642, 112
      %v2697 = vpop.permute.xlu0 %2696
      %2698 = vrot.lane.b32.xlu0 %v643, 112
      %v2699 = vpop.permute.xlu0 %2698
      %2700 = vrot.lane.b32.xlu0 %v616, 80
      %v2701 = vpop.permute.xlu0 %2700
      %2702 = vrot.lane.b32.xlu0 %v621, 80
      %v2703 = vpop.permute.xlu0 %2702
      %v2704 = vsel %vm654, %v2697, 0
      %v2706 = vsel %vm654, %v2699, 0
      %v2708 = vsel %vm654, %v2701, 0
      %v2710 = vsel %vm654, %v2703, 0
      %2712 = vmatprep.subr.mxu0 0.0
      %2713 = vmatpush1.xpose.msra.mxu0 %v2708
      %2714 = vmatprep.subr.mxu0 0.0
      %2715 = vmatpush1.xpose.msra.mxu0 %v2710
      %2716 = vmatprep.subr.mxu0 0.0
      %2717 = vmatpush1.xpose.msra.mxu0 0.0
      %2718 = vmatprep.subr.mxu0 0.0
      %2719 = vmatpush1.xpose.msra.mxu0 0.0
      %2720 = vmatprep.subr.mxu0 0.0
      %2721 = vmatpush1.xpose.msra.mxu0 0.0
      %2722 = vmatprep.subr.mxu0 0.0
      %2723 = vmatpush1.xpose.msra.mxu0 0.0
      %2724 = vmatprep.subr.mxu0 0.0
      %2725 = vmatpush1.xpose.msra.mxu0 0.0
      %2726 = vmatprep.subr.mxu0 0.0
      %2727 = vmatpush1.xpose.msra.mxu0 0.0
      %2728 = vmatprep.subr.mxu0 0.0
      %2729 = vmatpush1.xpose.msra.mxu0 0.0
      %2730 = vmatprep.subr.mxu0 0.0
      %2731 = vmatpush1.xpose.msra.mxu0 0.0
      %2732 = vmatprep.subr.mxu0 0.0
      %2733 = vmatpush1.xpose.msra.mxu0 0.0
      %2734 = vmatprep.subr.mxu0 0.0
      %2735 = vmatpush1.xpose.msra.mxu0 0.0
      %2736 = vmatprep.subr.mxu0 0.0
      %2737 = vmatpush1.xpose.msra.mxu0 0.0
      %2738 = vmatprep.subr.mxu0 0.0
      %2739 = vmatpush1.xpose.msra.mxu0 0.0
      %2740 = vmatprep.subr.mxu0 0.0
      %2741 = vmatpush1.xpose.msra.mxu0 0.0
      %2742 = vmatprep.subr.mxu0 0.0
      %2743 = vmatpush1.xpose.msra.mxu0 0.0
      %2744 = vmatprep.subr.mxu0 0.0
      %2745 = vmatpush1.xpose.msra.mxu0 0.0
      %2746 = vmatprep.subr.mxu0 0.0
      %2747 = vmatpush1.xpose.msra.mxu0 0.0
      %2748 = vmatprep.subr.mxu0 0.0
      %2749 = vmatpush1.xpose.msra.mxu0 0.0
      %2750 = vmatprep.subr.mxu0 0.0
      %2751 = vmatpush1.xpose.msra.mxu0 0.0
      %2752 = vmatprep.subr.mxu0 0.0
      %2753 = vmatpush1.xpose.msra.mxu0 0.0
      %2754 = vmatprep.subr.mxu0 0.0
      %2755 = vmatpush1.xpose.msra.mxu0 0.0
      %2756 = vmatprep.subr.mxu0 0.0
      %2757 = vmatpush1.xpose.msra.mxu0 0.0
      %2758 = vmatprep.subr.mxu0 0.0
      %2759 = vmatpush1.xpose.msra.mxu0 0.0
      %2760 = vmatprep.subr.mxu0 0.0
      %2761 = vmatpush1.xpose.msra.mxu0 0.0
      %2762 = vmatprep.subr.mxu0 0.0
      %2763 = vmatpush1.xpose.msra.mxu0 0.0
      %2764 = vmatprep.subr.mxu0 0.0
      %2765 = vmatpush1.xpose.msra.mxu0 0.0
      %2766 = vmatprep.subr.mxu0 0.0
      %2767 = vmatpush1.xpose.msra.mxu0 0.0
      %2768 = vmatprep.subr.mxu0 0.0
      %2769 = vmatpush1.xpose.msra.mxu0 0.0
      %2770 = vmatprep.subr.mxu0 0.0
      %2771 = vmatpush1.xpose.msra.mxu0 0.0
      %2772 = vmatprep.subr.mxu0 0.0
      %2773 = vmatpush1.xpose.msra.mxu0 0.0
      %2774 = vmatprep.subr.mxu0 0.0
      %2775 = vmatpush1.xpose.msra.mxu0 0.0
      %2776 = vmatprep.mubr.f32.mxu0 0.0
      %2777 = vmatmul.mubr.f32.gmra.mrb[0].mxu0 %v2704
      %v2778 = vpop.f32.mrb[0].mxu0
      %v2779 = vadd.f32 %v2512, %v2778
      %v2780 = vpop.f32.mrb[0].mxu0
      %2781 = vmatprep.mubr.f32.mxu0 0.0
      %2782 = vmatmul.mubr.f32.gmra.mrb[0].mxu0 %v2706
      %v2783 = vpop.f32.mrb[0].mxu0
      %v2784 = vadd.f32 %v2513, %v2783
      %v2785 = vpop.f32.mrb[0].mxu0
      %2786 = vdwg.mxu0
      %2787 = vrot.lane.b32.xlu0 %v644, 112
      %v2788 = vpop.permute.xlu0 %2787
      %2789 = vrot.lane.b32.xlu0 %v645, 112
      %v2790 = vpop.permute.xlu0 %2789
      %2791 = vrot.lane.b32.xlu0 %v626, 80
      %v2792 = vpop.permute.xlu0 %2791
      %2793 = vrot.lane.b32.xlu0 %v631, 80
      %v2794 = vpop.permute.xlu0 %2793
      %v2795 = vsel %vm654, %v2788, 0
      %v2797 = vsel %vm654, %v2790, 0
      %v2799 = vsel %vm654, %v2792, 0
      %v2801 = vsel %vm654, %v2794, 0
      %2803 = vmatprep.subr.mxu0 0.0
      %2804 = vmatpush1.xpose.msra.mxu0 %v2799
      %2805 = vmatprep.subr.mxu0 0.0
      %2806 = vmatpush1.xpose.msra.mxu0 %v2801
      %2807 = vmatprep.subr.mxu0 0.0
      %2808 = vmatpush1.xpose.msra.mxu0 0.0
      %2809 = vmatprep.subr.mxu0 0.0
      %2810 = vmatpush1.xpose.msra.mxu0 0.0
      %2811 = vmatprep.subr.mxu0 0.0
      %2812 = vmatpush1.xpose.msra.mxu0 0.0
      %2813 = vmatprep.subr.mxu0 0.0
      %2814 = vmatpush1.xpose.msra.mxu0 0.0
      %2815 = vmatprep.subr.mxu0 0.0
      %2816 = vmatpush1.xpose.msra.mxu0 0.0
      %2817 = vmatprep.subr.mxu0 0.0
      %2818 = vmatpush1.xpose.msra.mxu0 0.0
      %2819 = vmatprep.subr.mxu0 0.0
      %2820 = vmatpush1.xpose.msra.mxu0 0.0
      %2821 = vmatprep.subr.mxu0 0.0
      %2822 = vmatpush1.xpose.msra.mxu0 0.0
      %2823 = vmatprep.subr.mxu0 0.0
      %2824 = vmatpush1.xpose.msra.mxu0 0.0
      %2825 = vmatprep.subr.mxu0 0.0
      %2826 = vmatpush1.xpose.msra.mxu0 0.0
      %2827 = vmatprep.subr.mxu0 0.0
      %2828 = vmatpush1.xpose.msra.mxu0 0.0
      %2829 = vmatprep.subr.mxu0 0.0
      %2830 = vmatpush1.xpose.msra.mxu0 0.0
      %2831 = vmatprep.subr.mxu0 0.0
      %2832 = vmatpush1.xpose.msra.mxu0 0.0
      %2833 = vmatprep.subr.mxu0 0.0
      %2834 = vmatpush1.xpose.msra.mxu0 0.0
      %2835 = vmatprep.subr.mxu0 0.0
      %2836 = vmatpush1.xpose.msra.mxu0 0.0
      %2837 = vmatprep.subr.mxu0 0.0
      %2838 = vmatpush1.xpose.msra.mxu0 0.0
      %2839 = vmatprep.subr.mxu0 0.0
      %2840 = vmatpush1.xpose.msra.mxu0 0.0
      %2841 = vmatprep.subr.mxu0 0.0
      %2842 = vmatpush1.xpose.msra.mxu0 0.0
      %2843 = vmatprep.subr.mxu0 0.0
      %2844 = vmatpush1.xpose.msra.mxu0 0.0
      %2845 = vmatprep.subr.mxu0 0.0
      %2846 = vmatpush1.xpose.msra.mxu0 0.0
      %2847 = vmatprep.subr.mxu0 0.0
      %2848 = vmatpush1.xpose.msra.mxu0 0.0
      %2849 = vmatprep.subr.mxu0 0.0
      %2850 = vmatpush1.xpose.msra.mxu0 0.0
      %2851 = vmatprep.subr.mxu0 0.0
      %2852 = vmatpush1.xpose.msra.mxu0 0.0
      %2853 = vmatprep.subr.mxu0 0.0
      %2854 = vmatpush1.xpose.msra.mxu0 0.0
      %2855 = vmatprep.subr.mxu0 0.0
      %2856 = vmatpush1.xpose.msra.mxu0 0.0
      %2857 = vmatprep.subr.mxu0 0.0
      %2858 = vmatpush1.xpose.msra.mxu0 0.0
      %2859 = vmatprep.subr.mxu0 0.0
      %2860 = vmatpush1.xpose.msra.mxu0 0.0
      %2861 = vmatprep.subr.mxu0 0.0
      %2862 = vmatpush1.xpose.msra.mxu0 0.0
      %2863 = vmatprep.subr.mxu0 0.0
      %2864 = vmatpush1.xpose.msra.mxu0 0.0
      %2865 = vmatprep.subr.mxu0 0.0
      %2866 = vmatpush1.xpose.msra.mxu0 0.0
      %2867 = vmatprep.mubr.f32.mxu0 0.0
      %2868 = vmatmul.mubr.f32.gmra.mrb[0].mxu0 %v2795
      %v2869 = vpop.f32.mrb[0].mxu0
      %v2870 = vadd.f32 %v2512, %v2869
      %v2871 = vpop.f32.mrb[0].mxu0
      %2872 = vmatprep.mubr.f32.mxu0 0.0
      %2873 = vmatmul.mubr.f32.gmra.mrb[0].mxu0 %v2797
      %v2874 = vpop.f32.mrb[0].mxu0
      %v2875 = vadd.f32 %v2513, %v2874
      %v2876 = vpop.f32.mrb[0].mxu0
      %2877 = vdwg.mxu0
      %v2878 = vsel %vm1013, %v2597, -inf
      %2879 = vmax.xlane.f32.xlu0 %v2878
      %v2880 = vpop.xlane.xlu0 %2879
      %v2881 = vsel %vm1013, %v2602, -inf
      %2882 = vmax.xlane.f32.xlu0 %v2881
      %v2883 = vpop.xlane.xlu0 %2882
      %v2884 = vsel %vm1013, %v2688, -inf
      %2885 = vmax.xlane.f32.xlu0 %v2884
      %v2886 = vpop.xlane.xlu0 %2885
      %v2887 = vsel %vm1013, %v2693, -inf
      %2888 = vmax.xlane.f32.xlu0 %v2887
      %v2889 = vpop.xlane.xlu0 %2888
      %v2890 = vsel %vm1013, %v2779, -inf
      %2891 = vmax.xlane.f32.xlu0 %v2890
      %v2892 = vpop.xlane.xlu0 %2891
      %v2893 = vsel %vm1013, %v2784, -inf
      %2894 = vmax.xlane.f32.xlu0 %v2893
      %v2895 = vpop.xlane.xlu0 %2894
      %v2896 = vsel %vm1013, %v2870, -inf
      %2897 = vmax.xlane.f32.xlu0 %v2896
      %v2898 = vpop.xlane.xlu0 %2897
      %v2899 = vsel %vm1013, %v2875, -inf
      %2900 = vmax.xlane.f32.xlu0 %v2899
      %v2901 = vpop.xlane.xlu0 %2900
      %v2902 = vsub.f32 %v2597, %v2880
      %v2903 = vsub.f32 %v2602, %v2883
      %v2904 = vsub.f32 %v2688, %v2886
      %v2905 = vsub.f32 %v2693, %v2889
      %v2906 = vsub.f32 %v2779, %v2892
      %v2907 = vsub.f32 %v2784, %v2895
      %v2908 = vsub.f32 %v2870, %v2898
      %v2909 = vsub.f32 %v2875, %v2901
      %v2910 = vmul.f32 %v2902, 1.442695
      %v2911 = vpow.pop %v2910
      %v2912 = vmul.f32 %v2903, 1.442695
      %v2913 = vpow.pop %v2912
      %v2914 = vmul.f32 %v2904, 1.442695
      %v2915 = vpow.pop %v2914
      %v2916 = vmul.f32 %v2905, 1.442695
      %v2917 = vpow.pop %v2916
      %v2918 = vmul.f32 %v2906, 1.442695
      %v2919 = vpow.pop %v2918
      %v2920 = vmul.f32 %v2907, 1.442695
      %v2921 = vpow.pop %v2920
      %v2922 = vmul.f32 %v2908, 1.442695
      %v2923 = vpow.pop %v2922
      %v2924 = vmul.f32 %v2909, 1.442695
      %v2925 = vpow.pop %v2924
      %v2926 = vsel %vm1013, %v2911, 0.0
      %2927 = vadd.xlane.f32.xlu0 %v2926
      %v2928 = vpop.xlane.xlu0 %2927
      %v2929 = vsel %vm1013, %v2913, 0.0
      %2930 = vadd.xlane.f32.xlu0 %v2929
      %v2931 = vpop.xlane.xlu0 %2930
      %v2932 = vsel %vm1013, %v2915, 0.0
      %2933 = vadd.xlane.f32.xlu0 %v2932
      %v2934 = vpop.xlane.xlu0 %2933
      %v2935 = vsel %vm1013, %v2917, 0.0
      %2936 = vadd.xlane.f32.xlu0 %v2935
      %v2937 = vpop.xlane.xlu0 %2936
      %v2938 = vsel %vm1013, %v2919, 0.0
      %2939 = vadd.xlane.f32.xlu0 %v2938
      %v2940 = vpop.xlane.xlu0 %2939
      %v2941 = vsel %vm1013, %v2921, 0.0
      %2942 = vadd.xlane.f32.xlu0 %v2941
      %v2943 = vpop.xlane.xlu0 %2942
      %v2944 = vsel %vm1013, %v2923, 0.0
      %2945 = vadd.xlane.f32.xlu0 %v2944
      %v2946 = vpop.xlane.xlu0 %2945
      %v2947 = vsel %vm1013, %v2925, 0.0
      %2948 = vadd.xlane.f32.xlu0 %v2947
      %v2949 = vpop.xlane.xlu0 %2948
      %v2950 = vrcp.pop %v2928
      %v2951 = vmul.f32 %v2911, %v2950
      %v2952 = vrcp.pop %v2931
      %v2953 = vmul.f32 %v2913, %v2952
      %v2954 = vrcp.pop %v2934
      %v2955 = vmul.f32 %v2915, %v2954
      %v2956 = vrcp.pop %v2937
      %v2957 = vmul.f32 %v2917, %v2956
      %v2958 = vrcp.pop %v2940
      %v2959 = vmul.f32 %v2919, %v2958
      %v2960 = vrcp.pop %v2943
      %v2961 = vmul.f32 %v2921, %v2960
      %v2962 = vrcp.pop %v2946
      %v2963 = vmul.f32 %v2923, %v2962
      %v2964 = vrcp.pop %v2949
      %v2965 = vmul.f32 %v2925, %v2964
      %2966 = vrot.lane.b32.xlu0 %v596, 48
      %v2967 = vpop.permute.xlu0 %2966
      %2968 = vrot.lane.b32.xlu0 %v601, 48
      %v2969 = vpop.permute.xlu0 %2968
      %v2973 = vsel %vm1013, %v2951, 0
      %v2976 = vsel %vm1013, %v2953, 0
      %2978 = vmatprep.subr.mxu0 0.0
      %2979 = vmatpush1.msra.mxu0 %v2967
      %2980 = vmatprep.subr.mxu0 0.0
      %2981 = vmatpush1.msra.mxu0 %v2969
      %2982 = vmatprep.subr.mxu0 0.0
      %2983 = vmatpush1.msra.mxu0 0.0
      %2984 = vmatprep.subr.mxu0 0.0
      %2985 = vmatpush1.msra.mxu0 0.0
      %2986 = vmatprep.subr.mxu0 0.0
      %2987 = vmatpush1.msra.mxu0 0.0
      %2988 = vmatprep.subr.mxu0 0.0
      %2989 = vmatpush1.msra.mxu0 0.0
      %2990 = vmatprep.subr.mxu0 0.0
      %2991 = vmatpush1.msra.mxu0 0.0
      %2992 = vmatprep.subr.mxu0 0.0
      %2993 = vmatpush1.msra.mxu0 0.0
      %2994 = vmatprep.subr.mxu0 0.0
      %2995 = vmatpush1.msra.mxu0 0.0
      %2996 = vmatprep.subr.mxu0 0.0
      %2997 = vmatpush1.msra.mxu0 0.0
      %2998 = vmatprep.subr.mxu0 0.0
      %2999 = vmatpush1.msra.mxu0 0.0
      %3000 = vmatprep.subr.mxu0 0.0
      %3001 = vmatpush1.msra.mxu0 0.0
      %3002 = vmatprep.subr.mxu0 0.0
      %3003 = vmatpush1.msra.mxu0 0.0
      %3004 = vmatprep.subr.mxu0 0.0
      %3005 = vmatpush1.msra.mxu0 0.0
      %3006 = vmatprep.subr.mxu0 0.0
      %3007 = vmatpush1.msra.mxu0 0.0
      %3008 = vmatprep.subr.mxu0 0.0
      %3009 = vmatpush1.msra.mxu0 0.0
      %3010 = vmatprep.subr.mxu0 0.0
      %3011 = vmatpush1.msra.mxu0 0.0
      %3012 = vmatprep.subr.mxu0 0.0
      %3013 = vmatpush1.msra.mxu0 0.0
      %3014 = vmatprep.subr.mxu0 0.0
      %3015 = vmatpush1.msra.mxu0 0.0
      %3016 = vmatprep.subr.mxu0 0.0
      %3017 = vmatpush1.msra.mxu0 0.0
      %3018 = vmatprep.subr.mxu0 0.0
      %3019 = vmatpush1.msra.mxu0 0.0
      %3020 = vmatprep.subr.mxu0 0.0
      %3021 = vmatpush1.msra.mxu0 0.0
      %3022 = vmatprep.subr.mxu0 0.0
      %3023 = vmatpush1.msra.mxu0 0.0
      %3024 = vmatprep.subr.mxu0 0.0
      %3025 = vmatpush1.msra.mxu0 0.0
      %3026 = vmatprep.subr.mxu0 0.0
      %3027 = vmatpush1.msra.mxu0 0.0
      %3028 = vmatprep.subr.mxu0 0.0
      %3029 = vmatpush1.msra.mxu0 0.0
      %3030 = vmatprep.subr.mxu0 0.0
      %3031 = vmatpush1.msra.mxu0 0.0
      %3032 = vmatprep.subr.mxu0 0.0
      %3033 = vmatpush1.msra.mxu0 0.0
      %3034 = vmatprep.subr.mxu0 0.0
      %3035 = vmatpush1.msra.mxu0 0.0
      %3036 = vmatprep.subr.mxu0 0.0
      %3037 = vmatpush1.msra.mxu0 0.0
      %3038 = vmatprep.subr.mxu0 0.0
      %3039 = vmatpush1.msra.mxu0 0.0
      %3040 = vmatprep.subr.mxu0 0.0
      %3041 = vmatpush1.msra.mxu0 0.0
      %3042 = vmatprep.mubr.f32.mxu0 0.0
      %3043 = vmatmul.mubr.f32.gmra.mrb[0].mxu0 %v2973
      %v3044 = vpop.f32.mrb[0].mxu0
      %v3045 = vadd.f32 0.0, %v3044
      %v3046 = vpop.f32.mrb[0].mxu0
      %3047 = vmatprep.mubr.f32.mxu0 0.0
      %3048 = vmatmul.mubr.f32.gmra.mrb[0].mxu0 %v2976
      %v3049 = vpop.f32.mrb[0].mxu0
      %v3050 = vadd.f32 0.0, %v3049
      %v3051 = vpop.f32.mrb[0].mxu0
      %3052 = vdwg.mxu0
      %3053 = vrot.lane.b32.xlu0 %v606, 48
      %v3054 = vpop.permute.xlu0 %3053
      %3055 = vrot.lane.b32.xlu0 %v611, 48
      %v3056 = vpop.permute.xlu0 %3055
      %v3060 = vsel %vm1013, %v2955, 0
      %v3063 = vsel %vm1013, %v2957, 0
      %3065 = vmatprep.subr.mxu0 0.0
      %3066 = vmatpush1.msra.mxu0 %v3054
      %3067 = vmatprep.subr.mxu0 0.0
      %3068 = vmatpush1.msra.mxu0 %v3056
      %3069 = vmatprep.subr.mxu0 0.0
      %3070 = vmatpush1.msra.mxu0 0.0
      %3071 = vmatprep.subr.mxu0 0.0
      %3072 = vmatpush1.msra.mxu0 0.0
      %3073 = vmatprep.subr.mxu0 0.0
      %3074 = vmatpush1.msra.mxu0 0.0
      %3075 = vmatprep.subr.mxu0 0.0
      %3076 = vmatpush1.msra.mxu0 0.0
      %3077 = vmatprep.subr.mxu0 0.0
      %3078 = vmatpush1.msra.mxu0 0.0
      %3079 = vmatprep.subr.mxu0 0.0
      %3080 = vmatpush1.msra.mxu0 0.0
      %3081 = vmatprep.subr.mxu0 0.0
      %3082 = vmatpush1.msra.mxu0 0.0
      %3083 = vmatprep.subr.mxu0 0.0
      %3084 = vmatpush1.msra.mxu0 0.0
      %3085 = vmatprep.subr.mxu0 0.0
      %3086 = vmatpush1.msra.mxu0 0.0
      %3087 = vmatprep.subr.mxu0 0.0
      %3088 = vmatpush1.msra.mxu0 0.0
      %3089 = vmatprep.subr.mxu0 0.0
      %3090 = vmatpush1.msra.mxu0 0.0
      %3091 = vmatprep.subr.mxu0 0.0
      %3092 = vmatpush1.msra.mxu0 0.0
      %3093 = vmatprep.subr.mxu0 0.0
      %3094 = vmatpush1.msra.mxu0 0.0
      %3095 = vmatprep.subr.mxu0 0.0
      %3096 = vmatpush1.msra.mxu0 0.0
      %3097 = vmatprep.subr.mxu0 0.0
      %3098 = vmatpush1.msra.mxu0 0.0
      %3099 = vmatprep.subr.mxu0 0.0
      %3100 = vmatpush1.msra.mxu0 0.0
      %3101 = vmatprep.subr.mxu0 0.0
      %3102 = vmatpush1.msra.mxu0 0.0
      %3103 = vmatprep.subr.mxu0 0.0
      %3104 = vmatpush1.msra.mxu0 0.0
      %3105 = vmatprep.subr.mxu0 0.0
      %3106 = vmatpush1.msra.mxu0 0.0
      %3107 = vmatprep.subr.mxu0 0.0
      %3108 = vmatpush1.msra.mxu0 0.0
      %3109 = vmatprep.subr.mxu0 0.0
      %3110 = vmatpush1.msra.mxu0 0.0
      %3111 = vmatprep.subr.mxu0 0.0
      %3112 = vmatpush1.msra.mxu0 0.0
      %3113 = vmatprep.subr.mxu0 0.0
      %3114 = vmatpush1.msra.mxu0 0.0
      %3115 = vmatprep.subr.mxu0 0.0
      %3116 = vmatpush1.msra.mxu0 0.0
      %3117 = vmatprep.subr.mxu0 0.0
      %3118 = vmatpush1.msra.mxu0 0.0
      %3119 = vmatprep.subr.mxu0 0.0
      %3120 = vmatpush1.msra.mxu0 0.0
      %3121 = vmatprep.subr.mxu0 0.0
      %3122 = vmatpush1.msra.mxu0 0.0
      %3123 = vmatprep.subr.mxu0 0.0
      %3124 = vmatpush1.msra.mxu0 0.0
      %3125 = vmatprep.subr.mxu0 0.0
      %3126 = vmatpush1.msra.mxu0 0.0
      %3127 = vmatprep.subr.mxu0 0.0
      %3128 = vmatpush1.msra.mxu0 0.0
      %3129 = vmatprep.mubr.f32.mxu0 0.0
      %3130 = vmatmul.mubr.f32.gmra.mrb[0].mxu0 %v3060
      %v3131 = vpop.f32.mrb[0].mxu0
      %v3132 = vadd.f32 0.0, %v3131
      %v3133 = vpop.f32.mrb[0].mxu0
      %3134 = vmatprep.mubr.f32.mxu0 0.0
      %3135 = vmatmul.mubr.f32.gmra.mrb[0].mxu0 %v3063
      %v3136 = vpop.f32.mrb[0].mxu0
      %v3137 = vadd.f32 0.0, %v3136
      %v3138 = vpop.f32.mrb[0].mxu0
      %3139 = vdwg.mxu0
      %3140 = vrot.lane.b32.xlu0 %v616, 48
      %v3141 = vpop.permute.xlu0 %3140
      %3142 = vrot.lane.b32.xlu0 %v621, 48
      %v3143 = vpop.permute.xlu0 %3142
      %v3147 = vsel %vm1013, %v2959, 0
      %v3150 = vsel %vm1013, %v2961, 0
      %3152 = vmatprep.subr.mxu0 0.0
      %3153 = vmatpush1.msra.mxu0 %v3141
      %3154 = vmatprep.subr.mxu0 0.0
      %3155 = vmatpush1.msra.mxu0 %v3143
      %3156 = vmatprep.subr.mxu0 0.0
      %3157 = vmatpush1.msra.mxu0 0.0
      %3158 = vmatprep.subr.mxu0 0.0
      %3159 = vmatpush1.msra.mxu0 0.0
      %3160 = vmatprep.subr.mxu0 0.0
      %3161 = vmatpush1.msra.mxu0 0.0
      %3162 = vmatprep.subr.mxu0 0.0
      %3163 = vmatpush1.msra.mxu0 0.0
      %3164 = vmatprep.subr.mxu0 0.0
      %3165 = vmatpush1.msra.mxu0 0.0
      %3166 = vmatprep.subr.mxu0 0.0
      %3167 = vmatpush1.msra.mxu0 0.0
      %3168 = vmatprep.subr.mxu0 0.0
      %3169 = vmatpush1.msra.mxu0 0.0
      %3170 = vmatprep.subr.mxu0 0.0
      %3171 = vmatpush1.msra.mxu0 0.0
      %3172 = vmatprep.subr.mxu0 0.0
      %3173 = vmatpush1.msra.mxu0 0.0
      %3174 = vmatprep.subr.mxu0 0.0
      %3175 = vmatpush1.msra.mxu0 0.0
      %3176 = vmatprep.subr.mxu0 0.0
      %3177 = vmatpush1.msra.mxu0 0.0
      %3178 = vmatprep.subr.mxu0 0.0
      %3179 = vmatpush1.msra.mxu0 0.0
      %3180 = vmatprep.subr.mxu0 0.0
      %3181 = vmatpush1.msra.mxu0 0.0
      %3182 = vmatprep.subr.mxu0 0.0
      %3183 = vmatpush1.msra.mxu0 0.0
      %3184 = vmatprep.subr.mxu0 0.0
      %3185 = vmatpush1.msra.mxu0 0.0
      %3186 = vmatprep.subr.mxu0 0.0
      %3187 = vmatpush1.msra.mxu0 0.0
      %3188 = vmatprep.subr.mxu0 0.0
      %3189 = vmatpush1.msra.mxu0 0.0
      %3190 = vmatprep.subr.mxu0 0.0
      %3191 = vmatpush1.msra.mxu0 0.0
      %3192 = vmatprep.subr.mxu0 0.0
      %3193 = vmatpush1.msra.mxu0 0.0
      %3194 = vmatprep.subr.mxu0 0.0
      %3195 = vmatpush1.msra.mxu0 0.0
      %3196 = vmatprep.subr.mxu0 0.0
      %3197 = vmatpush1.msra.mxu0 0.0
      %3198 = vmatprep.subr.mxu0 0.0
      %3199 = vmatpush1.msra.mxu0 0.0
      %3200 = vmatprep.subr.mxu0 0.0
      %3201 = vmatpush1.msra.mxu0 0.0
      %3202 = vmatprep.subr.mxu0 0.0
      %3203 = vmatpush1.msra.mxu0 0.0
      %3204 = vmatprep.subr.mxu0 0.0
      %3205 = vmatpush1.msra.mxu0 0.0
      %3206 = vmatprep.subr.mxu0 0.0
      %3207 = vmatpush1.msra.mxu0 0.0
      %3208 = vmatprep.subr.mxu0 0.0
      %3209 = vmatpush1.msra.mxu0 0.0
      %3210 = vmatprep.subr.mxu0 0.0
      %3211 = vmatpush1.msra.mxu0 0.0
      %3212 = vmatprep.subr.mxu0 0.0
      %3213 = vmatpush1.msra.mxu0 0.0
      %3214 = vmatprep.subr.mxu0 0.0
      %3215 = vmatpush1.msra.mxu0 0.0
      %3216 = vmatprep.mubr.f32.mxu0 0.0
      %3217 = vmatmul.mubr.f32.gmra.mrb[0].mxu0 %v3147
      %v3218 = vpop.f32.mrb[0].mxu0
      %v3219 = vadd.f32 0.0, %v3218
      %v3220 = vpop.f32.mrb[0].mxu0
      %3221 = vmatprep.mubr.f32.mxu0 0.0
      %3222 = vmatmul.mubr.f32.gmra.mrb[0].mxu0 %v3150
      %v3223 = vpop.f32.mrb[0].mxu0
      %v3224 = vadd.f32 0.0, %v3223
      %v3225 = vpop.f32.mrb[0].mxu0
      %3226 = vdwg.mxu0
      %3227 = vrot.lane.b32.xlu0 %v626, 48
      %v3228 = vpop.permute.xlu0 %3227
      %3229 = vrot.lane.b32.xlu0 %v631, 48
      %v3230 = vpop.permute.xlu0 %3229
      %v3234 = vsel %vm1013, %v2963, 0
      %v3237 = vsel %vm1013, %v2965, 0
      %3239 = vmatprep.subr.mxu0 0.0
      %3240 = vmatpush1.msra.mxu0 %v3228
      %3241 = vmatprep.subr.mxu0 0.0
      %3242 = vmatpush1.msra.mxu0 %v3230
      %3243 = vmatprep.subr.mxu0 0.0
      %3244 = vmatpush1.msra.mxu0 0.0
      %3245 = vmatprep.subr.mxu0 0.0
      %3246 = vmatpush1.msra.mxu0 0.0
      %3247 = vmatprep.subr.mxu0 0.0
      %3248 = vmatpush1.msra.mxu0 0.0
      %3249 = vmatprep.subr.mxu0 0.0
      %3250 = vmatpush1.msra.mxu0 0.0
      %3251 = vmatprep.subr.mxu0 0.0
      %3252 = vmatpush1.msra.mxu0 0.0
      %3253 = vmatprep.subr.mxu0 0.0
      %3254 = vmatpush1.msra.mxu0 0.0
      %3255 = vmatprep.subr.mxu0 0.0
      %3256 = vmatpush1.msra.mxu0 0.0
      %3257 = vmatprep.subr.mxu0 0.0
      %3258 = vmatpush1.msra.mxu0 0.0
      %3259 = vmatprep.subr.mxu0 0.0
      %3260 = vmatpush1.msra.mxu0 0.0
      %3261 = vmatprep.subr.mxu0 0.0
      %3262 = vmatpush1.msra.mxu0 0.0
      %3263 = vmatprep.subr.mxu0 0.0
      %3264 = vmatpush1.msra.mxu0 0.0
      %3265 = vmatprep.subr.mxu0 0.0
      %3266 = vmatpush1.msra.mxu0 0.0
      %3267 = vmatprep.subr.mxu0 0.0
      %3268 = vmatpush1.msra.mxu0 0.0
      %3269 = vmatprep.subr.mxu0 0.0
      %3270 = vmatpush1.msra.mxu0 0.0
      %3271 = vmatprep.subr.mxu0 0.0
      %3272 = vmatpush1.msra.mxu0 0.0
      %3273 = vmatprep.subr.mxu0 0.0
      %3274 = vmatpush1.msra.mxu0 0.0
      %3275 = vmatprep.subr.mxu0 0.0
      %3276 = vmatpush1.msra.mxu0 0.0
      %3277 = vmatprep.subr.mxu0 0.0
      %3278 = vmatpush1.msra.mxu0 0.0
      %3279 = vmatprep.subr.mxu0 0.0
      %3280 = vmatpush1.msra.mxu0 0.0
      %3281 = vmatprep.subr.mxu0 0.0
      %3282 = vmatpush1.msra.mxu0 0.0
      %3283 = vmatprep.subr.mxu0 0.0
      %3284 = vmatpush1.msra.mxu0 0.0
      %3285 = vmatprep.subr.mxu0 0.0
      %3286 = vmatpush1.msra.mxu0 0.0
      %3287 = vmatprep.subr.mxu0 0.0
      %3288 = vmatpush1.msra.mxu0 0.0
      %3289 = vmatprep.subr.mxu0 0.0
      %3290 = vmatpush1.msra.mxu0 0.0
      %3291 = vmatprep.subr.mxu0 0.0
      %3292 = vmatpush1.msra.mxu0 0.0
      %3293 = vmatprep.subr.mxu0 0.0
      %3294 = vmatpush1.msra.mxu0 0.0
      %3295 = vmatprep.subr.mxu0 0.0
      %3296 = vmatpush1.msra.mxu0 0.0
      %3297 = vmatprep.subr.mxu0 0.0
      %3298 = vmatpush1.msra.mxu0 0.0
      %3299 = vmatprep.subr.mxu0 0.0
      %3300 = vmatpush1.msra.mxu0 0.0
      %3301 = vmatprep.subr.mxu0 0.0
      %3302 = vmatpush1.msra.mxu0 0.0
      %3303 = vmatprep.mubr.f32.mxu0 0.0
      %3304 = vmatmul.mubr.f32.gmra.mrb[0].mxu0 %v3234
      %v3305 = vpop.f32.mrb[0].mxu0
      %v3306 = vadd.f32 0.0, %v3305
      %v3307 = vpop.f32.mrb[0].mxu0
      %3308 = vmatprep.mubr.f32.mxu0 0.0
      %3309 = vmatmul.mubr.f32.gmra.mrb[0].mxu0 %v3237
      %v3310 = vpop.f32.mrb[0].mxu0
      %v3311 = vadd.f32 0.0, %v3310
      %v3312 = vpop.f32.mrb[0].mxu0
      %3313 = vdwg.mxu0
      %v3315 = vsel %vm654, %v3045, 0
      %v3318 = vsel %vm654, %v3050, 0
      %v3321 = vsel %vm654, %v3132, 0
      %v3324 = vsel %vm654, %v3137, 0
      %v3327 = vsel %vm654, %v3219, 0
      %v3330 = vsel %vm654, %v3224, 0
      %v3333 = vsel %vm654, %v3306, 0
      %v3336 = vsel %vm654, %v3311, 0
      %3338 = vmatprep.subr.mxu0 0.0
      %3339 = vmatpush1.msra.mxu0 %v636
      %3340 = vmatprep.subr.mxu0 0.0
      %3341 = vmatpush1.msra.mxu0 0.0
      %3342 = vmatprep.subr.mxu0 0.0
      %3343 = vmatpush1.msra.mxu0 0.0
      %3344 = vmatprep.subr.mxu0 0.0
      %3345 = vmatpush1.msra.mxu0 0.0
      %3346 = vmatprep.subr.mxu0 0.0
      %3347 = vmatpush1.msra.mxu0 0.0
      %3348 = vmatprep.subr.mxu0 0.0
      %3349 = vmatpush1.msra.mxu0 0.0
      %3350 = vmatprep.subr.mxu0 0.0
      %3351 = vmatpush1.msra.mxu0 0.0
      %3352 = vmatprep.subr.mxu0 0.0
      %3353 = vmatpush1.msra.mxu0 0.0
      %3354 = vmatprep.subr.mxu0 0.0
      %3355 = vmatpush1.msra.mxu0 0.0
      %3356 = vmatprep.subr.mxu0 0.0
      %3357 = vmatpush1.msra.mxu0 0.0
      %3358 = vmatprep.subr.mxu0 0.0
      %3359 = vmatpush1.msra.mxu0 0.0
      %3360 = vmatprep.subr.mxu0 0.0
      %3361 = vmatpush1.msra.mxu0 0.0
      %3362 = vmatprep.subr.mxu0 0.0
      %3363 = vmatpush1.msra.mxu0 0.0
      %3364 = vmatprep.subr.mxu0 0.0
      %3365 = vmatpush1.msra.mxu0 0.0
      %3366 = vmatprep.subr.mxu0 0.0
      %3367 = vmatpush1.msra.mxu0 0.0
      %3368 = vmatprep.subr.mxu0 0.0
      %3369 = vmatpush1.msra.mxu0 0.0
      %3370 = vmatprep.subr.mxu0 0.0
      %3371 = vmatpush1.msra.mxu0 0.0
      %3372 = vmatprep.subr.mxu0 0.0
      %3373 = vmatpush1.msra.mxu0 0.0
      %3374 = vmatprep.subr.mxu0 0.0
      %3375 = vmatpush1.msra.mxu0 0.0
      %3376 = vmatprep.subr.mxu0 0.0
      %3377 = vmatpush1.msra.mxu0 0.0
      %3378 = vmatprep.subr.mxu0 0.0
      %3379 = vmatpush1.msra.mxu0 0.0
      %3380 = vmatprep.subr.mxu0 0.0
      %3381 = vmatpush1.msra.mxu0 0.0
      %3382 = vmatprep.subr.mxu0 0.0
      %3383 = vmatpush1.msra.mxu0 0.0
      %3384 = vmatprep.subr.mxu0 0.0
      %3385 = vmatpush1.msra.mxu0 0.0
      %3386 = vmatprep.subr.mxu0 0.0
      %3387 = vmatpush1.msra.mxu0 0.0
      %3388 = vmatprep.subr.mxu0 0.0
      %3389 = vmatpush1.msra.mxu0 0.0
      %3390 = vmatprep.subr.mxu0 0.0
      %3391 = vmatpush1.msra.mxu0 0.0
      %3392 = vmatprep.subr.mxu0 0.0
      %3393 = vmatpush1.msra.mxu0 0.0
      %3394 = vmatprep.subr.mxu0 0.0
      %3395 = vmatpush1.msra.mxu0 0.0
      %3396 = vmatprep.subr.mxu0 0.0
      %3397 = vmatpush1.msra.mxu0 0.0
      %3398 = vmatprep.subr.mxu0 0.0
      %3399 = vmatpush1.msra.mxu0 0.0
      %3400 = vmatprep.subr.mxu0 0.0
      %3401 = vmatpush1.msra.mxu0 0.0
      %3402 = vmatprep.mubr.f32.mxu0 0.0
      %3403 = vmatmul.mubr.f32.gmra.mrb[0].mxu0 %v3315
      %v3404 = vpop.f32.mrb[0].mxu0
      %v3405 = vadd.f32 0.0, %v3404
      %v3406 = vpop.f32.mrb[0].mxu0
      %3407 = vmatprep.mubr.f32.mxu0 0.0
      %3408 = vmatmul.mubr.f32.gmra.mrb[0].mxu0 %v3318
      %v3409 = vpop.f32.mrb[0].mxu0
      %v3410 = vadd.f32 0.0, %v3409
      %v3411 = vpop.f32.mrb[0].mxu0
      %3412 = vmatprep.mubr.f32.mxu0 0.0
      %3413 = vmatmul.mubr.f32.gmra.mrb[0].mxu0 %v3321
      %v3414 = vpop.f32.mrb[0].mxu0
      %v3415 = vadd.f32 0.0, %v3414
      %v3416 = vpop.f32.mrb[0].mxu0
      %3417 = vmatprep.mubr.f32.mxu0 0.0
      %3418 = vmatmul.mubr.f32.gmra.mrb[0].mxu0 %v3324
      %v3419 = vpop.f32.mrb[0].mxu0
      %v3420 = vadd.f32 0.0, %v3419
      %v3421 = vpop.f32.mrb[0].mxu0
      %3422 = vmatprep.mubr.f32.mxu0 0.0
      %3423 = vmatmul.mubr.f32.gmra.mrb[0].mxu0 %v3327
      %v3424 = vpop.f32.mrb[0].mxu0
      %v3425 = vadd.f32 0.0, %v3424
      %v3426 = vpop.f32.mrb[0].mxu0
      %3427 = vmatprep.mubr.f32.mxu0 0.0
      %3428 = vmatmul.mubr.f32.gmra.mrb[0].mxu0 %v3330
      %v3429 = vpop.f32.mrb[0].mxu0
      %v3430 = vadd.f32 0.0, %v3429
      %v3431 = vpop.f32.mrb[0].mxu0
      %3432 = vmatprep.mubr.f32.mxu0 0.0
      %3433 = vmatmul.mubr.f32.gmra.mrb[0].mxu0 %v3333
      %v3434 = vpop.f32.mrb[0].mxu0
      %v3435 = vadd.f32 0.0, %v3434
      %v3436 = vpop.f32.mrb[0].mxu0
      %3437 = vmatprep.mubr.f32.mxu0 0.0
      %3438 = vmatmul.mubr.f32.gmra.mrb[0].mxu0 %v3336
      %v3439 = vpop.f32.mrb[0].mxu0
      %v3440 = vadd.f32 0.0, %v3439
      %v3441 = vpop.f32.mrb[0].mxu0
      %3442 = vdwg.mxu0
      %v3443 = vadd.f32 %v2473, %v3405
      %v3444 = vadd.f32 %v2478, %v3410
      %v3445 = vadd.f32 %v2483, %v3415
      %v3446 = vadd.f32 %v2488, %v3420
      %v3447 = vadd.f32 %v2493, %v3425
      %v3448 = vadd.f32 %v2498, %v3430
      %v3449 = vadd.f32 %v2503, %v3435
      %v3450 = vadd.f32 %v2508, %v3440
      %s3451 = scalar_lea.vmem %s1, 48
      %v3452 = vld [vmem:[%s3451] sm:$0xff]
      %v3453 = vld [vmem:[%s3451 + $0x8] sm:$0xff]
      %3454 = vrot.lane.b32.xlu0 %v638, 104
      %v3455 = vpop.permute.xlu0 %3454
      %3456 = vrot.lane.b32.xlu0 %v639, 104
      %v3457 = vpop.permute.xlu0 %3456
      %3458 = vrot.lane.b32.xlu0 %v596, 72
      %v3459 = vpop.permute.xlu0 %3458
      %3460 = vrot.lane.b32.xlu0 %v601, 72
      %v3461 = vpop.permute.xlu0 %3460
      %v3462 = vsel %vm654, %v3455, 0
      %v3464 = vsel %vm654, %v3457, 0
      %v3466 = vsel %vm654, %v3459, 0
      %v3468 = vsel %vm654, %v3461, 0
      %3470 = vmatprep.subr.mxu0 0.0
      %3471 = vmatpush1.xpose.msra.mxu0 %v3466
      %3472 = vmatprep.subr.mxu0 0.0
      %3473 = vmatpush1.xpose.msra.mxu0 %v3468
      %3474 = vmatprep.subr.mxu0 0.0
      %3475 = vmatpush1.xpose.msra.mxu0 0.0
      %3476 = vmatprep.subr.mxu0 0.0
      %3477 = vmatpush1.xpose.msra.mxu0 0.0
      %3478 = vmatprep.subr.mxu0 0.0
      %3479 = vmatpush1.xpose.msra.mxu0 0.0
      %3480 = vmatprep.subr.mxu0 0.0
      %3481 = vmatpush1.xpose.msra.mxu0 0.0
      %3482 = vmatprep.subr.mxu0 0.0
      %3483 = vmatpush1.xpose.msra.mxu0 0.0
      %3484 = vmatprep.subr.mxu0 0.0
      %3485 = vmatpush1.xpose.msra.mxu0 0.0
      %3486 = vmatprep.subr.mxu0 0.0
      %3487 = vmatpush1.xpose.msra.mxu0 0.0
      %3488 = vmatprep.subr.mxu0 0.0
      %3489 = vmatpush1.xpose.msra.mxu0 0.0
      %3490 = vmatprep.subr.mxu0 0.0
      %3491 = vmatpush1.xpose.msra.mxu0 0.0
      %3492 = vmatprep.subr.mxu0 0.0
      %3493 = vmatpush1.xpose.msra.mxu0 0.0
      %3494 = vmatprep.subr.mxu0 0.0
      %3495 = vmatpush1.xpose.msra.mxu0 0.0
      %3496 = vmatprep.subr.mxu0 0.0
      %3497 = vmatpush1.xpose.msra.mxu0 0.0
      %3498 = vmatprep.subr.mxu0 0.0
      %3499 = vmatpush1.xpose.msra.mxu0 0.0
      %3500 = vmatprep.subr.mxu0 0.0
      %3501 = vmatpush1.xpose.msra.mxu0 0.0
      %3502 = vmatprep.subr.mxu0 0.0
      %3503 = vmatpush1.xpose.msra.mxu0 0.0
      %3504 = vmatprep.subr.mxu0 0.0
      %3505 = vmatpush1.xpose.msra.mxu0 0.0
      %3506 = vmatprep.subr.mxu0 0.0
      %3507 = vmatpush1.xpose.msra.mxu0 0.0
      %3508 = vmatprep.subr.mxu0 0.0
      %3509 = vmatpush1.xpose.msra.mxu0 0.0
      %3510 = vmatprep.subr.mxu0 0.0
      %3511 = vmatpush1.xpose.msra.mxu0 0.0
      %3512 = vmatprep.subr.mxu0 0.0
      %3513 = vmatpush1.xpose.msra.mxu0 0.0
      %3514 = vmatprep.subr.mxu0 0.0
      %3515 = vmatpush1.xpose.msra.mxu0 0.0
      %3516 = vmatprep.subr.mxu0 0.0
      %3517 = vmatpush1.xpose.msra.mxu0 0.0
      %3518 = vmatprep.subr.mxu0 0.0
      %3519 = vmatpush1.xpose.msra.mxu0 0.0
      %3520 = vmatprep.subr.mxu0 0.0
      %3521 = vmatpush1.xpose.msra.mxu0 0.0
      %3522 = vmatprep.subr.mxu0 0.0
      %3523 = vmatpush1.xpose.msra.mxu0 0.0
      %3524 = vmatprep.subr.mxu0 0.0
      %3525 = vmatpush1.xpose.msra.mxu0 0.0
      %3526 = vmatprep.subr.mxu0 0.0
      %3527 = vmatpush1.xpose.msra.mxu0 0.0
      %3528 = vmatprep.subr.mxu0 0.0
      %3529 = vmatpush1.xpose.msra.mxu0 0.0
      %3530 = vmatprep.subr.mxu0 0.0
      %3531 = vmatpush1.xpose.msra.mxu0 0.0
      %3532 = vmatprep.subr.mxu0 0.0
      %3533 = vmatpush1.xpose.msra.mxu0 0.0
      %3534 = vmatprep.mubr.f32.mxu0 0.0
      %3535 = vmatmul.mubr.f32.gmra.mrb[0].mxu0 %v3462
      %v3536 = vpop.f32.mrb[0].mxu0
      %v3537 = vadd.f32 %v3452, %v3536
      %v3538 = vpop.f32.mrb[0].mxu0
      %3539 = vmatprep.mubr.f32.mxu0 0.0
      %3540 = vmatmul.mubr.f32.gmra.mrb[0].mxu0 %v3464
      %v3541 = vpop.f32.mrb[0].mxu0
      %v3542 = vadd.f32 %v3453, %v3541
      %v3543 = vpop.f32.mrb[0].mxu0
      %3544 = vdwg.mxu0
      %3545 = vrot.lane.b32.xlu0 %v640, 104
      %v3546 = vpop.permute.xlu0 %3545
      %3547 = vrot.lane.b32.xlu0 %v641, 104
      %v3548 = vpop.permute.xlu0 %3547
      %3549 = vrot.lane.b32.xlu0 %v606, 72
      %v3550 = vpop.permute.xlu0 %3549
      %3551 = vrot.lane.b32.xlu0 %v611, 72
      %v3552 = vpop.permute.xlu0 %3551
      %v3553 = vsel %vm654, %v3546, 0
      %v3555 = vsel %vm654, %v3548, 0
      %v3557 = vsel %vm654, %v3550, 0
      %v3559 = vsel %vm654, %v3552, 0
      %3561 = vmatprep.subr.mxu0 0.0
      %3562 = vmatpush1.xpose.msra.mxu0 %v3557
      %3563 = vmatprep.subr.mxu0 0.0
      %3564 = vmatpush1.xpose.msra.mxu0 %v3559
      %3565 = vmatprep.subr.mxu0 0.0
      %3566 = vmatpush1.xpose.msra.mxu0 0.0
      %3567 = vmatprep.subr.mxu0 0.0
      %3568 = vmatpush1.xpose.msra.mxu0 0.0
      %3569 = vmatprep.subr.mxu0 0.0
      %3570 = vmatpush1.xpose.msra.mxu0 0.0
      %3571 = vmatprep.subr.mxu0 0.0
      %3572 = vmatpush1.xpose.msra.mxu0 0.0
      %3573 = vmatprep.subr.mxu0 0.0
      %3574 = vmatpush1.xpose.msra.mxu0 0.0
      %3575 = vmatprep.subr.mxu0 0.0
      %3576 = vmatpush1.xpose.msra.mxu0 0.0
      %3577 = vmatprep.subr.mxu0 0.0
      %3578 = vmatpush1.xpose.msra.mxu0 0.0
      %3579 = vmatprep.subr.mxu0 0.0
      %3580 = vmatpush1.xpose.msra.mxu0 0.0
      %3581 = vmatprep.subr.mxu0 0.0
      %3582 = vmatpush1.xpose.msra.mxu0 0.0
      %3583 = vmatprep.subr.mxu0 0.0
      %3584 = vmatpush1.xpose.msra.mxu0 0.0
      %3585 = vmatprep.subr.mxu0 0.0
      %3586 = vmatpush1.xpose.msra.mxu0 0.0
      %3587 = vmatprep.subr.mxu0 0.0
      %3588 = vmatpush1.xpose.msra.mxu0 0.0
      %3589 = vmatprep.subr.mxu0 0.0
      %3590 = vmatpush1.xpose.msra.mxu0 0.0
      %3591 = vmatprep.subr.mxu0 0.0
      %3592 = vmatpush1.xpose.msra.mxu0 0.0
      %3593 = vmatprep.subr.mxu0 0.0
      %3594 = vmatpush1.xpose.msra.mxu0 0.0
      %3595 = vmatprep.subr.mxu0 0.0
      %3596 = vmatpush1.xpose.msra.mxu0 0.0
      %3597 = vmatprep.subr.mxu0 0.0
      %3598 = vmatpush1.xpose.msra.mxu0 0.0
      %3599 = vmatprep.subr.mxu0 0.0
      %3600 = vmatpush1.xpose.msra.mxu0 0.0
      %3601 = vmatprep.subr.mxu0 0.0
      %3602 = vmatpush1.xpose.msra.mxu0 0.0
      %3603 = vmatprep.subr.mxu0 0.0
      %3604 = vmatpush1.xpose.msra.mxu0 0.0
      %3605 = vmatprep.subr.mxu0 0.0
      %3606 = vmatpush1.xpose.msra.mxu0 0.0
      %3607 = vmatprep.subr.mxu0 0.0
      %3608 = vmatpush1.xpose.msra.mxu0 0.0
      %3609 = vmatprep.subr.mxu0 0.0
      %3610 = vmatpush1.xpose.msra.mxu0 0.0
      %3611 = vmatprep.subr.mxu0 0.0
      %3612 = vmatpush1.xpose.msra.mxu0 0.0
      %3613 = vmatprep.subr.mxu0 0.0
      %3614 = vmatpush1.xpose.msra.mxu0 0.0
      %3615 = vmatprep.subr.mxu0 0.0
      %3616 = vmatpush1.xpose.msra.mxu0 0.0
      %3617 = vmatprep.subr.mxu0 0.0
      %3618 = vmatpush1.xpose.msra.mxu0 0.0
      %3619 = vmatprep.subr.mxu0 0.0
      %3620 = vmatpush1.xpose.msra.mxu0 0.0
      %3621 = vmatprep.subr.mxu0 0.0
      %3622 = vmatpush1.xpose.msra.mxu0 0.0
      %3623 = vmatprep.subr.mxu0 0.0
      %3624 = vmatpush1.xpose.msra.mxu0 0.0
      %3625 = vmatprep.mubr.f32.mxu0 0.0
      %3626 = vmatmul.mubr.f32.gmra.mrb[0].mxu0 %v3553
      %v3627 = vpop.f32.mrb[0].mxu0
      %v3628 = vadd.f32 %v3452, %v3627
      %v3629 = vpop.f32.mrb[0].mxu0
      %3630 = vmatprep.mubr.f32.mxu0 0.0
      %3631 = vmatmul.mubr.f32.gmra.mrb[0].mxu0 %v3555
      %v3632 = vpop.f32.mrb[0].mxu0
      %v3633 = vadd.f32 %v3453, %v3632
      %v3634 = vpop.f32.mrb[0].mxu0
      %3635 = vdwg.mxu0
      %3636 = vrot.lane.b32.xlu0 %v642, 104
      %v3637 = vpop.permute.xlu0 %3636
      %3638 = vrot.lane.b32.xlu0 %v643, 104
      %v3639 = vpop.permute.xlu0 %3638
      %3640 = vrot.lane.b32.xlu0 %v616, 72
      %v3641 = vpop.permute.xlu0 %3640
      %3642 = vrot.lane.b32.xlu0 %v621, 72
      %v3643 = vpop.permute.xlu0 %3642
      %v3644 = vsel %vm654, %v3637, 0
      %v3646 = vsel %vm654, %v3639, 0
      %v3648 = vsel %vm654, %v3641, 0
      %v3650 = vsel %vm654, %v3643, 0
      %3652 = vmatprep.subr.mxu0 0.0
      %3653 = vmatpush1.xpose.msra.mxu0 %v3648
      %3654 = vmatprep.subr.mxu0 0.0
      %3655 = vmatpush1.xpose.msra.mxu0 %v3650
      %3656 = vmatprep.subr.mxu0 0.0
      %3657 = vmatpush1.xpose.msra.mxu0 0.0
      %3658 = vmatprep.subr.mxu0 0.0
      %3659 = vmatpush1.xpose.msra.mxu0 0.0
      %3660 = vmatprep.subr.mxu0 0.0
      %3661 = vmatpush1.xpose.msra.mxu0 0.0
      %3662 = vmatprep.subr.mxu0 0.0
      %3663 = vmatpush1.xpose.msra.mxu0 0.0
      %3664 = vmatprep.subr.mxu0 0.0
      %3665 = vmatpush1.xpose.msra.mxu0 0.0
      %3666 = vmatprep.subr.mxu0 0.0
      %3667 = vmatpush1.xpose.msra.mxu0 0.0
      %3668 = vmatprep.subr.mxu0 0.0
      %3669 = vmatpush1.xpose.msra.mxu0 0.0
      %3670 = vmatprep.subr.mxu0 0.0
      %3671 = vmatpush1.xpose.msra.mxu0 0.0
      %3672 = vmatprep.subr.mxu0 0.0
      %3673 = vmatpush1.xpose.msra.mxu0 0.0
      %3674 = vmatprep.subr.mxu0 0.0
      %3675 = vmatpush1.xpose.msra.mxu0 0.0
      %3676 = vmatprep.subr.mxu0 0.0
      %3677 = vmatpush1.xpose.msra.mxu0 0.0
      %3678 = vmatprep.subr.mxu0 0.0
      %3679 = vmatpush1.xpose.msra.mxu0 0.0
      %3680 = vmatprep.subr.mxu0 0.0
      %3681 = vmatpush1.xpose.msra.mxu0 0.0
      %3682 = vmatprep.subr.mxu0 0.0
      %3683 = vmatpush1.xpose.msra.mxu0 0.0
      %3684 = vmatprep.subr.mxu0 0.0
      %3685 = vmatpush1.xpose.msra.mxu0 0.0
      %3686 = vmatprep.subr.mxu0 0.0
      %3687 = vmatpush1.xpose.msra.mxu0 0.0
      %3688 = vmatprep.subr.mxu0 0.0
      %3689 = vmatpush1.xpose.msra.mxu0 0.0
      %3690 = vmatprep.subr.mxu0 0.0
      %3691 = vmatpush1.xpose.msra.mxu0 0.0
      %3692 = vmatprep.subr.mxu0 0.0
      %3693 = vmatpush1.xpose.msra.mxu0 0.0
      %3694 = vmatprep.subr.mxu0 0.0
      %3695 = vmatpush1.xpose.msra.mxu0 0.0
      %3696 = vmatprep.subr.mxu0 0.0
      %3697 = vmatpush1.xpose.msra.mxu0 0.0
      %3698 = vmatprep.subr.mxu0 0.0
      %3699 = vmatpush1.xpose.msra.mxu0 0.0
      %3700 = vmatprep.subr.mxu0 0.0
      %3701 = vmatpush1.xpose.msra.mxu0 0.0
      %3702 = vmatprep.subr.mxu0 0.0
      %3703 = vmatpush1.xpose.msra.mxu0 0.0
      %3704 = vmatprep.subr.mxu0 0.0
      %3705 = vmatpush1.xpose.msra.mxu0 0.0
      %3706 = vmatprep.subr.mxu0 0.0
      %3707 = vmatpush1.xpose.msra.mxu0 0.0
      %3708 = vmatprep.subr.mxu0 0.0
      %3709 = vmatpush1.xpose.msra.mxu0 0.0
      %3710 = vmatprep.subr.mxu0 0.0
      %3711 = vmatpush1.xpose.msra.mxu0 0.0
      %3712 = vmatprep.subr.mxu0 0.0
      %3713 = vmatpush1.xpose.msra.mxu0 0.0
      %3714 = vmatprep.subr.mxu0 0.0
      %3715 = vmatpush1.xpose.msra.mxu0 0.0
      %3716 = vmatprep.mubr.f32.mxu0 0.0
      %3717 = vmatmul.mubr.f32.gmra.mrb[0].mxu0 %v3644
      %v3718 = vpop.f32.mrb[0].mxu0
      %v3719 = vadd.f32 %v3452, %v3718
      %v3720 = vpop.f32.mrb[0].mxu0
      %3721 = vmatprep.mubr.f32.mxu0 0.0
      %3722 = vmatmul.mubr.f32.gmra.mrb[0].mxu0 %v3646
      %v3723 = vpop.f32.mrb[0].mxu0
      %v3724 = vadd.f32 %v3453, %v3723
      %v3725 = vpop.f32.mrb[0].mxu0
      %3726 = vdwg.mxu0
      %3727 = vrot.lane.b32.xlu0 %v644, 104
      %v3728 = vpop.permute.xlu0 %3727
      %3729 = vrot.lane.b32.xlu0 %v645, 104
      %v3730 = vpop.permute.xlu0 %3729
      %3731 = vrot.lane.b32.xlu0 %v626, 72
      %v3732 = vpop.permute.xlu0 %3731
      %3733 = vrot.lane.b32.xlu0 %v631, 72
      %v3734 = vpop.permute.xlu0 %3733
      %v3735 = vsel %vm654, %v3728, 0
      %v3737 = vsel %vm654, %v3730, 0
      %v3739 = vsel %vm654, %v3732, 0
      %v3741 = vsel %vm654, %v3734, 0
      %3743 = vmatprep.subr.mxu0 0.0
      %3744 = vmatpush1.xpose.msra.mxu0 %v3739
      %3745 = vmatprep.subr.mxu0 0.0
      %3746 = vmatpush1.xpose.msra.mxu0 %v3741
      %3747 = vmatprep.subr.mxu0 0.0
      %3748 = vmatpush1.xpose.msra.mxu0 0.0
      %3749 = vmatprep.subr.mxu0 0.0
      %3750 = vmatpush1.xpose.msra.mxu0 0.0
      %3751 = vmatprep.subr.mxu0 0.0
      %3752 = vmatpush1.xpose.msra.mxu0 0.0
      %3753 = vmatprep.subr.mxu0 0.0
      %3754 = vmatpush1.xpose.msra.mxu0 0.0
      %3755 = vmatprep.subr.mxu0 0.0
      %3756 = vmatpush1.xpose.msra.mxu0 0.0
      %3757 = vmatprep.subr.mxu0 0.0
      %3758 = vmatpush1.xpose.msra.mxu0 0.0
      %3759 = vmatprep.subr.mxu0 0.0
      %3760 = vmatpush1.xpose.msra.mxu0 0.0
      %3761 = vmatprep.subr.mxu0 0.0
      %3762 = vmatpush1.xpose.msra.mxu0 0.0
      %3763 = vmatprep.subr.mxu0 0.0
      %3764 = vmatpush1.xpose.msra.mxu0 0.0
      %3765 = vmatprep.subr.mxu0 0.0
      %3766 = vmatpush1.xpose.msra.mxu0 0.0
      %3767 = vmatprep.subr.mxu0 0.0
      %3768 = vmatpush1.xpose.msra.mxu0 0.0
      %3769 = vmatprep.subr.mxu0 0.0
      %3770 = vmatpush1.xpose.msra.mxu0 0.0
      %3771 = vmatprep.subr.mxu0 0.0
      %3772 = vmatpush1.xpose.msra.mxu0 0.0
      %3773 = vmatprep.subr.mxu0 0.0
      %3774 = vmatpush1.xpose.msra.mxu0 0.0
      %3775 = vmatprep.subr.mxu0 0.0
      %3776 = vmatpush1.xpose.msra.mxu0 0.0
      %3777 = vmatprep.subr.mxu0 0.0
      %3778 = vmatpush1.xpose.msra.mxu0 0.0
      %3779 = vmatprep.subr.mxu0 0.0
      %3780 = vmatpush1.xpose.msra.mxu0 0.0
      %3781 = vmatprep.subr.mxu0 0.0
      %3782 = vmatpush1.xpose.msra.mxu0 0.0
      %3783 = vmatprep.subr.mxu0 0.0
      %3784 = vmatpush1.xpose.msra.mxu0 0.0
      %3785 = vmatprep.subr.mxu0 0.0
      %3786 = vmatpush1.xpose.msra.mxu0 0.0
      %3787 = vmatprep.subr.mxu0 0.0
      %3788 = vmatpush1.xpose.msra.mxu0 0.0
      %3789 = vmatprep.subr.mxu0 0.0
      %3790 = vmatpush1.xpose.msra.mxu0 0.0
      %3791 = vmatprep.subr.mxu0 0.0
      %3792 = vmatpush1.xpose.msra.mxu0 0.0
      %3793 = vmatprep.subr.mxu0 0.0
      %3794 = vmatpush1.xpose.msra.mxu0 0.0
      %3795 = vmatprep.subr.mxu0 0.0
      %3796 = vmatpush1.xpose.msra.mxu0 0.0
      %3797 = vmatprep.subr.mxu0 0.0
      %3798 = vmatpush1.xpose.msra.mxu0 0.0
      %3799 = vmatprep.subr.mxu0 0.0
      %3800 = vmatpush1.xpose.msra.mxu0 0.0
      %3801 = vmatprep.subr.mxu0 0.0
      %3802 = vmatpush1.xpose.msra.mxu0 0.0
      %3803 = vmatprep.subr.mxu0 0.0
      %3804 = vmatpush1.xpose.msra.mxu0 0.0
      %3805 = vmatprep.subr.mxu0 0.0
      %3806 = vmatpush1.xpose.msra.mxu0 0.0
      %3807 = vmatprep.mubr.f32.mxu0 0.0
      %3808 = vmatmul.mubr.f32.gmra.mrb[0].mxu0 %v3735
      %v3809 = vpop.f32.mrb[0].mxu0
      %v3810 = vadd.f32 %v3452, %v3809
      %v3811 = vpop.f32.mrb[0].mxu0
      %3812 = vmatprep.mubr.f32.mxu0 0.0
      %3813 = vmatmul.mubr.f32.gmra.mrb[0].mxu0 %v3737
      %v3814 = vpop.f32.mrb[0].mxu0
      %v3815 = vadd.f32 %v3453, %v3814
      %v3816 = vpop.f32.mrb[0].mxu0
      %3817 = vdwg.mxu0
      %v3818 = vsel %vm1013, %v3537, -inf
      %3819 = vmax.xlane.f32.xlu0 %v3818
      %v3820 = vpop.xlane.xlu0 %3819
      %v3821 = vsel %vm1013, %v3542, -inf
      %3822 = vmax.xlane.f32.xlu0 %v3821
      %v3823 = vpop.xlane.xlu0 %3822
      %v3824 = vsel %vm1013, %v3628, -inf
      %3825 = vmax.xlane.f32.xlu0 %v3824
      %v3826 = vpop.xlane.xlu0 %3825
      %v3827 = vsel %vm1013, %v3633, -inf
      %3828 = vmax.xlane.f32.xlu0 %v3827
      %v3829 = vpop.xlane.xlu0 %3828
      %v3830 = vsel %vm1013, %v3719, -inf
      %3831 = vmax.xlane.f32.xlu0 %v3830
      %v3832 = vpop.xlane.xlu0 %3831
      %v3833 = vsel %vm1013, %v3724, -inf
      %3834 = vmax.xlane.f32.xlu0 %v3833
      %v3835 = vpop.xlane.xlu0 %3834
      %v3836 = vsel %vm1013, %v3810, -inf
      %3837 = vmax.xlane.f32.xlu0 %v3836
      %v3838 = vpop.xlane.xlu0 %3837
      %v3839 = vsel %vm1013, %v3815, -inf
      %3840 = vmax.xlane.f32.xlu0 %v3839
      %v3841 = vpop.xlane.xlu0 %3840
      %v3842 = vsub.f32 %v3537, %v3820
      %v3843 = vsub.f32 %v3542, %v3823
      %v3844 = vsub.f32 %v3628, %v3826
      %v3845 = vsub.f32 %v3633, %v3829
      %v3846 = vsub.f32 %v3719, %v3832
      %v3847 = vsub.f32 %v3724, %v3835
      %v3848 = vsub.f32 %v3810, %v3838
      %v3849 = vsub.f32 %v3815, %v3841
      %v3850 = vmul.f32 %v3842, 1.442695
      %v3851 = vpow.pop %v3850
      %v3852 = vmul.f32 %v3843, 1.442695
      %v3853 = vpow.pop %v3852
      %v3854 = vmul.f32 %v3844, 1.442695
      %v3855 = vpow.pop %v3854
      %v3856 = vmul.f32 %v3845, 1.442695
      %v3857 = vpow.pop %v3856
      %v3858 = vmul.f32 %v3846, 1.442695
      %v3859 = vpow.pop %v3858
      %v3860 = vmul.f32 %v3847, 1.442695
      %v3861 = vpow.pop %v3860
      %v3862 = vmul.f32 %v3848, 1.442695
      %v3863 = vpow.pop %v3862
      %v3864 = vmul.f32 %v3849, 1.442695
      %v3865 = vpow.pop %v3864
      %v3866 = vsel %vm1013, %v3851, 0.0
      %3867 = vadd.xlane.f32.xlu0 %v3866
      %v3868 = vpop.xlane.xlu0 %3867
      %v3869 = vsel %vm1013, %v3853, 0.0
      %3870 = vadd.xlane.f32.xlu0 %v3869
      %v3871 = vpop.xlane.xlu0 %3870
      %v3872 = vsel %vm1013, %v3855, 0.0
      %3873 = vadd.xlane.f32.xlu0 %v3872
      %v3874 = vpop.xlane.xlu0 %3873
      %v3875 = vsel %vm1013, %v3857, 0.0
      %3876 = vadd.xlane.f32.xlu0 %v3875
      %v3877 = vpop.xlane.xlu0 %3876
      %v3878 = vsel %vm1013, %v3859, 0.0
      %3879 = vadd.xlane.f32.xlu0 %v3878
      %v3880 = vpop.xlane.xlu0 %3879
      %v3881 = vsel %vm1013, %v3861, 0.0
      %3882 = vadd.xlane.f32.xlu0 %v3881
      %v3883 = vpop.xlane.xlu0 %3882
      %v3884 = vsel %vm1013, %v3863, 0.0
      %3885 = vadd.xlane.f32.xlu0 %v3884
      %v3886 = vpop.xlane.xlu0 %3885
      %v3887 = vsel %vm1013, %v3865, 0.0
      %3888 = vadd.xlane.f32.xlu0 %v3887
      %v3889 = vpop.xlane.xlu0 %3888
      %v3890 = vrcp.pop %v3868
      %v3891 = vmul.f32 %v3851, %v3890
      %v3892 = vrcp.pop %v3871
      %v3893 = vmul.f32 %v3853, %v3892
      %v3894 = vrcp.pop %v3874
      %v3895 = vmul.f32 %v3855, %v3894
      %v3896 = vrcp.pop %v3877
      %v3897 = vmul.f32 %v3857, %v3896
      %v3898 = vrcp.pop %v3880
      %v3899 = vmul.f32 %v3859, %v3898
      %v3900 = vrcp.pop %v3883
      %v3901 = vmul.f32 %v3861, %v3900
      %v3902 = vrcp.pop %v3886
      %v3903 = vmul.f32 %v3863, %v3902
      %v3904 = vrcp.pop %v3889
      %v3905 = vmul.f32 %v3865, %v3904
      %3906 = vrot.lane.b32.xlu0 %v596, 40
      %v3907 = vpop.permute.xlu0 %3906
      %3908 = vrot.lane.b32.xlu0 %v601, 40
      %v3909 = vpop.permute.xlu0 %3908
      %v3913 = vsel %vm1013, %v3891, 0
      %v3916 = vsel %vm1013, %v3893, 0
      %3918 = vmatprep.subr.mxu0 0.0
      %3919 = vmatpush1.msra.mxu0 %v3907
      %3920 = vmatprep.subr.mxu0 0.0
      %3921 = vmatpush1.msra.mxu0 %v3909
      %3922 = vmatprep.subr.mxu0 0.0
      %3923 = vmatpush1.msra.mxu0 0.0
      %3924 = vmatprep.subr.mxu0 0.0
      %3925 = vmatpush1.msra.mxu0 0.0
      %3926 = vmatprep.subr.mxu0 0.0
      %3927 = vmatpush1.msra.mxu0 0.0
      %3928 = vmatprep.subr.mxu0 0.0
      %3929 = vmatpush1.msra.mxu0 0.0
      %3930 = vmatprep.subr.mxu0 0.0
      %3931 = vmatpush1.msra.mxu0 0.0
      %3932 = vmatprep.subr.mxu0 0.0
      %3933 = vmatpush1.msra.mxu0 0.0
      %3934 = vmatprep.subr.mxu0 0.0
      %3935 = vmatpush1.msra.mxu0 0.0
      %3936 = vmatprep.subr.mxu0 0.0
      %3937 = vmatpush1.msra.mxu0 0.0
      %3938 = vmatprep.subr.mxu0 0.0
      %3939 = vmatpush1.msra.mxu0 0.0
      %3940 = vmatprep.subr.mxu0 0.0
      %3941 = vmatpush1.msra.mxu0 0.0
      %3942 = vmatprep.subr.mxu0 0.0
      %3943 = vmatpush1.msra.mxu0 0.0
      %3944 = vmatprep.subr.mxu0 0.0
      %3945 = vmatpush1.msra.mxu0 0.0
      %3946 = vmatprep.subr.mxu0 0.0
      %3947 = vmatpush1.msra.mxu0 0.0
      %3948 = vmatprep.subr.mxu0 0.0
      %3949 = vmatpush1.msra.mxu0 0.0
      %3950 = vmatprep.subr.mxu0 0.0
      %3951 = vmatpush1.msra.mxu0 0.0
      %3952 = vmatprep.subr.mxu0 0.0
      %3953 = vmatpush1.msra.mxu0 0.0
      %3954 = vmatprep.subr.mxu0 0.0
      %3955 = vmatpush1.msra.mxu0 0.0
      %3956 = vmatprep.subr.mxu0 0.0
      %3957 = vmatpush1.msra.mxu0 0.0
      %3958 = vmatprep.subr.mxu0 0.0
      %3959 = vmatpush1.msra.mxu0 0.0
      %3960 = vmatprep.subr.mxu0 0.0
      %3961 = vmatpush1.msra.mxu0 0.0
      %3962 = vmatprep.subr.mxu0 0.0
      %3963 = vmatpush1.msra.mxu0 0.0
      %3964 = vmatprep.subr.mxu0 0.0
      %3965 = vmatpush1.msra.mxu0 0.0
      %3966 = vmatprep.subr.mxu0 0.0
      %3967 = vmatpush1.msra.mxu0 0.0
      %3968 = vmatprep.subr.mxu0 0.0
      %3969 = vmatpush1.msra.mxu0 0.0
      %3970 = vmatprep.subr.mxu0 0.0
      %3971 = vmatpush1.msra.mxu0 0.0
      %3972 = vmatprep.subr.mxu0 0.0
      %3973 = vmatpush1.msra.mxu0 0.0
      %3974 = vmatprep.subr.mxu0 0.0
      %3975 = vmatpush1.msra.mxu0 0.0
      %3976 = vmatprep.subr.mxu0 0.0
      %3977 = vmatpush1.msra.mxu0 0.0
      %3978 = vmatprep.subr.mxu0 0.0
      %3979 = vmatpush1.msra.mxu0 0.0
      %3980 = vmatprep.subr.mxu0 0.0
      %3981 = vmatpush1.msra.mxu0 0.0
      %3982 = vmatprep.mubr.f32.mxu0 0.0
      %3983 = vmatmul.mubr.f32.gmra.mrb[0].mxu0 %v3913
      %v3984 = vpop.f32.mrb[0].mxu0
      %v3985 = vadd.f32 0.0, %v3984
      %v3986 = vpop.f32.mrb[0].mxu0
      %3987 = vmatprep.mubr.f32.mxu0 0.0
      %3988 = vmatmul.mubr.f32.gmra.mrb[0].mxu0 %v3916
      %v3989 = vpop.f32.mrb[0].mxu0
      %v3990 = vadd.f32 0.0, %v3989
      %v3991 = vpop.f32.mrb[0].mxu0
      %3992 = vdwg.mxu0
      %3993 = vrot.lane.b32.xlu0 %v606, 40
      %v3994 = vpop.permute.xlu0 %3993
      %3995 = vrot.lane.b32.xlu0 %v611, 40
      %v3996 = vpop.permute.xlu0 %3995
      %v4000 = vsel %vm1013, %v3895, 0
      %v4003 = vsel %vm1013, %v3897, 0
      %4005 = vmatprep.subr.mxu0 0.0
      %4006 = vmatpush1.msra.mxu0 %v3994
      %4007 = vmatprep.subr.mxu0 0.0
      %4008 = vmatpush1.msra.mxu0 %v3996
      %4009 = vmatprep.subr.mxu0 0.0
      %4010 = vmatpush1.msra.mxu0 0.0
      %4011 = vmatprep.subr.mxu0 0.0
      %4012 = vmatpush1.msra.mxu0 0.0
      %4013 = vmatprep.subr.mxu0 0.0
      %4014 = vmatpush1.msra.mxu0 0.0
      %4015 = vmatprep.subr.mxu0 0.0
      %4016 = vmatpush1.msra.mxu0 0.0
      %4017 = vmatprep.subr.mxu0 0.0
      %4018 = vmatpush1.msra.mxu0 0.0
      %4019 = vmatprep.subr.mxu0 0.0
      %4020 = vmatpush1.msra.mxu0 0.0
      %4021 = vmatprep.subr.mxu0 0.0
      %4022 = vmatpush1.msra.mxu0 0.0
      %4023 = vmatprep.subr.mxu0 0.0
      %4024 = vmatpush1.msra.mxu0 0.0
      %4025 = vmatprep.subr.mxu0 0.0
      %4026 = vmatpush1.msra.mxu0 0.0
      %4027 = vmatprep.subr.mxu0 0.0
      %4028 = vmatpush1.msra.mxu0 0.0
      %4029 = vmatprep.subr.mxu0 0.0
      %4030 = vmatpush1.msra.mxu0 0.0
      %4031 = vmatprep.subr.mxu0 0.0
      %4032 = vmatpush1.msra.mxu0 0.0
      %4033 = vmatprep.subr.mxu0 0.0
      %4034 = vmatpush1.msra.mxu0 0.0
      %4035 = vmatprep.subr.mxu0 0.0
      %4036 = vmatpush1.msra.mxu0 0.0
      %4037 = vmatprep.subr.mxu0 0.0
      %4038 = vmatpush1.msra.mxu0 0.0
      %4039 = vmatprep.subr.mxu0 0.0
      %4040 = vmatpush1.msra.mxu0 0.0
      %4041 = vmatprep.subr.mxu0 0.0
      %4042 = vmatpush1.msra.mxu0 0.0
      %4043 = vmatprep.subr.mxu0 0.0
      %4044 = vmatpush1.msra.mxu0 0.0
      %4045 = vmatprep.subr.mxu0 0.0
      %4046 = vmatpush1.msra.mxu0 0.0
      %4047 = vmatprep.subr.mxu0 0.0
      %4048 = vmatpush1.msra.mxu0 0.0
      %4049 = vmatprep.subr.mxu0 0.0
      %4050 = vmatpush1.msra.mxu0 0.0
      %4051 = vmatprep.subr.mxu0 0.0
      %4052 = vmatpush1.msra.mxu0 0.0
      %4053 = vmatprep.subr.mxu0 0.0
      %4054 = vmatpush1.msra.mxu0 0.0
      %4055 = vmatprep.subr.mxu0 0.0
      %4056 = vmatpush1.msra.mxu0 0.0
      %4057 = vmatprep.subr.mxu0 0.0
      %4058 = vmatpush1.msra.mxu0 0.0
      %4059 = vmatprep.subr.mxu0 0.0
      %4060 = vmatpush1.msra.mxu0 0.0
      %4061 = vmatprep.subr.mxu0 0.0
      %4062 = vmatpush1.msra.mxu0 0.0
      %4063 = vmatprep.subr.mxu0 0.0
      %4064 = vmatpush1.msra.mxu0 0.0
      %4065 = vmatprep.subr.mxu0 0.0
      %4066 = vmatpush1.msra.mxu0 0.0
      %4067 = vmatprep.subr.mxu0 0.0
      %4068 = vmatpush1.msra.mxu0 0.0
      %4069 = vmatprep.mubr.f32.mxu0 0.0
      %4070 = vmatmul.mubr.f32.gmra.mrb[0].mxu0 %v4000
      %v4071 = vpop.f32.mrb[0].mxu0
      %v4072 = vadd.f32 0.0, %v4071
      %v4073 = vpop.f32.mrb[0].mxu0
      %4074 = vmatprep.mubr.f32.mxu0 0.0
      %4075 = vmatmul.mubr.f32.gmra.mrb[0].mxu0 %v4003
      %v4076 = vpop.f32.mrb[0].mxu0
      %v4077 = vadd.f32 0.0, %v4076
      %v4078 = vpop.f32.mrb[0].mxu0
      %4079 = vdwg.mxu0
      %4080 = vrot.lane.b32.xlu0 %v616, 40
      %v4081 = vpop.permute.xlu0 %4080
      %4082 = vrot.lane.b32.xlu0 %v621, 40
      %v4083 = vpop.permute.xlu0 %4082
      %v4087 = vsel %vm1013, %v3899, 0
      %v4090 = vsel %vm1013, %v3901, 0
      %4092 = vmatprep.subr.mxu0 0.0
      %4093 = vmatpush1.msra.mxu0 %v4081
      %4094 = vmatprep.subr.mxu0 0.0
      %4095 = vmatpush1.msra.mxu0 %v4083
      %4096 = vmatprep.subr.mxu0 0.0
      %4097 = vmatpush1.msra.mxu0 0.0
      %4098 = vmatprep.subr.mxu0 0.0
      %4099 = vmatpush1.msra.mxu0 0.0
      %4100 = vmatprep.subr.mxu0 0.0
      %4101 = vmatpush1.msra.mxu0 0.0
      %4102 = vmatprep.subr.mxu0 0.0
      %4103 = vmatpush1.msra.mxu0 0.0
      %4104 = vmatprep.subr.mxu0 0.0
      %4105 = vmatpush1.msra.mxu0 0.0
      %4106 = vmatprep.subr.mxu0 0.0
      %4107 = vmatpush1.msra.mxu0 0.0
      %4108 = vmatprep.subr.mxu0 0.0
      %4109 = vmatpush1.msra.mxu0 0.0
      %4110 = vmatprep.subr.mxu0 0.0
      %4111 = vmatpush1.msra.mxu0 0.0
      %4112 = vmatprep.subr.mxu0 0.0
      %4113 = vmatpush1.msra.mxu0 0.0
      %4114 = vmatprep.subr.mxu0 0.0
      %4115 = vmatpush1.msra.mxu0 0.0
      %4116 = vmatprep.subr.mxu0 0.0
      %4117 = vmatpush1.msra.mxu0 0.0
      %4118 = vmatprep.subr.mxu0 0.0
      %4119 = vmatpush1.msra.mxu0 0.0
      %4120 = vmatprep.subr.mxu0 0.0
      %4121 = vmatpush1.msra.mxu0 0.0
      %4122 = vmatprep.subr.mxu0 0.0
      %4123 = vmatpush1.msra.mxu0 0.0
      %4124 = vmatprep.subr.mxu0 0.0
      %4125 = vmatpush1.msra.mxu0 0.0
      %4126 = vmatprep.subr.mxu0 0.0
      %4127 = vmatpush1.msra.mxu0 0.0
      %4128 = vmatprep.subr.mxu0 0.0
      %4129 = vmatpush1.msra.mxu0 0.0
      %4130 = vmatprep.subr.mxu0 0.0
      %4131 = vmatpush1.msra.mxu0 0.0
      %4132 = vmatprep.subr.mxu0 0.0
      %4133 = vmatpush1.msra.mxu0 0.0
      %4134 = vmatprep.subr.mxu0 0.0
      %4135 = vmatpush1.msra.mxu0 0.0
      %4136 = vmatprep.subr.mxu0 0.0
      %4137 = vmatpush1.msra.mxu0 0.0
      %4138 = vmatprep.subr.mxu0 0.0
      %4139 = vmatpush1.msra.mxu0 0.0
      %4140 = vmatprep.subr.mxu0 0.0
      %4141 = vmatpush1.msra.mxu0 0.0
      %4142 = vmatprep.subr.mxu0 0.0
      %4143 = vmatpush1.msra.mxu0 0.0
      %4144 = vmatprep.subr.mxu0 0.0
      %4145 = vmatpush1.msra.mxu0 0.0
      %4146 = vmatprep.subr.mxu0 0.0
      %4147 = vmatpush1.msra.mxu0 0.0
      %4148 = vmatprep.subr.mxu0 0.0
      %4149 = vmatpush1.msra.mxu0 0.0
      %4150 = vmatprep.subr.mxu0 0.0
      %4151 = vmatpush1.msra.mxu0 0.0
      %4152 = vmatprep.subr.mxu0 0.0
      %4153 = vmatpush1.msra.mxu0 0.0
      %4154 = vmatprep.subr.mxu0 0.0
      %4155 = vmatpush1.msra.mxu0 0.0
      %4156 = vmatprep.mubr.f32.mxu0 0.0
      %4157 = vmatmul.mubr.f32.gmra.mrb[0].mxu0 %v4087
      %v4158 = vpop.f32.mrb[0].mxu0
      %v4159 = vadd.f32 0.0, %v4158
      %v4160 = vpop.f32.mrb[0].mxu0
      %4161 = vmatprep.mubr.f32.mxu0 0.0
      %4162 = vmatmul.mubr.f32.gmra.mrb[0].mxu0 %v4090
      %v4163 = vpop.f32.mrb[0].mxu0
      %v4164 = vadd.f32 0.0, %v4163
      %v4165 = vpop.f32.mrb[0].mxu0
      %4166 = vdwg.mxu0
      %4167 = vrot.lane.b32.xlu0 %v626, 40
      %v4168 = vpop.permute.xlu0 %4167
      %4169 = vrot.lane.b32.xlu0 %v631, 40
      %v4170 = vpop.permute.xlu0 %4169
      %v4174 = vsel %vm1013, %v3903, 0
      %v4177 = vsel %vm1013, %v3905, 0
      %4179 = vmatprep.subr.mxu0 0.0
      %4180 = vmatpush1.msra.mxu0 %v4168
      %4181 = vmatprep.subr.mxu0 0.0
      %4182 = vmatpush1.msra.mxu0 %v4170
      %4183 = vmatprep.subr.mxu0 0.0
      %4184 = vmatpush1.msra.mxu0 0.0
      %4185 = vmatprep.subr.mxu0 0.0
      %4186 = vmatpush1.msra.mxu0 0.0
      %4187 = vmatprep.subr.mxu0 0.0
      %4188 = vmatpush1.msra.mxu0 0.0
      %4189 = vmatprep.subr.mxu0 0.0
      %4190 = vmatpush1.msra.mxu0 0.0
      %4191 = vmatprep.subr.mxu0 0.0
      %4192 = vmatpush1.msra.mxu0 0.0
      %4193 = vmatprep.subr.mxu0 0.0
      %4194 = vmatpush1.msra.mxu0 0.0
      %4195 = vmatprep.subr.mxu0 0.0
      %4196 = vmatpush1.msra.mxu0 0.0
      %4197 = vmatprep.subr.mxu0 0.0
      %4198 = vmatpush1.msra.mxu0 0.0
      %4199 = vmatprep.subr.mxu0 0.0
      %4200 = vmatpush1.msra.mxu0 0.0
      %4201 = vmatprep.subr.mxu0 0.0
      %4202 = vmatpush1.msra.mxu0 0.0
      %4203 = vmatprep.subr.mxu0 0.0
      %4204 = vmatpush1.msra.mxu0 0.0
      %4205 = vmatprep.subr.mxu0 0.0
      %4206 = vmatpush1.msra.mxu0 0.0
      %4207 = vmatprep.subr.mxu0 0.0
      %4208 = vmatpush1.msra.mxu0 0.0
      %4209 = vmatprep.subr.mxu0 0.0
      %4210 = vmatpush1.msra.mxu0 0.0
      %4211 = vmatprep.subr.mxu0 0.0
      %4212 = vmatpush1.msra.mxu0 0.0
      %4213 = vmatprep.subr.mxu0 0.0
      %4214 = vmatpush1.msra.mxu0 0.0
      %4215 = vmatprep.subr.mxu0 0.0
      %4216 = vmatpush1.msra.mxu0 0.0
      %4217 = vmatprep.subr.mxu0 0.0
      %4218 = vmatpush1.msra.mxu0 0.0
      %4219 = vmatprep.subr.mxu0 0.0
      %4220 = vmatpush1.msra.mxu0 0.0
      %4221 = vmatprep.subr.mxu0 0.0
      %4222 = vmatpush1.msra.mxu0 0.0
      %4223 = vmatprep.subr.mxu0 0.0
      %4224 = vmatpush1.msra.mxu0 0.0
      %4225 = vmatprep.subr.mxu0 0.0
      %4226 = vmatpush1.msra.mxu0 0.0
      %4227 = vmatprep.subr.mxu0 0.0
      %4228 = vmatpush1.msra.mxu0 0.0
      %4229 = vmatprep.subr.mxu0 0.0
      %4230 = vmatpush1.msra.mxu0 0.0
      %4231 = vmatprep.subr.mxu0 0.0
      %4232 = vmatpush1.msra.mxu0 0.0
      %4233 = vmatprep.subr.mxu0 0.0
      %4234 = vmatpush1.msra.mxu0 0.0
      %4235 = vmatprep.subr.mxu0 0.0
      %4236 = vmatpush1.msra.mxu0 0.0
      %4237 = vmatprep.subr.mxu0 0.0
      %4238 = vmatpush1.msra.mxu0 0.0
      %4239 = vmatprep.subr.mxu0 0.0
      %4240 = vmatpush1.msra.mxu0 0.0
      %4241 = vmatprep.subr.mxu0 0.0
      %4242 = vmatpush1.msra.mxu0 0.0
      %4243 = vmatprep.mubr.f32.mxu0 0.0
      %4244 = vmatmul.mubr.f32.gmra.mrb[0].mxu0 %v4174
      %v4245 = vpop.f32.mrb[0].mxu0
      %v4246 = vadd.f32 0.0, %v4245
      %v4247 = vpop.f32.mrb[0].mxu0
      %4248 = vmatprep.mubr.f32.mxu0 0.0
      %4249 = vmatmul.mubr.f32.gmra.mrb[0].mxu0 %v4177
      %v4250 = vpop.f32.mrb[0].mxu0
      %v4251 = vadd.f32 0.0, %v4250
      %v4252 = vpop.f32.mrb[0].mxu0
      %4253 = vdwg.mxu0
      %v4255 = vsel %vm654, %v3985, 0
      %v4258 = vsel %vm654, %v3990, 0
      %v4261 = vsel %vm654, %v4072, 0
      %v4264 = vsel %vm654, %v4077, 0
      %v4267 = vsel %vm654, %v4159, 0
      %v4270 = vsel %vm654, %v4164, 0
      %v4273 = vsel %vm654, %v4246, 0
      %v4276 = vsel %vm654, %v4251, 0
      %4278 = vmatprep.subr.mxu0 0.0
      %4279 = vmatpush1.msra.mxu0 %v637
      %4280 = vmatprep.subr.mxu0 0.0
      %4281 = vmatpush1.msra.mxu0 0.0
      %4282 = vmatprep.subr.mxu0 0.0
      %4283 = vmatpush1.msra.mxu0 0.0
      %4284 = vmatprep.subr.mxu0 0.0
      %4285 = vmatpush1.msra.mxu0 0.0
      %4286 = vmatprep.subr.mxu0 0.0
      %4287 = vmatpush1.msra.mxu0 0.0
      %4288 = vmatprep.subr.mxu0 0.0
      %4289 = vmatpush1.msra.mxu0 0.0
      %4290 = vmatprep.subr.mxu0 0.0
      %4291 = vmatpush1.msra.mxu0 0.0
      %4292 = vmatprep.subr.mxu0 0.0
      %4293 = vmatpush1.msra.mxu0 0.0
      %4294 = vmatprep.subr.mxu0 0.0
      %4295 = vmatpush1.msra.mxu0 0.0
      %4296 = vmatprep.subr.mxu0 0.0
      %4297 = vmatpush1.msra.mxu0 0.0
      %4298 = vmatprep.subr.mxu0 0.0
      %4299 = vmatpush1.msra.mxu0 0.0
      %4300 = vmatprep.subr.mxu0 0.0
      %4301 = vmatpush1.msra.mxu0 0.0
      %4302 = vmatprep.subr.mxu0 0.0
      %4303 = vmatpush1.msra.mxu0 0.0
      %4304 = vmatprep.subr.mxu0 0.0
      %4305 = vmatpush1.msra.mxu0 0.0
      %4306 = vmatprep.subr.mxu0 0.0
      %4307 = vmatpush1.msra.mxu0 0.0
      %4308 = vmatprep.subr.mxu0 0.0
      %4309 = vmatpush1.msra.mxu0 0.0
      %4310 = vmatprep.subr.mxu0 0.0
      %4311 = vmatpush1.msra.mxu0 0.0
      %4312 = vmatprep.subr.mxu0 0.0
      %4313 = vmatpush1.msra.mxu0 0.0
      %4314 = vmatprep.subr.mxu0 0.0
      %4315 = vmatpush1.msra.mxu0 0.0
      %4316 = vmatprep.subr.mxu0 0.0
      %4317 = vmatpush1.msra.mxu0 0.0
      %4318 = vmatprep.subr.mxu0 0.0
      %4319 = vmatpush1.msra.mxu0 0.0
      %4320 = vmatprep.subr.mxu0 0.0
      %4321 = vmatpush1.msra.mxu0 0.0
      %4322 = vmatprep.subr.mxu0 0.0
      %4323 = vmatpush1.msra.mxu0 0.0
      %4324 = vmatprep.subr.mxu0 0.0
      %4325 = vmatpush1.msra.mxu0 0.0
      %4326 = vmatprep.subr.mxu0 0.0
      %4327 = vmatpush1.msra.mxu0 0.0
      %4328 = vmatprep.subr.mxu0 0.0
      %4329 = vmatpush1.msra.mxu0 0.0
      %4330 = vmatprep.subr.mxu0 0.0
      %4331 = vmatpush1.msra.mxu0 0.0
      %4332 = vmatprep.subr.mxu0 0.0
      %4333 = vmatpush1.msra.mxu0 0.0
      %4334 = vmatprep.subr.mxu0 0.0
      %4335 = vmatpush1.msra.mxu0 0.0
      %4336 = vmatprep.subr.mxu0 0.0
      %4337 = vmatpush1.msra.mxu0 0.0
      %4338 = vmatprep.subr.mxu0 0.0
      %4339 = vmatpush1.msra.mxu0 0.0
      %4340 = vmatprep.subr.mxu0 0.0
      %4341 = vmatpush1.msra.mxu0 0.0
      %4342 = vmatprep.mubr.f32.mxu0 0.0
      %4343 = vmatmul.mubr.f32.gmra.mrb[0].mxu0 %v4255
      %v4344 = vpop.f32.mrb[0].mxu0
      %v4345 = vadd.f32 0.0, %v4344
      %v4346 = vpop.f32.mrb[0].mxu0
      %4347 = vmatprep.mubr.f32.mxu0 0.0
      %4348 = vmatmul.mubr.f32.gmra.mrb[0].mxu0 %v4258
      %v4349 = vpop.f32.mrb[0].mxu0
      %v4350 = vadd.f32 0.0, %v4349
      %v4351 = vpop.f32.mrb[0].mxu0
      %4352 = vmatprep.mubr.f32.mxu0 0.0
      %4353 = vmatmul.mubr.f32.gmra.mrb[0].mxu0 %v4261
      %v4354 = vpop.f32.mrb[0].mxu0
      %v4355 = vadd.f32 0.0, %v4354
      %v4356 = vpop.f32.mrb[0].mxu0
      %4357 = vmatprep.mubr.f32.mxu0 0.0
      %4358 = vmatmul.mubr.f32.gmra.mrb[0].mxu0 %v4264
      %v4359 = vpop.f32.mrb[0].mxu0
      %v4360 = vadd.f32 0.0, %v4359
      %v4361 = vpop.f32.mrb[0].mxu0
      %4362 = vmatprep.mubr.f32.mxu0 0.0
      %4363 = vmatmul.mubr.f32.gmra.mrb[0].mxu0 %v4267
      %v4364 = vpop.f32.mrb[0].mxu0
      %v4365 = vadd.f32 0.0, %v4364
      %v4366 = vpop.f32.mrb[0].mxu0
      %4367 = vmatprep.mubr.f32.mxu0 0.0
      %4368 = vmatmul.mubr.f32.gmra.mrb[0].mxu0 %v4270
      %v4369 = vpop.f32.mrb[0].mxu0
      %v4370 = vadd.f32 0.0, %v4369
      %v4371 = vpop.f32.mrb[0].mxu0
      %4372 = vmatprep.mubr.f32.mxu0 0.0
      %4373 = vmatmul.mubr.f32.gmra.mrb[0].mxu0 %v4273
      %v4374 = vpop.f32.mrb[0].mxu0
      %v4375 = vadd.f32 0.0, %v4374
      %v4376 = vpop.f32.mrb[0].mxu0
      %4377 = vmatprep.mubr.f32.mxu0 0.0
      %4378 = vmatmul.mubr.f32.gmra.mrb[0].mxu0 %v4276
      %v4379 = vpop.f32.mrb[0].mxu0
      %v4380 = vadd.f32 0.0, %v4379
      %v4381 = vpop.f32.mrb[0].mxu0
      %4382 = vdwg.mxu0
      %v4383 = vadd.f32 %v3443, %v4345
      %v4384 = vadd.f32 %v3444, %v4350
      %v4385 = vadd.f32 %v3445, %v4355
      %v4386 = vadd.f32 %v3446, %v4360
      %v4387 = vadd.f32 %v3447, %v4365
      %v4388 = vadd.f32 %v3448, %v4370
      %v4389 = vadd.f32 %v3449, %v4375
      %v4390 = vadd.f32 %v3450, %v4380
      %v4391 = vld [vmem:[%s7] sm:$0x1]
      %v4393 = vlaneseq
      %v4394 = vshrl.u32 %v4393, 7
      %v4395 = vsub.s32 0, %v4394
      %v4396 = vrot.slane %v4391, %v4395
      %v4398 = vadd.f32 %v4383, %v4396
      %v4399 = vadd.f32 %v4384, %v4396
      %v4400 = vadd.f32 %v4385, %v4396
      %v4401 = vadd.f32 %v4386, %v4396
      %v4402 = vadd.f32 %v4387, %v4396
      %v4403 = vadd.f32 %v4388, %v4396
      %v4404 = vadd.f32 %v4389, %v4396
      %v4405 = vadd.f32 %v4390, %v4396
      %4406 = vst.msk [vmem:[%s348] sm:$0xff] %vm360, %v4398
      %4407 = vst.msk [vmem:[%s348 + $0x8] sm:$0xff] %vm360, %v4399
      %4408 = vst.msk [vmem:[%s348 + $0x10] sm:$0xff] %vm360, %v4400
      %4409 = vst.msk [vmem:[%s348 + $0x18] sm:$0xff] %vm360, %v4401
      %4410 = vst.msk [vmem:[%s348 + $0x20] sm:$0xff] %vm360, %v4402
      %4411 = vst.msk [vmem:[%s348 + $0x28] sm:$0xff] %vm360, %v4403
      %4412 = vst.msk [vmem:[%s348 + $0x30] sm:$0xff] %vm360, %v4404
      %4413 = vst.msk [vmem:[%s348 + $0x38] sm:$0xff] %vm360, %v4405
      %s4414 = smul.u32 4, %s24
      %p4415 = scmp.lt.s32.totalorder %s23, 1
      %s4416 = scalar_select %p4415, %s23, 1
      %p4417 = scmp.lt.s32.totalorder %s4414, 3
      %s4418 = scalar_select %p4417, %s4414, 3
      %s4419 = smul.addr %s4418, 2
      %s4420 = smul.addr %s4416, 8
      %s4421 = sadd.s32 %s4419, %s4420
      %s4422 = smul.addr %s4421, 8
      %s4423 = scalar_lea.vmem %s8, %s4422
      // Predicated region
      $region53: #{_lambda_.4} parent=51 // pred_check
        %p4424 = pneg %p226
      $region54: #{_lambda_.4} parent=51 // pred_check_branch
        %4426 = sbr.rel (%p4424) target = $region56
      $region55: #{_lambda_.4} parent=51 // pred_region
        %s4427 = smul.u32 4, %s24
      $region56: #{_lambda_.4} parent=51 // pred_fallthru
        _
    $region52: #{_lambda_.4} parent=5 // pred_fallthru
      _
    %p4428 = scmp.le.s32.totalorder 2, %s14
    // Predicated region
    $region57: #{_lambda_.4} parent=5 // pred_check
      %p4429 = pneg %p4428
    $region58: #{_lambda_.4} parent=5 // pred_check_branch
      %4431 = sbr.rel (%p4429) target = $region60
    $region59: #{_lambda_.4} parent=5 // pred_region
      %s4432 = ssub.s32 %s14, 2
      // Predicated region
      $region61: #{_lambda_.4} parent=59 // pred_check
        %p4433 = pneg %p232
      $region62: #{_lambda_.4} parent=59 // pred_check_branch
        %4435 = sbr.rel (%p4433) target = $region64
      $region63: #{_lambda_.4} parent=59 // pred_region
        %s4436 = smul.u32 4, %s26
        %p4437 = scmp.lt.s32.totalorder %s25, 1
        %s4438 = scalar_select %p4437, %s25, 1
        %p4439 = scmp.lt.s32.totalorder %s4436, 3
        %s4440 = scalar_select %p4439, %s4436, 3
        %s4441 = smul.addr %s4440, 2
        %s4442 = smul.addr %s4438, 8
        %s4443 = sadd.s32 %s4441, %s4442
        %s4444 = smul.addr %s4443, 8
        %s4445 = scalar_lea.vmem %s8, %s4444
      $region64: #{_lambda_.4} parent=59 // pred_fallthru
        _
    $region60: #{_lambda_.4} parent=5 // pred_fallthru
      _
  $region6: #{_lambda_.4} parent=0 // loop_footer
    %s18 = sadd.s32 1, %s14
  $region7: #{_lambda_.4} parent=0 // loop_footer_branch
    %13 = sbr.rel target = $region3
  $region8: #{_lambda_.4} parent=0 // loop_exit
    _

// kernel: _lambda_.6
$region0: #{_lambda_.6}
  #allocation0 [shape = 'u32[]', space=smem, size = 0x4, offset = 0x4, fixed_abs, tag = 'smem constant byte address 0x4 - core index']
  #allocation1 [shape = 'u32[144,128]{1,0:T(1,128)}', space=vmem, size = 0x12000, scoped, tag = 'internal scratch']
  %s0 = inlined_call_operand.vmem [shape: f32[2,4,16,32], index: 0, kind: input, shape index: {}]
  %s1 = inlined_call_operand.vmem [shape: f32[4,16,16], index: 1, kind: input, shape index: {}]
  %s2 = inlined_call_operand.vmem [shape: f32[4,16,16], index: 2, kind: input, shape index: {}]
  %s3 = inlined_call_operand.vmem [shape: f32[1,32], index: 3, kind: input, shape index: {}]
  %s4 = inlined_call_operand.vmem [shape: f32[1,32], index: 4, kind: input, shape index: {}]
  %s5 = inlined_call_operand.vmem [shape: f32[32,96], index: 5, kind: input, shape index: {}]
  %s6 = inlined_call_operand.vmem [shape: f32[1,96], index: 6, kind: input, shape index: {}]
  %s7 = inlined_call_operand.vmem [shape: f32[32,32], index: 7, kind: input, shape index: {}]
  %s8 = inlined_call_operand.vmem [shape: f32[1,32], index: 8, kind: input, shape index: {}]
  %s9 = inlined_call_operand.vmem [shape: f32[2,4,16,32], index: 9, kind: output, shape index: {}]
  %s10 = sld [smem:[#allocation0]]
  $region69: #{_lambda_.6} parent=0
    _
  %s12 = ssub.s32 1, %s10
  %s13 = scalar_select 0, %s12, %s10
  loop: start=0, step=1, limit=4
  $region2: #{_lambda_.6} parent=0 // loop_pre_header
    _
  $region3: #{_lambda_.6} parent=0 // loop_header
    %s15 = sphi 0, %s19
    %p16 = scmp.ge.s32.totalorder %s15, 4
    %s22 = sphi 0, %s34
    %s23 = sphi 0, %s30
    %s24 = sphi 0, %s22
    %s25 = sphi 0, %s23
    %s26 = sphi 0, %s24
    %s27 = sphi 0, %s25
    %s39 = sphi 0, %s41
    %s42 = sphi 0, %s39
    %s43 = sphi 0, %s42
    %s59 = sphi 0, %s43
    %s65 = sphi 0, %s67
    %s68 = sphi 0, %s65
    %s69 = sphi 0, %s68
    %s85 = sphi 0, %s69
    %s89 = sphi 0, %s89
    %s91 = sphi 0, %s89
    %s92 = sphi 0, %s91
    %s106 = sphi 0, %s92
    %s110 = sphi 0, %s110
    %s112 = sphi 0, %s110
    %s113 = sphi 0, %s112
    %s127 = sphi 0, %s113
    %s131 = sphi 0, %s131
    %s133 = sphi 0, %s131
    %s134 = sphi 0, %s133
    %s148 = sphi 0, %s134
    %s152 = sphi 0, %s152
    %s154 = sphi 0, %s152
    %s155 = sphi 0, %s154
    %s169 = sphi 0, %s155
    %s173 = sphi 0, %s173
    %s175 = sphi 0, %s173
    %s176 = sphi 0, %s175
    %s190 = sphi 0, %s176
    %s194 = sphi 0, %s194
    %s196 = sphi 0, %s194
    %s197 = sphi 0, %s196
    %s211 = sphi 0, %s197
    %s215 = sphi 0, %s215
    %s217 = sphi 0, %s215
    %s218 = sphi 0, %s217
    %s232 = sphi 0, %s218
    %s240 = sphi 0, %s242
    %s243 = sphi 0, %s240
    %s244 = sphi 0, %s243
    %s260 = sphi 0, %s244
  $region4: #{_lambda_.6} parent=0 // loop_header_branch
    %18 = sbr.rel (%p16) target = $region8
  $region5: #{_lambda_.6} parent=0 // loop_body
    %s20 = ssub.s32 %s15, 1
    %s21 = ssub.s32 %s15, 2
    %s28 = sadd.s32 1, %s23
    %p29 = scmp.ge.s32.totalorder %s28, 1
    %s30 = scalar_select %p29, 0, %s28
    %s31 = sadd.s32 1, %s22
    %s32 = scalar_select %p29, %s31, %s22
    %p33 = scmp.ge.s32.totalorder %s32, 2
    %s34 = scalar_select %p33, 0, %s32
    %s35 = ssub.s32 %s22, %s34
    %s36 = ssub.s32 %s23, %s30
    %s37 = sor.u32 %s35, %s36
    %p38 = scmp.eq.s32.totalorder %s37, 0
    %s40 = sadd.s32 %s39, 1
    %s41 = scalar_select %p38, %s39, %s40
    %p44 = pneg %p38
    %p45 = scmp.eq.s32.totalorder %s15, 1
    %p46 = por %p44, %p45
    %p47 = scmp.ne.s32.totalorder %s39, %s42
    %p48 = scmp.eq.s32.totalorder %s15, 0
    %p49 = por %p47, %p48
    %p50 = scmp.ne.s32.totalorder %s39, %s42
    %p51 = scmp.eq.s32.totalorder %s20, 1
    %p52 = por %p50, %p51
    %p53 = scmp.ne.s32.totalorder %s42, %s43
    %p54 = scmp.eq.s32.totalorder %s20, 0
    %p55 = por %p53, %p54
    %p56 = scmp.ne.s32.totalorder %s42, %s43
    %p57 = scmp.eq.s32.totalorder %s21, 1
    %p58 = por %p56, %p57
    %p60 = scmp.ne.s32.totalorder %s43, %s59
    %p61 = scmp.eq.s32.totalorder %s21, 0
    %p62 = por %p60, %p61
    %s63 = ssub.s32 %s23, %s30
    %p64 = scmp.eq.s32.totalorder %s63, 0
    %s66 = sadd.s32 %s65, 1
    %s67 = scalar_select %p64, %s65, %s66
    %p70 = pneg %p64
    %p71 = scmp.eq.s32.totalorder %s15, 1
    %p72 = por %p70, %p71
    %p73 = scmp.ne.s32.totalorder %s65, %s68
    %p74 = scmp.eq.s32.totalorder %s15, 0
    %p75 = por %p73, %p74
    %p76 = scmp.ne.s32.totalorder %s65, %s68
    %p77 = scmp.eq.s32.totalorder %s20, 1
    %p78 = por %p76, %p77
    %p79 = scmp.ne.s32.totalorder %s68, %s69
    %p80 = scmp.eq.s32.totalorder %s20, 0
    %p81 = por %p79, %p80
    %p82 = scmp.ne.s32.totalorder %s68, %s69
    %p83 = scmp.eq.s32.totalorder %s21, 1
    %p84 = por %p82, %p83
    %p86 = scmp.ne.s32.totalorder %s69, %s85
    %p87 = scmp.eq.s32.totalorder %s21, 0
    %p88 = por %p86, %p87
    %s90 = sadd.s32 %s89, 1
    %p93 = scmp.eq.s32.totalorder %s15, 1
    %p94 = scmp.ne.s32.totalorder %s89, %s91
    %p95 = scmp.eq.s32.totalorder %s15, 0
    %p96 = por %p94, %p95
    %p97 = scmp.ne.s32.totalorder %s89, %s91
    %p98 = scmp.eq.s32.totalorder %s20, 1
    %p99 = por %p97, %p98
    %p100 = scmp.ne.s32.totalorder %s91, %s92
    %p101 = scmp.eq.s32.totalorder %s20, 0
    %p102 = por %p100, %p101
    %p103 = scmp.ne.s32.totalorder %s91, %s92
    %p104 = scmp.eq.s32.totalorder %s21, 1
    %p105 = por %p103, %p104
    %p107 = scmp.ne.s32.totalorder %s92, %s106
    %p108 = scmp.eq.s32.totalorder %s21, 0
    %p109 = por %p107, %p108
    %s111 = sadd.s32 %s110, 1
    %p114 = scmp.eq.s32.totalorder %s15, 1
    %p115 = scmp.ne.s32.totalorder %s110, %s112
    %p116 = scmp.eq.s32.totalorder %s15, 0
    %p117 = por %p115, %p116
    %p118 = scmp.ne.s32.totalorder %s110, %s112
    %p119 = scmp.eq.s32.totalorder %s20, 1
    %p120 = por %p118, %p119
    %p121 = scmp.ne.s32.totalorder %s112, %s113
    %p122 = scmp.eq.s32.totalorder %s20, 0
    %p123 = por %p121, %p122
    %p124 = scmp.ne.s32.totalorder %s112, %s113
    %p125 = scmp.eq.s32.totalorder %s21, 1
    %p126 = por %p124, %p125
    %p128 = scmp.ne.s32.totalorder %s113, %s127
    %p129 = scmp.eq.s32.totalorder %s21, 0
    %p130 = por %p128, %p129
    %s132 = sadd.s32 %s131, 1
    %p135 = scmp.eq.s32.totalorder %s15, 1
    %p136 = scmp.ne.s32.totalorder %s131, %s133
    %p137 = scmp.eq.s32.totalorder %s15, 0
    %p138 = por %p136, %p137
    %p139 = scmp.ne.s32.totalorder %s131, %s133
    %p140 = scmp.eq.s32.totalorder %s20, 1
    %p141 = por %p139, %p140
    %p142 = scmp.ne.s32.totalorder %s133, %s134
    %p143 = scmp.eq.s32.totalorder %s20, 0
    %p144 = por %p142, %p143
    %p145 = scmp.ne.s32.totalorder %s133, %s134
    %p146 = scmp.eq.s32.totalorder %s21, 1
    %p147 = por %p145, %p146
    %p149 = scmp.ne.s32.totalorder %s134, %s148
    %p150 = scmp.eq.s32.totalorder %s21, 0
    %p151 = por %p149, %p150
    %s153 = sadd.s32 %s152, 1
    %p156 = scmp.eq.s32.totalorder %s15, 1
    %p157 = scmp.ne.s32.totalorder %s152, %s154
    %p158 = scmp.eq.s32.totalorder %s15, 0
    %p159 = por %p157, %p158
    %p160 = scmp.ne.s32.totalorder %s152, %s154
    %p161 = scmp.eq.s32.totalorder %s20, 1
    %p162 = por %p160, %p161
    %p163 = scmp.ne.s32.totalorder %s154, %s155
    %p164 = scmp.eq.s32.totalorder %s20, 0
    %p165 = por %p163, %p164
    %p166 = scmp.ne.s32.totalorder %s154, %s155
    %p167 = scmp.eq.s32.totalorder %s21, 1
    %p168 = por %p166, %p167
    %p170 = scmp.ne.s32.totalorder %s155, %s169
    %p171 = scmp.eq.s32.totalorder %s21, 0
    %p172 = por %p170, %p171
    %s174 = sadd.s32 %s173, 1
    %p177 = scmp.eq.s32.totalorder %s15, 1
    %p178 = scmp.ne.s32.totalorder %s173, %s175
    %p179 = scmp.eq.s32.totalorder %s15, 0
    %p180 = por %p178, %p179
    %p181 = scmp.ne.s32.totalorder %s173, %s175
    %p182 = scmp.eq.s32.totalorder %s20, 1
    %p183 = por %p181, %p182
    %p184 = scmp.ne.s32.totalorder %s175, %s176
    %p185 = scmp.eq.s32.totalorder %s20, 0
    %p186 = por %p184, %p185
    %p187 = scmp.ne.s32.totalorder %s175, %s176
    %p188 = scmp.eq.s32.totalorder %s21, 1
    %p189 = por %p187, %p188
    %p191 = scmp.ne.s32.totalorder %s176, %s190
    %p192 = scmp.eq.s32.totalorder %s21, 0
    %p193 = por %p191, %p192
    %s195 = sadd.s32 %s194, 1
    %p198 = scmp.eq.s32.totalorder %s15, 1
    %p199 = scmp.ne.s32.totalorder %s194, %s196
    %p200 = scmp.eq.s32.totalorder %s15, 0
    %p201 = por %p199, %p200
    %p202 = scmp.ne.s32.totalorder %s194, %s196
    %p203 = scmp.eq.s32.totalorder %s20, 1
    %p204 = por %p202, %p203
    %p205 = scmp.ne.s32.totalorder %s196, %s197
    %p206 = scmp.eq.s32.totalorder %s20, 0
    %p207 = por %p205, %p206
    %p208 = scmp.ne.s32.totalorder %s196, %s197
    %p209 = scmp.eq.s32.totalorder %s21, 1
    %p210 = por %p208, %p209
    %p212 = scmp.ne.s32.totalorder %s197, %s211
    %p213 = scmp.eq.s32.totalorder %s21, 0
    %p214 = por %p212, %p213
    %s216 = sadd.s32 %s215, 1
    %p219 = scmp.eq.s32.totalorder %s15, 1
    %p220 = scmp.ne.s32.totalorder %s215, %s217
    %p221 = scmp.eq.s32.totalorder %s15, 0
    %p222 = por %p220, %p221
    %p223 = scmp.ne.s32.totalorder %s215, %s217
    %p224 = scmp.eq.s32.totalorder %s20, 1
    %p225 = por %p223, %p224
    %p226 = scmp.ne.s32.totalorder %s217, %s218
    %p227 = scmp.eq.s32.totalorder %s20, 0
    %p228 = por %p226, %p227
    %p229 = scmp.ne.s32.totalorder %s217, %s218
    %p230 = scmp.eq.s32.totalorder %s21, 1
    %p231 = por %p229, %p230
    %p233 = scmp.ne.s32.totalorder %s218, %s232
    %p234 = scmp.eq.s32.totalorder %s21, 0
    %p235 = por %p233, %p234
    %s236 = ssub.s32 %s22, %s34
    %s237 = ssub.s32 %s23, %s30
    %s238 = sor.u32 %s236, %s237
    %p239 = scmp.eq.s32.totalorder %s238, 0
    %s241 = sadd.s32 %s240, 1
    %s242 = scalar_select %p239, %s240, %s241
    %p245 = pneg %p239
    %p246 = scmp.eq.s32.totalorder %s15, 1
    %p247 = por %p245, %p246
    %p248 = scmp.ne.s32.totalorder %s240, %s243
    %p249 = scmp.eq.s32.totalorder %s15, 0
    %p250 = por %p248, %p249
    %p251 = scmp.ne.s32.totalorder %s240, %s243
    %p252 = scmp.eq.s32.totalorder %s20, 1
    %p253 = por %p251, %p252
    %p254 = scmp.ne.s32.totalorder %s243, %s244
    %p255 = scmp.eq.s32.totalorder %s20, 0
    %p256 = por %p254, %p255
    %p257 = scmp.ne.s32.totalorder %s243, %s244
    %p258 = scmp.eq.s32.totalorder %s21, 1
    %p259 = por %p257, %p258
    %p261 = scmp.ne.s32.totalorder %s244, %s260
    %p262 = scmp.eq.s32.totalorder %s21, 0
    %p263 = por %p261, %p262
    %p264 = scmp.le.s32.totalorder 1, %s15
    %p265 = scmp.lt.s32.totalorder %s15, 3
    %p266 = pnand %p264, %p265
    %p267 = pneg %p266
    // Predicated region
    $region9: #{_lambda_.6} parent=5 // pred_check
      _
    $region10: #{_lambda_.6} parent=5 // pred_check_branch
      %269 = sbr.rel (%p266) target = $region12
    $region11: #{_lambda_.6} parent=5 // pred_region
      %s270 = ssub.s32 %s15, 1
      // Predicated region
      $region13: #{_lambda_.6} parent=11 // pred_check
        %p271 = pneg %p81
      $region14: #{_lambda_.6} parent=11 // pred_check_branch
        %273 = sbr.rel (%p271) target = $region16
      $region15: #{_lambda_.6} parent=11 // pred_region
        %s274 = smul.u32 4, %s25
        %p275 = scmp.lt.s32.totalorder %s274, 3
        %s276 = scalar_select %p275, %s274, 3
        %s277 = smul.addr %s276, 2
        %s278 = smul.addr %s277, 8
        %s279 = scalar_lea.vmem %s1, %s278
        %s280 = smul.u32 4, %s25
      $region16: #{_lambda_.6} parent=11 // pred_fallthru
        _
      // Predicated region
      $region17: #{_lambda_.6} parent=11 // pred_check
        %p281 = pneg %p102
      $region18: #{_lambda_.6} parent=11 // pred_check_branch
        %283 = sbr.rel (%p281) target = $region20
      $region19: #{_lambda_.6} parent=11 // pred_region
        _
      $region20: #{_lambda_.6} parent=11 // pred_fallthru
        _
      // Predicated region
      $region21: #{_lambda_.6} parent=11 // pred_check
        %p284 = pneg %p123
      $region22: #{_lambda_.6} parent=11 // pred_check_branch
        %286 = sbr.rel (%p284) target = $region24
      $region23: #{_lambda_.6} parent=11 // pred_region
        _
      $region24: #{_lambda_.6} parent=11 // pred_fallthru
        _
      // Predicated region
      $region25: #{_lambda_.6} parent=11 // pred_check
        %p287 = pneg %p144
      $region26: #{_lambda_.6} parent=11 // pred_check_branch
        %289 = sbr.rel (%p287) target = $region28
      $region27: #{_lambda_.6} parent=11 // pred_region
        _
      $region28: #{_lambda_.6} parent=11 // pred_fallthru
        _
      // Predicated region
      $region29: #{_lambda_.6} parent=11 // pred_check
        %p290 = pneg %p165
      $region30: #{_lambda_.6} parent=11 // pred_check_branch
        %292 = sbr.rel (%p290) target = $region32
      $region31: #{_lambda_.6} parent=11 // pred_region
        _
      $region32: #{_lambda_.6} parent=11 // pred_fallthru
        _
      // Predicated region
      $region33: #{_lambda_.6} parent=11 // pred_check
        %p293 = pneg %p186
      $region34: #{_lambda_.6} parent=11 // pred_check_branch
        %295 = sbr.rel (%p293) target = $region36
      $region35: #{_lambda_.6} parent=11 // pred_region
        _
      $region36: #{_lambda_.6} parent=11 // pred_fallthru
        _
      // Predicated region
      $region37: #{_lambda_.6} parent=11 // pred_check
        %p296 = pneg %p207
      $region38: #{_lambda_.6} parent=11 // pred_check_branch
        %298 = sbr.rel (%p296) target = $region40
      $region39: #{_lambda_.6} parent=11 // pred_region
        _
      $region40: #{_lambda_.6} parent=11 // pred_fallthru
        _
      // Predicated region
      $region41: #{_lambda_.6} parent=11 // pred_check
        %p299 = pneg %p228
      $region42: #{_lambda_.6} parent=11 // pred_check_branch
        %301 = sbr.rel (%p299) target = $region44
      $region43: #{_lambda_.6} parent=11 // pred_region
        _
      $region44: #{_lambda_.6} parent=11 // pred_fallthru
        _
    $region12: #{_lambda_.6} parent=5 // pred_fallthru
      _
    %p302 = scmp.lt.s32.totalorder %s15, 2
    // Predicated region
    $region45: #{_lambda_.6} parent=5 // pred_check
      %p303 = pneg %p302
    $region46: #{_lambda_.6} parent=5 // pred_check_branch
      %305 = sbr.rel (%p303) target = $region48
    $region47: #{_lambda_.6} parent=5 // pred_region
      // Predicated region
      $region49: #{_lambda_.6} parent=47 // pred_check
        %p306 = pneg %p49
      $region50: #{_lambda_.6} parent=47 // pred_check_branch
        %308 = sbr.rel (%p306) target = $region52
      $region51: #{_lambda_.6} parent=47 // pred_region
        %s309 = smul.u32 4, %s23
        %p310 = scmp.lt.s32.totalorder %s22, 1
        %s311 = scalar_select %p310, %s22, 1
        %p312 = scmp.lt.s32.totalorder %s309, 3
        %s313 = scalar_select %p312, %s309, 3
        %s314 = smul.addr %s313, 2
        %s315 = smul.addr %s311, 8
        %s316 = sadd.s32 %s314, %s315
        %s317 = smul.addr %s316, 8
        %s318 = scalar_lea.vmem %s0, %s317
        %s319 = smul.u32 4, %s23
      $region52: #{_lambda_.6} parent=47 // pred_fallthru
        _
    $region48: #{_lambda_.6} parent=5 // pred_fallthru
      _
    %p320 = scmp.le.s32.totalorder 1, %s15
    %p321 = scmp.lt.s32.totalorder %s15, 3
    %p322 = pnand %p320, %p321
    %p323 = pneg %p322
    // Predicated region
    $region53: #{_lambda_.6} parent=5 // pred_check
      _
    $region54: #{_lambda_.6} parent=5 // pred_check_branch
      %325 = sbr.rel (%p322) target = $region56
    $region55: #{_lambda_.6} parent=5 // pred_region
      %s326 = ssub.s32 %s15, 1
      %s327 = smul.u32 4, %s25
      %p328 = scmp.lt.s32.totalorder %s24, 1
      %s329 = scalar_select %p328, %s24, 1
      %p330 = scmp.lt.s32.totalorder %s327, 3
      %s331 = scalar_select %p330, %s327, 3
      %s332 = smul.addr %s331, 2
      %s333 = smul.addr %s329, 8
      %s334 = sadd.s32 %s332, %s333
      %s335 = smul.addr %s334, 8
      %s336 = scalar_lea.vmem %s0, %s335
      %p337 = pneg %p55
      %p338 = pneg %p52
      %s339 = smul.u32 4, %s25
      %p340 = scmp.lt.s32.totalorder %s339, 3
      %s341 = scalar_select %p340, %s339, 3
      %s342 = smul.addr %s341, 2
      %s343 = smul.addr %s342, 8
      %s344 = scalar_lea.vmem %s1, %s343
      %p345 = pneg %p81
      %p346 = pneg %p78
      %p347 = pneg %p102
      %p348 = pneg %p99
      %p349 = pneg %p123
      %p350 = pneg %p120
      %p351 = pneg %p144
      %p352 = pneg %p141
      %p353 = pneg %p165
      %p354 = pneg %p162
      %p355 = pneg %p186
      %p356 = pneg %p183
      %p357 = pneg %p207
      %p358 = pneg %p204
      %p359 = pneg %p228
      %p360 = pneg %p225
      %p361 = pneg %p256
      %p362 = pneg %p253
      %s363 = smul.u32 4, %s25
      %p364 = scmp.lt.s32.totalorder %s24, 1
      %s365 = scalar_select %p364, %s24, 1
      %p366 = scmp.lt.s32.totalorder %s363, 3
      %s367 = scalar_select %p366, %s363, 3
      %s368 = smul.addr %s367, 2
      %s369 = smul.addr %s365, 8
      %s370 = sadd.s32 %s368, %s369
      %s371 = smul.addr %s370, 8
      %s372 = scalar_lea.vmem %s9, %s371
      %s373 = smul.u32 4, %s25
      %p374 = scmp.lt.s32.totalorder %s24, 1
      %s375 = scalar_select %p374, %s24, 1
      %p376 = scmp.lt.s32.totalorder %s373, 3
      %s377 = scalar_select %p376, %s373, 3
      %s378 = smul.addr %s377, 2
      %s379 = smul.addr %s375, 8
      %s380 = sadd.s32 %s378, %s379
      %s381 = smul.addr %s380, 8
      %s382 = scalar_lea.vmem %s0, %s381
      %s383 = smul.u32 4, %s25
      %s384 = smul.u32 4, %s25
      %p385 = scmp.lt.s32.totalorder %s384, 3
      %s386 = scalar_select %p385, %s384, 3
      %s387 = smul.addr %s386, 2
      %s388 = smul.addr %s387, 8
      %s389 = scalar_lea.vmem %s1, %s388
      %s390 = smul.u32 4, %s25
      %s391 = smul.u32 4, %s25
      %p392 = scmp.lt.s32.totalorder %s24, 1
      %s393 = scalar_select %p392, %s24, 1
      %p394 = scmp.lt.s32.totalorder %s391, 3
      %s395 = scalar_select %p394, %s391, 3
      %s396 = smul.addr %s395, 2
      %s397 = smul.addr %s393, 8
      %s398 = sadd.s32 %s396, %s397
      %s399 = smul.addr %s398, 8
      %s400 = scalar_lea.vmem %s9, %s399
      %s401 = smul.u32 4, %s25
      %v402 = vld [vmem:[%s382] sm:$0xff]
      %v403 = vld [vmem:[%s382 + $0x8] sm:$0xff]
      %v404 = vld [vmem:[%s382 + $0x10] sm:$0xff]
      %v405 = vld [vmem:[%s382 + $0x18] sm:$0xff]
      %v406 = vld [vmem:[%s382 + $0x20] sm:$0xff]
      %v407 = vld [vmem:[%s382 + $0x28] sm:$0xff]
      %v408 = vld [vmem:[%s382 + $0x30] sm:$0xff]
      %v409 = vld [vmem:[%s382 + $0x38] sm:$0xff]
      %v410 = vld [vmem:[%s3] sm:$0x1]
      %v411 = vld [vmem:[%s4] sm:$0x1]
      %vm412 = vcmask 261120
      %v413 = vsel %vm412, %v402, 0.0
      %414 = vadd.xlane.f32.xlu0 %v413
      %v415 = vpop.xlane.xlu0 %414
      %v416 = vsel %vm412, %v403, 0.0
      %417 = vadd.xlane.f32.xlu0 %v416
      %v418 = vpop.xlane.xlu0 %417
      %v419 = vsel %vm412, %v404, 0.0
      %420 = vadd.xlane.f32.xlu0 %v419
      %v421 = vpop.xlane.xlu0 %420
      %v422 = vsel %vm412, %v405, 0.0
      %423 = vadd.xlane.f32.xlu0 %v422
      %v424 = vpop.xlane.xlu0 %423
      %v425 = vsel %vm412, %v406, 0.0
      %426 = vadd.xlane.f32.xlu0 %v425
      %v427 = vpop.xlane.xlu0 %426
      %v428 = vsel %vm412, %v407, 0.0
      %429 = vadd.xlane.f32.xlu0 %v428
      %v430 = vpop.xlane.xlu0 %429
      %v431 = vsel %vm412, %v408, 0.0
      %432 = vadd.xlane.f32.xlu0 %v431
      %v433 = vpop.xlane.xlu0 %432
      %v434 = vsel %vm412, %v409, 0.0
      %435 = vadd.xlane.f32.xlu0 %v434
      %v436 = vpop.xlane.xlu0 %435
      %v437 = vrcp.pop 32.0
      %v438 = vmul.f32 %v415, %v437
      %v439 = vmul.f32 %v418, %v437
      %v440 = vmul.f32 %v421, %v437
      %v441 = vmul.f32 %v424, %v437
      %v442 = vmul.f32 %v427, %v437
      %v443 = vmul.f32 %v430, %v437
      %v444 = vmul.f32 %v433, %v437
      %v445 = vmul.f32 %v436, %v437
      %v446 = vsub.f32 %v402, %v438
      %v447 = vsub.f32 %v403, %v439
      %v448 = vsub.f32 %v404, %v440
      %v449 = vsub.f32 %v405, %v441
      %v450 = vsub.f32 %v406, %v442
      %v451 = vsub.f32 %v407, %v443
      %v452 = vsub.f32 %v408, %v444
      %v453 = vsub.f32 %v409, %v445
      %v454 = vmul.f32 %v446, %v446
      %v455 = vmul.f32 %v447, %v447
      %v456 = vmul.f32 %v448, %v448
      %v457 = vmul.f32 %v449, %v449
      %v458 = vmul.f32 %v450, %v450
      %v459 = vmul.f32 %v451, %v451
      %v460 = vmul.f32 %v452, %v452
      %v461 = vmul.f32 %v453, %v453
      %v462 = vsel %vm412, %v454, 0.0
      %463 = vadd.xlane.f32.xlu0 %v462
      %v464 = vpop.xlane.xlu0 %463
      %v465 = vsel %vm412, %v455, 0.0
      %466 = vadd.xlane.f32.xlu0 %v465
      %v467 = vpop.xlane.xlu0 %466
      %v468 = vsel %vm412, %v456, 0.0
      %469 = vadd.xlane.f32.xlu0 %v468
      %v470 = vpop.xlane.xlu0 %469
      %v471 = vsel %vm412, %v457, 0.0
      %472 = vadd.xlane.f32.xlu0 %v471
      %v473 = vpop.xlane.xlu0 %472
      %v474 = vsel %vm412, %v458, 0.0
      %475 = vadd.xlane.f32.xlu0 %v474
      %v476 = vpop.xlane.xlu0 %475
      %v477 = vsel %vm412, %v459, 0.0
      %478 = vadd.xlane.f32.xlu0 %v477
      %v479 = vpop.xlane.xlu0 %478
      %v480 = vsel %vm412, %v460, 0.0
      %481 = vadd.xlane.f32.xlu0 %v480
      %v482 = vpop.xlane.xlu0 %481
      %v483 = vsel %vm412, %v461, 0.0
      %484 = vadd.xlane.f32.xlu0 %v483
      %v485 = vpop.xlane.xlu0 %484
      %v486 = vmul.f32 %v464, %v437
      %v487 = vmul.f32 %v467, %v437
      %v488 = vmul.f32 %v470, %v437
      %v489 = vmul.f32 %v473, %v437
      %v490 = vmul.f32 %v476, %v437
      %v491 = vmul.f32 %v479, %v437
      %v492 = vmul.f32 %v482, %v437
      %v493 = vmul.f32 %v485, %v437
      %v494 = vadd.f32 %v486, 1e-05
      %v495 = vadd.f32 %v487, 1e-05
      %v496 = vadd.f32 %v488, 1e-05
      %v497 = vadd.f32 %v489, 1e-05
      %v498 = vadd.f32 %v490, 1e-05
      %v499 = vadd.f32 %v491, 1e-05
      %v500 = vadd.f32 %v492, 1e-05
      %v501 = vadd.f32 %v493, 1e-05
      %v502 = vrsqrt.pop %v494
      %v503 = vrsqrt.pop %v495
      %v504 = vrsqrt.pop %v496
      %v505 = vrsqrt.pop %v497
      %v506 = vrsqrt.pop %v498
      %v507 = vrsqrt.pop %v499
      %v508 = vrsqrt.pop %v500
      %v509 = vrsqrt.pop %v501
      %v510 = vmul.f32 %v446, %v502
      %v511 = vmul.f32 %v447, %v503
      %v512 = vmul.f32 %v448, %v504
      %v513 = vmul.f32 %v449, %v505
      %v514 = vmul.f32 %v450, %v506
      %v515 = vmul.f32 %v451, %v507
      %v516 = vmul.f32 %v452, %v508
      %v517 = vmul.f32 %v453, %v509
      %v519 = vlaneseq
      %v520 = vshrl.u32 %v519, 7
      %v521 = vsub.s32 0, %v520
      %v522 = vrot.slane %v410, %v521
      %v524 = vmul.f32 %v510, %v522
      %v525 = vmul.f32 %v511, %v522
      %v526 = vmul.f32 %v512, %v522
      %v527 = vmul.f32 %v513, %v522
      %v528 = vmul.f32 %v514, %v522
      %v529 = vmul.f32 %v515, %v522
      %v530 = vmul.f32 %v516, %v522
      %v531 = vmul.f32 %v517, %v522
      %v533 = vlaneseq
      %v534 = vshrl.u32 %v533, 7
      %v535 = vsub.s32 0, %v534
      %v536 = vrot.slane %v411, %v535
      %v538 = vadd.f32 %v524, %v536
      %v539 = vadd.f32 %v525, %v536
      %v540 = vadd.f32 %v526, %v536
      %v541 = vadd.f32 %v527, %v536
      %v542 = vadd.f32 %v528, %v536
      %v543 = vadd.f32 %v529, %v536
      %v544 = vadd.f32 %v530, %v536
      %v545 = vadd.f32 %v531, %v536
      %v546 = vld [vmem:[%s5] sm:$0xff]
      %v547 = vld [vmem:[%s5 + $0x8] sm:$0xff]
      %v548 = vld [vmem:[%s5 + $0x10] sm:$0xff]
      %v549 = vld [vmem:[%s5 + $0x18] sm:$0xff]
      %v550 = vld [vmem:[%s6] sm:$0x1]
      %v552 = vlaneseq
      %v553 = vshrl.u32 %v552, 7
      %v554 = vsub.s32 0, %v553
      %v555 = vrot.slane %v550, %v554
      %v558 = vsel %vm412, %v538, 0
      %v561 = vsel %vm412, %v539, 0
      %v564 = vsel %vm412, %v540, 0
      %v567 = vsel %vm412, %v541, 0
      %v570 = vsel %vm412, %v542, 0
      %v573 = vsel %vm412, %v543, 0
      %v576 = vsel %vm412, %v544, 0
      %v579 = vsel %vm412, %v545, 0
      %581 = vmatprep.subr.mxu0 0.0
      %582 = vmatpush1.msra.mxu0 %v546
      %583 = vmatprep.subr.mxu0 0.0
      %584 = vmatpush1.msra.mxu0 %v547
      %585 = vmatprep.subr.mxu0 0.0
      %586 = vmatpush1.msra.mxu0 %v548
      %587 = vmatprep.subr.mxu0 0.0
      %588 = vmatpush1.msra.mxu0 %v549
      %589 = vmatprep.subr.mxu0 0.0
      %590 = vmatpush1.msra.mxu0 0.0
      %591 = vmatprep.subr.mxu0 0.0
      %592 = vmatpush1.msra.mxu0 0.0
      %593 = vmatprep.subr.mxu0 0.0
      %594 = vmatpush1.msra.mxu0 0.0
      %595 = vmatprep.subr.mxu0 0.0
      %596 = vmatpush1.msra.mxu0 0.0
      %597 = vmatprep.subr.mxu0 0.0
      %598 = vmatpush1.msra.mxu0 0.0
      %599 = vmatprep.subr.mxu0 0.0
      %600 = vmatpush1.msra.mxu0 0.0
      %601 = vmatprep.subr.mxu0 0.0
      %602 = vmatpush1.msra.mxu0 0.0
      %603 = vmatprep.subr.mxu0 0.0
      %604 = vmatpush1.msra.mxu0 0.0
      %605 = vmatprep.subr.mxu0 0.0
      %606 = vmatpush1.msra.mxu0 0.0
      %607 = vmatprep.subr.mxu0 0.0
      %608 = vmatpush1.msra.mxu0 0.0
      %609 = vmatprep.subr.mxu0 0.0
      %610 = vmatpush1.msra.mxu0 0.0
      %611 = vmatprep.subr.mxu0 0.0
      %612 = vmatpush1.msra.mxu0 0.0
      %613 = vmatprep.subr.mxu0 0.0
      %614 = vmatpush1.msra.mxu0 0.0
      %615 = vmatprep.subr.mxu0 0.0
      %616 = vmatpush1.msra.mxu0 0.0
      %617 = vmatprep.subr.mxu0 0.0
      %618 = vmatpush1.msra.mxu0 0.0
      %619 = vmatprep.subr.mxu0 0.0
      %620 = vmatpush1.msra.mxu0 0.0
      %621 = vmatprep.subr.mxu0 0.0
      %622 = vmatpush1.msra.mxu0 0.0
      %623 = vmatprep.subr.mxu0 0.0
      %624 = vmatpush1.msra.mxu0 0.0
      %625 = vmatprep.subr.mxu0 0.0
      %626 = vmatpush1.msra.mxu0 0.0
      %627 = vmatprep.subr.mxu0 0.0
      %628 = vmatpush1.msra.mxu0 0.0
      %629 = vmatprep.subr.mxu0 0.0
      %630 = vmatpush1.msra.mxu0 0.0
      %631 = vmatprep.subr.mxu0 0.0
      %632 = vmatpush1.msra.mxu0 0.0
      %633 = vmatprep.subr.mxu0 0.0
      %634 = vmatpush1.msra.mxu0 0.0
      %635 = vmatprep.subr.mxu0 0.0
      %636 = vmatpush1.msra.mxu0 0.0
      %637 = vmatprep.subr.mxu0 0.0
      %638 = vmatpush1.msra.mxu0 0.0
      %639 = vmatprep.subr.mxu0 0.0
      %640 = vmatpush1.msra.mxu0 0.0
      %641 = vmatprep.subr.mxu0 0.0
      %642 = vmatpush1.msra.mxu0 0.0
      %643 = vmatprep.subr.mxu0 0.0
      %644 = vmatpush1.msra.mxu0 0.0
      %645 = vmatprep.mubr.f32.mxu0 0.0
      %646 = vmatmul.mubr.f32.gmra.mrb[0].mxu0 %v558
      %v647 = vpop.f32.mrb[0].mxu0
      %v648 = vadd.f32 %v555, %v647
      %v649 = vpop.f32.mrb[0].mxu0
      %650 = vmatprep.mubr.f32.mxu0 0.0
      %651 = vmatmul.mubr.f32.gmra.mrb[0].mxu0 %v561
      %v652 = vpop.f32.mrb[0].mxu0
      %v653 = vadd.f32 %v555, %v652
      %v654 = vpop.f32.mrb[0].mxu0
      %655 = vmatprep.mubr.f32.mxu0 0.0
      %656 = vmatmul.mubr.f32.gmra.mrb[0].mxu0 %v564
      %v657 = vpop.f32.mrb[0].mxu0
      %v658 = vadd.f32 %v555, %v657
      %v659 = vpop.f32.mrb[0].mxu0
      %660 = vmatprep.mubr.f32.mxu0 0.0
      %661 = vmatmul.mubr.f32.gmra.mrb[0].mxu0 %v567
      %v662 = vpop.f32.mrb[0].mxu0
      %v663 = vadd.f32 %v555, %v662
      %v664 = vpop.f32.mrb[0].mxu0
      %665 = vmatprep.mubr.f32.mxu0 0.0
      %666 = vmatmul.mubr.f32.gmra.mrb[0].mxu0 %v570
      %v667 = vpop.f32.mrb[0].mxu0
      %v668 = vadd.f32 %v555, %v667
      %v669 = vpop.f32.mrb[0].mxu0
      %670 = vmatprep.mubr.f32.mxu0 0.0
      %671 = vmatmul.mubr.f32.gmra.mrb[0].mxu0 %v573
      %v672 = vpop.f32.mrb[0].mxu0
      %v673 = vadd.f32 %v555, %v672
      %v674 = vpop.f32.mrb[0].mxu0
      %675 = vmatprep.mubr.f32.mxu0 0.0
      %676 = vmatmul.mubr.f32.gmra.mrb[0].mxu0 %v576
      %v677 = vpop.f32.mrb[0].mxu0
      %v678 = vadd.f32 %v555, %v677
      %v679 = vpop.f32.mrb[0].mxu0
      %680 = vmatprep.mubr.f32.mxu0 0.0
      %681 = vmatmul.mubr.f32.gmra.mrb[0].mxu0 %v579
      %v682 = vpop.f32.mrb[0].mxu0
      %v683 = vadd.f32 %v555, %v682
      %v684 = vpop.f32.mrb[0].mxu0
      %685 = vdwg.mxu0
      %v686 = vld [vmem:[%s7] sm:$0xff]
      %v687 = vld [vmem:[%s7 + $0x8] sm:$0xff]
      %v688 = vld [vmem:[%s7 + $0x10] sm:$0xff]
      %v689 = vld [vmem:[%s7 + $0x18] sm:$0xff]
      %v690 = vmul.f32 %v648, 0.35355338
      %v691 = vmul.f32 %v653, 0.35355338
      %v692 = vmul.f32 %v658, 0.35355338
      %v693 = vmul.f32 %v663, 0.35355338
      %v694 = vmul.f32 %v668, 0.35355338
      %v695 = vmul.f32 %v673, 0.35355338
      %v696 = vmul.f32 %v678, 0.35355338
      %v697 = vmul.f32 %v683, 0.35355338
      %v698 = vld [vmem:[%s2] sm:$0xff]
      %v699 = vld [vmem:[%s2 + $0x8] sm:$0xff]
      %702 = vrot.lane.b32.xlu0 %v648, 96
      %v703 = vpop.permute.xlu0 %702
      %704 = vrot.lane.b32.xlu0 %v653, 96
      %v705 = vpop.permute.xlu0 %704
      %vm706 = vcmask 64512
      %v708 = vsel %vm706, %v690, 0
      %v711 = vsel %vm706, %v691, 0
      %v713 = vsel %vm706, %v703, 0
      %v715 = vsel %vm706, %v705, 0
      %717 = vmatprep.subr.mxu0 0.0
      %718 = vmatpush1.xpose.msra.mxu0 %v713
      %719 = vmatprep.subr.mxu0 0.0
      %720 = vmatpush1.xpose.msra.mxu0 %v715
      %721 = vmatprep.subr.mxu0 0.0
      %722 = vmatpush1.xpose.msra.mxu0 0.0
      %723 = vmatprep.subr.mxu0 0.0
      %724 = vmatpush1.xpose.msra.mxu0 0.0
      %725 = vmatprep.subr.mxu0 0.0
      %726 = vmatpush1.xpose.msra.mxu0 0.0
      %727 = vmatprep.subr.mxu0 0.0
      %728 = vmatpush1.xpose.msra.mxu0 0.0
      %729 = vmatprep.subr.mxu0 0.0
      %730 = vmatpush1.xpose.msra.mxu0 0.0
      %731 = vmatprep.subr.mxu0 0.0
      %732 = vmatpush1.xpose.msra.mxu0 0.0
      %733 = vmatprep.subr.mxu0 0.0
      %734 = vmatpush1.xpose.msra.mxu0 0.0
      %735 = vmatprep.subr.mxu0 0.0
      %736 = vmatpush1.xpose.msra.mxu0 0.0
      %737 = vmatprep.subr.mxu0 0.0
      %738 = vmatpush1.xpose.msra.mxu0 0.0
      %739 = vmatprep.subr.mxu0 0.0
      %740 = vmatpush1.xpose.msra.mxu0 0.0
      %741 = vmatprep.subr.mxu0 0.0
      %742 = vmatpush1.xpose.msra.mxu0 0.0
      %743 = vmatprep.subr.mxu0 0.0
      %744 = vmatpush1.xpose.msra.mxu0 0.0
      %745 = vmatprep.subr.mxu0 0.0
      %746 = vmatpush1.xpose.msra.mxu0 0.0
      %747 = vmatprep.subr.mxu0 0.0
      %748 = vmatpush1.xpose.msra.mxu0 0.0
      %749 = vmatprep.subr.mxu0 0.0
      %750 = vmatpush1.xpose.msra.mxu0 0.0
      %751 = vmatprep.subr.mxu0 0.0
      %752 = vmatpush1.xpose.msra.mxu0 0.0
      %753 = vmatprep.subr.mxu0 0.0
      %754 = vmatpush1.xpose.msra.mxu0 0.0
      %755 = vmatprep.subr.mxu0 0.0
      %756 = vmatpush1.xpose.msra.mxu0 0.0
      %757 = vmatprep.subr.mxu0 0.0
      %758 = vmatpush1.xpose.msra.mxu0 0.0
      %759 = vmatprep.subr.mxu0 0.0
      %760 = vmatpush1.xpose.msra.mxu0 0.0
      %761 = vmatprep.subr.mxu0 0.0
      %762 = vmatpush1.xpose.msra.mxu0 0.0
      %763 = vmatprep.subr.mxu0 0.0
      %764 = vmatpush1.xpose.msra.mxu0 0.0
      %765 = vmatprep.subr.mxu0 0.0
      %766 = vmatpush1.xpose.msra.mxu0 0.0
      %767 = vmatprep.subr.mxu0 0.0
      %768 = vmatpush1.xpose.msra.mxu0 0.0
      %769 = vmatprep.subr.mxu0 0.0
      %770 = vmatpush1.xpose.msra.mxu0 0.0
      %771 = vmatprep.subr.mxu0 0.0
      %772 = vmatpush1.xpose.msra.mxu0 0.0
      %773 = vmatprep.subr.mxu0 0.0
      %774 = vmatpush1.xpose.msra.mxu0 0.0
      %775 = vmatprep.subr.mxu0 0.0
      %776 = vmatpush1.xpose.msra.mxu0 0.0
      %777 = vmatprep.subr.mxu0 0.0
      %778 = vmatpush1.xpose.msra.mxu0 0.0
      %779 = vmatprep.subr.mxu0 0.0
      %780 = vmatpush1.xpose.msra.mxu0 0.0
      %781 = vmatprep.mubr.f32.mxu0 0.0
      %782 = vmatmul.mubr.f32.gmra.mrb[0].mxu0 %v708
      %v783 = vpop.f32.mrb[0].mxu0
      %v784 = vadd.f32 %v698, %v783
      %v785 = vpop.f32.mrb[0].mxu0
      %786 = vmatprep.mubr.f32.mxu0 0.0
      %787 = vmatmul.mubr.f32.gmra.mrb[0].mxu0 %v711
      %v788 = vpop.f32.mrb[0].mxu0
      %v789 = vadd.f32 %v699, %v788
      %v790 = vpop.f32.mrb[0].mxu0
      %791 = vdwg.mxu0
      %794 = vrot.lane.b32.xlu0 %v658, 96
      %v795 = vpop.permute.xlu0 %794
      %796 = vrot.lane.b32.xlu0 %v663, 96
      %v797 = vpop.permute.xlu0 %796
      %v799 = vsel %vm706, %v692, 0
      %v802 = vsel %vm706, %v693, 0
      %v804 = vsel %vm706, %v795, 0
      %v806 = vsel %vm706, %v797, 0
      %808 = vmatprep.subr.mxu0 0.0
      %809 = vmatpush1.xpose.msra.mxu0 %v804
      %810 = vmatprep.subr.mxu0 0.0
      %811 = vmatpush1.xpose.msra.mxu0 %v806
      %812 = vmatprep.subr.mxu0 0.0
      %813 = vmatpush1.xpose.msra.mxu0 0.0
      %814 = vmatprep.subr.mxu0 0.0
      %815 = vmatpush1.xpose.msra.mxu0 0.0
      %816 = vmatprep.subr.mxu0 0.0
      %817 = vmatpush1.xpose.msra.mxu0 0.0
      %818 = vmatprep.subr.mxu0 0.0
      %819 = vmatpush1.xpose.msra.mxu0 0.0
      %820 = vmatprep.subr.mxu0 0.0
      %821 = vmatpush1.xpose.msra.mxu0 0.0
      %822 = vmatprep.subr.mxu0 0.0
      %823 = vmatpush1.xpose.msra.mxu0 0.0
      %824 = vmatprep.subr.mxu0 0.0
      %825 = vmatpush1.xpose.msra.mxu0 0.0
      %826 = vmatprep.subr.mxu0 0.0
      %827 = vmatpush1.xpose.msra.mxu0 0.0
      %828 = vmatprep.subr.mxu0 0.0
      %829 = vmatpush1.xpose.msra.mxu0 0.0
      %830 = vmatprep.subr.mxu0 0.0
      %831 = vmatpush1.xpose.msra.mxu0 0.0
      %832 = vmatprep.subr.mxu0 0.0
      %833 = vmatpush1.xpose.msra.mxu0 0.0
      %834 = vmatprep.subr.mxu0 0.0
      %835 = vmatpush1.xpose.msra.mxu0 0.0
      %836 = vmatprep.subr.mxu0 0.0
      %837 = vmatpush1.xpose.msra.mxu0 0.0
      %838 = vmatprep.subr.mxu0 0.0
      %839 = vmatpush1.xpose.msra.mxu0 0.0
      %840 = vmatprep.subr.mxu0 0.0
      %841 = vmatpush1.xpose.msra.mxu0 0.0
      %842 = vmatprep.subr.mxu0 0.0
      %843 = vmatpush1.xpose.msra.mxu0 0.0
      %844 = vmatprep.subr.mxu0 0.0
      %845 = vmatpush1.xpose.msra.mxu0 0.0
      %846 = vmatprep.subr.mxu0 0.0
      %847 = vmatpush1.xpose.msra.mxu0 0.0
      %848 = vmatprep.subr.mxu0 0.0
      %849 = vmatpush1.xpose.msra.mxu0 0.0
      %850 = vmatprep.subr.mxu0 0.0
      %851 = vmatpush1.xpose.msra.mxu0 0.0
      %852 = vmatprep.subr.mxu0 0.0
      %853 = vmatpush1.xpose.msra.mxu0 0.0
      %854 = vmatprep.subr.mxu0 0.0
      %855 = vmatpush1.xpose.msra.mxu0 0.0
      %856 = vmatprep.subr.mxu0 0.0
      %857 = vmatpush1.xpose.msra.mxu0 0.0
      %858 = vmatprep.subr.mxu0 0.0
      %859 = vmatpush1.xpose.msra.mxu0 0.0
      %860 = vmatprep.subr.mxu0 0.0
      %861 = vmatpush1.xpose.msra.mxu0 0.0
      %862 = vmatprep.subr.mxu0 0.0
      %863 = vmatpush1.xpose.msra.mxu0 0.0
      %864 = vmatprep.subr.mxu0 0.0
      %865 = vmatpush1.xpose.msra.mxu0 0.0
      %866 = vmatprep.subr.mxu0 0.0
      %867 = vmatpush1.xpose.msra.mxu0 0.0
      %868 = vmatprep.subr.mxu0 0.0
      %869 = vmatpush1.xpose.msra.mxu0 0.0
      %870 = vmatprep.subr.mxu0 0.0
      %871 = vmatpush1.xpose.msra.mxu0 0.0
      %872 = vmatprep.mubr.f32.mxu0 0.0
      %873 = vmatmul.mubr.f32.gmra.mrb[0].mxu0 %v799
      %v874 = vpop.f32.mrb[0].mxu0
      %v875 = vadd.f32 %v698, %v874
      %v876 = vpop.f32.mrb[0].mxu0
      %877 = vmatprep.mubr.f32.mxu0 0.0
      %878 = vmatmul.mubr.f32.gmra.mrb[0].mxu0 %v802
      %v879 = vpop.f32.mrb[0].mxu0
      %v880 = vadd.f32 %v699, %v879
      %v881 = vpop.f32.mrb[0].mxu0
      %882 = vdwg.mxu0
      %885 = vrot.lane.b32.xlu0 %v668, 96
      %v886 = vpop.permute.xlu0 %885
      %887 = vrot.lane.b32.xlu0 %v673, 96
      %v888 = vpop.permute.xlu0 %887
      %v890 = vsel %vm706, %v694, 0
      %v893 = vsel %vm706, %v695, 0
      %v895 = vsel %vm706, %v886, 0
      %v897 = vsel %vm706, %v888, 0
      %899 = vmatprep.subr.mxu0 0.0
      %900 = vmatpush1.xpose.msra.mxu0 %v895
      %901 = vmatprep.subr.mxu0 0.0
      %902 = vmatpush1.xpose.msra.mxu0 %v897
      %903 = vmatprep.subr.mxu0 0.0
      %904 = vmatpush1.xpose.msra.mxu0 0.0
      %905 = vmatprep.subr.mxu0 0.0
      %906 = vmatpush1.xpose.msra.mxu0 0.0
      %907 = vmatprep.subr.mxu0 0.0
      %908 = vmatpush1.xpose.msra.mxu0 0.0
      %909 = vmatprep.subr.mxu0 0.0
      %910 = vmatpush1.xpose.msra.mxu0 0.0
      %911 = vmatprep.subr.mxu0 0.0
      %912 = vmatpush1.xpose.msra.mxu0 0.0
      %913 = vmatprep.subr.mxu0 0.0
      %914 = vmatpush1.xpose.msra.mxu0 0.0
      %915 = vmatprep.subr.mxu0 0.0
      %916 = vmatpush1.xpose.msra.mxu0 0.0
      %917 = vmatprep.subr.mxu0 0.0
      %918 = vmatpush1.xpose.msra.mxu0 0.0
      %919 = vmatprep.subr.mxu0 0.0
      %920 = vmatpush1.xpose.msra.mxu0 0.0
      %921 = vmatprep.subr.mxu0 0.0
      %922 = vmatpush1.xpose.msra.mxu0 0.0
      %923 = vmatprep.subr.mxu0 0.0
      %924 = vmatpush1.xpose.msra.mxu0 0.0
      %925 = vmatprep.subr.mxu0 0.0
      %926 = vmatpush1.xpose.msra.mxu0 0.0
      %927 = vmatprep.subr.mxu0 0.0
      %928 = vmatpush1.xpose.msra.mxu0 0.0
      %929 = vmatprep.subr.mxu0 0.0
      %930 = vmatpush1.xpose.msra.mxu0 0.0
      %931 = vmatprep.subr.mxu0 0.0
      %932 = vmatpush1.xpose.msra.mxu0 0.0
      %933 = vmatprep.subr.mxu0 0.0
      %934 = vmatpush1.xpose.msra.mxu0 0.0
      %935 = vmatprep.subr.mxu0 0.0
      %936 = vmatpush1.xpose.msra.mxu0 0.0
      %937 = vmatprep.subr.mxu0 0.0
      %938 = vmatpush1.xpose.msra.mxu0 0.0
      %939 = vmatprep.subr.mxu0 0.0
      %940 = vmatpush1.xpose.msra.mxu0 0.0
      %941 = vmatprep.subr.mxu0 0.0
      %942 = vmatpush1.xpose.msra.mxu0 0.0
      %943 = vmatprep.subr.mxu0 0.0
      %944 = vmatpush1.xpose.msra.mxu0 0.0
      %945 = vmatprep.subr.mxu0 0.0
      %946 = vmatpush1.xpose.msra.mxu0 0.0
      %947 = vmatprep.subr.mxu0 0.0
      %948 = vmatpush1.xpose.msra.mxu0 0.0
      %949 = vmatprep.subr.mxu0 0.0
      %950 = vmatpush1.xpose.msra.mxu0 0.0
      %951 = vmatprep.subr.mxu0 0.0
      %952 = vmatpush1.xpose.msra.mxu0 0.0
      %953 = vmatprep.subr.mxu0 0.0
      %954 = vmatpush1.xpose.msra.mxu0 0.0
      %955 = vmatprep.subr.mxu0 0.0
      %956 = vmatpush1.xpose.msra.mxu0 0.0
      %957 = vmatprep.subr.mxu0 0.0
      %958 = vmatpush1.xpose.msra.mxu0 0.0
      %959 = vmatprep.subr.mxu0 0.0
      %960 = vmatpush1.xpose.msra.mxu0 0.0
      %961 = vmatprep.subr.mxu0 0.0
      %962 = vmatpush1.xpose.msra.mxu0 0.0
      %963 = vmatprep.mubr.f32.mxu0 0.0
      %964 = vmatmul.mubr.f32.gmra.mrb[0].mxu0 %v890
      %v965 = vpop.f32.mrb[0].mxu0
      %v966 = vadd.f32 %v698, %v965
      %v967 = vpop.f32.mrb[0].mxu0
      %968 = vmatprep.mubr.f32.mxu0 0.0
      %969 = vmatmul.mubr.f32.gmra.mrb[0].mxu0 %v893
      %v970 = vpop.f32.mrb[0].mxu0
      %v971 = vadd.f32 %v699, %v970
      %v972 = vpop.f32.mrb[0].mxu0
      %973 = vdwg.mxu0
      %976 = vrot.lane.b32.xlu0 %v678, 96
      %v977 = vpop.permute.xlu0 %976
      %978 = vrot.lane.b32.xlu0 %v683, 96
      %v979 = vpop.permute.xlu0 %978
      %v981 = vsel %vm706, %v696, 0
      %v984 = vsel %vm706, %v697, 0
      %v986 = vsel %vm706, %v977, 0
      %v988 = vsel %vm706, %v979, 0
      %990 = vmatprep.subr.mxu0 0.0
      %991 = vmatpush1.xpose.msra.mxu0 %v986
      %992 = vmatprep.subr.mxu0 0.0
      %993 = vmatpush1.xpose.msra.mxu0 %v988
      %994 = vmatprep.subr.mxu0 0.0
      %995 = vmatpush1.xpose.msra.mxu0 0.0
      %996 = vmatprep.subr.mxu0 0.0
      %997 = vmatpush1.xpose.msra.mxu0 0.0
      %998 = vmatprep.subr.mxu0 0.0
      %999 = vmatpush1.xpose.msra.mxu0 0.0
      %1000 = vmatprep.subr.mxu0 0.0
      %1001 = vmatpush1.xpose.msra.mxu0 0.0
      %1002 = vmatprep.subr.mxu0 0.0
      %1003 = vmatpush1.xpose.msra.mxu0 0.0
      %1004 = vmatprep.subr.mxu0 0.0
      %1005 = vmatpush1.xpose.msra.mxu0 0.0
      %1006 = vmatprep.subr.mxu0 0.0
      %1007 = vmatpush1.xpose.msra.mxu0 0.0
      %1008 = vmatprep.subr.mxu0 0.0
      %1009 = vmatpush1.xpose.msra.mxu0 0.0
      %1010 = vmatprep.subr.mxu0 0.0
      %1011 = vmatpush1.xpose.msra.mxu0 0.0
      %1012 = vmatprep.subr.mxu0 0.0
      %1013 = vmatpush1.xpose.msra.mxu0 0.0
      %1014 = vmatprep.subr.mxu0 0.0
      %1015 = vmatpush1.xpose.msra.mxu0 0.0
      %1016 = vmatprep.subr.mxu0 0.0
      %1017 = vmatpush1.xpose.msra.mxu0 0.0
      %1018 = vmatprep.subr.mxu0 0.0
      %1019 = vmatpush1.xpose.msra.mxu0 0.0
      %1020 = vmatprep.subr.mxu0 0.0
      %1021 = vmatpush1.xpose.msra.mxu0 0.0
      %1022 = vmatprep.subr.mxu0 0.0
      %1023 = vmatpush1.xpose.msra.mxu0 0.0
      %1024 = vmatprep.subr.mxu0 0.0
      %1025 = vmatpush1.xpose.msra.mxu0 0.0
      %1026 = vmatprep.subr.mxu0 0.0
      %1027 = vmatpush1.xpose.msra.mxu0 0.0
      %1028 = vmatprep.subr.mxu0 0.0
      %1029 = vmatpush1.xpose.msra.mxu0 0.0
      %1030 = vmatprep.subr.mxu0 0.0
      %1031 = vmatpush1.xpose.msra.mxu0 0.0
      %1032 = vmatprep.subr.mxu0 0.0
      %1033 = vmatpush1.xpose.msra.mxu0 0.0
      %1034 = vmatprep.subr.mxu0 0.0
      %1035 = vmatpush1.xpose.msra.mxu0 0.0
      %1036 = vmatprep.subr.mxu0 0.0
      %1037 = vmatpush1.xpose.msra.mxu0 0.0
      %1038 = vmatprep.subr.mxu0 0.0
      %1039 = vmatpush1.xpose.msra.mxu0 0.0
      %1040 = vmatprep.subr.mxu0 0.0
      %1041 = vmatpush1.xpose.msra.mxu0 0.0
      %1042 = vmatprep.subr.mxu0 0.0
      %1043 = vmatpush1.xpose.msra.mxu0 0.0
      %1044 = vmatprep.subr.mxu0 0.0
      %1045 = vmatpush1.xpose.msra.mxu0 0.0
      %1046 = vmatprep.subr.mxu0 0.0
      %1047 = vmatpush1.xpose.msra.mxu0 0.0
      %1048 = vmatprep.subr.mxu0 0.0
      %1049 = vmatpush1.xpose.msra.mxu0 0.0
      %1050 = vmatprep.subr.mxu0 0.0
      %1051 = vmatpush1.xpose.msra.mxu0 0.0
      %1052 = vmatprep.subr.mxu0 0.0
      %1053 = vmatpush1.xpose.msra.mxu0 0.0
      %1054 = vmatprep.mubr.f32.mxu0 0.0
      %1055 = vmatmul.mubr.f32.gmra.mrb[0].mxu0 %v981
      %v1056 = vpop.f32.mrb[0].mxu0
      %v1057 = vadd.f32 %v698, %v1056
      %v1058 = vpop.f32.mrb[0].mxu0
      %1059 = vmatprep.mubr.f32.mxu0 0.0
      %1060 = vmatmul.mubr.f32.gmra.mrb[0].mxu0 %v984
      %v1061 = vpop.f32.mrb[0].mxu0
      %v1062 = vadd.f32 %v699, %v1061
      %v1063 = vpop.f32.mrb[0].mxu0
      %1064 = vdwg.mxu0
      %v1065 = vld [vmem:[%s389] sm:$0xff]
      %v1066 = vld [vmem:[%s389 + $0x8] sm:$0xff]
      %v1067 = vld [vmem:[%s389 + $0x10] sm:$0xff]
      %v1068 = vld [vmem:[%s389 + $0x18] sm:$0xff]
      %v1069 = vld [vmem:[%s389 + $0x20] sm:$0xff]
      %v1070 = vld [vmem:[%s389 + $0x28] sm:$0xff]
      %v1071 = vld [vmem:[%s389 + $0x30] sm:$0xff]
      %v1072 = vld [vmem:[%s389 + $0x38] sm:$0xff]
      %v1073 = vadd.f32 %v784, %v1065
      %v1074 = vadd.f32 %v789, %v1066
      %v1075 = vadd.f32 %v875, %v1067
      %v1076 = vadd.f32 %v880, %v1068
      %v1077 = vadd.f32 %v966, %v1069
      %v1078 = vadd.f32 %v971, %v1070
      %v1079 = vadd.f32 %v1057, %v1071
      %v1080 = vadd.f32 %v1062, %v1072
      %vm1081 = vcmask 130048
      %v1082 = vsel %vm1081, %v1073, -inf
      %1083 = vmax.xlane.f32.xlu0 %v1082
      %v1084 = vpop.xlane.xlu0 %1083
      %v1085 = vsel %vm1081, %v1074, -inf
      %1086 = vmax.xlane.f32.xlu0 %v1085
      %v1087 = vpop.xlane.xlu0 %1086
      %v1088 = vsel %vm1081, %v1075, -inf
      %1089 = vmax.xlane.f32.xlu0 %v1088
      %v1090 = vpop.xlane.xlu0 %1089
      %v1091 = vsel %vm1081, %v1076, -inf
      %1092 = vmax.xlane.f32.xlu0 %v1091
      %v1093 = vpop.xlane.xlu0 %1092
      %v1094 = vsel %vm1081, %v1077, -inf
      %1095 = vmax.xlane.f32.xlu0 %v1094
      %v1096 = vpop.xlane.xlu0 %1095
      %v1097 = vsel %vm1081, %v1078, -inf
      %1098 = vmax.xlane.f32.xlu0 %v1097
      %v1099 = vpop.xlane.xlu0 %1098
      %v1100 = vsel %vm1081, %v1079, -inf
      %1101 = vmax.xlane.f32.xlu0 %v1100
      %v1102 = vpop.xlane.xlu0 %1101
      %v1103 = vsel %vm1081, %v1080, -inf
      %1104 = vmax.xlane.f32.xlu0 %v1103
      %v1105 = vpop.xlane.xlu0 %1104
      %v1106 = vsub.f32 %v1073, %v1084
      %v1107 = vsub.f32 %v1074, %v1087
      %v1108 = vsub.f32 %v1075, %v1090
      %v1109 = vsub.f32 %v1076, %v1093
      %v1110 = vsub.f32 %v1077, %v1096
      %v1111 = vsub.f32 %v1078, %v1099
      %v1112 = vsub.f32 %v1079, %v1102
      %v1113 = vsub.f32 %v1080, %v1105
      %v1114 = vmul.f32 %v1106, 1.442695
      %v1115 = vpow.pop %v1114
      %v1116 = vmul.f32 %v1107, 1.442695
      %v1117 = vpow.pop %v1116
      %v1118 = vmul.f32 %v1108, 1.442695
      %v1119 = vpow.pop %v1118
      %v1120 = vmul.f32 %v1109, 1.442695
      %v1121 = vpow.pop %v1120
      %v1122 = vmul.f32 %v1110, 1.442695
      %v1123 = vpow.pop %v1122
      %v1124 = vmul.f32 %v1111, 1.442695
      %v1125 = vpow.pop %v1124
      %v1126 = vmul.f32 %v1112, 1.442695
      %v1127 = vpow.pop %v1126
      %v1128 = vmul.f32 %v1113, 1.442695
      %v1129 = vpow.pop %v1128
      %v1130 = vsel %vm1081, %v1115, 0.0
      %1131 = vadd.xlane.f32.xlu0 %v1130
      %v1132 = vpop.xlane.xlu0 %1131
      %v1133 = vsel %vm1081, %v1117, 0.0
      %1134 = vadd.xlane.f32.xlu0 %v1133
      %v1135 = vpop.xlane.xlu0 %1134
      %v1136 = vsel %vm1081, %v1119, 0.0
      %1137 = vadd.xlane.f32.xlu0 %v1136
      %v1138 = vpop.xlane.xlu0 %1137
      %v1139 = vsel %vm1081, %v1121, 0.0
      %1140 = vadd.xlane.f32.xlu0 %v1139
      %v1141 = vpop.xlane.xlu0 %1140
      %v1142 = vsel %vm1081, %v1123, 0.0
      %1143 = vadd.xlane.f32.xlu0 %v1142
      %v1144 = vpop.xlane.xlu0 %1143
      %v1145 = vsel %vm1081, %v1125, 0.0
      %1146 = vadd.xlane.f32.xlu0 %v1145
      %v1147 = vpop.xlane.xlu0 %1146
      %v1148 = vsel %vm1081, %v1127, 0.0
      %1149 = vadd.xlane.f32.xlu0 %v1148
      %v1150 = vpop.xlane.xlu0 %1149
      %v1151 = vsel %vm1081, %v1129, 0.0
      %1152 = vadd.xlane.f32.xlu0 %v1151
      %v1153 = vpop.xlane.xlu0 %1152
      %v1154 = vrcp.pop %v1132
      %v1155 = vmul.f32 %v1115, %v1154
      %v1156 = vrcp.pop %v1135
      %v1157 = vmul.f32 %v1117, %v1156
      %v1158 = vrcp.pop %v1138
      %v1159 = vmul.f32 %v1119, %v1158
      %v1160 = vrcp.pop %v1141
      %v1161 = vmul.f32 %v1121, %v1160
      %v1162 = vrcp.pop %v1144
      %v1163 = vmul.f32 %v1123, %v1162
      %v1164 = vrcp.pop %v1147
      %v1165 = vmul.f32 %v1125, %v1164
      %v1166 = vrcp.pop %v1150
      %v1167 = vmul.f32 %v1127, %v1166
      %v1168 = vrcp.pop %v1153
      %v1169 = vmul.f32 %v1129, %v1168
      %1170 = vrot.lane.b32.xlu0 %v648, 64
      %v1171 = vpop.permute.xlu0 %1170
      %1172 = vrot.lane.b32.xlu0 %v653, 64
      %v1173 = vpop.permute.xlu0 %1172
      %v1177 = vsel %vm1081, %v1155, 0
      %v1180 = vsel %vm1081, %v1157, 0
      %1182 = vmatprep.subr.mxu0 0.0
      %1183 = vmatpush1.msra.mxu0 %v1171
      %1184 = vmatprep.subr.mxu0 0.0
      %1185 = vmatpush1.msra.mxu0 %v1173
      %1186 = vmatprep.subr.mxu0 0.0
      %1187 = vmatpush1.msra.mxu0 0.0
      %1188 = vmatprep.subr.mxu0 0.0
      %1189 = vmatpush1.msra.mxu0 0.0
      %1190 = vmatprep.subr.mxu0 0.0
      %1191 = vmatpush1.msra.mxu0 0.0
      %1192 = vmatprep.subr.mxu0 0.0
      %1193 = vmatpush1.msra.mxu0 0.0
      %1194 = vmatprep.subr.mxu0 0.0
      %1195 = vmatpush1.msra.mxu0 0.0
      %1196 = vmatprep.subr.mxu0 0.0
      %1197 = vmatpush1.msra.mxu0 0.0
      %1198 = vmatprep.subr.mxu0 0.0
      %1199 = vmatpush1.msra.mxu0 0.0
      %1200 = vmatprep.subr.mxu0 0.0
      %1201 = vmatpush1.msra.mxu0 0.0
      %1202 = vmatprep.subr.mxu0 0.0
      %1203 = vmatpush1.msra.mxu0 0.0
      %1204 = vmatprep.subr.mxu0 0.0
      %1205 = vmatpush1.msra.mxu0 0.0
      %1206 = vmatprep.subr.mxu0 0.0
      %1207 = vmatpush1.msra.mxu0 0.0
      %1208 = vmatprep.subr.mxu0 0.0
      %1209 = vmatpush1.msra.mxu0 0.0
      %1210 = vmatprep.subr.mxu0 0.0
      %1211 = vmatpush1.msra.mxu0 0.0
      %1212 = vmatprep.subr.mxu0 0.0
      %1213 = vmatpush1.msra.mxu0 0.0
      %1214 = vmatprep.subr.mxu0 0.0
      %1215 = vmatpush1.msra.mxu0 0.0
      %1216 = vmatprep.subr.mxu0 0.0
      %1217 = vmatpush1.msra.mxu0 0.0
      %1218 = vmatprep.subr.mxu0 0.0
      %1219 = vmatpush1.msra.mxu0 0.0
      %1220 = vmatprep.subr.mxu0 0.0
      %1221 = vmatpush1.msra.mxu0 0.0
      %1222 = vmatprep.subr.mxu0 0.0
      %1223 = vmatpush1.msra.mxu0 0.0
      %1224 = vmatprep.subr.mxu0 0.0
      %1225 = vmatpush1.msra.mxu0 0.0
      %1226 = vmatprep.subr.mxu0 0.0
      %1227 = vmatpush1.msra.mxu0 0.0
      %1228 = vmatprep.subr.mxu0 0.0
      %1229 = vmatpush1.msra.mxu0 0.0
      %1230 = vmatprep.subr.mxu0 0.0
      %1231 = vmatpush1.msra.mxu0 0.0
      %1232 = vmatprep.subr.mxu0 0.0
      %1233 = vmatpush1.msra.mxu0 0.0
      %1234 = vmatprep.subr.mxu0 0.0
      %1235 = vmatpush1.msra.mxu0 0.0
      %1236 = vmatprep.subr.mxu0 0.0
      %1237 = vmatpush1.msra.mxu0 0.0
      %1238 = vmatprep.subr.mxu0 0.0
      %1239 = vmatpush1.msra.mxu0 0.0
      %1240 = vmatprep.subr.mxu0 0.0
      %1241 = vmatpush1.msra.mxu0 0.0
      %1242 = vmatprep.subr.mxu0 0.0
      %1243 = vmatpush1.msra.mxu0 0.0
      %1244 = vmatprep.subr.mxu0 0.0
      %1245 = vmatpush1.msra.mxu0 0.0
      %1246 = vmatprep.mubr.f32.mxu0 0.0
      %1247 = vmatmul.mubr.f32.gmra.mrb[0].mxu0 %v1177
      %v1248 = vpop.f32.mrb[0].mxu0
      %v1249 = vadd.f32 0.0, %v1248
      %v1250 = vpop.f32.mrb[0].mxu0
      %1251 = vmatprep.mubr.f32.mxu0 0.0
      %1252 = vmatmul.mubr.f32.gmra.mrb[0].mxu0 %v1180
      %v1253 = vpop.f32.mrb[0].mxu0
      %v1254 = vadd.f32 0.0, %v1253
      %v1255 = vpop.f32.mrb[0].mxu0
      %1256 = vdwg.mxu0
      %1257 = vrot.lane.b32.xlu0 %v658, 64
      %v1258 = vpop.permute.xlu0 %1257
      %1259 = vrot.lane.b32.xlu0 %v663, 64
      %v1260 = vpop.permute.xlu0 %1259
      %v1264 = vsel %vm1081, %v1159, 0
      %v1267 = vsel %vm1081, %v1161, 0
      %1269 = vmatprep.subr.mxu0 0.0
      %1270 = vmatpush1.msra.mxu0 %v1258
      %1271 = vmatprep.subr.mxu0 0.0
      %1272 = vmatpush1.msra.mxu0 %v1260
      %1273 = vmatprep.subr.mxu0 0.0
      %1274 = vmatpush1.msra.mxu0 0.0
      %1275 = vmatprep.subr.mxu0 0.0
      %1276 = vmatpush1.msra.mxu0 0.0
      %1277 = vmatprep.subr.mxu0 0.0
      %1278 = vmatpush1.msra.mxu0 0.0
      %1279 = vmatprep.subr.mxu0 0.0
      %1280 = vmatpush1.msra.mxu0 0.0
      %1281 = vmatprep.subr.mxu0 0.0
      %1282 = vmatpush1.msra.mxu0 0.0
      %1283 = vmatprep.subr.mxu0 0.0
      %1284 = vmatpush1.msra.mxu0 0.0
      %1285 = vmatprep.subr.mxu0 0.0
      %1286 = vmatpush1.msra.mxu0 0.0
      %1287 = vmatprep.subr.mxu0 0.0
      %1288 = vmatpush1.msra.mxu0 0.0
      %1289 = vmatprep.subr.mxu0 0.0
      %1290 = vmatpush1.msra.mxu0 0.0
      %1291 = vmatprep.subr.mxu0 0.0
      %1292 = vmatpush1.msra.mxu0 0.0
      %1293 = vmatprep.subr.mxu0 0.0
      %1294 = vmatpush1.msra.mxu0 0.0
      %1295 = vmatprep.subr.mxu0 0.0
      %1296 = vmatpush1.msra.mxu0 0.0
      %1297 = vmatprep.subr.mxu0 0.0
      %1298 = vmatpush1.msra.mxu0 0.0
      %1299 = vmatprep.subr.mxu0 0.0
      %1300 = vmatpush1.msra.mxu0 0.0
      %1301 = vmatprep.subr.mxu0 0.0
      %1302 = vmatpush1.msra.mxu0 0.0
      %1303 = vmatprep.subr.mxu0 0.0
      %1304 = vmatpush1.msra.mxu0 0.0
      %1305 = vmatprep.subr.mxu0 0.0
      %1306 = vmatpush1.msra.mxu0 0.0
      %1307 = vmatprep.subr.mxu0 0.0
      %1308 = vmatpush1.msra.mxu0 0.0
      %1309 = vmatprep.subr.mxu0 0.0
      %1310 = vmatpush1.msra.mxu0 0.0
      %1311 = vmatprep.subr.mxu0 0.0
      %1312 = vmatpush1.msra.mxu0 0.0
      %1313 = vmatprep.subr.mxu0 0.0
      %1314 = vmatpush1.msra.mxu0 0.0
      %1315 = vmatprep.subr.mxu0 0.0
      %1316 = vmatpush1.msra.mxu0 0.0
      %1317 = vmatprep.subr.mxu0 0.0
      %1318 = vmatpush1.msra.mxu0 0.0
      %1319 = vmatprep.subr.mxu0 0.0
      %1320 = vmatpush1.msra.mxu0 0.0
      %1321 = vmatprep.subr.mxu0 0.0
      %1322 = vmatpush1.msra.mxu0 0.0
      %1323 = vmatprep.subr.mxu0 0.0
      %1324 = vmatpush1.msra.mxu0 0.0
      %1325 = vmatprep.subr.mxu0 0.0
      %1326 = vmatpush1.msra.mxu0 0.0
      %1327 = vmatprep.subr.mxu0 0.0
      %1328 = vmatpush1.msra.mxu0 0.0
      %1329 = vmatprep.subr.mxu0 0.0
      %1330 = vmatpush1.msra.mxu0 0.0
      %1331 = vmatprep.subr.mxu0 0.0
      %1332 = vmatpush1.msra.mxu0 0.0
      %1333 = vmatprep.mubr.f32.mxu0 0.0
      %1334 = vmatmul.mubr.f32.gmra.mrb[0].mxu0 %v1264
      %v1335 = vpop.f32.mrb[0].mxu0
      %v1336 = vadd.f32 0.0, %v1335
      %v1337 = vpop.f32.mrb[0].mxu0
      %1338 = vmatprep.mubr.f32.mxu0 0.0
      %1339 = vmatmul.mubr.f32.gmra.mrb[0].mxu0 %v1267
      %v1340 = vpop.f32.mrb[0].mxu0
      %v1341 = vadd.f32 0.0, %v1340
      %v1342 = vpop.f32.mrb[0].mxu0
      %1343 = vdwg.mxu0
      %1344 = vrot.lane.b32.xlu0 %v668, 64
      %v1345 = vpop.permute.xlu0 %1344
      %1346 = vrot.lane.b32.xlu0 %v673, 64
      %v1347 = vpop.permute.xlu0 %1346
      %v1351 = vsel %vm1081, %v1163, 0
      %v1354 = vsel %vm1081, %v1165, 0
      %1356 = vmatprep.subr.mxu0 0.0
      %1357 = vmatpush1.msra.mxu0 %v1345
      %1358 = vmatprep.subr.mxu0 0.0
      %1359 = vmatpush1.msra.mxu0 %v1347
      %1360 = vmatprep.subr.mxu0 0.0
      %1361 = vmatpush1.msra.mxu0 0.0
      %1362 = vmatprep.subr.mxu0 0.0
      %1363 = vmatpush1.msra.mxu0 0.0
      %1364 = vmatprep.subr.mxu0 0.0
      %1365 = vmatpush1.msra.mxu0 0.0
      %1366 = vmatprep.subr.mxu0 0.0
      %1367 = vmatpush1.msra.mxu0 0.0
      %1368 = vmatprep.subr.mxu0 0.0
      %1369 = vmatpush1.msra.mxu0 0.0
      %1370 = vmatprep.subr.mxu0 0.0
      %1371 = vmatpush1.msra.mxu0 0.0
      %1372 = vmatprep.subr.mxu0 0.0
      %1373 = vmatpush1.msra.mxu0 0.0
      %1374 = vmatprep.subr.mxu0 0.0
      %1375 = vmatpush1.msra.mxu0 0.0
      %1376 = vmatprep.subr.mxu0 0.0
      %1377 = vmatpush1.msra.mxu0 0.0
      %1378 = vmatprep.subr.mxu0 0.0
      %1379 = vmatpush1.msra.mxu0 0.0
      %1380 = vmatprep.subr.mxu0 0.0
      %1381 = vmatpush1.msra.mxu0 0.0
      %1382 = vmatprep.subr.mxu0 0.0
      %1383 = vmatpush1.msra.mxu0 0.0
      %1384 = vmatprep.subr.mxu0 0.0
      %1385 = vmatpush1.msra.mxu0 0.0
      %1386 = vmatprep.subr.mxu0 0.0
      %1387 = vmatpush1.msra.mxu0 0.0
      %1388 = vmatprep.subr.mxu0 0.0
      %1389 = vmatpush1.msra.mxu0 0.0
      %1390 = vmatprep.subr.mxu0 0.0
      %1391 = vmatpush1.msra.mxu0 0.0
      %1392 = vmatprep.subr.mxu0 0.0
      %1393 = vmatpush1.msra.mxu0 0.0
      %1394 = vmatprep.subr.mxu0 0.0
      %1395 = vmatpush1.msra.mxu0 0.0
      %1396 = vmatprep.subr.mxu0 0.0
      %1397 = vmatpush1.msra.mxu0 0.0
      %1398 = vmatprep.subr.mxu0 0.0
      %1399 = vmatpush1.msra.mxu0 0.0
      %1400 = vmatprep.subr.mxu0 0.0
      %1401 = vmatpush1.msra.mxu0 0.0
      %1402 = vmatprep.subr.mxu0 0.0
      %1403 = vmatpush1.msra.mxu0 0.0
      %1404 = vmatprep.subr.mxu0 0.0
      %1405 = vmatpush1.msra.mxu0 0.0
      %1406 = vmatprep.subr.mxu0 0.0
      %1407 = vmatpush1.msra.mxu0 0.0
      %1408 = vmatprep.subr.mxu0 0.0
      %1409 = vmatpush1.msra.mxu0 0.0
      %1410 = vmatprep.subr.mxu0 0.0
      %1411 = vmatpush1.msra.mxu0 0.0
      %1412 = vmatprep.subr.mxu0 0.0
      %1413 = vmatpush1.msra.mxu0 0.0
      %1414 = vmatprep.subr.mxu0 0.0
      %1415 = vmatpush1.msra.mxu0 0.0
      %1416 = vmatprep.subr.mxu0 0.0
      %1417 = vmatpush1.msra.mxu0 0.0
      %1418 = vmatprep.subr.mxu0 0.0
      %1419 = vmatpush1.msra.mxu0 0.0
      %1420 = vmatprep.mubr.f32.mxu0 0.0
      %1421 = vmatmul.mubr.f32.gmra.mrb[0].mxu0 %v1351
      %v1422 = vpop.f32.mrb[0].mxu0
      %v1423 = vadd.f32 0.0, %v1422
      %v1424 = vpop.f32.mrb[0].mxu0
      %1425 = vmatprep.mubr.f32.mxu0 0.0
      %1426 = vmatmul.mubr.f32.gmra.mrb[0].mxu0 %v1354
      %v1427 = vpop.f32.mrb[0].mxu0
      %v1428 = vadd.f32 0.0, %v1427
      %v1429 = vpop.f32.mrb[0].mxu0
      %1430 = vdwg.mxu0
      %1431 = vrot.lane.b32.xlu0 %v678, 64
      %v1432 = vpop.permute.xlu0 %1431
      %1433 = vrot.lane.b32.xlu0 %v683, 64
      %v1434 = vpop.permute.xlu0 %1433
      %v1438 = vsel %vm1081, %v1167, 0
      %v1441 = vsel %vm1081, %v1169, 0
      %1443 = vmatprep.subr.mxu0 0.0
      %1444 = vmatpush1.msra.mxu0 %v1432
      %1445 = vmatprep.subr.mxu0 0.0
      %1446 = vmatpush1.msra.mxu0 %v1434
      %1447 = vmatprep.subr.mxu0 0.0
      %1448 = vmatpush1.msra.mxu0 0.0
      %1449 = vmatprep.subr.mxu0 0.0
      %1450 = vmatpush1.msra.mxu0 0.0
      %1451 = vmatprep.subr.mxu0 0.0
      %1452 = vmatpush1.msra.mxu0 0.0
      %1453 = vmatprep.subr.mxu0 0.0
      %1454 = vmatpush1.msra.mxu0 0.0
      %1455 = vmatprep.subr.mxu0 0.0
      %1456 = vmatpush1.msra.mxu0 0.0
      %1457 = vmatprep.subr.mxu0 0.0
      %1458 = vmatpush1.msra.mxu0 0.0
      %1459 = vmatprep.subr.mxu0 0.0
      %1460 = vmatpush1.msra.mxu0 0.0
      %1461 = vmatprep.subr.mxu0 0.0
      %1462 = vmatpush1.msra.mxu0 0.0
      %1463 = vmatprep.subr.mxu0 0.0
      %1464 = vmatpush1.msra.mxu0 0.0
      %1465 = vmatprep.subr.mxu0 0.0
      %1466 = vmatpush1.msra.mxu0 0.0
      %1467 = vmatprep.subr.mxu0 0.0
      %1468 = vmatpush1.msra.mxu0 0.0
      %1469 = vmatprep.subr.mxu0 0.0
      %1470 = vmatpush1.msra.mxu0 0.0
      %1471 = vmatprep.subr.mxu0 0.0
      %1472 = vmatpush1.msra.mxu0 0.0
      %1473 = vmatprep.subr.mxu0 0.0
      %1474 = vmatpush1.msra.mxu0 0.0
      %1475 = vmatprep.subr.mxu0 0.0
      %1476 = vmatpush1.msra.mxu0 0.0
      %1477 = vmatprep.subr.mxu0 0.0
      %1478 = vmatpush1.msra.mxu0 0.0
      %1479 = vmatprep.subr.mxu0 0.0
      %1480 = vmatpush1.msra.mxu0 0.0
      %1481 = vmatprep.subr.mxu0 0.0
      %1482 = vmatpush1.msra.mxu0 0.0
      %1483 = vmatprep.subr.mxu0 0.0
      %1484 = vmatpush1.msra.mxu0 0.0
      %1485 = vmatprep.subr.mxu0 0.0
      %1486 = vmatpush1.msra.mxu0 0.0
      %1487 = vmatprep.subr.mxu0 0.0
      %1488 = vmatpush1.msra.mxu0 0.0
      %1489 = vmatprep.subr.mxu0 0.0
      %1490 = vmatpush1.msra.mxu0 0.0
      %1491 = vmatprep.subr.mxu0 0.0
      %1492 = vmatpush1.msra.mxu0 0.0
      %1493 = vmatprep.subr.mxu0 0.0
      %1494 = vmatpush1.msra.mxu0 0.0
      %1495 = vmatprep.subr.mxu0 0.0
      %1496 = vmatpush1.msra.mxu0 0.0
      %1497 = vmatprep.subr.mxu0 0.0
      %1498 = vmatpush1.msra.mxu0 0.0
      %1499 = vmatprep.subr.mxu0 0.0
      %1500 = vmatpush1.msra.mxu0 0.0
      %1501 = vmatprep.subr.mxu0 0.0
      %1502 = vmatpush1.msra.mxu0 0.0
      %1503 = vmatprep.subr.mxu0 0.0
      %1504 = vmatpush1.msra.mxu0 0.0
      %1505 = vmatprep.subr.mxu0 0.0
      %1506 = vmatpush1.msra.mxu0 0.0
      %1507 = vmatprep.mubr.f32.mxu0 0.0
      %1508 = vmatmul.mubr.f32.gmra.mrb[0].mxu0 %v1438
      %v1509 = vpop.f32.mrb[0].mxu0
      %v1510 = vadd.f32 0.0, %v1509
      %v1511 = vpop.f32.mrb[0].mxu0
      %1512 = vmatprep.mubr.f32.mxu0 0.0
      %1513 = vmatmul.mubr.f32.gmra.mrb[0].mxu0 %v1441
      %v1514 = vpop.f32.mrb[0].mxu0
      %v1515 = vadd.f32 0.0, %v1514
      %v1516 = vpop.f32.mrb[0].mxu0
      %1517 = vdwg.mxu0
      %s1518 = scalar_lea.vmem %s2, 16
      %v1519 = vld [vmem:[%s1518] sm:$0xff]
      %v1520 = vld [vmem:[%s1518 + $0x8] sm:$0xff]
      %1521 = vrot.lane.b32.xlu0 %v690, 120
      %v1522 = vpop.permute.xlu0 %1521
      %1523 = vrot.lane.b32.xlu0 %v691, 120
      %v1524 = vpop.permute.xlu0 %1523
      %1525 = vrot.lane.b32.xlu0 %v648, 88
      %v1526 = vpop.permute.xlu0 %1525
      %1527 = vrot.lane.b32.xlu0 %v653, 88
      %v1528 = vpop.permute.xlu0 %1527
      %v1529 = vsel %vm706, %v1522, 0
      %v1531 = vsel %vm706, %v1524, 0
      %v1533 = vsel %vm706, %v1526, 0
      %v1535 = vsel %vm706, %v1528, 0
      %1537 = vmatprep.subr.mxu0 0.0
      %1538 = vmatpush1.xpose.msra.mxu0 %v1533
      %1539 = vmatprep.subr.mxu0 0.0
      %1540 = vmatpush1.xpose.msra.mxu0 %v1535
      %1541 = vmatprep.subr.mxu0 0.0
      %1542 = vmatpush1.xpose.msra.mxu0 0.0
      %1543 = vmatprep.subr.mxu0 0.0
      %1544 = vmatpush1.xpose.msra.mxu0 0.0
      %1545 = vmatprep.subr.mxu0 0.0
      %1546 = vmatpush1.xpose.msra.mxu0 0.0
      %1547 = vmatprep.subr.mxu0 0.0
      %1548 = vmatpush1.xpose.msra.mxu0 0.0
      %1549 = vmatprep.subr.mxu0 0.0
      %1550 = vmatpush1.xpose.msra.mxu0 0.0
      %1551 = vmatprep.subr.mxu0 0.0
      %1552 = vmatpush1.xpose.msra.mxu0 0.0
      %1553 = vmatprep.subr.mxu0 0.0
      %1554 = vmatpush1.xpose.msra.mxu0 0.0
      %1555 = vmatprep.subr.mxu0 0.0
      %1556 = vmatpush1.xpose.msra.mxu0 0.0
      %1557 = vmatprep.subr.mxu0 0.0
      %1558 = vmatpush1.xpose.msra.mxu0 0.0
      %1559 = vmatprep.subr.mxu0 0.0
      %1560 = vmatpush1.xpose.msra.mxu0 0.0
      %1561 = vmatprep.subr.mxu0 0.0
      %1562 = vmatpush1.xpose.msra.mxu0 0.0
      %1563 = vmatprep.subr.mxu0 0.0
      %1564 = vmatpush1.xpose.msra.mxu0 0.0
      %1565 = vmatprep.subr.mxu0 0.0
      %1566 = vmatpush1.xpose.msra.mxu0 0.0
      %1567 = vmatprep.subr.mxu0 0.0
      %1568 = vmatpush1.xpose.msra.mxu0 0.0
      %1569 = vmatprep.subr.mxu0 0.0
      %1570 = vmatpush1.xpose.msra.mxu0 0.0
      %1571 = vmatprep.subr.mxu0 0.0
      %1572 = vmatpush1.xpose.msra.mxu0 0.0
      %1573 = vmatprep.subr.mxu0 0.0
      %1574 = vmatpush1.xpose.msra.mxu0 0.0
      %1575 = vmatprep.subr.mxu0 0.0
      %1576 = vmatpush1.xpose.msra.mxu0 0.0
      %1577 = vmatprep.subr.mxu0 0.0
      %1578 = vmatpush1.xpose.msra.mxu0 0.0
      %1579 = vmatprep.subr.mxu0 0.0
      %1580 = vmatpush1.xpose.msra.mxu0 0.0
      %1581 = vmatprep.subr.mxu0 0.0
      %1582 = vmatpush1.xpose.msra.mxu0 0.0
      %1583 = vmatprep.subr.mxu0 0.0
      %1584 = vmatpush1.xpose.msra.mxu0 0.0
      %1585 = vmatprep.subr.mxu0 0.0
      %1586 = vmatpush1.xpose.msra.mxu0 0.0
      %1587 = vmatprep.subr.mxu0 0.0
      %1588 = vmatpush1.xpose.msra.mxu0 0.0
      %1589 = vmatprep.subr.mxu0 0.0
      %1590 = vmatpush1.xpose.msra.mxu0 0.0
      %1591 = vmatprep.subr.mxu0 0.0
      %1592 = vmatpush1.xpose.msra.mxu0 0.0
      %1593 = vmatprep.subr.mxu0 0.0
      %1594 = vmatpush1.xpose.msra.mxu0 0.0
      %1595 = vmatprep.subr.mxu0 0.0
      %1596 = vmatpush1.xpose.msra.mxu0 0.0
      %1597 = vmatprep.subr.mxu0 0.0
      %1598 = vmatpush1.xpose.msra.mxu0 0.0
      %1599 = vmatprep.subr.mxu0 0.0
      %1600 = vmatpush1.xpose.msra.mxu0 0.0
      %1601 = vmatprep.mubr.f32.mxu0 0.0
      %1602 = vmatmul.mubr.f32.gmra.mrb[0].mxu0 %v1529
      %v1603 = vpop.f32.mrb[0].mxu0
      %v1604 = vadd.f32 %v1519, %v1603
      %v1605 = vpop.f32.mrb[0].mxu0
      %1606 = vmatprep.mubr.f32.mxu0 0.0
      %1607 = vmatmul.mubr.f32.gmra.mrb[0].mxu0 %v1531
      %v1608 = vpop.f32.mrb[0].mxu0
      %v1609 = vadd.f32 %v1520, %v1608
      %v1610 = vpop.f32.mrb[0].mxu0
      %1611 = vdwg.mxu0
      %1612 = vrot.lane.b32.xlu0 %v692, 120
      %v1613 = vpop.permute.xlu0 %1612
      %1614 = vrot.lane.b32.xlu0 %v693, 120
      %v1615 = vpop.permute.xlu0 %1614
      %1616 = vrot.lane.b32.xlu0 %v658, 88
      %v1617 = vpop.permute.xlu0 %1616
      %1618 = vrot.lane.b32.xlu0 %v663, 88
      %v1619 = vpop.permute.xlu0 %1618
      %v1620 = vsel %vm706, %v1613, 0
      %v1622 = vsel %vm706, %v1615, 0
      %v1624 = vsel %vm706, %v1617, 0
      %v1626 = vsel %vm706, %v1619, 0
      %1628 = vmatprep.subr.mxu0 0.0
      %1629 = vmatpush1.xpose.msra.mxu0 %v1624
      %1630 = vmatprep.subr.mxu0 0.0
      %1631 = vmatpush1.xpose.msra.mxu0 %v1626
      %1632 = vmatprep.subr.mxu0 0.0
      %1633 = vmatpush1.xpose.msra.mxu0 0.0
      %1634 = vmatprep.subr.mxu0 0.0
      %1635 = vmatpush1.xpose.msra.mxu0 0.0
      %1636 = vmatprep.subr.mxu0 0.0
      %1637 = vmatpush1.xpose.msra.mxu0 0.0
      %1638 = vmatprep.subr.mxu0 0.0
      %1639 = vmatpush1.xpose.msra.mxu0 0.0
      %1640 = vmatprep.subr.mxu0 0.0
      %1641 = vmatpush1.xpose.msra.mxu0 0.0
      %1642 = vmatprep.subr.mxu0 0.0
      %1643 = vmatpush1.xpose.msra.mxu0 0.0
      %1644 = vmatprep.subr.mxu0 0.0
      %1645 = vmatpush1.xpose.msra.mxu0 0.0
      %1646 = vmatprep.subr.mxu0 0.0
      %1647 = vmatpush1.xpose.msra.mxu0 0.0
      %1648 = vmatprep.subr.mxu0 0.0
      %1649 = vmatpush1.xpose.msra.mxu0 0.0
      %1650 = vmatprep.subr.mxu0 0.0
      %1651 = vmatpush1.xpose.msra.mxu0 0.0
      %1652 = vmatprep.subr.mxu0 0.0
      %1653 = vmatpush1.xpose.msra.mxu0 0.0
      %1654 = vmatprep.subr.mxu0 0.0
      %1655 = vmatpush1.xpose.msra.mxu0 0.0
      %1656 = vmatprep.subr.mxu0 0.0
      %1657 = vmatpush1.xpose.msra.mxu0 0.0
      %1658 = vmatprep.subr.mxu0 0.0
      %1659 = vmatpush1.xpose.msra.mxu0 0.0
      %1660 = vmatprep.subr.mxu0 0.0
      %1661 = vmatpush1.xpose.msra.mxu0 0.0
      %1662 = vmatprep.subr.mxu0 0.0
      %1663 = vmatpush1.xpose.msra.mxu0 0.0
      %1664 = vmatprep.subr.mxu0 0.0
      %1665 = vmatpush1.xpose.msra.mxu0 0.0
      %1666 = vmatprep.subr.mxu0 0.0
      %1667 = vmatpush1.xpose.msra.mxu0 0.0
      %1668 = vmatprep.subr.mxu0 0.0
      %1669 = vmatpush1.xpose.msra.mxu0 0.0
      %1670 = vmatprep.subr.mxu0 0.0
      %1671 = vmatpush1.xpose.msra.mxu0 0.0
      %1672 = vmatprep.subr.mxu0 0.0
      %1673 = vmatpush1.xpose.msra.mxu0 0.0
      %1674 = vmatprep.subr.mxu0 0.0
      %1675 = vmatpush1.xpose.msra.mxu0 0.0
      %1676 = vmatprep.subr.mxu0 0.0
      %1677 = vmatpush1.xpose.msra.mxu0 0.0
      %1678 = vmatprep.subr.mxu0 0.0
      %1679 = vmatpush1.xpose.msra.mxu0 0.0
      %1680 = vmatprep.subr.mxu0 0.0
      %1681 = vmatpush1.xpose.msra.mxu0 0.0
      %1682 = vmatprep.subr.mxu0 0.0
      %1683 = vmatpush1.xpose.msra.mxu0 0.0
      %1684 = vmatprep.subr.mxu0 0.0
      %1685 = vmatpush1.xpose.msra.mxu0 0.0
      %1686 = vmatprep.subr.mxu0 0.0
      %1687 = vmatpush1.xpose.msra.mxu0 0.0
      %1688 = vmatprep.subr.mxu0 0.0
      %1689 = vmatpush1.xpose.msra.mxu0 0.0
      %1690 = vmatprep.subr.mxu0 0.0
      %1691 = vmatpush1.xpose.msra.mxu0 0.0
      %1692 = vmatprep.mubr.f32.mxu0 0.0
      %1693 = vmatmul.mubr.f32.gmra.mrb[0].mxu0 %v1620
      %v1694 = vpop.f32.mrb[0].mxu0
      %v1695 = vadd.f32 %v1519, %v1694
      %v1696 = vpop.f32.mrb[0].mxu0
      %1697 = vmatprep.mubr.f32.mxu0 0.0
      %1698 = vmatmul.mubr.f32.gmra.mrb[0].mxu0 %v1622
      %v1699 = vpop.f32.mrb[0].mxu0
      %v1700 = vadd.f32 %v1520, %v1699
      %v1701 = vpop.f32.mrb[0].mxu0
      %1702 = vdwg.mxu0
      %1703 = vrot.lane.b32.xlu0 %v694, 120
      %v1704 = vpop.permute.xlu0 %1703
      %1705 = vrot.lane.b32.xlu0 %v695, 120
      %v1706 = vpop.permute.xlu0 %1705
      %1707 = vrot.lane.b32.xlu0 %v668, 88
      %v1708 = vpop.permute.xlu0 %1707
      %1709 = vrot.lane.b32.xlu0 %v673, 88
      %v1710 = vpop.permute.xlu0 %1709
      %v1711 = vsel %vm706, %v1704, 0
      %v1713 = vsel %vm706, %v1706, 0
      %v1715 = vsel %vm706, %v1708, 0
      %v1717 = vsel %vm706, %v1710, 0
      %1719 = vmatprep.subr.mxu0 0.0
      %1720 = vmatpush1.xpose.msra.mxu0 %v1715
      %1721 = vmatprep.subr.mxu0 0.0
      %1722 = vmatpush1.xpose.msra.mxu0 %v1717
      %1723 = vmatprep.subr.mxu0 0.0
      %1724 = vmatpush1.xpose.msra.mxu0 0.0
      %1725 = vmatprep.subr.mxu0 0.0
      %1726 = vmatpush1.xpose.msra.mxu0 0.0
      %1727 = vmatprep.subr.mxu0 0.0
      %1728 = vmatpush1.xpose.msra.mxu0 0.0
      %1729 = vmatprep.subr.mxu0 0.0
      %1730 = vmatpush1.xpose.msra.mxu0 0.0
      %1731 = vmatprep.subr.mxu0 0.0
      %1732 = vmatpush1.xpose.msra.mxu0 0.0
      %1733 = vmatprep.subr.mxu0 0.0
      %1734 = vmatpush1.xpose.msra.mxu0 0.0
      %1735 = vmatprep.subr.mxu0 0.0
      %1736 = vmatpush1.xpose.msra.mxu0 0.0
      %1737 = vmatprep.subr.mxu0 0.0
      %1738 = vmatpush1.xpose.msra.mxu0 0.0
      %1739 = vmatprep.subr.mxu0 0.0
      %1740 = vmatpush1.xpose.msra.mxu0 0.0
      %1741 = vmatprep.subr.mxu0 0.0
      %1742 = vmatpush1.xpose.msra.mxu0 0.0
      %1743 = vmatprep.subr.mxu0 0.0
      %1744 = vmatpush1.xpose.msra.mxu0 0.0
      %1745 = vmatprep.subr.mxu0 0.0
      %1746 = vmatpush1.xpose.msra.mxu0 0.0
      %1747 = vmatprep.subr.mxu0 0.0
      %1748 = vmatpush1.xpose.msra.mxu0 0.0
      %1749 = vmatprep.subr.mxu0 0.0
      %1750 = vmatpush1.xpose.msra.mxu0 0.0
      %1751 = vmatprep.subr.mxu0 0.0
      %1752 = vmatpush1.xpose.msra.mxu0 0.0
      %1753 = vmatprep.subr.mxu0 0.0
      %1754 = vmatpush1.xpose.msra.mxu0 0.0
      %1755 = vmatprep.subr.mxu0 0.0
      %1756 = vmatpush1.xpose.msra.mxu0 0.0
      %1757 = vmatprep.subr.mxu0 0.0
      %1758 = vmatpush1.xpose.msra.mxu0 0.0
      %1759 = vmatprep.subr.mxu0 0.0
      %1760 = vmatpush1.xpose.msra.mxu0 0.0
      %1761 = vmatprep.subr.mxu0 0.0
      %1762 = vmatpush1.xpose.msra.mxu0 0.0
      %1763 = vmatprep.subr.mxu0 0.0
      %1764 = vmatpush1.xpose.msra.mxu0 0.0
      %1765 = vmatprep.subr.mxu0 0.0
      %1766 = vmatpush1.xpose.msra.mxu0 0.0
      %1767 = vmatprep.subr.mxu0 0.0
      %1768 = vmatpush1.xpose.msra.mxu0 0.0
      %1769 = vmatprep.subr.mxu0 0.0
      %1770 = vmatpush1.xpose.msra.mxu0 0.0
      %1771 = vmatprep.subr.mxu0 0.0
      %1772 = vmatpush1.xpose.msra.mxu0 0.0
      %1773 = vmatprep.subr.mxu0 0.0
      %1774 = vmatpush1.xpose.msra.mxu0 0.0
      %1775 = vmatprep.subr.mxu0 0.0
      %1776 = vmatpush1.xpose.msra.mxu0 0.0
      %1777 = vmatprep.subr.mxu0 0.0
      %1778 = vmatpush1.xpose.msra.mxu0 0.0
      %1779 = vmatprep.subr.mxu0 0.0
      %1780 = vmatpush1.xpose.msra.mxu0 0.0
      %1781 = vmatprep.subr.mxu0 0.0
      %1782 = vmatpush1.xpose.msra.mxu0 0.0
      %1783 = vmatprep.mubr.f32.mxu0 0.0
      %1784 = vmatmul.mubr.f32.gmra.mrb[0].mxu0 %v1711
      %v1785 = vpop.f32.mrb[0].mxu0
      %v1786 = vadd.f32 %v1519, %v1785
      %v1787 = vpop.f32.mrb[0].mxu0
      %1788 = vmatprep.mubr.f32.mxu0 0.0
      %1789 = vmatmul.mubr.f32.gmra.mrb[0].mxu0 %v1713
      %v1790 = vpop.f32.mrb[0].mxu0
      %v1791 = vadd.f32 %v1520, %v1790
      %v1792 = vpop.f32.mrb[0].mxu0
      %1793 = vdwg.mxu0
      %1794 = vrot.lane.b32.xlu0 %v696, 120
      %v1795 = vpop.permute.xlu0 %1794
      %1796 = vrot.lane.b32.xlu0 %v697, 120
      %v1797 = vpop.permute.xlu0 %1796
      %1798 = vrot.lane.b32.xlu0 %v678, 88
      %v1799 = vpop.permute.xlu0 %1798
      %1800 = vrot.lane.b32.xlu0 %v683, 88
      %v1801 = vpop.permute.xlu0 %1800
      %v1802 = vsel %vm706, %v1795, 0
      %v1804 = vsel %vm706, %v1797, 0
      %v1806 = vsel %vm706, %v1799, 0
      %v1808 = vsel %vm706, %v1801, 0
      %1810 = vmatprep.subr.mxu0 0.0
      %1811 = vmatpush1.xpose.msra.mxu0 %v1806
      %1812 = vmatprep.subr.mxu0 0.0
      %1813 = vmatpush1.xpose.msra.mxu0 %v1808
      %1814 = vmatprep.subr.mxu0 0.0
      %1815 = vmatpush1.xpose.msra.mxu0 0.0
      %1816 = vmatprep.subr.mxu0 0.0
      %1817 = vmatpush1.xpose.msra.mxu0 0.0
      %1818 = vmatprep.subr.mxu0 0.0
      %1819 = vmatpush1.xpose.msra.mxu0 0.0
      %1820 = vmatprep.subr.mxu0 0.0
      %1821 = vmatpush1.xpose.msra.mxu0 0.0
      %1822 = vmatprep.subr.mxu0 0.0
      %1823 = vmatpush1.xpose.msra.mxu0 0.0
      %1824 = vmatprep.subr.mxu0 0.0
      %1825 = vmatpush1.xpose.msra.mxu0 0.0
      %1826 = vmatprep.subr.mxu0 0.0
      %1827 = vmatpush1.xpose.msra.mxu0 0.0
      %1828 = vmatprep.subr.mxu0 0.0
      %1829 = vmatpush1.xpose.msra.mxu0 0.0
      %1830 = vmatprep.subr.mxu0 0.0
      %1831 = vmatpush1.xpose.msra.mxu0 0.0
      %1832 = vmatprep.subr.mxu0 0.0
      %1833 = vmatpush1.xpose.msra.mxu0 0.0
      %1834 = vmatprep.subr.mxu0 0.0
      %1835 = vmatpush1.xpose.msra.mxu0 0.0
      %1836 = vmatprep.subr.mxu0 0.0
      %1837 = vmatpush1.xpose.msra.mxu0 0.0
      %1838 = vmatprep.subr.mxu0 0.0
      %1839 = vmatpush1.xpose.msra.mxu0 0.0
      %1840 = vmatprep.subr.mxu0 0.0
      %1841 = vmatpush1.xpose.msra.mxu0 0.0
      %1842 = vmatprep.subr.mxu0 0.0
      %1843 = vmatpush1.xpose.msra.mxu0 0.0
      %1844 = vmatprep.subr.mxu0 0.0
      %1845 = vmatpush1.xpose.msra.mxu0 0.0
      %1846 = vmatprep.subr.mxu0 0.0
      %1847 = vmatpush1.xpose.msra.mxu0 0.0
      %1848 = vmatprep.subr.mxu0 0.0
      %1849 = vmatpush1.xpose.msra.mxu0 0.0
      %1850 = vmatprep.subr.mxu0 0.0
      %1851 = vmatpush1.xpose.msra.mxu0 0.0
      %1852 = vmatprep.subr.mxu0 0.0
      %1853 = vmatpush1.xpose.msra.mxu0 0.0
      %1854 = vmatprep.subr.mxu0 0.0
      %1855 = vmatpush1.xpose.msra.mxu0 0.0
      %1856 = vmatprep.subr.mxu0 0.0
      %1857 = vmatpush1.xpose.msra.mxu0 0.0
      %1858 = vmatprep.subr.mxu0 0.0
      %1859 = vmatpush1.xpose.msra.mxu0 0.0
      %1860 = vmatprep.subr.mxu0 0.0
      %1861 = vmatpush1.xpose.msra.mxu0 0.0
      %1862 = vmatprep.subr.mxu0 0.0
      %1863 = vmatpush1.xpose.msra.mxu0 0.0
      %1864 = vmatprep.subr.mxu0 0.0
      %1865 = vmatpush1.xpose.msra.mxu0 0.0
      %1866 = vmatprep.subr.mxu0 0.0
      %1867 = vmatpush1.xpose.msra.mxu0 0.0
      %1868 = vmatprep.subr.mxu0 0.0
      %1869 = vmatpush1.xpose.msra.mxu0 0.0
      %1870 = vmatprep.subr.mxu0 0.0
      %1871 = vmatpush1.xpose.msra.mxu0 0.0
      %1872 = vmatprep.subr.mxu0 0.0
      %1873 = vmatpush1.xpose.msra.mxu0 0.0
      %1874 = vmatprep.mubr.f32.mxu0 0.0
      %1875 = vmatmul.mubr.f32.gmra.mrb[0].mxu0 %v1802
      %v1876 = vpop.f32.mrb[0].mxu0
      %v1877 = vadd.f32 %v1519, %v1876
      %v1878 = vpop.f32.mrb[0].mxu0
      %1879 = vmatprep.mubr.f32.mxu0 0.0
      %1880 = vmatmul.mubr.f32.gmra.mrb[0].mxu0 %v1804
      %v1881 = vpop.f32.mrb[0].mxu0
      %v1882 = vadd.f32 %v1520, %v1881
      %v1883 = vpop.f32.mrb[0].mxu0
      %1884 = vdwg.mxu0
      %v1885 = vld [vmem:[%s389] sm:$0xff]
      %v1886 = vld [vmem:[%s389 + $0x8] sm:$0xff]
      %v1887 = vld [vmem:[%s389 + $0x10] sm:$0xff]
      %v1888 = vld [vmem:[%s389 + $0x18] sm:$0xff]
      %v1889 = vld [vmem:[%s389 + $0x20] sm:$0xff]
      %v1890 = vld [vmem:[%s389 + $0x28] sm:$0xff]
      %v1891 = vld [vmem:[%s389 + $0x30] sm:$0xff]
      %v1892 = vld [vmem:[%s389 + $0x38] sm:$0xff]
      %v1893 = vadd.f32 %v1604, %v1885
      %v1894 = vadd.f32 %v1609, %v1886
      %v1895 = vadd.f32 %v1695, %v1887
      %v1896 = vadd.f32 %v1700, %v1888
      %v1897 = vadd.f32 %v1786, %v1889
      %v1898 = vadd.f32 %v1791, %v1890
      %v1899 = vadd.f32 %v1877, %v1891
      %v1900 = vadd.f32 %v1882, %v1892
      %v1901 = vsel %vm1081, %v1893, -inf
      %1902 = vmax.xlane.f32.xlu0 %v1901
      %v1903 = vpop.xlane.xlu0 %1902
      %v1904 = vsel %vm1081, %v1894, -inf
      %1905 = vmax.xlane.f32.xlu0 %v1904
      %v1906 = vpop.xlane.xlu0 %1905
      %v1907 = vsel %vm1081, %v1895, -inf
      %1908 = vmax.xlane.f32.xlu0 %v1907
      %v1909 = vpop.xlane.xlu0 %1908
      %v1910 = vsel %vm1081, %v1896, -inf
      %1911 = vmax.xlane.f32.xlu0 %v1910
      %v1912 = vpop.xlane.xlu0 %1911
      %v1913 = vsel %vm1081, %v1897, -inf
      %1914 = vmax.xlane.f32.xlu0 %v1913
      %v1915 = vpop.xlane.xlu0 %1914
      %v1916 = vsel %vm1081, %v1898, -inf
      %1917 = vmax.xlane.f32.xlu0 %v1916
      %v1918 = vpop.xlane.xlu0 %1917
      %v1919 = vsel %vm1081, %v1899, -inf
      %1920 = vmax.xlane.f32.xlu0 %v1919
      %v1921 = vpop.xlane.xlu0 %1920
      %v1922 = vsel %vm1081, %v1900, -inf
      %1923 = vmax.xlane.f32.xlu0 %v1922
      %v1924 = vpop.xlane.xlu0 %1923
      %v1925 = vsub.f32 %v1893, %v1903
      %v1926 = vsub.f32 %v1894, %v1906
      %v1927 = vsub.f32 %v1895, %v1909
      %v1928 = vsub.f32 %v1896, %v1912
      %v1929 = vsub.f32 %v1897, %v1915
      %v1930 = vsub.f32 %v1898, %v1918
      %v1931 = vsub.f32 %v1899, %v1921
      %v1932 = vsub.f32 %v1900, %v1924
      %v1933 = vmul.f32 %v1925, 1.442695
      %v1934 = vpow.pop %v1933
      %v1935 = vmul.f32 %v1926, 1.442695
      %v1936 = vpow.pop %v1935
      %v1937 = vmul.f32 %v1927, 1.442695
      %v1938 = vpow.pop %v1937
      %v1939 = vmul.f32 %v1928, 1.442695
      %v1940 = vpow.pop %v1939
      %v1941 = vmul.f32 %v1929, 1.442695
      %v1942 = vpow.pop %v1941
      %v1943 = vmul.f32 %v1930, 1.442695
      %v1944 = vpow.pop %v1943
      %v1945 = vmul.f32 %v1931, 1.442695
      %v1946 = vpow.pop %v1945
      %v1947 = vmul.f32 %v1932, 1.442695
      %v1948 = vpow.pop %v1947
      %v1949 = vsel %vm1081, %v1934, 0.0
      %1950 = vadd.xlane.f32.xlu0 %v1949
      %v1951 = vpop.xlane.xlu0 %1950
      %v1952 = vsel %vm1081, %v1936, 0.0
      %1953 = vadd.xlane.f32.xlu0 %v1952
      %v1954 = vpop.xlane.xlu0 %1953
      %v1955 = vsel %vm1081, %v1938, 0.0
      %1956 = vadd.xlane.f32.xlu0 %v1955
      %v1957 = vpop.xlane.xlu0 %1956
      %v1958 = vsel %vm1081, %v1940, 0.0
      %1959 = vadd.xlane.f32.xlu0 %v1958
      %v1960 = vpop.xlane.xlu0 %1959
      %v1961 = vsel %vm1081, %v1942, 0.0
      %1962 = vadd.xlane.f32.xlu0 %v1961
      %v1963 = vpop.xlane.xlu0 %1962
      %v1964 = vsel %vm1081, %v1944, 0.0
      %1965 = vadd.xlane.f32.xlu0 %v1964
      %v1966 = vpop.xlane.xlu0 %1965
      %v1967 = vsel %vm1081, %v1946, 0.0
      %1968 = vadd.xlane.f32.xlu0 %v1967
      %v1969 = vpop.xlane.xlu0 %1968
      %v1970 = vsel %vm1081, %v1948, 0.0
      %1971 = vadd.xlane.f32.xlu0 %v1970
      %v1972 = vpop.xlane.xlu0 %1971
      %v1973 = vrcp.pop %v1951
      %v1974 = vmul.f32 %v1934, %v1973
      %v1975 = vrcp.pop %v1954
      %v1976 = vmul.f32 %v1936, %v1975
      %v1977 = vrcp.pop %v1957
      %v1978 = vmul.f32 %v1938, %v1977
      %v1979 = vrcp.pop %v1960
      %v1980 = vmul.f32 %v1940, %v1979
      %v1981 = vrcp.pop %v1963
      %v1982 = vmul.f32 %v1942, %v1981
      %v1983 = vrcp.pop %v1966
      %v1984 = vmul.f32 %v1944, %v1983
      %v1985 = vrcp.pop %v1969
      %v1986 = vmul.f32 %v1946, %v1985
      %v1987 = vrcp.pop %v1972
      %v1988 = vmul.f32 %v1948, %v1987
      %1989 = vrot.lane.b32.xlu0 %v648, 56
      %v1990 = vpop.permute.xlu0 %1989
      %1991 = vrot.lane.b32.xlu0 %v653, 56
      %v1992 = vpop.permute.xlu0 %1991
      %v1996 = vsel %vm1081, %v1974, 0
      %v1999 = vsel %vm1081, %v1976, 0
      %2001 = vmatprep.subr.mxu0 0.0
      %2002 = vmatpush1.msra.mxu0 %v1990
      %2003 = vmatprep.subr.mxu0 0.0
      %2004 = vmatpush1.msra.mxu0 %v1992
      %2005 = vmatprep.subr.mxu0 0.0
      %2006 = vmatpush1.msra.mxu0 0.0
      %2007 = vmatprep.subr.mxu0 0.0
      %2008 = vmatpush1.msra.mxu0 0.0
      %2009 = vmatprep.subr.mxu0 0.0
      %2010 = vmatpush1.msra.mxu0 0.0
      %2011 = vmatprep.subr.mxu0 0.0
      %2012 = vmatpush1.msra.mxu0 0.0
      %2013 = vmatprep.subr.mxu0 0.0
      %2014 = vmatpush1.msra.mxu0 0.0
      %2015 = vmatprep.subr.mxu0 0.0
      %2016 = vmatpush1.msra.mxu0 0.0
      %2017 = vmatprep.subr.mxu0 0.0
      %2018 = vmatpush1.msra.mxu0 0.0
      %2019 = vmatprep.subr.mxu0 0.0
      %2020 = vmatpush1.msra.mxu0 0.0
      %2021 = vmatprep.subr.mxu0 0.0
      %2022 = vmatpush1.msra.mxu0 0.0
      %2023 = vmatprep.subr.mxu0 0.0
      %2024 = vmatpush1.msra.mxu0 0.0
      %2025 = vmatprep.subr.mxu0 0.0
      %2026 = vmatpush1.msra.mxu0 0.0
      %2027 = vmatprep.subr.mxu0 0.0
      %2028 = vmatpush1.msra.mxu0 0.0
      %2029 = vmatprep.subr.mxu0 0.0
      %2030 = vmatpush1.msra.mxu0 0.0
      %2031 = vmatprep.subr.mxu0 0.0
      %2032 = vmatpush1.msra.mxu0 0.0
      %2033 = vmatprep.subr.mxu0 0.0
      %2034 = vmatpush1.msra.mxu0 0.0
      %2035 = vmatprep.subr.mxu0 0.0
      %2036 = vmatpush1.msra.mxu0 0.0
      %2037 = vmatprep.subr.mxu0 0.0
      %2038 = vmatpush1.msra.mxu0 0.0
      %2039 = vmatprep.subr.mxu0 0.0
      %2040 = vmatpush1.msra.mxu0 0.0
      %2041 = vmatprep.subr.mxu0 0.0
      %2042 = vmatpush1.msra.mxu0 0.0
      %2043 = vmatprep.subr.mxu0 0.0
      %2044 = vmatpush1.msra.mxu0 0.0
      %2045 = vmatprep.subr.mxu0 0.0
      %2046 = vmatpush1.msra.mxu0 0.0
      %2047 = vmatprep.subr.mxu0 0.0
      %2048 = vmatpush1.msra.mxu0 0.0
      %2049 = vmatprep.subr.mxu0 0.0
      %2050 = vmatpush1.msra.mxu0 0.0
      %2051 = vmatprep.subr.mxu0 0.0
      %2052 = vmatpush1.msra.mxu0 0.0
      %2053 = vmatprep.subr.mxu0 0.0
      %2054 = vmatpush1.msra.mxu0 0.0
      %2055 = vmatprep.subr.mxu0 0.0
      %2056 = vmatpush1.msra.mxu0 0.0
      %2057 = vmatprep.subr.mxu0 0.0
      %2058 = vmatpush1.msra.mxu0 0.0
      %2059 = vmatprep.subr.mxu0 0.0
      %2060 = vmatpush1.msra.mxu0 0.0
      %2061 = vmatprep.subr.mxu0 0.0
      %2062 = vmatpush1.msra.mxu0 0.0
      %2063 = vmatprep.subr.mxu0 0.0
      %2064 = vmatpush1.msra.mxu0 0.0
      %2065 = vmatprep.mubr.f32.mxu0 0.0
      %2066 = vmatmul.mubr.f32.gmra.mrb[0].mxu0 %v1996
      %v2067 = vpop.f32.mrb[0].mxu0
      %v2068 = vadd.f32 0.0, %v2067
      %v2069 = vpop.f32.mrb[0].mxu0
      %2070 = vmatprep.mubr.f32.mxu0 0.0
      %2071 = vmatmul.mubr.f32.gmra.mrb[0].mxu0 %v1999
      %v2072 = vpop.f32.mrb[0].mxu0
      %v2073 = vadd.f32 0.0, %v2072
      %v2074 = vpop.f32.mrb[0].mxu0
      %2075 = vdwg.mxu0
      %2076 = vrot.lane.b32.xlu0 %v658, 56
      %v2077 = vpop.permute.xlu0 %2076
      %2078 = vrot.lane.b32.xlu0 %v663, 56
      %v2079 = vpop.permute.xlu0 %2078
      %v2083 = vsel %vm1081, %v1978, 0
      %v2086 = vsel %vm1081, %v1980, 0
      %2088 = vmatprep.subr.mxu0 0.0
      %2089 = vmatpush1.msra.mxu0 %v2077
      %2090 = vmatprep.subr.mxu0 0.0
      %2091 = vmatpush1.msra.mxu0 %v2079
      %2092 = vmatprep.subr.mxu0 0.0
      %2093 = vmatpush1.msra.mxu0 0.0
      %2094 = vmatprep.subr.mxu0 0.0
      %2095 = vmatpush1.msra.mxu0 0.0
      %2096 = vmatprep.subr.mxu0 0.0
      %2097 = vmatpush1.msra.mxu0 0.0
      %2098 = vmatprep.subr.mxu0 0.0
      %2099 = vmatpush1.msra.mxu0 0.0
      %2100 = vmatprep.subr.mxu0 0.0
      %2101 = vmatpush1.msra.mxu0 0.0
      %2102 = vmatprep.subr.mxu0 0.0
      %2103 = vmatpush1.msra.mxu0 0.0
      %2104 = vmatprep.subr.mxu0 0.0
      %2105 = vmatpush1.msra.mxu0 0.0
      %2106 = vmatprep.subr.mxu0 0.0
      %2107 = vmatpush1.msra.mxu0 0.0
      %2108 = vmatprep.subr.mxu0 0.0
      %2109 = vmatpush1.msra.mxu0 0.0
      %2110 = vmatprep.subr.mxu0 0.0
      %2111 = vmatpush1.msra.mxu0 0.0
      %2112 = vmatprep.subr.mxu0 0.0
      %2113 = vmatpush1.msra.mxu0 0.0
      %2114 = vmatprep.subr.mxu0 0.0
      %2115 = vmatpush1.msra.mxu0 0.0
      %2116 = vmatprep.subr.mxu0 0.0
      %2117 = vmatpush1.msra.mxu0 0.0
      %2118 = vmatprep.subr.mxu0 0.0
      %2119 = vmatpush1.msra.mxu0 0.0
      %2120 = vmatprep.subr.mxu0 0.0
      %2121 = vmatpush1.msra.mxu0 0.0
      %2122 = vmatprep.subr.mxu0 0.0
      %2123 = vmatpush1.msra.mxu0 0.0
      %2124 = vmatprep.subr.mxu0 0.0
      %2125 = vmatpush1.msra.mxu0 0.0
      %2126 = vmatprep.subr.mxu0 0.0
      %2127 = vmatpush1.msra.mxu0 0.0
      %2128 = vmatprep.subr.mxu0 0.0
      %2129 = vmatpush1.msra.mxu0 0.0
      %2130 = vmatprep.subr.mxu0 0.0
      %2131 = vmatpush1.msra.mxu0 0.0
      %2132 = vmatprep.subr.mxu0 0.0
      %2133 = vmatpush1.msra.mxu0 0.0
      %2134 = vmatprep.subr.mxu0 0.0
      %2135 = vmatpush1.msra.mxu0 0.0
      %2136 = vmatprep.subr.mxu0 0.0
      %2137 = vmatpush1.msra.mxu0 0.0
      %2138 = vmatprep.subr.mxu0 0.0
      %2139 = vmatpush1.msra.mxu0 0.0
      %2140 = vmatprep.subr.mxu0 0.0
      %2141 = vmatpush1.msra.mxu0 0.0
      %2142 = vmatprep.subr.mxu0 0.0
      %2143 = vmatpush1.msra.mxu0 0.0
      %2144 = vmatprep.subr.mxu0 0.0
      %2145 = vmatpush1.msra.mxu0 0.0
      %2146 = vmatprep.subr.mxu0 0.0
      %2147 = vmatpush1.msra.mxu0 0.0
      %2148 = vmatprep.subr.mxu0 0.0
      %2149 = vmatpush1.msra.mxu0 0.0
      %2150 = vmatprep.subr.mxu0 0.0
      %2151 = vmatpush1.msra.mxu0 0.0
      %2152 = vmatprep.mubr.f32.mxu0 0.0
      %2153 = vmatmul.mubr.f32.gmra.mrb[0].mxu0 %v2083
      %v2154 = vpop.f32.mrb[0].mxu0
      %v2155 = vadd.f32 0.0, %v2154
      %v2156 = vpop.f32.mrb[0].mxu0
      %2157 = vmatprep.mubr.f32.mxu0 0.0
      %2158 = vmatmul.mubr.f32.gmra.mrb[0].mxu0 %v2086
      %v2159 = vpop.f32.mrb[0].mxu0
      %v2160 = vadd.f32 0.0, %v2159
      %v2161 = vpop.f32.mrb[0].mxu0
      %2162 = vdwg.mxu0
      %2163 = vrot.lane.b32.xlu0 %v668, 56
      %v2164 = vpop.permute.xlu0 %2163
      %2165 = vrot.lane.b32.xlu0 %v673, 56
      %v2166 = vpop.permute.xlu0 %2165
      %v2170 = vsel %vm1081, %v1982, 0
      %v2173 = vsel %vm1081, %v1984, 0
      %2175 = vmatprep.subr.mxu0 0.0
      %2176 = vmatpush1.msra.mxu0 %v2164
      %2177 = vmatprep.subr.mxu0 0.0
      %2178 = vmatpush1.msra.mxu0 %v2166
      %2179 = vmatprep.subr.mxu0 0.0
      %2180 = vmatpush1.msra.mxu0 0.0
      %2181 = vmatprep.subr.mxu0 0.0
      %2182 = vmatpush1.msra.mxu0 0.0
      %2183 = vmatprep.subr.mxu0 0.0
      %2184 = vmatpush1.msra.mxu0 0.0
      %2185 = vmatprep.subr.mxu0 0.0
      %2186 = vmatpush1.msra.mxu0 0.0
      %2187 = vmatprep.subr.mxu0 0.0
      %2188 = vmatpush1.msra.mxu0 0.0
      %2189 = vmatprep.subr.mxu0 0.0
      %2190 = vmatpush1.msra.mxu0 0.0
      %2191 = vmatprep.subr.mxu0 0.0
      %2192 = vmatpush1.msra.mxu0 0.0
      %2193 = vmatprep.subr.mxu0 0.0
      %2194 = vmatpush1.msra.mxu0 0.0
      %2195 = vmatprep.subr.mxu0 0.0
      %2196 = vmatpush1.msra.mxu0 0.0
      %2197 = vmatprep.subr.mxu0 0.0
      %2198 = vmatpush1.msra.mxu0 0.0
      %2199 = vmatprep.subr.mxu0 0.0
      %2200 = vmatpush1.msra.mxu0 0.0
      %2201 = vmatprep.subr.mxu0 0.0
      %2202 = vmatpush1.msra.mxu0 0.0
      %2203 = vmatprep.subr.mxu0 0.0
      %2204 = vmatpush1.msra.mxu0 0.0
      %2205 = vmatprep.subr.mxu0 0.0
      %2206 = vmatpush1.msra.mxu0 0.0
      %2207 = vmatprep.subr.mxu0 0.0
      %2208 = vmatpush1.msra.mxu0 0.0
      %2209 = vmatprep.subr.mxu0 0.0
      %2210 = vmatpush1.msra.mxu0 0.0
      %2211 = vmatprep.subr.mxu0 0.0
      %2212 = vmatpush1.msra.mxu0 0.0
      %2213 = vmatprep.subr.mxu0 0.0
      %2214 = vmatpush1.msra.mxu0 0.0
      %2215 = vmatprep.subr.mxu0 0.0
      %2216 = vmatpush1.msra.mxu0 0.0
      %2217 = vmatprep.subr.mxu0 0.0
      %2218 = vmatpush1.msra.mxu0 0.0
      %2219 = vmatprep.subr.mxu0 0.0
      %2220 = vmatpush1.msra.mxu0 0.0
      %2221 = vmatprep.subr.mxu0 0.0
      %2222 = vmatpush1.msra.mxu0 0.0
      %2223 = vmatprep.subr.mxu0 0.0
      %2224 = vmatpush1.msra.mxu0 0.0
      %2225 = vmatprep.subr.mxu0 0.0
      %2226 = vmatpush1.msra.mxu0 0.0
      %2227 = vmatprep.subr.mxu0 0.0
      %2228 = vmatpush1.msra.mxu0 0.0
      %2229 = vmatprep.subr.mxu0 0.0
      %2230 = vmatpush1.msra.mxu0 0.0
      %2231 = vmatprep.subr.mxu0 0.0
      %2232 = vmatpush1.msra.mxu0 0.0
      %2233 = vmatprep.subr.mxu0 0.0
      %2234 = vmatpush1.msra.mxu0 0.0
      %2235 = vmatprep.subr.mxu0 0.0
      %2236 = vmatpush1.msra.mxu0 0.0
      %2237 = vmatprep.subr.mxu0 0.0
      %2238 = vmatpush1.msra.mxu0 0.0
      %2239 = vmatprep.mubr.f32.mxu0 0.0
      %2240 = vmatmul.mubr.f32.gmra.mrb[0].mxu0 %v2170
      %v2241 = vpop.f32.mrb[0].mxu0
      %v2242 = vadd.f32 0.0, %v2241
      %v2243 = vpop.f32.mrb[0].mxu0
      %2244 = vmatprep.mubr.f32.mxu0 0.0
      %2245 = vmatmul.mubr.f32.gmra.mrb[0].mxu0 %v2173
      %v2246 = vpop.f32.mrb[0].mxu0
      %v2247 = vadd.f32 0.0, %v2246
      %v2248 = vpop.f32.mrb[0].mxu0
      %2249 = vdwg.mxu0
      %2250 = vrot.lane.b32.xlu0 %v678, 56
      %v2251 = vpop.permute.xlu0 %2250
      %2252 = vrot.lane.b32.xlu0 %v683, 56
      %v2253 = vpop.permute.xlu0 %2252
      %v2257 = vsel %vm1081, %v1986, 0
      %v2260 = vsel %vm1081, %v1988, 0
      %2262 = vmatprep.subr.mxu0 0.0
      %2263 = vmatpush1.msra.mxu0 %v2251
      %2264 = vmatprep.subr.mxu0 0.0
      %2265 = vmatpush1.msra.mxu0 %v2253
      %2266 = vmatprep.subr.mxu0 0.0
      %2267 = vmatpush1.msra.mxu0 0.0
      %2268 = vmatprep.subr.mxu0 0.0
      %2269 = vmatpush1.msra.mxu0 0.0
      %2270 = vmatprep.subr.mxu0 0.0
      %2271 = vmatpush1.msra.mxu0 0.0
      %2272 = vmatprep.subr.mxu0 0.0
      %2273 = vmatpush1.msra.mxu0 0.0
      %2274 = vmatprep.subr.mxu0 0.0
      %2275 = vmatpush1.msra.mxu0 0.0
      %2276 = vmatprep.subr.mxu0 0.0
      %2277 = vmatpush1.msra.mxu0 0.0
      %2278 = vmatprep.subr.mxu0 0.0
      %2279 = vmatpush1.msra.mxu0 0.0
      %2280 = vmatprep.subr.mxu0 0.0
      %2281 = vmatpush1.msra.mxu0 0.0
      %2282 = vmatprep.subr.mxu0 0.0
      %2283 = vmatpush1.msra.mxu0 0.0
      %2284 = vmatprep.subr.mxu0 0.0
      %2285 = vmatpush1.msra.mxu0 0.0
      %2286 = vmatprep.subr.mxu0 0.0
      %2287 = vmatpush1.msra.mxu0 0.0
      %2288 = vmatprep.subr.mxu0 0.0
      %2289 = vmatpush1.msra.mxu0 0.0
      %2290 = vmatprep.subr.mxu0 0.0
      %2291 = vmatpush1.msra.mxu0 0.0
      %2292 = vmatprep.subr.mxu0 0.0
      %2293 = vmatpush1.msra.mxu0 0.0
      %2294 = vmatprep.subr.mxu0 0.0
      %2295 = vmatpush1.msra.mxu0 0.0
      %2296 = vmatprep.subr.mxu0 0.0
      %2297 = vmatpush1.msra.mxu0 0.0
      %2298 = vmatprep.subr.mxu0 0.0
      %2299 = vmatpush1.msra.mxu0 0.0
      %2300 = vmatprep.subr.mxu0 0.0
      %2301 = vmatpush1.msra.mxu0 0.0
      %2302 = vmatprep.subr.mxu0 0.0
      %2303 = vmatpush1.msra.mxu0 0.0
      %2304 = vmatprep.subr.mxu0 0.0
      %2305 = vmatpush1.msra.mxu0 0.0
      %2306 = vmatprep.subr.mxu0 0.0
      %2307 = vmatpush1.msra.mxu0 0.0
      %2308 = vmatprep.subr.mxu0 0.0
      %2309 = vmatpush1.msra.mxu0 0.0
      %2310 = vmatprep.subr.mxu0 0.0
      %2311 = vmatpush1.msra.mxu0 0.0
      %2312 = vmatprep.subr.mxu0 0.0
      %2313 = vmatpush1.msra.mxu0 0.0
      %2314 = vmatprep.subr.mxu0 0.0
      %2315 = vmatpush1.msra.mxu0 0.0
      %2316 = vmatprep.subr.mxu0 0.0
      %2317 = vmatpush1.msra.mxu0 0.0
      %2318 = vmatprep.subr.mxu0 0.0
      %2319 = vmatpush1.msra.mxu0 0.0
      %2320 = vmatprep.subr.mxu0 0.0
      %2321 = vmatpush1.msra.mxu0 0.0
      %2322 = vmatprep.subr.mxu0 0.0
      %2323 = vmatpush1.msra.mxu0 0.0
      %2324 = vmatprep.subr.mxu0 0.0
      %2325 = vmatpush1.msra.mxu0 0.0
      %2326 = vmatprep.mubr.f32.mxu0 0.0
      %2327 = vmatmul.mubr.f32.gmra.mrb[0].mxu0 %v2257
      %v2328 = vpop.f32.mrb[0].mxu0
      %v2329 = vadd.f32 0.0, %v2328
      %v2330 = vpop.f32.mrb[0].mxu0
      %2331 = vmatprep.mubr.f32.mxu0 0.0
      %2332 = vmatmul.mubr.f32.gmra.mrb[0].mxu0 %v2260
      %v2333 = vpop.f32.mrb[0].mxu0
      %v2334 = vadd.f32 0.0, %v2333
      %v2335 = vpop.f32.mrb[0].mxu0
      %2336 = vdwg.mxu0
      %v2338 = vsel %vm706, %v2068, 0
      %v2341 = vsel %vm706, %v2073, 0
      %v2344 = vsel %vm706, %v2155, 0
      %v2347 = vsel %vm706, %v2160, 0
      %v2350 = vsel %vm706, %v2242, 0
      %v2353 = vsel %vm706, %v2247, 0
      %v2356 = vsel %vm706, %v2329, 0
      %v2359 = vsel %vm706, %v2334, 0
      %2361 = vmatprep.subr.mxu0 0.0
      %2362 = vmatpush1.msra.mxu0 %v687
      %2363 = vmatprep.subr.mxu0 0.0
      %2364 = vmatpush1.msra.mxu0 0.0
      %2365 = vmatprep.subr.mxu0 0.0
      %2366 = vmatpush1.msra.mxu0 0.0
      %2367 = vmatprep.subr.mxu0 0.0
      %2368 = vmatpush1.msra.mxu0 0.0
      %2369 = vmatprep.subr.mxu0 0.0
      %2370 = vmatpush1.msra.mxu0 0.0
      %2371 = vmatprep.subr.mxu0 0.0
      %2372 = vmatpush1.msra.mxu0 0.0
      %2373 = vmatprep.subr.mxu0 0.0
      %2374 = vmatpush1.msra.mxu0 0.0
      %2375 = vmatprep.subr.mxu0 0.0
      %2376 = vmatpush1.msra.mxu0 0.0
      %2377 = vmatprep.subr.mxu0 0.0
      %2378 = vmatpush1.msra.mxu0 0.0
      %2379 = vmatprep.subr.mxu0 0.0
      %2380 = vmatpush1.msra.mxu0 0.0
      %2381 = vmatprep.subr.mxu0 0.0
      %2382 = vmatpush1.msra.mxu0 0.0
      %2383 = vmatprep.subr.mxu0 0.0
      %2384 = vmatpush1.msra.mxu0 0.0
      %2385 = vmatprep.subr.mxu0 0.0
      %2386 = vmatpush1.msra.mxu0 0.0
      %2387 = vmatprep.subr.mxu0 0.0
      %2388 = vmatpush1.msra.mxu0 0.0
      %2389 = vmatprep.subr.mxu0 0.0
      %2390 = vmatpush1.msra.mxu0 0.0
      %2391 = vmatprep.subr.mxu0 0.0
      %2392 = vmatpush1.msra.mxu0 0.0
      %2393 = vmatprep.subr.mxu0 0.0
      %2394 = vmatpush1.msra.mxu0 0.0
      %2395 = vmatprep.subr.mxu0 0.0
      %2396 = vmatpush1.msra.mxu0 0.0
      %2397 = vmatprep.subr.mxu0 0.0
      %2398 = vmatpush1.msra.mxu0 0.0
      %2399 = vmatprep.subr.mxu0 0.0
      %2400 = vmatpush1.msra.mxu0 0.0
      %2401 = vmatprep.subr.mxu0 0.0
      %2402 = vmatpush1.msra.mxu0 0.0
      %2403 = vmatprep.subr.mxu0 0.0
      %2404 = vmatpush1.msra.mxu0 0.0
      %2405 = vmatprep.subr.mxu0 0.0
      %2406 = vmatpush1.msra.mxu0 0.0
      %2407 = vmatprep.subr.mxu0 0.0
      %2408 = vmatpush1.msra.mxu0 0.0
      %2409 = vmatprep.subr.mxu0 0.0
      %2410 = vmatpush1.msra.mxu0 0.0
      %2411 = vmatprep.subr.mxu0 0.0
      %2412 = vmatpush1.msra.mxu0 0.0
      %2413 = vmatprep.subr.mxu0 0.0
      %2414 = vmatpush1.msra.mxu0 0.0
      %2415 = vmatprep.subr.mxu0 0.0
      %2416 = vmatpush1.msra.mxu0 0.0
      %2417 = vmatprep.subr.mxu0 0.0
      %2418 = vmatpush1.msra.mxu0 0.0
      %2419 = vmatprep.subr.mxu0 0.0
      %2420 = vmatpush1.msra.mxu0 0.0
      %2421 = vmatprep.subr.mxu0 0.0
      %2422 = vmatpush1.msra.mxu0 0.0
      %2423 = vmatprep.subr.mxu0 0.0
      %2424 = vmatpush1.msra.mxu0 0.0
      %2425 = vmatprep.mubr.f32.mxu0 0.0
      %2426 = vmatmul.mubr.f32.gmra.mrb[0].mxu0 %v2338
      %v2427 = vpop.f32.mrb[0].mxu0
      %v2428 = vadd.f32 0.0, %v2427
      %v2429 = vpop.f32.mrb[0].mxu0
      %2430 = vmatprep.mubr.f32.mxu0 0.0
      %2431 = vmatmul.mubr.f32.gmra.mrb[0].mxu0 %v2341
      %v2432 = vpop.f32.mrb[0].mxu0
      %v2433 = vadd.f32 0.0, %v2432
      %v2434 = vpop.f32.mrb[0].mxu0
      %2435 = vmatprep.mubr.f32.mxu0 0.0
      %2436 = vmatmul.mubr.f32.gmra.mrb[0].mxu0 %v2344
      %v2437 = vpop.f32.mrb[0].mxu0
      %v2438 = vadd.f32 0.0, %v2437
      %v2439 = vpop.f32.mrb[0].mxu0
      %2440 = vmatprep.mubr.f32.mxu0 0.0
      %2441 = vmatmul.mubr.f32.gmra.mrb[0].mxu0 %v2347
      %v2442 = vpop.f32.mrb[0].mxu0
      %v2443 = vadd.f32 0.0, %v2442
      %v2444 = vpop.f32.mrb[0].mxu0
      %2445 = vmatprep.mubr.f32.mxu0 0.0
      %2446 = vmatmul.mubr.f32.gmra.mrb[0].mxu0 %v2350
      %v2447 = vpop.f32.mrb[0].mxu0
      %v2448 = vadd.f32 0.0, %v2447
      %v2449 = vpop.f32.mrb[0].mxu0
      %2450 = vmatprep.mubr.f32.mxu0 0.0
      %2451 = vmatmul.mubr.f32.gmra.mrb[0].mxu0 %v2353
      %v2452 = vpop.f32.mrb[0].mxu0
      %v2453 = vadd.f32 0.0, %v2452
      %v2454 = vpop.f32.mrb[0].mxu0
      %2455 = vmatprep.mubr.f32.mxu0 0.0
      %2456 = vmatmul.mubr.f32.gmra.mrb[0].mxu0 %v2356
      %v2457 = vpop.f32.mrb[0].mxu0
      %v2458 = vadd.f32 0.0, %v2457
      %v2459 = vpop.f32.mrb[0].mxu0
      %2460 = vmatprep.mubr.f32.mxu0 0.0
      %2461 = vmatmul.mubr.f32.gmra.mrb[0].mxu0 %v2359
      %v2462 = vpop.f32.mrb[0].mxu0
      %v2463 = vadd.f32 0.0, %v2462
      %v2464 = vpop.f32.mrb[0].mxu0
      %2465 = vdwg.mxu0
      %v2467 = vsel %vm706, %v1249, 0
      %v2470 = vsel %vm706, %v1254, 0
      %v2473 = vsel %vm706, %v1336, 0
      %v2476 = vsel %vm706, %v1341, 0
      %v2479 = vsel %vm706, %v1423, 0
      %v2482 = vsel %vm706, %v1428, 0
      %v2485 = vsel %vm706, %v1510, 0
      %v2488 = vsel %vm706, %v1515, 0
      %2490 = vmatprep.subr.mxu0 0.0
      %2491 = vmatpush1.msra.mxu0 %v686
      %2492 = vmatprep.subr.mxu0 0.0
      %2493 = vmatpush1.msra.mxu0 0.0
      %2494 = vmatprep.subr.mxu0 0.0
      %2495 = vmatpush1.msra.mxu0 0.0
      %2496 = vmatprep.subr.mxu0 0.0
      %2497 = vmatpush1.msra.mxu0 0.0
      %2498 = vmatprep.subr.mxu0 0.0
      %2499 = vmatpush1.msra.mxu0 0.0
      %2500 = vmatprep.subr.mxu0 0.0
      %2501 = vmatpush1.msra.mxu0 0.0
      %2502 = vmatprep.subr.mxu0 0.0
      %2503 = vmatpush1.msra.mxu0 0.0
      %2504 = vmatprep.subr.mxu0 0.0
      %2505 = vmatpush1.msra.mxu0 0.0
      %2506 = vmatprep.subr.mxu0 0.0
      %2507 = vmatpush1.msra.mxu0 0.0
      %2508 = vmatprep.subr.mxu0 0.0
      %2509 = vmatpush1.msra.mxu0 0.0
      %2510 = vmatprep.subr.mxu0 0.0
      %2511 = vmatpush1.msra.mxu0 0.0
      %2512 = vmatprep.subr.mxu0 0.0
      %2513 = vmatpush1.msra.mxu0 0.0
      %2514 = vmatprep.subr.mxu0 0.0
      %2515 = vmatpush1.msra.mxu0 0.0
      %2516 = vmatprep.subr.mxu0 0.0
      %2517 = vmatpush1.msra.mxu0 0.0
      %2518 = vmatprep.subr.mxu0 0.0
      %2519 = vmatpush1.msra.mxu0 0.0
      %2520 = vmatprep.subr.mxu0 0.0
      %2521 = vmatpush1.msra.mxu0 0.0
      %2522 = vmatprep.subr.mxu0 0.0
      %2523 = vmatpush1.msra.mxu0 0.0
      %2524 = vmatprep.subr.mxu0 0.0
      %2525 = vmatpush1.msra.mxu0 0.0
      %2526 = vmatprep.subr.mxu0 0.0
      %2527 = vmatpush1.msra.mxu0 0.0
      %2528 = vmatprep.subr.mxu0 0.0
      %2529 = vmatpush1.msra.mxu0 0.0
      %2530 = vmatprep.subr.mxu0 0.0
      %2531 = vmatpush1.msra.mxu0 0.0
      %2532 = vmatprep.subr.mxu0 0.0
      %2533 = vmatpush1.msra.mxu0 0.0
      %2534 = vmatprep.subr.mxu0 0.0
      %2535 = vmatpush1.msra.mxu0 0.0
      %2536 = vmatprep.subr.mxu0 0.0
      %2537 = vmatpush1.msra.mxu0 0.0
      %2538 = vmatprep.subr.mxu0 0.0
      %2539 = vmatpush1.msra.mxu0 0.0
      %2540 = vmatprep.subr.mxu0 0.0
      %2541 = vmatpush1.msra.mxu0 0.0
      %2542 = vmatprep.subr.mxu0 0.0
      %2543 = vmatpush1.msra.mxu0 0.0
      %2544 = vmatprep.subr.mxu0 0.0
      %2545 = vmatpush1.msra.mxu0 0.0
      %2546 = vmatprep.subr.mxu0 0.0
      %2547 = vmatpush1.msra.mxu0 0.0
      %2548 = vmatprep.subr.mxu0 0.0
      %2549 = vmatpush1.msra.mxu0 0.0
      %2550 = vmatprep.subr.mxu0 0.0
      %2551 = vmatpush1.msra.mxu0 0.0
      %2552 = vmatprep.subr.mxu0 0.0
      %2553 = vmatpush1.msra.mxu0 0.0
      %2554 = vmatprep.mubr.f32.mxu0 0.0
      %2555 = vmatmul.mubr.f32.gmra.mrb[0].mxu0 %v2467
      %v2556 = vpop.f32.mrb[0].mxu0
      %v2557 = vadd.f32 %v2428, %v2556
      %v2558 = vpop.f32.mrb[0].mxu0
      %2559 = vmatprep.mubr.f32.mxu0 0.0
      %2560 = vmatmul.mubr.f32.gmra.mrb[0].mxu0 %v2470
      %v2561 = vpop.f32.mrb[0].mxu0
      %v2562 = vadd.f32 %v2433, %v2561
      %v2563 = vpop.f32.mrb[0].mxu0
      %2564 = vmatprep.mubr.f32.mxu0 0.0
      %2565 = vmatmul.mubr.f32.gmra.mrb[0].mxu0 %v2473
      %v2566 = vpop.f32.mrb[0].mxu0
      %v2567 = vadd.f32 %v2438, %v2566
      %v2568 = vpop.f32.mrb[0].mxu0
      %2569 = vmatprep.mubr.f32.mxu0 0.0
      %2570 = vmatmul.mubr.f32.gmra.mrb[0].mxu0 %v2476
      %v2571 = vpop.f32.mrb[0].mxu0
      %v2572 = vadd.f32 %v2443, %v2571
      %v2573 = vpop.f32.mrb[0].mxu0
      %2574 = vmatprep.mubr.f32.mxu0 0.0
      %2575 = vmatmul.mubr.f32.gmra.mrb[0].mxu0 %v2479
      %v2576 = vpop.f32.mrb[0].mxu0
      %v2577 = vadd.f32 %v2448, %v2576
      %v2578 = vpop.f32.mrb[0].mxu0
      %2579 = vmatprep.mubr.f32.mxu0 0.0
      %2580 = vmatmul.mubr.f32.gmra.mrb[0].mxu0 %v2482
      %v2581 = vpop.f32.mrb[0].mxu0
      %v2582 = vadd.f32 %v2453, %v2581
      %v2583 = vpop.f32.mrb[0].mxu0
      %2584 = vmatprep.mubr.f32.mxu0 0.0
      %2585 = vmatmul.mubr.f32.gmra.mrb[0].mxu0 %v2485
      %v2586 = vpop.f32.mrb[0].mxu0
      %v2587 = vadd.f32 %v2458, %v2586
      %v2588 = vpop.f32.mrb[0].mxu0
      %2589 = vmatprep.mubr.f32.mxu0 0.0
      %2590 = vmatmul.mubr.f32.gmra.mrb[0].mxu0 %v2488
      %v2591 = vpop.f32.mrb[0].mxu0
      %v2592 = vadd.f32 %v2463, %v2591
      %v2593 = vpop.f32.mrb[0].mxu0
      %2594 = vdwg.mxu0
      %s2595 = scalar_lea.vmem %s2, 32
      %v2596 = vld [vmem:[%s2595] sm:$0xff]
      %v2597 = vld [vmem:[%s2595 + $0x8] sm:$0xff]
      %2598 = vrot.lane.b32.xlu0 %v690, 112
      %v2599 = vpop.permute.xlu0 %2598
      %2600 = vrot.lane.b32.xlu0 %v691, 112
      %v2601 = vpop.permute.xlu0 %2600
      %2602 = vrot.lane.b32.xlu0 %v648, 80
      %v2603 = vpop.permute.xlu0 %2602
      %2604 = vrot.lane.b32.xlu0 %v653, 80
      %v2605 = vpop.permute.xlu0 %2604
      %v2606 = vsel %vm706, %v2599, 0
      %v2608 = vsel %vm706, %v2601, 0
      %v2610 = vsel %vm706, %v2603, 0
      %v2612 = vsel %vm706, %v2605, 0
      %2614 = vmatprep.subr.mxu0 0.0
      %2615 = vmatpush1.xpose.msra.mxu0 %v2610
      %2616 = vmatprep.subr.mxu0 0.0
      %2617 = vmatpush1.xpose.msra.mxu0 %v2612
      %2618 = vmatprep.subr.mxu0 0.0
      %2619 = vmatpush1.xpose.msra.mxu0 0.0
      %2620 = vmatprep.subr.mxu0 0.0
      %2621 = vmatpush1.xpose.msra.mxu0 0.0
      %2622 = vmatprep.subr.mxu0 0.0
      %2623 = vmatpush1.xpose.msra.mxu0 0.0
      %2624 = vmatprep.subr.mxu0 0.0
      %2625 = vmatpush1.xpose.msra.mxu0 0.0
      %2626 = vmatprep.subr.mxu0 0.0
      %2627 = vmatpush1.xpose.msra.mxu0 0.0
      %2628 = vmatprep.subr.mxu0 0.0
      %2629 = vmatpush1.xpose.msra.mxu0 0.0
      %2630 = vmatprep.subr.mxu0 0.0
      %2631 = vmatpush1.xpose.msra.mxu0 0.0
      %2632 = vmatprep.subr.mxu0 0.0
      %2633 = vmatpush1.xpose.msra.mxu0 0.0
      %2634 = vmatprep.subr.mxu0 0.0
      %2635 = vmatpush1.xpose.msra.mxu0 0.0
      %2636 = vmatprep.subr.mxu0 0.0
      %2637 = vmatpush1.xpose.msra.mxu0 0.0
      %2638 = vmatprep.subr.mxu0 0.0
      %2639 = vmatpush1.xpose.msra.mxu0 0.0
      %2640 = vmatprep.subr.mxu0 0.0
      %2641 = vmatpush1.xpose.msra.mxu0 0.0
      %2642 = vmatprep.subr.mxu0 0.0
      %2643 = vmatpush1.xpose.msra.mxu0 0.0
      %2644 = vmatprep.subr.mxu0 0.0
      %2645 = vmatpush1.xpose.msra.mxu0 0.0
      %2646 = vmatprep.subr.mxu0 0.0
      %2647 = vmatpush1.xpose.msra.mxu0 0.0
      %2648 = vmatprep.subr.mxu0 0.0
      %2649 = vmatpush1.xpose.msra.mxu0 0.0
      %2650 = vmatprep.subr.mxu0 0.0
      %2651 = vmatpush1.xpose.msra.mxu0 0.0
      %2652 = vmatprep.subr.mxu0 0.0
      %2653 = vmatpush1.xpose.msra.mxu0 0.0
      %2654 = vmatprep.subr.mxu0 0.0
      %2655 = vmatpush1.xpose.msra.mxu0 0.0
      %2656 = vmatprep.subr.mxu0 0.0
      %2657 = vmatpush1.xpose.msra.mxu0 0.0
      %2658 = vmatprep.subr.mxu0 0.0
      %2659 = vmatpush1.xpose.msra.mxu0 0.0
      %2660 = vmatprep.subr.mxu0 0.0
      %2661 = vmatpush1.xpose.msra.mxu0 0.0
      %2662 = vmatprep.subr.mxu0 0.0
      %2663 = vmatpush1.xpose.msra.mxu0 0.0
      %2664 = vmatprep.subr.mxu0 0.0
      %2665 = vmatpush1.xpose.msra.mxu0 0.0
      %2666 = vmatprep.subr.mxu0 0.0
      %2667 = vmatpush1.xpose.msra.mxu0 0.0
      %2668 = vmatprep.subr.mxu0 0.0
      %2669 = vmatpush1.xpose.msra.mxu0 0.0
      %2670 = vmatprep.subr.mxu0 0.0
      %2671 = vmatpush1.xpose.msra.mxu0 0.0
      %2672 = vmatprep.subr.mxu0 0.0
      %2673 = vmatpush1.xpose.msra.mxu0 0.0
      %2674 = vmatprep.subr.mxu0 0.0
      %2675 = vmatpush1.xpose.msra.mxu0 0.0
      %2676 = vmatprep.subr.mxu0 0.0
      %2677 = vmatpush1.xpose.msra.mxu0 0.0
      %2678 = vmatprep.mubr.f32.mxu0 0.0
      %2679 = vmatmul.mubr.f32.gmra.mrb[0].mxu0 %v2606
      %v2680 = vpop.f32.mrb[0].mxu0
      %v2681 = vadd.f32 %v2596, %v2680
      %v2682 = vpop.f32.mrb[0].mxu0
      %2683 = vmatprep.mubr.f32.mxu0 0.0
      %2684 = vmatmul.mubr.f32.gmra.mrb[0].mxu0 %v2608
      %v2685 = vpop.f32.mrb[0].mxu0
      %v2686 = vadd.f32 %v2597, %v2685
      %v2687 = vpop.f32.mrb[0].mxu0
      %2688 = vdwg.mxu0
      %2689 = vrot.lane.b32.xlu0 %v692, 112
      %v2690 = vpop.permute.xlu0 %2689
      %2691 = vrot.lane.b32.xlu0 %v693, 112
      %v2692 = vpop.permute.xlu0 %2691
      %2693 = vrot.lane.b32.xlu0 %v658, 80
      %v2694 = vpop.permute.xlu0 %2693
      %2695 = vrot.lane.b32.xlu0 %v663, 80
      %v2696 = vpop.permute.xlu0 %2695
      %v2697 = vsel %vm706, %v2690, 0
      %v2699 = vsel %vm706, %v2692, 0
      %v2701 = vsel %vm706, %v2694, 0
      %v2703 = vsel %vm706, %v2696, 0
      %2705 = vmatprep.subr.mxu0 0.0
      %2706 = vmatpush1.xpose.msra.mxu0 %v2701
      %2707 = vmatprep.subr.mxu0 0.0
      %2708 = vmatpush1.xpose.msra.mxu0 %v2703
      %2709 = vmatprep.subr.mxu0 0.0
      %2710 = vmatpush1.xpose.msra.mxu0 0.0
      %2711 = vmatprep.subr.mxu0 0.0
      %2712 = vmatpush1.xpose.msra.mxu0 0.0
      %2713 = vmatprep.subr.mxu0 0.0
      %2714 = vmatpush1.xpose.msra.mxu0 0.0
      %2715 = vmatprep.subr.mxu0 0.0
      %2716 = vmatpush1.xpose.msra.mxu0 0.0
      %2717 = vmatprep.subr.mxu0 0.0
      %2718 = vmatpush1.xpose.msra.mxu0 0.0
      %2719 = vmatprep.subr.mxu0 0.0
      %2720 = vmatpush1.xpose.msra.mxu0 0.0
      %2721 = vmatprep.subr.mxu0 0.0
      %2722 = vmatpush1.xpose.msra.mxu0 0.0
      %2723 = vmatprep.subr.mxu0 0.0
      %2724 = vmatpush1.xpose.msra.mxu0 0.0
      %2725 = vmatprep.subr.mxu0 0.0
      %2726 = vmatpush1.xpose.msra.mxu0 0.0
      %2727 = vmatprep.subr.mxu0 0.0
      %2728 = vmatpush1.xpose.msra.mxu0 0.0
      %2729 = vmatprep.subr.mxu0 0.0
      %2730 = vmatpush1.xpose.msra.mxu0 0.0
      %2731 = vmatprep.subr.mxu0 0.0
      %2732 = vmatpush1.xpose.msra.mxu0 0.0
      %2733 = vmatprep.subr.mxu0 0.0
      %2734 = vmatpush1.xpose.msra.mxu0 0.0
      %2735 = vmatprep.subr.mxu0 0.0
      %2736 = vmatpush1.xpose.msra.mxu0 0.0
      %2737 = vmatprep.subr.mxu0 0.0
      %2738 = vmatpush1.xpose.msra.mxu0 0.0
      %2739 = vmatprep.subr.mxu0 0.0
      %2740 = vmatpush1.xpose.msra.mxu0 0.0
      %2741 = vmatprep.subr.mxu0 0.0
      %2742 = vmatpush1.xpose.msra.mxu0 0.0
      %2743 = vmatprep.subr.mxu0 0.0
      %2744 = vmatpush1.xpose.msra.mxu0 0.0
      %2745 = vmatprep.subr.mxu0 0.0
      %2746 = vmatpush1.xpose.msra.mxu0 0.0
      %2747 = vmatprep.subr.mxu0 0.0
      %2748 = vmatpush1.xpose.msra.mxu0 0.0
      %2749 = vmatprep.subr.mxu0 0.0
      %2750 = vmatpush1.xpose.msra.mxu0 0.0
      %2751 = vmatprep.subr.mxu0 0.0
      %2752 = vmatpush1.xpose.msra.mxu0 0.0
      %2753 = vmatprep.subr.mxu0 0.0
      %2754 = vmatpush1.xpose.msra.mxu0 0.0
      %2755 = vmatprep.subr.mxu0 0.0
      %2756 = vmatpush1.xpose.msra.mxu0 0.0
      %2757 = vmatprep.subr.mxu0 0.0
      %2758 = vmatpush1.xpose.msra.mxu0 0.0
      %2759 = vmatprep.subr.mxu0 0.0
      %2760 = vmatpush1.xpose.msra.mxu0 0.0
      %2761 = vmatprep.subr.mxu0 0.0
      %2762 = vmatpush1.xpose.msra.mxu0 0.0
      %2763 = vmatprep.subr.mxu0 0.0
      %2764 = vmatpush1.xpose.msra.mxu0 0.0
      %2765 = vmatprep.subr.mxu0 0.0
      %2766 = vmatpush1.xpose.msra.mxu0 0.0
      %2767 = vmatprep.subr.mxu0 0.0
      %2768 = vmatpush1.xpose.msra.mxu0 0.0
      %2769 = vmatprep.mubr.f32.mxu0 0.0
      %2770 = vmatmul.mubr.f32.gmra.mrb[0].mxu0 %v2697
      %v2771 = vpop.f32.mrb[0].mxu0
      %v2772 = vadd.f32 %v2596, %v2771
      %v2773 = vpop.f32.mrb[0].mxu0
      %2774 = vmatprep.mubr.f32.mxu0 0.0
      %2775 = vmatmul.mubr.f32.gmra.mrb[0].mxu0 %v2699
      %v2776 = vpop.f32.mrb[0].mxu0
      %v2777 = vadd.f32 %v2597, %v2776
      %v2778 = vpop.f32.mrb[0].mxu0
      %2779 = vdwg.mxu0
      %2780 = vrot.lane.b32.xlu0 %v694, 112
      %v2781 = vpop.permute.xlu0 %2780
      %2782 = vrot.lane.b32.xlu0 %v695, 112
      %v2783 = vpop.permute.xlu0 %2782
      %2784 = vrot.lane.b32.xlu0 %v668, 80
      %v2785 = vpop.permute.xlu0 %2784
      %2786 = vrot.lane.b32.xlu0 %v673, 80
      %v2787 = vpop.permute.xlu0 %2786
      %v2788 = vsel %vm706, %v2781, 0
      %v2790 = vsel %vm706, %v2783, 0
      %v2792 = vsel %vm706, %v2785, 0
      %v2794 = vsel %vm706, %v2787, 0
      %2796 = vmatprep.subr.mxu0 0.0
      %2797 = vmatpush1.xpose.msra.mxu0 %v2792
      %2798 = vmatprep.subr.mxu0 0.0
      %2799 = vmatpush1.xpose.msra.mxu0 %v2794
      %2800 = vmatprep.subr.mxu0 0.0
      %2801 = vmatpush1.xpose.msra.mxu0 0.0
      %2802 = vmatprep.subr.mxu0 0.0
      %2803 = vmatpush1.xpose.msra.mxu0 0.0
      %2804 = vmatprep.subr.mxu0 0.0
      %2805 = vmatpush1.xpose.msra.mxu0 0.0
      %2806 = vmatprep.subr.mxu0 0.0
      %2807 = vmatpush1.xpose.msra.mxu0 0.0
      %2808 = vmatprep.subr.mxu0 0.0
      %2809 = vmatpush1.xpose.msra.mxu0 0.0
      %2810 = vmatprep.subr.mxu0 0.0
      %2811 = vmatpush1.xpose.msra.mxu0 0.0
      %2812 = vmatprep.subr.mxu0 0.0
      %2813 = vmatpush1.xpose.msra.mxu0 0.0
      %2814 = vmatprep.subr.mxu0 0.0
      %2815 = vmatpush1.xpose.msra.mxu0 0.0
      %2816 = vmatprep.subr.mxu0 0.0
      %2817 = vmatpush1.xpose.msra.mxu0 0.0
      %2818 = vmatprep.subr.mxu0 0.0
      %2819 = vmatpush1.xpose.msra.mxu0 0.0
      %2820 = vmatprep.subr.mxu0 0.0
      %2821 = vmatpush1.xpose.msra.mxu0 0.0
      %2822 = vmatprep.subr.mxu0 0.0
      %2823 = vmatpush1.xpose.msra.mxu0 0.0
      %2824 = vmatprep.subr.mxu0 0.0
      %2825 = vmatpush1.xpose.msra.mxu0 0.0
      %2826 = vmatprep.subr.mxu0 0.0
      %2827 = vmatpush1.xpose.msra.mxu0 0.0
      %2828 = vmatprep.subr.mxu0 0.0
      %2829 = vmatpush1.xpose.msra.mxu0 0.0
      %2830 = vmatprep.subr.mxu0 0.0
      %2831 = vmatpush1.xpose.msra.mxu0 0.0
      %2832 = vmatprep.subr.mxu0 0.0
      %2833 = vmatpush1.xpose.msra.mxu0 0.0
      %2834 = vmatprep.subr.mxu0 0.0
      %2835 = vmatpush1.xpose.msra.mxu0 0.0
      %2836 = vmatprep.subr.mxu0 0.0
      %2837 = vmatpush1.xpose.msra.mxu0 0.0
      %2838 = vmatprep.subr.mxu0 0.0
      %2839 = vmatpush1.xpose.msra.mxu0 0.0
      %2840 = vmatprep.subr.mxu0 0.0
      %2841 = vmatpush1.xpose.msra.mxu0 0.0
      %2842 = vmatprep.subr.mxu0 0.0
      %2843 = vmatpush1.xpose.msra.mxu0 0.0
      %2844 = vmatprep.subr.mxu0 0.0
      %2845 = vmatpush1.xpose.msra.mxu0 0.0
      %2846 = vmatprep.subr.mxu0 0.0
      %2847 = vmatpush1.xpose.msra.mxu0 0.0
      %2848 = vmatprep.subr.mxu0 0.0
      %2849 = vmatpush1.xpose.msra.mxu0 0.0
      %2850 = vmatprep.subr.mxu0 0.0
      %2851 = vmatpush1.xpose.msra.mxu0 0.0
      %2852 = vmatprep.subr.mxu0 0.0
      %2853 = vmatpush1.xpose.msra.mxu0 0.0
      %2854 = vmatprep.subr.mxu0 0.0
      %2855 = vmatpush1.xpose.msra.mxu0 0.0
      %2856 = vmatprep.subr.mxu0 0.0
      %2857 = vmatpush1.xpose.msra.mxu0 0.0
      %2858 = vmatprep.subr.mxu0 0.0
      %2859 = vmatpush1.xpose.msra.mxu0 0.0
      %2860 = vmatprep.mubr.f32.mxu0 0.0
      %2861 = vmatmul.mubr.f32.gmra.mrb[0].mxu0 %v2788
      %v2862 = vpop.f32.mrb[0].mxu0
      %v2863 = vadd.f32 %v2596, %v2862
      %v2864 = vpop.f32.mrb[0].mxu0
      %2865 = vmatprep.mubr.f32.mxu0 0.0
      %2866 = vmatmul.mubr.f32.gmra.mrb[0].mxu0 %v2790
      %v2867 = vpop.f32.mrb[0].mxu0
      %v2868 = vadd.f32 %v2597, %v2867
      %v2869 = vpop.f32.mrb[0].mxu0
      %2870 = vdwg.mxu0
      %2871 = vrot.lane.b32.xlu0 %v696, 112
      %v2872 = vpop.permute.xlu0 %2871
      %2873 = vrot.lane.b32.xlu0 %v697, 112
      %v2874 = vpop.permute.xlu0 %2873
      %2875 = vrot.lane.b32.xlu0 %v678, 80
      %v2876 = vpop.permute.xlu0 %2875
      %2877 = vrot.lane.b32.xlu0 %v683, 80
      %v2878 = vpop.permute.xlu0 %2877
      %v2879 = vsel %vm706, %v2872, 0
      %v2881 = vsel %vm706, %v2874, 0
      %v2883 = vsel %vm706, %v2876, 0
      %v2885 = vsel %vm706, %v2878, 0
      %2887 = vmatprep.subr.mxu0 0.0
      %2888 = vmatpush1.xpose.msra.mxu0 %v2883
      %2889 = vmatprep.subr.mxu0 0.0
      %2890 = vmatpush1.xpose.msra.mxu0 %v2885
      %2891 = vmatprep.subr.mxu0 0.0
      %2892 = vmatpush1.xpose.msra.mxu0 0.0
      %2893 = vmatprep.subr.mxu0 0.0
      %2894 = vmatpush1.xpose.msra.mxu0 0.0
      %2895 = vmatprep.subr.mxu0 0.0
      %2896 = vmatpush1.xpose.msra.mxu0 0.0
      %2897 = vmatprep.subr.mxu0 0.0
      %2898 = vmatpush1.xpose.msra.mxu0 0.0
      %2899 = vmatprep.subr.mxu0 0.0
      %2900 = vmatpush1.xpose.msra.mxu0 0.0
      %2901 = vmatprep.subr.mxu0 0.0
      %2902 = vmatpush1.xpose.msra.mxu0 0.0
      %2903 = vmatprep.subr.mxu0 0.0
      %2904 = vmatpush1.xpose.msra.mxu0 0.0
      %2905 = vmatprep.subr.mxu0 0.0
      %2906 = vmatpush1.xpose.msra.mxu0 0.0
      %2907 = vmatprep.subr.mxu0 0.0
      %2908 = vmatpush1.xpose.msra.mxu0 0.0
      %2909 = vmatprep.subr.mxu0 0.0
      %2910 = vmatpush1.xpose.msra.mxu0 0.0
      %2911 = vmatprep.subr.mxu0 0.0
      %2912 = vmatpush1.xpose.msra.mxu0 0.0
      %2913 = vmatprep.subr.mxu0 0.0
      %2914 = vmatpush1.xpose.msra.mxu0 0.0
      %2915 = vmatprep.subr.mxu0 0.0
      %2916 = vmatpush1.xpose.msra.mxu0 0.0
      %2917 = vmatprep.subr.mxu0 0.0
      %2918 = vmatpush1.xpose.msra.mxu0 0.0
      %2919 = vmatprep.subr.mxu0 0.0
      %2920 = vmatpush1.xpose.msra.mxu0 0.0
      %2921 = vmatprep.subr.mxu0 0.0
      %2922 = vmatpush1.xpose.msra.mxu0 0.0
      %2923 = vmatprep.subr.mxu0 0.0
      %2924 = vmatpush1.xpose.msra.mxu0 0.0
      %2925 = vmatprep.subr.mxu0 0.0
      %2926 = vmatpush1.xpose.msra.mxu0 0.0
      %2927 = vmatprep.subr.mxu0 0.0
      %2928 = vmatpush1.xpose.msra.mxu0 0.0
      %2929 = vmatprep.subr.mxu0 0.0
      %2930 = vmatpush1.xpose.msra.mxu0 0.0
      %2931 = vmatprep.subr.mxu0 0.0
      %2932 = vmatpush1.xpose.msra.mxu0 0.0
      %2933 = vmatprep.subr.mxu0 0.0
      %2934 = vmatpush1.xpose.msra.mxu0 0.0
      %2935 = vmatprep.subr.mxu0 0.0
      %2936 = vmatpush1.xpose.msra.mxu0 0.0
      %2937 = vmatprep.subr.mxu0 0.0
      %2938 = vmatpush1.xpose.msra.mxu0 0.0
      %2939 = vmatprep.subr.mxu0 0.0
      %2940 = vmatpush1.xpose.msra.mxu0 0.0
      %2941 = vmatprep.subr.mxu0 0.0
      %2942 = vmatpush1.xpose.msra.mxu0 0.0
      %2943 = vmatprep.subr.mxu0 0.0
      %2944 = vmatpush1.xpose.msra.mxu0 0.0
      %2945 = vmatprep.subr.mxu0 0.0
      %2946 = vmatpush1.xpose.msra.mxu0 0.0
      %2947 = vmatprep.subr.mxu0 0.0
      %2948 = vmatpush1.xpose.msra.mxu0 0.0
      %2949 = vmatprep.subr.mxu0 0.0
      %2950 = vmatpush1.xpose.msra.mxu0 0.0
      %2951 = vmatprep.mubr.f32.mxu0 0.0
      %2952 = vmatmul.mubr.f32.gmra.mrb[0].mxu0 %v2879
      %v2953 = vpop.f32.mrb[0].mxu0
      %v2954 = vadd.f32 %v2596, %v2953
      %v2955 = vpop.f32.mrb[0].mxu0
      %2956 = vmatprep.mubr.f32.mxu0 0.0
      %2957 = vmatmul.mubr.f32.gmra.mrb[0].mxu0 %v2881
      %v2958 = vpop.f32.mrb[0].mxu0
      %v2959 = vadd.f32 %v2597, %v2958
      %v2960 = vpop.f32.mrb[0].mxu0
      %2961 = vdwg.mxu0
      %v2962 = vld [vmem:[%s389] sm:$0xff]
      %v2963 = vld [vmem:[%s389 + $0x8] sm:$0xff]
      %v2964 = vld [vmem:[%s389 + $0x10] sm:$0xff]
      %v2965 = vld [vmem:[%s389 + $0x18] sm:$0xff]
      %v2966 = vld [vmem:[%s389 + $0x20] sm:$0xff]
      %v2967 = vld [vmem:[%s389 + $0x28] sm:$0xff]
      %v2968 = vld [vmem:[%s389 + $0x30] sm:$0xff]
      %v2969 = vld [vmem:[%s389 + $0x38] sm:$0xff]
      %v2970 = vadd.f32 %v2681, %v2962
      %v2971 = vadd.f32 %v2686, %v2963
      %v2972 = vadd.f32 %v2772, %v2964
      %v2973 = vadd.f32 %v2777, %v2965
      %v2974 = vadd.f32 %v2863, %v2966
      %v2975 = vadd.f32 %v2868, %v2967
      %v2976 = vadd.f32 %v2954, %v2968
      %v2977 = vadd.f32 %v2959, %v2969
      %v2978 = vsel %vm1081, %v2970, -inf
      %2979 = vmax.xlane.f32.xlu0 %v2978
      %v2980 = vpop.xlane.xlu0 %2979
      %v2981 = vsel %vm1081, %v2971, -inf
      %2982 = vmax.xlane.f32.xlu0 %v2981
      %v2983 = vpop.xlane.xlu0 %2982
      %v2984 = vsel %vm1081, %v2972, -inf
      %2985 = vmax.xlane.f32.xlu0 %v2984
      %v2986 = vpop.xlane.xlu0 %2985
      %v2987 = vsel %vm1081, %v2973, -inf
      %2988 = vmax.xlane.f32.xlu0 %v2987
      %v2989 = vpop.xlane.xlu0 %2988
      %v2990 = vsel %vm1081, %v2974, -inf
      %2991 = vmax.xlane.f32.xlu0 %v2990
      %v2992 = vpop.xlane.xlu0 %2991
      %v2993 = vsel %vm1081, %v2975, -inf
      %2994 = vmax.xlane.f32.xlu0 %v2993
      %v2995 = vpop.xlane.xlu0 %2994
      %v2996 = vsel %vm1081, %v2976, -inf
      %2997 = vmax.xlane.f32.xlu0 %v2996
      %v2998 = vpop.xlane.xlu0 %2997
      %v2999 = vsel %vm1081, %v2977, -inf
      %3000 = vmax.xlane.f32.xlu0 %v2999
      %v3001 = vpop.xlane.xlu0 %3000
      %v3002 = vsub.f32 %v2970, %v2980
      %v3003 = vsub.f32 %v2971, %v2983
      %v3004 = vsub.f32 %v2972, %v2986
      %v3005 = vsub.f32 %v2973, %v2989
      %v3006 = vsub.f32 %v2974, %v2992
      %v3007 = vsub.f32 %v2975, %v2995
      %v3008 = vsub.f32 %v2976, %v2998
      %v3009 = vsub.f32 %v2977, %v3001
      %v3010 = vmul.f32 %v3002, 1.442695
      %v3011 = vpow.pop %v3010
      %v3012 = vmul.f32 %v3003, 1.442695
      %v3013 = vpow.pop %v3012
      %v3014 = vmul.f32 %v3004, 1.442695
      %v3015 = vpow.pop %v3014
      %v3016 = vmul.f32 %v3005, 1.442695
      %v3017 = vpow.pop %v3016
      %v3018 = vmul.f32 %v3006, 1.442695
      %v3019 = vpow.pop %v3018
      %v3020 = vmul.f32 %v3007, 1.442695
      %v3021 = vpow.pop %v3020
      %v3022 = vmul.f32 %v3008, 1.442695
      %v3023 = vpow.pop %v3022
      %v3024 = vmul.f32 %v3009, 1.442695
      %v3025 = vpow.pop %v3024
      %v3026 = vsel %vm1081, %v3011, 0.0
      %3027 = vadd.xlane.f32.xlu0 %v3026
      %v3028 = vpop.xlane.xlu0 %3027
      %v3029 = vsel %vm1081, %v3013, 0.0
      %3030 = vadd.xlane.f32.xlu0 %v3029
      %v3031 = vpop.xlane.xlu0 %3030
      %v3032 = vsel %vm1081, %v3015, 0.0
      %3033 = vadd.xlane.f32.xlu0 %v3032
      %v3034 = vpop.xlane.xlu0 %3033
      %v3035 = vsel %vm1081, %v3017, 0.0
      %3036 = vadd.xlane.f32.xlu0 %v3035
      %v3037 = vpop.xlane.xlu0 %3036
      %v3038 = vsel %vm1081, %v3019, 0.0
      %3039 = vadd.xlane.f32.xlu0 %v3038
      %v3040 = vpop.xlane.xlu0 %3039
      %v3041 = vsel %vm1081, %v3021, 0.0
      %3042 = vadd.xlane.f32.xlu0 %v3041
      %v3043 = vpop.xlane.xlu0 %3042
      %v3044 = vsel %vm1081, %v3023, 0.0
      %3045 = vadd.xlane.f32.xlu0 %v3044
      %v3046 = vpop.xlane.xlu0 %3045
      %v3047 = vsel %vm1081, %v3025, 0.0
      %3048 = vadd.xlane.f32.xlu0 %v3047
      %v3049 = vpop.xlane.xlu0 %3048
      %v3050 = vrcp.pop %v3028
      %v3051 = vmul.f32 %v3011, %v3050
      %v3052 = vrcp.pop %v3031
      %v3053 = vmul.f32 %v3013, %v3052
      %v3054 = vrcp.pop %v3034
      %v3055 = vmul.f32 %v3015, %v3054
      %v3056 = vrcp.pop %v3037
      %v3057 = vmul.f32 %v3017, %v3056
      %v3058 = vrcp.pop %v3040
      %v3059 = vmul.f32 %v3019, %v3058
      %v3060 = vrcp.pop %v3043
      %v3061 = vmul.f32 %v3021, %v3060
      %v3062 = vrcp.pop %v3046
      %v3063 = vmul.f32 %v3023, %v3062
      %v3064 = vrcp.pop %v3049
      %v3065 = vmul.f32 %v3025, %v3064
      %3066 = vrot.lane.b32.xlu0 %v648, 48
      %v3067 = vpop.permute.xlu0 %3066
      %3068 = vrot.lane.b32.xlu0 %v653, 48
      %v3069 = vpop.permute.xlu0 %3068
      %v3073 = vsel %vm1081, %v3051, 0
      %v3076 = vsel %vm1081, %v3053, 0
      %3078 = vmatprep.subr.mxu0 0.0
      %3079 = vmatpush1.msra.mxu0 %v3067
      %3080 = vmatprep.subr.mxu0 0.0
      %3081 = vmatpush1.msra.mxu0 %v3069
      %3082 = vmatprep.subr.mxu0 0.0
      %3083 = vmatpush1.msra.mxu0 0.0
      %3084 = vmatprep.subr.mxu0 0.0
      %3085 = vmatpush1.msra.mxu0 0.0
      %3086 = vmatprep.subr.mxu0 0.0
      %3087 = vmatpush1.msra.mxu0 0.0
      %3088 = vmatprep.subr.mxu0 0.0
      %3089 = vmatpush1.msra.mxu0 0.0
      %3090 = vmatprep.subr.mxu0 0.0
      %3091 = vmatpush1.msra.mxu0 0.0
      %3092 = vmatprep.subr.mxu0 0.0
      %3093 = vmatpush1.msra.mxu0 0.0
      %3094 = vmatprep.subr.mxu0 0.0
      %3095 = vmatpush1.msra.mxu0 0.0
      %3096 = vmatprep.subr.mxu0 0.0
      %3097 = vmatpush1.msra.mxu0 0.0
      %3098 = vmatprep.subr.mxu0 0.0
      %3099 = vmatpush1.msra.mxu0 0.0
      %3100 = vmatprep.subr.mxu0 0.0
      %3101 = vmatpush1.msra.mxu0 0.0
      %3102 = vmatprep.subr.mxu0 0.0
      %3103 = vmatpush1.msra.mxu0 0.0
      %3104 = vmatprep.subr.mxu0 0.0
      %3105 = vmatpush1.msra.mxu0 0.0
      %3106 = vmatprep.subr.mxu0 0.0
      %3107 = vmatpush1.msra.mxu0 0.0
      %3108 = vmatprep.subr.mxu0 0.0
      %3109 = vmatpush1.msra.mxu0 0.0
      %3110 = vmatprep.subr.mxu0 0.0
      %3111 = vmatpush1.msra.mxu0 0.0
      %3112 = vmatprep.subr.mxu0 0.0
      %3113 = vmatpush1.msra.mxu0 0.0
      %3114 = vmatprep.subr.mxu0 0.0
      %3115 = vmatpush1.msra.mxu0 0.0
      %3116 = vmatprep.subr.mxu0 0.0
      %3117 = vmatpush1.msra.mxu0 0.0
      %3118 = vmatprep.subr.mxu0 0.0
      %3119 = vmatpush1.msra.mxu0 0.0
      %3120 = vmatprep.subr.mxu0 0.0
      %3121 = vmatpush1.msra.mxu0 0.0
      %3122 = vmatprep.subr.mxu0 0.0
      %3123 = vmatpush1.msra.mxu0 0.0
      %3124 = vmatprep.subr.mxu0 0.0
      %3125 = vmatpush1.msra.mxu0 0.0
      %3126 = vmatprep.subr.mxu0 0.0
      %3127 = vmatpush1.msra.mxu0 0.0
      %3128 = vmatprep.subr.mxu0 0.0
      %3129 = vmatpush1.msra.mxu0 0.0
      %3130 = vmatprep.subr.mxu0 0.0
      %3131 = vmatpush1.msra.mxu0 0.0
      %3132 = vmatprep.subr.mxu0 0.0
      %3133 = vmatpush1.msra.mxu0 0.0
      %3134 = vmatprep.subr.mxu0 0.0
      %3135 = vmatpush1.msra.mxu0 0.0
      %3136 = vmatprep.subr.mxu0 0.0
      %3137 = vmatpush1.msra.mxu0 0.0
      %3138 = vmatprep.subr.mxu0 0.0
      %3139 = vmatpush1.msra.mxu0 0.0
      %3140 = vmatprep.subr.mxu0 0.0
      %3141 = vmatpush1.msra.mxu0 0.0
      %3142 = vmatprep.mubr.f32.mxu0 0.0
      %3143 = vmatmul.mubr.f32.gmra.mrb[0].mxu0 %v3073
      %v3144 = vpop.f32.mrb[0].mxu0
      %v3145 = vadd.f32 0.0, %v3144
      %v3146 = vpop.f32.mrb[0].mxu0
      %3147 = vmatprep.mubr.f32.mxu0 0.0
      %3148 = vmatmul.mubr.f32.gmra.mrb[0].mxu0 %v3076
      %v3149 = vpop.f32.mrb[0].mxu0
      %v3150 = vadd.f32 0.0, %v3149
      %v3151 = vpop.f32.mrb[0].mxu0
      %3152 = vdwg.mxu0
      %3153 = vrot.lane.b32.xlu0 %v658, 48
      %v3154 = vpop.permute.xlu0 %3153
      %3155 = vrot.lane.b32.xlu0 %v663, 48
      %v3156 = vpop.permute.xlu0 %3155
      %v3160 = vsel %vm1081, %v3055, 0
      %v3163 = vsel %vm1081, %v3057, 0
      %3165 = vmatprep.subr.mxu0 0.0
      %3166 = vmatpush1.msra.mxu0 %v3154
      %3167 = vmatprep.subr.mxu0 0.0
      %3168 = vmatpush1.msra.mxu0 %v3156
      %3169 = vmatprep.subr.mxu0 0.0
      %3170 = vmatpush1.msra.mxu0 0.0
      %3171 = vmatprep.subr.mxu0 0.0
      %3172 = vmatpush1.msra.mxu0 0.0
      %3173 = vmatprep.subr.mxu0 0.0
      %3174 = vmatpush1.msra.mxu0 0.0
      %3175 = vmatprep.subr.mxu0 0.0
      %3176 = vmatpush1.msra.mxu0 0.0
      %3177 = vmatprep.subr.mxu0 0.0
      %3178 = vmatpush1.msra.mxu0 0.0
      %3179 = vmatprep.subr.mxu0 0.0
      %3180 = vmatpush1.msra.mxu0 0.0
      %3181 = vmatprep.subr.mxu0 0.0
      %3182 = vmatpush1.msra.mxu0 0.0
      %3183 = vmatprep.subr.mxu0 0.0
      %3184 = vmatpush1.msra.mxu0 0.0
      %3185 = vmatprep.subr.mxu0 0.0
      %3186 = vmatpush1.msra.mxu0 0.0
      %3187 = vmatprep.subr.mxu0 0.0
      %3188 = vmatpush1.msra.mxu0 0.0
      %3189 = vmatprep.subr.mxu0 0.0
      %3190 = vmatpush1.msra.mxu0 0.0
      %3191 = vmatprep.subr.mxu0 0.0
      %3192 = vmatpush1.msra.mxu0 0.0
      %3193 = vmatprep.subr.mxu0 0.0
      %3194 = vmatpush1.msra.mxu0 0.0
      %3195 = vmatprep.subr.mxu0 0.0
      %3196 = vmatpush1.msra.mxu0 0.0
      %3197 = vmatprep.subr.mxu0 0.0
      %3198 = vmatpush1.msra.mxu0 0.0
      %3199 = vmatprep.subr.mxu0 0.0
      %3200 = vmatpush1.msra.mxu0 0.0
      %3201 = vmatprep.subr.mxu0 0.0
      %3202 = vmatpush1.msra.mxu0 0.0
      %3203 = vmatprep.subr.mxu0 0.0
      %3204 = vmatpush1.msra.mxu0 0.0
      %3205 = vmatprep.subr.mxu0 0.0
      %3206 = vmatpush1.msra.mxu0 0.0
      %3207 = vmatprep.subr.mxu0 0.0
      %3208 = vmatpush1.msra.mxu0 0.0
      %3209 = vmatprep.subr.mxu0 0.0
      %3210 = vmatpush1.msra.mxu0 0.0
      %3211 = vmatprep.subr.mxu0 0.0
      %3212 = vmatpush1.msra.mxu0 0.0
      %3213 = vmatprep.subr.mxu0 0.0
      %3214 = vmatpush1.msra.mxu0 0.0
      %3215 = vmatprep.subr.mxu0 0.0
      %3216 = vmatpush1.msra.mxu0 0.0
      %3217 = vmatprep.subr.mxu0 0.0
      %3218 = vmatpush1.msra.mxu0 0.0
      %3219 = vmatprep.subr.mxu0 0.0
      %3220 = vmatpush1.msra.mxu0 0.0
      %3221 = vmatprep.subr.mxu0 0.0
      %3222 = vmatpush1.msra.mxu0 0.0
      %3223 = vmatprep.subr.mxu0 0.0
      %3224 = vmatpush1.msra.mxu0 0.0
      %3225 = vmatprep.subr.mxu0 0.0
      %3226 = vmatpush1.msra.mxu0 0.0
      %3227 = vmatprep.subr.mxu0 0.0
      %3228 = vmatpush1.msra.mxu0 0.0
      %3229 = vmatprep.mubr.f32.mxu0 0.0
      %3230 = vmatmul.mubr.f32.gmra.mrb[0].mxu0 %v3160
      %v3231 = vpop.f32.mrb[0].mxu0
      %v3232 = vadd.f32 0.0, %v3231
      %v3233 = vpop.f32.mrb[0].mxu0
      %3234 = vmatprep.mubr.f32.mxu0 0.0
      %3235 = vmatmul.mubr.f32.gmra.mrb[0].mxu0 %v3163
      %v3236 = vpop.f32.mrb[0].mxu0
      %v3237 = vadd.f32 0.0, %v3236
      %v3238 = vpop.f32.mrb[0].mxu0
      %3239 = vdwg.mxu0
      %3240 = vrot.lane.b32.xlu0 %v668, 48
      %v3241 = vpop.permute.xlu0 %3240
      %3242 = vrot.lane.b32.xlu0 %v673, 48
      %v3243 = vpop.permute.xlu0 %3242
      %v3247 = vsel %vm1081, %v3059, 0
      %v3250 = vsel %vm1081, %v3061, 0
      %3252 = vmatprep.subr.mxu0 0.0
      %3253 = vmatpush1.msra.mxu0 %v3241
      %3254 = vmatprep.subr.mxu0 0.0
      %3255 = vmatpush1.msra.mxu0 %v3243
      %3256 = vmatprep.subr.mxu0 0.0
      %3257 = vmatpush1.msra.mxu0 0.0
      %3258 = vmatprep.subr.mxu0 0.0
      %3259 = vmatpush1.msra.mxu0 0.0
      %3260 = vmatprep.subr.mxu0 0.0
      %3261 = vmatpush1.msra.mxu0 0.0
      %3262 = vmatprep.subr.mxu0 0.0
      %3263 = vmatpush1.msra.mxu0 0.0
      %3264 = vmatprep.subr.mxu0 0.0
      %3265 = vmatpush1.msra.mxu0 0.0
      %3266 = vmatprep.subr.mxu0 0.0
      %3267 = vmatpush1.msra.mxu0 0.0
      %3268 = vmatprep.subr.mxu0 0.0
      %3269 = vmatpush1.msra.mxu0 0.0
      %3270 = vmatprep.subr.mxu0 0.0
      %3271 = vmatpush1.msra.mxu0 0.0
      %3272 = vmatprep.subr.mxu0 0.0
      %3273 = vmatpush1.msra.mxu0 0.0
      %3274 = vmatprep.subr.mxu0 0.0
      %3275 = vmatpush1.msra.mxu0 0.0
      %3276 = vmatprep.subr.mxu0 0.0
      %3277 = vmatpush1.msra.mxu0 0.0
      %3278 = vmatprep.subr.mxu0 0.0
      %3279 = vmatpush1.msra.mxu0 0.0
      %3280 = vmatprep.subr.mxu0 0.0
      %3281 = vmatpush1.msra.mxu0 0.0
      %3282 = vmatprep.subr.mxu0 0.0
      %3283 = vmatpush1.msra.mxu0 0.0
      %3284 = vmatprep.subr.mxu0 0.0
      %3285 = vmatpush1.msra.mxu0 0.0
      %3286 = vmatprep.subr.mxu0 0.0
      %3287 = vmatpush1.msra.mxu0 0.0
      %3288 = vmatprep.subr.mxu0 0.0
      %3289 = vmatpush1.msra.mxu0 0.0
      %3290 = vmatprep.subr.mxu0 0.0
      %3291 = vmatpush1.msra.mxu0 0.0
      %3292 = vmatprep.subr.mxu0 0.0
      %3293 = vmatpush1.msra.mxu0 0.0
      %3294 = vmatprep.subr.mxu0 0.0
      %3295 = vmatpush1.msra.mxu0 0.0
      %3296 = vmatprep.subr.mxu0 0.0
      %3297 = vmatpush1.msra.mxu0 0.0
      %3298 = vmatprep.subr.mxu0 0.0
      %3299 = vmatpush1.msra.mxu0 0.0
      %3300 = vmatprep.subr.mxu0 0.0
      %3301 = vmatpush1.msra.mxu0 0.0
      %3302 = vmatprep.subr.mxu0 0.0
      %3303 = vmatpush1.msra.mxu0 0.0
      %3304 = vmatprep.subr.mxu0 0.0
      %3305 = vmatpush1.msra.mxu0 0.0
      %3306 = vmatprep.subr.mxu0 0.0
      %3307 = vmatpush1.msra.mxu0 0.0
      %3308 = vmatprep.subr.mxu0 0.0
      %3309 = vmatpush1.msra.mxu0 0.0
      %3310 = vmatprep.subr.mxu0 0.0
      %3311 = vmatpush1.msra.mxu0 0.0
      %3312 = vmatprep.subr.mxu0 0.0
      %3313 = vmatpush1.msra.mxu0 0.0
      %3314 = vmatprep.subr.mxu0 0.0
      %3315 = vmatpush1.msra.mxu0 0.0
      %3316 = vmatprep.mubr.f32.mxu0 0.0
      %3317 = vmatmul.mubr.f32.gmra.mrb[0].mxu0 %v3247
      %v3318 = vpop.f32.mrb[0].mxu0
      %v3319 = vadd.f32 0.0, %v3318
      %v3320 = vpop.f32.mrb[0].mxu0
      %3321 = vmatprep.mubr.f32.mxu0 0.0
      %3322 = vmatmul.mubr.f32.gmra.mrb[0].mxu0 %v3250
      %v3323 = vpop.f32.mrb[0].mxu0
      %v3324 = vadd.f32 0.0, %v3323
      %v3325 = vpop.f32.mrb[0].mxu0
      %3326 = vdwg.mxu0
      %3327 = vrot.lane.b32.xlu0 %v678, 48
      %v3328 = vpop.permute.xlu0 %3327
      %3329 = vrot.lane.b32.xlu0 %v683, 48
      %v3330 = vpop.permute.xlu0 %3329
      %v3334 = vsel %vm1081, %v3063, 0
      %v3337 = vsel %vm1081, %v3065, 0
      %3339 = vmatprep.subr.mxu0 0.0
      %3340 = vmatpush1.msra.mxu0 %v3328
      %3341 = vmatprep.subr.mxu0 0.0
      %3342 = vmatpush1.msra.mxu0 %v3330
      %3343 = vmatprep.subr.mxu0 0.0
      %3344 = vmatpush1.msra.mxu0 0.0
      %3345 = vmatprep.subr.mxu0 0.0
      %3346 = vmatpush1.msra.mxu0 0.0
      %3347 = vmatprep.subr.mxu0 0.0
      %3348 = vmatpush1.msra.mxu0 0.0
      %3349 = vmatprep.subr.mxu0 0.0
      %3350 = vmatpush1.msra.mxu0 0.0
      %3351 = vmatprep.subr.mxu0 0.0
      %3352 = vmatpush1.msra.mxu0 0.0
      %3353 = vmatprep.subr.mxu0 0.0
      %3354 = vmatpush1.msra.mxu0 0.0
      %3355 = vmatprep.subr.mxu0 0.0
      %3356 = vmatpush1.msra.mxu0 0.0
      %3357 = vmatprep.subr.mxu0 0.0
      %3358 = vmatpush1.msra.mxu0 0.0
      %3359 = vmatprep.subr.mxu0 0.0
      %3360 = vmatpush1.msra.mxu0 0.0
      %3361 = vmatprep.subr.mxu0 0.0
      %3362 = vmatpush1.msra.mxu0 0.0
      %3363 = vmatprep.subr.mxu0 0.0
      %3364 = vmatpush1.msra.mxu0 0.0
      %3365 = vmatprep.subr.mxu0 0.0
      %3366 = vmatpush1.msra.mxu0 0.0
      %3367 = vmatprep.subr.mxu0 0.0
      %3368 = vmatpush1.msra.mxu0 0.0
      %3369 = vmatprep.subr.mxu0 0.0
      %3370 = vmatpush1.msra.mxu0 0.0
      %3371 = vmatprep.subr.mxu0 0.0
      %3372 = vmatpush1.msra.mxu0 0.0
      %3373 = vmatprep.subr.mxu0 0.0
      %3374 = vmatpush1.msra.mxu0 0.0
      %3375 = vmatprep.subr.mxu0 0.0
      %3376 = vmatpush1.msra.mxu0 0.0
      %3377 = vmatprep.subr.mxu0 0.0
      %3378 = vmatpush1.msra.mxu0 0.0
      %3379 = vmatprep.subr.mxu0 0.0
      %3380 = vmatpush1.msra.mxu0 0.0
      %3381 = vmatprep.subr.mxu0 0.0
      %3382 = vmatpush1.msra.mxu0 0.0
      %3383 = vmatprep.subr.mxu0 0.0
      %3384 = vmatpush1.msra.mxu0 0.0
      %3385 = vmatprep.subr.mxu0 0.0
      %3386 = vmatpush1.msra.mxu0 0.0
      %3387 = vmatprep.subr.mxu0 0.0
      %3388 = vmatpush1.msra.mxu0 0.0
      %3389 = vmatprep.subr.mxu0 0.0
      %3390 = vmatpush1.msra.mxu0 0.0
      %3391 = vmatprep.subr.mxu0 0.0
      %3392 = vmatpush1.msra.mxu0 0.0
      %3393 = vmatprep.subr.mxu0 0.0
      %3394 = vmatpush1.msra.mxu0 0.0
      %3395 = vmatprep.subr.mxu0 0.0
      %3396 = vmatpush1.msra.mxu0 0.0
      %3397 = vmatprep.subr.mxu0 0.0
      %3398 = vmatpush1.msra.mxu0 0.0
      %3399 = vmatprep.subr.mxu0 0.0
      %3400 = vmatpush1.msra.mxu0 0.0
      %3401 = vmatprep.subr.mxu0 0.0
      %3402 = vmatpush1.msra.mxu0 0.0
      %3403 = vmatprep.mubr.f32.mxu0 0.0
      %3404 = vmatmul.mubr.f32.gmra.mrb[0].mxu0 %v3334
      %v3405 = vpop.f32.mrb[0].mxu0
      %v3406 = vadd.f32 0.0, %v3405
      %v3407 = vpop.f32.mrb[0].mxu0
      %3408 = vmatprep.mubr.f32.mxu0 0.0
      %3409 = vmatmul.mubr.f32.gmra.mrb[0].mxu0 %v3337
      %v3410 = vpop.f32.mrb[0].mxu0
      %v3411 = vadd.f32 0.0, %v3410
      %v3412 = vpop.f32.mrb[0].mxu0
      %3413 = vdwg.mxu0
      %v3415 = vsel %vm706, %v3145, 0
      %v3418 = vsel %vm706, %v3150, 0
      %v3421 = vsel %vm706, %v3232, 0
      %v3424 = vsel %vm706, %v3237, 0
      %v3427 = vsel %vm706, %v3319, 0
      %v3430 = vsel %vm706, %v3324, 0
      %v3433 = vsel %vm706, %v3406, 0
      %v3436 = vsel %vm706, %v3411, 0
      %3438 = vmatprep.subr.mxu0 0.0
      %3439 = vmatpush1.msra.mxu0 %v688
      %3440 = vmatprep.subr.mxu0 0.0
      %3441 = vmatpush1.msra.mxu0 0.0
      %3442 = vmatprep.subr.mxu0 0.0
      %3443 = vmatpush1.msra.mxu0 0.0
      %3444 = vmatprep.subr.mxu0 0.0
      %3445 = vmatpush1.msra.mxu0 0.0
      %3446 = vmatprep.subr.mxu0 0.0
      %3447 = vmatpush1.msra.mxu0 0.0
      %3448 = vmatprep.subr.mxu0 0.0
      %3449 = vmatpush1.msra.mxu0 0.0
      %3450 = vmatprep.subr.mxu0 0.0
      %3451 = vmatpush1.msra.mxu0 0.0
      %3452 = vmatprep.subr.mxu0 0.0
      %3453 = vmatpush1.msra.mxu0 0.0
      %3454 = vmatprep.subr.mxu0 0.0
      %3455 = vmatpush1.msra.mxu0 0.0
      %3456 = vmatprep.subr.mxu0 0.0
      %3457 = vmatpush1.msra.mxu0 0.0
      %3458 = vmatprep.subr.mxu0 0.0
      %3459 = vmatpush1.msra.mxu0 0.0
      %3460 = vmatprep.subr.mxu0 0.0
      %3461 = vmatpush1.msra.mxu0 0.0
      %3462 = vmatprep.subr.mxu0 0.0
      %3463 = vmatpush1.msra.mxu0 0.0
      %3464 = vmatprep.subr.mxu0 0.0
      %3465 = vmatpush1.msra.mxu0 0.0
      %3466 = vmatprep.subr.mxu0 0.0
      %3467 = vmatpush1.msra.mxu0 0.0
      %3468 = vmatprep.subr.mxu0 0.0
      %3469 = vmatpush1.msra.mxu0 0.0
      %3470 = vmatprep.subr.mxu0 0.0
      %3471 = vmatpush1.msra.mxu0 0.0
      %3472 = vmatprep.subr.mxu0 0.0
      %3473 = vmatpush1.msra.mxu0 0.0
      %3474 = vmatprep.subr.mxu0 0.0
      %3475 = vmatpush1.msra.mxu0 0.0
      %3476 = vmatprep.subr.mxu0 0.0
      %3477 = vmatpush1.msra.mxu0 0.0
      %3478 = vmatprep.subr.mxu0 0.0
      %3479 = vmatpush1.msra.mxu0 0.0
      %3480 = vmatprep.subr.mxu0 0.0
      %3481 = vmatpush1.msra.mxu0 0.0
      %3482 = vmatprep.subr.mxu0 0.0
      %3483 = vmatpush1.msra.mxu0 0.0
      %3484 = vmatprep.subr.mxu0 0.0
      %3485 = vmatpush1.msra.mxu0 0.0
      %3486 = vmatprep.subr.mxu0 0.0
      %3487 = vmatpush1.msra.mxu0 0.0
      %3488 = vmatprep.subr.mxu0 0.0
      %3489 = vmatpush1.msra.mxu0 0.0
      %3490 = vmatprep.subr.mxu0 0.0
      %3491 = vmatpush1.msra.mxu0 0.0
      %3492 = vmatprep.subr.mxu0 0.0
      %3493 = vmatpush1.msra.mxu0 0.0
      %3494 = vmatprep.subr.mxu0 0.0
      %3495 = vmatpush1.msra.mxu0 0.0
      %3496 = vmatprep.subr.mxu0 0.0
      %3497 = vmatpush1.msra.mxu0 0.0
      %3498 = vmatprep.subr.mxu0 0.0
      %3499 = vmatpush1.msra.mxu0 0.0
      %3500 = vmatprep.subr.mxu0 0.0
      %3501 = vmatpush1.msra.mxu0 0.0
      %3502 = vmatprep.mubr.f32.mxu0 0.0
      %3503 = vmatmul.mubr.f32.gmra.mrb[0].mxu0 %v3415
      %v3504 = vpop.f32.mrb[0].mxu0
      %v3505 = vadd.f32 0.0, %v3504
      %v3506 = vpop.f32.mrb[0].mxu0
      %3507 = vmatprep.mubr.f32.mxu0 0.0
      %3508 = vmatmul.mubr.f32.gmra.mrb[0].mxu0 %v3418
      %v3509 = vpop.f32.mrb[0].mxu0
      %v3510 = vadd.f32 0.0, %v3509
      %v3511 = vpop.f32.mrb[0].mxu0
      %3512 = vmatprep.mubr.f32.mxu0 0.0
      %3513 = vmatmul.mubr.f32.gmra.mrb[0].mxu0 %v3421
      %v3514 = vpop.f32.mrb[0].mxu0
      %v3515 = vadd.f32 0.0, %v3514
      %v3516 = vpop.f32.mrb[0].mxu0
      %3517 = vmatprep.mubr.f32.mxu0 0.0
      %3518 = vmatmul.mubr.f32.gmra.mrb[0].mxu0 %v3424
      %v3519 = vpop.f32.mrb[0].mxu0
      %v3520 = vadd.f32 0.0, %v3519
      %v3521 = vpop.f32.mrb[0].mxu0
      %3522 = vmatprep.mubr.f32.mxu0 0.0
      %3523 = vmatmul.mubr.f32.gmra.mrb[0].mxu0 %v3427
      %v3524 = vpop.f32.mrb[0].mxu0
      %v3525 = vadd.f32 0.0, %v3524
      %v3526 = vpop.f32.mrb[0].mxu0
      %3527 = vmatprep.mubr.f32.mxu0 0.0
      %3528 = vmatmul.mubr.f32.gmra.mrb[0].mxu0 %v3430
      %v3529 = vpop.f32.mrb[0].mxu0
      %v3530 = vadd.f32 0.0, %v3529
      %v3531 = vpop.f32.mrb[0].mxu0
      %3532 = vmatprep.mubr.f32.mxu0 0.0
      %3533 = vmatmul.mubr.f32.gmra.mrb[0].mxu0 %v3433
      %v3534 = vpop.f32.mrb[0].mxu0
      %v3535 = vadd.f32 0.0, %v3534
      %v3536 = vpop.f32.mrb[0].mxu0
      %3537 = vmatprep.mubr.f32.mxu0 0.0
      %3538 = vmatmul.mubr.f32.gmra.mrb[0].mxu0 %v3436
      %v3539 = vpop.f32.mrb[0].mxu0
      %v3540 = vadd.f32 0.0, %v3539
      %v3541 = vpop.f32.mrb[0].mxu0
      %3542 = vdwg.mxu0
      %v3543 = vadd.f32 %v2557, %v3505
      %v3544 = vadd.f32 %v2562, %v3510
      %v3545 = vadd.f32 %v2567, %v3515
      %v3546 = vadd.f32 %v2572, %v3520
      %v3547 = vadd.f32 %v2577, %v3525
      %v3548 = vadd.f32 %v2582, %v3530
      %v3549 = vadd.f32 %v2587, %v3535
      %v3550 = vadd.f32 %v2592, %v3540
      %s3551 = scalar_lea.vmem %s2, 48
      %v3552 = vld [vmem:[%s3551] sm:$0xff]
      %v3553 = vld [vmem:[%s3551 + $0x8] sm:$0xff]
      %3554 = vrot.lane.b32.xlu0 %v690, 104
      %v3555 = vpop.permute.xlu0 %3554
      %3556 = vrot.lane.b32.xlu0 %v691, 104
      %v3557 = vpop.permute.xlu0 %3556
      %3558 = vrot.lane.b32.xlu0 %v648, 72
      %v3559 = vpop.permute.xlu0 %3558
      %3560 = vrot.lane.b32.xlu0 %v653, 72
      %v3561 = vpop.permute.xlu0 %3560
      %v3562 = vsel %vm706, %v3555, 0
      %v3564 = vsel %vm706, %v3557, 0
      %v3566 = vsel %vm706, %v3559, 0
      %v3568 = vsel %vm706, %v3561, 0
      %3570 = vmatprep.subr.mxu0 0.0
      %3571 = vmatpush1.xpose.msra.mxu0 %v3566
      %3572 = vmatprep.subr.mxu0 0.0
      %3573 = vmatpush1.xpose.msra.mxu0 %v3568
      %3574 = vmatprep.subr.mxu0 0.0
      %3575 = vmatpush1.xpose.msra.mxu0 0.0
      %3576 = vmatprep.subr.mxu0 0.0
      %3577 = vmatpush1.xpose.msra.mxu0 0.0
      %3578 = vmatprep.subr.mxu0 0.0
      %3579 = vmatpush1.xpose.msra.mxu0 0.0
      %3580 = vmatprep.subr.mxu0 0.0
      %3581 = vmatpush1.xpose.msra.mxu0 0.0
      %3582 = vmatprep.subr.mxu0 0.0
      %3583 = vmatpush1.xpose.msra.mxu0 0.0
      %3584 = vmatprep.subr.mxu0 0.0
      %3585 = vmatpush1.xpose.msra.mxu0 0.0
      %3586 = vmatprep.subr.mxu0 0.0
      %3587 = vmatpush1.xpose.msra.mxu0 0.0
      %3588 = vmatprep.subr.mxu0 0.0
      %3589 = vmatpush1.xpose.msra.mxu0 0.0
      %3590 = vmatprep.subr.mxu0 0.0
      %3591 = vmatpush1.xpose.msra.mxu0 0.0
      %3592 = vmatprep.subr.mxu0 0.0
      %3593 = vmatpush1.xpose.msra.mxu0 0.0
      %3594 = vmatprep.subr.mxu0 0.0
      %3595 = vmatpush1.xpose.msra.mxu0 0.0
      %3596 = vmatprep.subr.mxu0 0.0
      %3597 = vmatpush1.xpose.msra.mxu0 0.0
      %3598 = vmatprep.subr.mxu0 0.0
      %3599 = vmatpush1.xpose.msra.mxu0 0.0
      %3600 = vmatprep.subr.mxu0 0.0
      %3601 = vmatpush1.xpose.msra.mxu0 0.0
      %3602 = vmatprep.subr.mxu0 0.0
      %3603 = vmatpush1.xpose.msra.mxu0 0.0
      %3604 = vmatprep.subr.mxu0 0.0
      %3605 = vmatpush1.xpose.msra.mxu0 0.0
      %3606 = vmatprep.subr.mxu0 0.0
      %3607 = vmatpush1.xpose.msra.mxu0 0.0
      %3608 = vmatprep.subr.mxu0 0.0
      %3609 = vmatpush1.xpose.msra.mxu0 0.0
      %3610 = vmatprep.subr.mxu0 0.0
      %3611 = vmatpush1.xpose.msra.mxu0 0.0
      %3612 = vmatprep.subr.mxu0 0.0
      %3613 = vmatpush1.xpose.msra.mxu0 0.0
      %3614 = vmatprep.subr.mxu0 0.0
      %3615 = vmatpush1.xpose.msra.mxu0 0.0
      %3616 = vmatprep.subr.mxu0 0.0
      %3617 = vmatpush1.xpose.msra.mxu0 0.0
      %3618 = vmatprep.subr.mxu0 0.0
      %3619 = vmatpush1.xpose.msra.mxu0 0.0
      %3620 = vmatprep.subr.mxu0 0.0
      %3621 = vmatpush1.xpose.msra.mxu0 0.0
      %3622 = vmatprep.subr.mxu0 0.0
      %3623 = vmatpush1.xpose.msra.mxu0 0.0
      %3624 = vmatprep.subr.mxu0 0.0
      %3625 = vmatpush1.xpose.msra.mxu0 0.0
      %3626 = vmatprep.subr.mxu0 0.0
      %3627 = vmatpush1.xpose.msra.mxu0 0.0
      %3628 = vmatprep.subr.mxu0 0.0
      %3629 = vmatpush1.xpose.msra.mxu0 0.0
      %3630 = vmatprep.subr.mxu0 0.0
      %3631 = vmatpush1.xpose.msra.mxu0 0.0
      %3632 = vmatprep.subr.mxu0 0.0
      %3633 = vmatpush1.xpose.msra.mxu0 0.0
      %3634 = vmatprep.mubr.f32.mxu0 0.0
      %3635 = vmatmul.mubr.f32.gmra.mrb[0].mxu0 %v3562
      %v3636 = vpop.f32.mrb[0].mxu0
      %v3637 = vadd.f32 %v3552, %v3636
      %v3638 = vpop.f32.mrb[0].mxu0
      %3639 = vmatprep.mubr.f32.mxu0 0.0
      %3640 = vmatmul.mubr.f32.gmra.mrb[0].mxu0 %v3564
      %v3641 = vpop.f32.mrb[0].mxu0
      %v3642 = vadd.f32 %v3553, %v3641
      %v3643 = vpop.f32.mrb[0].mxu0
      %3644 = vdwg.mxu0
      %3645 = vrot.lane.b32.xlu0 %v692, 104
      %v3646 = vpop.permute.xlu0 %3645
      %3647 = vrot.lane.b32.xlu0 %v693, 104
      %v3648 = vpop.permute.xlu0 %3647
      %3649 = vrot.lane.b32.xlu0 %v658, 72
      %v3650 = vpop.permute.xlu0 %3649
      %3651 = vrot.lane.b32.xlu0 %v663, 72
      %v3652 = vpop.permute.xlu0 %3651
      %v3653 = vsel %vm706, %v3646, 0
      %v3655 = vsel %vm706, %v3648, 0
      %v3657 = vsel %vm706, %v3650, 0
      %v3659 = vsel %vm706, %v3652, 0
      %3661 = vmatprep.subr.mxu0 0.0
      %3662 = vmatpush1.xpose.msra.mxu0 %v3657
      %3663 = vmatprep.subr.mxu0 0.0
      %3664 = vmatpush1.xpose.msra.mxu0 %v3659
      %3665 = vmatprep.subr.mxu0 0.0
      %3666 = vmatpush1.xpose.msra.mxu0 0.0
      %3667 = vmatprep.subr.mxu0 0.0
      %3668 = vmatpush1.xpose.msra.mxu0 0.0
      %3669 = vmatprep.subr.mxu0 0.0
      %3670 = vmatpush1.xpose.msra.mxu0 0.0
      %3671 = vmatprep.subr.mxu0 0.0
      %3672 = vmatpush1.xpose.msra.mxu0 0.0
      %3673 = vmatprep.subr.mxu0 0.0
      %3674 = vmatpush1.xpose.msra.mxu0 0.0
      %3675 = vmatprep.subr.mxu0 0.0
      %3676 = vmatpush1.xpose.msra.mxu0 0.0
      %3677 = vmatprep.subr.mxu0 0.0
      %3678 = vmatpush1.xpose.msra.mxu0 0.0
      %3679 = vmatprep.subr.mxu0 0.0
      %3680 = vmatpush1.xpose.msra.mxu0 0.0
      %3681 = vmatprep.subr.mxu0 0.0
      %3682 = vmatpush1.xpose.msra.mxu0 0.0
      %3683 = vmatprep.subr.mxu0 0.0
      %3684 = vmatpush1.xpose.msra.mxu0 0.0
      %3685 = vmatprep.subr.mxu0 0.0
      %3686 = vmatpush1.xpose.msra.mxu0 0.0
      %3687 = vmatprep.subr.mxu0 0.0
      %3688 = vmatpush1.xpose.msra.mxu0 0.0
      %3689 = vmatprep.subr.mxu0 0.0
      %3690 = vmatpush1.xpose.msra.mxu0 0.0
      %3691 = vmatprep.subr.mxu0 0.0
      %3692 = vmatpush1.xpose.msra.mxu0 0.0
      %3693 = vmatprep.subr.mxu0 0.0
      %3694 = vmatpush1.xpose.msra.mxu0 0.0
      %3695 = vmatprep.subr.mxu0 0.0
      %3696 = vmatpush1.xpose.msra.mxu0 0.0
      %3697 = vmatprep.subr.mxu0 0.0
      %3698 = vmatpush1.xpose.msra.mxu0 0.0
      %3699 = vmatprep.subr.mxu0 0.0
      %3700 = vmatpush1.xpose.msra.mxu0 0.0
      %3701 = vmatprep.subr.mxu0 0.0
      %3702 = vmatpush1.xpose.msra.mxu0 0.0
      %3703 = vmatprep.subr.mxu0 0.0
      %3704 = vmatpush1.xpose.msra.mxu0 0.0
      %3705 = vmatprep.subr.mxu0 0.0
      %3706 = vmatpush1.xpose.msra.mxu0 0.0
      %3707 = vmatprep.subr.mxu0 0.0
      %3708 = vmatpush1.xpose.msra.mxu0 0.0
      %3709 = vmatprep.subr.mxu0 0.0
      %3710 = vmatpush1.xpose.msra.mxu0 0.0
      %3711 = vmatprep.subr.mxu0 0.0
      %3712 = vmatpush1.xpose.msra.mxu0 0.0
      %3713 = vmatprep.subr.mxu0 0.0
      %3714 = vmatpush1.xpose.msra.mxu0 0.0
      %3715 = vmatprep.subr.mxu0 0.0
      %3716 = vmatpush1.xpose.msra.mxu0 0.0
      %3717 = vmatprep.subr.mxu0 0.0
      %3718 = vmatpush1.xpose.msra.mxu0 0.0
      %3719 = vmatprep.subr.mxu0 0.0
      %3720 = vmatpush1.xpose.msra.mxu0 0.0
      %3721 = vmatprep.subr.mxu0 0.0
      %3722 = vmatpush1.xpose.msra.mxu0 0.0
      %3723 = vmatprep.subr.mxu0 0.0
      %3724 = vmatpush1.xpose.msra.mxu0 0.0
      %3725 = vmatprep.mubr.f32.mxu0 0.0
      %3726 = vmatmul.mubr.f32.gmra.mrb[0].mxu0 %v3653
      %v3727 = vpop.f32.mrb[0].mxu0
      %v3728 = vadd.f32 %v3552, %v3727
      %v3729 = vpop.f32.mrb[0].mxu0
      %3730 = vmatprep.mubr.f32.mxu0 0.0
      %3731 = vmatmul.mubr.f32.gmra.mrb[0].mxu0 %v3655
      %v3732 = vpop.f32.mrb[0].mxu0
      %v3733 = vadd.f32 %v3553, %v3732
      %v3734 = vpop.f32.mrb[0].mxu0
      %3735 = vdwg.mxu0
      %3736 = vrot.lane.b32.xlu0 %v694, 104
      %v3737 = vpop.permute.xlu0 %3736
      %3738 = vrot.lane.b32.xlu0 %v695, 104
      %v3739 = vpop.permute.xlu0 %3738
      %3740 = vrot.lane.b32.xlu0 %v668, 72
      %v3741 = vpop.permute.xlu0 %3740
      %3742 = vrot.lane.b32.xlu0 %v673, 72
      %v3743 = vpop.permute.xlu0 %3742
      %v3744 = vsel %vm706, %v3737, 0
      %v3746 = vsel %vm706, %v3739, 0
      %v3748 = vsel %vm706, %v3741, 0
      %v3750 = vsel %vm706, %v3743, 0
      %3752 = vmatprep.subr.mxu0 0.0
      %3753 = vmatpush1.xpose.msra.mxu0 %v3748
      %3754 = vmatprep.subr.mxu0 0.0
      %3755 = vmatpush1.xpose.msra.mxu0 %v3750
      %3756 = vmatprep.subr.mxu0 0.0
      %3757 = vmatpush1.xpose.msra.mxu0 0.0
      %3758 = vmatprep.subr.mxu0 0.0
      %3759 = vmatpush1.xpose.msra.mxu0 0.0
      %3760 = vmatprep.subr.mxu0 0.0
      %3761 = vmatpush1.xpose.msra.mxu0 0.0
      %3762 = vmatprep.subr.mxu0 0.0
      %3763 = vmatpush1.xpose.msra.mxu0 0.0
      %3764 = vmatprep.subr.mxu0 0.0
      %3765 = vmatpush1.xpose.msra.mxu0 0.0
      %3766 = vmatprep.subr.mxu0 0.0
      %3767 = vmatpush1.xpose.msra.mxu0 0.0
      %3768 = vmatprep.subr.mxu0 0.0
      %3769 = vmatpush1.xpose.msra.mxu0 0.0
      %3770 = vmatprep.subr.mxu0 0.0
      %3771 = vmatpush1.xpose.msra.mxu0 0.0
      %3772 = vmatprep.subr.mxu0 0.0
      %3773 = vmatpush1.xpose.msra.mxu0 0.0
      %3774 = vmatprep.subr.mxu0 0.0
      %3775 = vmatpush1.xpose.msra.mxu0 0.0
      %3776 = vmatprep.subr.mxu0 0.0
      %3777 = vmatpush1.xpose.msra.mxu0 0.0
      %3778 = vmatprep.subr.mxu0 0.0
      %3779 = vmatpush1.xpose.msra.mxu0 0.0
      %3780 = vmatprep.subr.mxu0 0.0
      %3781 = vmatpush1.xpose.msra.mxu0 0.0
      %3782 = vmatprep.subr.mxu0 0.0
      %3783 = vmatpush1.xpose.msra.mxu0 0.0
      %3784 = vmatprep.subr.mxu0 0.0
      %3785 = vmatpush1.xpose.msra.mxu0 0.0
      %3786 = vmatprep.subr.mxu0 0.0
      %3787 = vmatpush1.xpose.msra.mxu0 0.0
      %3788 = vmatprep.subr.mxu0 0.0
      %3789 = vmatpush1.xpose.msra.mxu0 0.0
      %3790 = vmatprep.subr.mxu0 0.0
      %3791 = vmatpush1.xpose.msra.mxu0 0.0
      %3792 = vmatprep.subr.mxu0 0.0
      %3793 = vmatpush1.xpose.msra.mxu0 0.0
      %3794 = vmatprep.subr.mxu0 0.0
      %3795 = vmatpush1.xpose.msra.mxu0 0.0
      %3796 = vmatprep.subr.mxu0 0.0
      %3797 = vmatpush1.xpose.msra.mxu0 0.0
      %3798 = vmatprep.subr.mxu0 0.0
      %3799 = vmatpush1.xpose.msra.mxu0 0.0
      %3800 = vmatprep.subr.mxu0 0.0
      %3801 = vmatpush1.xpose.msra.mxu0 0.0
      %3802 = vmatprep.subr.mxu0 0.0
      %3803 = vmatpush1.xpose.msra.mxu0 0.0
      %3804 = vmatprep.subr.mxu0 0.0
      %3805 = vmatpush1.xpose.msra.mxu0 0.0
      %3806 = vmatprep.subr.mxu0 0.0
      %3807 = vmatpush1.xpose.msra.mxu0 0.0
      %3808 = vmatprep.subr.mxu0 0.0
      %3809 = vmatpush1.xpose.msra.mxu0 0.0
      %3810 = vmatprep.subr.mxu0 0.0
      %3811 = vmatpush1.xpose.msra.mxu0 0.0
      %3812 = vmatprep.subr.mxu0 0.0
      %3813 = vmatpush1.xpose.msra.mxu0 0.0
      %3814 = vmatprep.subr.mxu0 0.0
      %3815 = vmatpush1.xpose.msra.mxu0 0.0
      %3816 = vmatprep.mubr.f32.mxu0 0.0
      %3817 = vmatmul.mubr.f32.gmra.mrb[0].mxu0 %v3744
      %v3818 = vpop.f32.mrb[0].mxu0
      %v3819 = vadd.f32 %v3552, %v3818
      %v3820 = vpop.f32.mrb[0].mxu0
      %3821 = vmatprep.mubr.f32.mxu0 0.0
      %3822 = vmatmul.mubr.f32.gmra.mrb[0].mxu0 %v3746
      %v3823 = vpop.f32.mrb[0].mxu0
      %v3824 = vadd.f32 %v3553, %v3823
      %v3825 = vpop.f32.mrb[0].mxu0
      %3826 = vdwg.mxu0
      %3827 = vrot.lane.b32.xlu0 %v696, 104
      %v3828 = vpop.permute.xlu0 %3827
      %3829 = vrot.lane.b32.xlu0 %v697, 104
      %v3830 = vpop.permute.xlu0 %3829
      %3831 = vrot.lane.b32.xlu0 %v678, 72
      %v3832 = vpop.permute.xlu0 %3831
      %3833 = vrot.lane.b32.xlu0 %v683, 72
      %v3834 = vpop.permute.xlu0 %3833
      %v3835 = vsel %vm706, %v3828, 0
      %v3837 = vsel %vm706, %v3830, 0
      %v3839 = vsel %vm706, %v3832, 0
      %v3841 = vsel %vm706, %v3834, 0
      %3843 = vmatprep.subr.mxu0 0.0
      %3844 = vmatpush1.xpose.msra.mxu0 %v3839
      %3845 = vmatprep.subr.mxu0 0.0
      %3846 = vmatpush1.xpose.msra.mxu0 %v3841
      %3847 = vmatprep.subr.mxu0 0.0
      %3848 = vmatpush1.xpose.msra.mxu0 0.0
      %3849 = vmatprep.subr.mxu0 0.0
      %3850 = vmatpush1.xpose.msra.mxu0 0.0
      %3851 = vmatprep.subr.mxu0 0.0
      %3852 = vmatpush1.xpose.msra.mxu0 0.0
      %3853 = vmatprep.subr.mxu0 0.0
      %3854 = vmatpush1.xpose.msra.mxu0 0.0
      %3855 = vmatprep.subr.mxu0 0.0
      %3856 = vmatpush1.xpose.msra.mxu0 0.0
      %3857 = vmatprep.subr.mxu0 0.0
      %3858 = vmatpush1.xpose.msra.mxu0 0.0
      %3859 = vmatprep.subr.mxu0 0.0
      %3860 = vmatpush1.xpose.msra.mxu0 0.0
      %3861 = vmatprep.subr.mxu0 0.0
      %3862 = vmatpush1.xpose.msra.mxu0 0.0
      %3863 = vmatprep.subr.mxu0 0.0
      %3864 = vmatpush1.xpose.msra.mxu0 0.0
      %3865 = vmatprep.subr.mxu0 0.0
      %3866 = vmatpush1.xpose.msra.mxu0 0.0
      %3867 = vmatprep.subr.mxu0 0.0
      %3868 = vmatpush1.xpose.msra.mxu0 0.0
      %3869 = vmatprep.subr.mxu0 0.0
      %3870 = vmatpush1.xpose.msra.mxu0 0.0
      %3871 = vmatprep.subr.mxu0 0.0
      %3872 = vmatpush1.xpose.msra.mxu0 0.0
      %3873 = vmatprep.subr.mxu0 0.0
      %3874 = vmatpush1.xpose.msra.mxu0 0.0
      %3875 = vmatprep.subr.mxu0 0.0
      %3876 = vmatpush1.xpose.msra.mxu0 0.0
      %3877 = vmatprep.subr.mxu0 0.0
      %3878 = vmatpush1.xpose.msra.mxu0 0.0
      %3879 = vmatprep.subr.mxu0 0.0
      %3880 = vmatpush1.xpose.msra.mxu0 0.0
      %3881 = vmatprep.subr.mxu0 0.0
      %3882 = vmatpush1.xpose.msra.mxu0 0.0
      %3883 = vmatprep.subr.mxu0 0.0
      %3884 = vmatpush1.xpose.msra.mxu0 0.0
      %3885 = vmatprep.subr.mxu0 0.0
      %3886 = vmatpush1.xpose.msra.mxu0 0.0
      %3887 = vmatprep.subr.mxu0 0.0
      %3888 = vmatpush1.xpose.msra.mxu0 0.0
      %3889 = vmatprep.subr.mxu0 0.0
      %3890 = vmatpush1.xpose.msra.mxu0 0.0
      %3891 = vmatprep.subr.mxu0 0.0
      %3892 = vmatpush1.xpose.msra.mxu0 0.0
      %3893 = vmatprep.subr.mxu0 0.0
      %3894 = vmatpush1.xpose.msra.mxu0 0.0
      %3895 = vmatprep.subr.mxu0 0.0
      %3896 = vmatpush1.xpose.msra.mxu0 0.0
      %3897 = vmatprep.subr.mxu0 0.0
      %3898 = vmatpush1.xpose.msra.mxu0 0.0
      %3899 = vmatprep.subr.mxu0 0.0
      %3900 = vmatpush1.xpose.msra.mxu0 0.0
      %3901 = vmatprep.subr.mxu0 0.0
      %3902 = vmatpush1.xpose.msra.mxu0 0.0
      %3903 = vmatprep.subr.mxu0 0.0
      %3904 = vmatpush1.xpose.msra.mxu0 0.0
      %3905 = vmatprep.subr.mxu0 0.0
      %3906 = vmatpush1.xpose.msra.mxu0 0.0
      %3907 = vmatprep.mubr.f32.mxu0 0.0
      %3908 = vmatmul.mubr.f32.gmra.mrb[0].mxu0 %v3835
      %v3909 = vpop.f32.mrb[0].mxu0
      %v3910 = vadd.f32 %v3552, %v3909
      %v3911 = vpop.f32.mrb[0].mxu0
      %3912 = vmatprep.mubr.f32.mxu0 0.0
      %3913 = vmatmul.mubr.f32.gmra.mrb[0].mxu0 %v3837
      %v3914 = vpop.f32.mrb[0].mxu0
      %v3915 = vadd.f32 %v3553, %v3914
      %v3916 = vpop.f32.mrb[0].mxu0
      %3917 = vdwg.mxu0
      %v3918 = vld [vmem:[%s389] sm:$0xff]
      %v3919 = vld [vmem:[%s389 + $0x8] sm:$0xff]
      %v3920 = vld [vmem:[%s389 + $0x10] sm:$0xff]
      %v3921 = vld [vmem:[%s389 + $0x18] sm:$0xff]
      %v3922 = vld [vmem:[%s389 + $0x20] sm:$0xff]
      %v3923 = vld [vmem:[%s389 + $0x28] sm:$0xff]
      %v3924 = vld [vmem:[%s389 + $0x30] sm:$0xff]
      %v3925 = vld [vmem:[%s389 + $0x38] sm:$0xff]
      %v3926 = vadd.f32 %v3637, %v3918
      %v3927 = vadd.f32 %v3642, %v3919
      %v3928 = vadd.f32 %v3728, %v3920
      %v3929 = vadd.f32 %v3733, %v3921
      %v3930 = vadd.f32 %v3819, %v3922
      %v3931 = vadd.f32 %v3824, %v3923
      %v3932 = vadd.f32 %v3910, %v3924
      %v3933 = vadd.f32 %v3915, %v3925
      %v3934 = vsel %vm1081, %v3926, -inf
      %3935 = vmax.xlane.f32.xlu0 %v3934
      %v3936 = vpop.xlane.xlu0 %3935
      %v3937 = vsel %vm1081, %v3927, -inf
      %3938 = vmax.xlane.f32.xlu0 %v3937
      %v3939 = vpop.xlane.xlu0 %3938
      %v3940 = vsel %vm1081, %v3928, -inf
      %3941 = vmax.xlane.f32.xlu0 %v3940
      %v3942 = vpop.xlane.xlu0 %3941
      %v3943 = vsel %vm1081, %v3929, -inf
      %3944 = vmax.xlane.f32.xlu0 %v3943
      %v3945 = vpop.xlane.xlu0 %3944
      %v3946 = vsel %vm1081, %v3930, -inf
      %3947 = vmax.xlane.f32.xlu0 %v3946
      %v3948 = vpop.xlane.xlu0 %3947
      %v3949 = vsel %vm1081, %v3931, -inf
      %3950 = vmax.xlane.f32.xlu0 %v3949
      %v3951 = vpop.xlane.xlu0 %3950
      %v3952 = vsel %vm1081, %v3932, -inf
      %3953 = vmax.xlane.f32.xlu0 %v3952
      %v3954 = vpop.xlane.xlu0 %3953
      %v3955 = vsel %vm1081, %v3933, -inf
      %3956 = vmax.xlane.f32.xlu0 %v3955
      %v3957 = vpop.xlane.xlu0 %3956
      %v3958 = vsub.f32 %v3926, %v3936
      %v3959 = vsub.f32 %v3927, %v3939
      %v3960 = vsub.f32 %v3928, %v3942
      %v3961 = vsub.f32 %v3929, %v3945
      %v3962 = vsub.f32 %v3930, %v3948
      %v3963 = vsub.f32 %v3931, %v3951
      %v3964 = vsub.f32 %v3932, %v3954
      %v3965 = vsub.f32 %v3933, %v3957
      %v3966 = vmul.f32 %v3958, 1.442695
      %v3967 = vpow.pop %v3966
      %v3968 = vmul.f32 %v3959, 1.442695
      %v3969 = vpow.pop %v3968
      %v3970 = vmul.f32 %v3960, 1.442695
      %v3971 = vpow.pop %v3970
      %v3972 = vmul.f32 %v3961, 1.442695
      %v3973 = vpow.pop %v3972
      %v3974 = vmul.f32 %v3962, 1.442695
      %v3975 = vpow.pop %v3974
      %v3976 = vmul.f32 %v3963, 1.442695
      %v3977 = vpow.pop %v3976
      %v3978 = vmul.f32 %v3964, 1.442695
      %v3979 = vpow.pop %v3978
      %v3980 = vmul.f32 %v3965, 1.442695
      %v3981 = vpow.pop %v3980
      %v3982 = vsel %vm1081, %v3967, 0.0
      %3983 = vadd.xlane.f32.xlu0 %v3982
      %v3984 = vpop.xlane.xlu0 %3983
      %v3985 = vsel %vm1081, %v3969, 0.0
      %3986 = vadd.xlane.f32.xlu0 %v3985
      %v3987 = vpop.xlane.xlu0 %3986
      %v3988 = vsel %vm1081, %v3971, 0.0
      %3989 = vadd.xlane.f32.xlu0 %v3988
      %v3990 = vpop.xlane.xlu0 %3989
      %v3991 = vsel %vm1081, %v3973, 0.0
      %3992 = vadd.xlane.f32.xlu0 %v3991
      %v3993 = vpop.xlane.xlu0 %3992
      %v3994 = vsel %vm1081, %v3975, 0.0
      %3995 = vadd.xlane.f32.xlu0 %v3994
      %v3996 = vpop.xlane.xlu0 %3995
      %v3997 = vsel %vm1081, %v3977, 0.0
      %3998 = vadd.xlane.f32.xlu0 %v3997
      %v3999 = vpop.xlane.xlu0 %3998
      %v4000 = vsel %vm1081, %v3979, 0.0
      %4001 = vadd.xlane.f32.xlu0 %v4000
      %v4002 = vpop.xlane.xlu0 %4001
      %v4003 = vsel %vm1081, %v3981, 0.0
      %4004 = vadd.xlane.f32.xlu0 %v4003
      %v4005 = vpop.xlane.xlu0 %4004
      %v4006 = vrcp.pop %v3984
      %v4007 = vmul.f32 %v3967, %v4006
      %v4008 = vrcp.pop %v3987
      %v4009 = vmul.f32 %v3969, %v4008
      %v4010 = vrcp.pop %v3990
      %v4011 = vmul.f32 %v3971, %v4010
      %v4012 = vrcp.pop %v3993
      %v4013 = vmul.f32 %v3973, %v4012
      %v4014 = vrcp.pop %v3996
      %v4015 = vmul.f32 %v3975, %v4014
      %v4016 = vrcp.pop %v3999
      %v4017 = vmul.f32 %v3977, %v4016
      %v4018 = vrcp.pop %v4002
      %v4019 = vmul.f32 %v3979, %v4018
      %v4020 = vrcp.pop %v4005
      %v4021 = vmul.f32 %v3981, %v4020
      %4022 = vrot.lane.b32.xlu0 %v648, 40
      %v4023 = vpop.permute.xlu0 %4022
      %4024 = vrot.lane.b32.xlu0 %v653, 40
      %v4025 = vpop.permute.xlu0 %4024
      %v4029 = vsel %vm1081, %v4007, 0
      %v4032 = vsel %vm1081, %v4009, 0
      %4034 = vmatprep.subr.mxu0 0.0
      %4035 = vmatpush1.msra.mxu0 %v4023
      %4036 = vmatprep.subr.mxu0 0.0
      %4037 = vmatpush1.msra.mxu0 %v4025
      %4038 = vmatprep.subr.mxu0 0.0
      %4039 = vmatpush1.msra.mxu0 0.0
      %4040 = vmatprep.subr.mxu0 0.0
      %4041 = vmatpush1.msra.mxu0 0.0
      %4042 = vmatprep.subr.mxu0 0.0
      %4043 = vmatpush1.msra.mxu0 0.0
      %4044 = vmatprep.subr.mxu0 0.0
      %4045 = vmatpush1.msra.mxu0 0.0
      %4046 = vmatprep.subr.mxu0 0.0
      %4047 = vmatpush1.msra.mxu0 0.0
      %4048 = vmatprep.subr.mxu0 0.0
      %4049 = vmatpush1.msra.mxu0 0.0
      %4050 = vmatprep.subr.mxu0 0.0
      %4051 = vmatpush1.msra.mxu0 0.0
      %4052 = vmatprep.subr.mxu0 0.0
      %4053 = vmatpush1.msra.mxu0 0.0
      %4054 = vmatprep.subr.mxu0 0.0
      %4055 = vmatpush1.msra.mxu0 0.0
      %4056 = vmatprep.subr.mxu0 0.0
      %4057 = vmatpush1.msra.mxu0 0.0
      %4058 = vmatprep.subr.mxu0 0.0
      %4059 = vmatpush1.msra.mxu0 0.0
      %4060 = vmatprep.subr.mxu0 0.0
      %4061 = vmatpush1.msra.mxu0 0.0
      %4062 = vmatprep.subr.mxu0 0.0
      %4063 = vmatpush1.msra.mxu0 0.0
      %4064 = vmatprep.subr.mxu0 0.0
      %4065 = vmatpush1.msra.mxu0 0.0
      %4066 = vmatprep.subr.mxu0 0.0
      %4067 = vmatpush1.msra.mxu0 0.0
      %4068 = vmatprep.subr.mxu0 0.0
      %4069 = vmatpush1.msra.mxu0 0.0
      %4070 = vmatprep.subr.mxu0 0.0
      %4071 = vmatpush1.msra.mxu0 0.0
      %4072 = vmatprep.subr.mxu0 0.0
      %4073 = vmatpush1.msra.mxu0 0.0
      %4074 = vmatprep.subr.mxu0 0.0
      %4075 = vmatpush1.msra.mxu0 0.0
      %4076 = vmatprep.subr.mxu0 0.0
      %4077 = vmatpush1.msra.mxu0 0.0
      %4078 = vmatprep.subr.mxu0 0.0
      %4079 = vmatpush1.msra.mxu0 0.0
      %4080 = vmatprep.subr.mxu0 0.0
      %4081 = vmatpush1.msra.mxu0 0.0
      %4082 = vmatprep.subr.mxu0 0.0
      %4083 = vmatpush1.msra.mxu0 0.0
      %4084 = vmatprep.subr.mxu0 0.0
      %4085 = vmatpush1.msra.mxu0 0.0
      %4086 = vmatprep.subr.mxu0 0.0
      %4087 = vmatpush1.msra.mxu0 0.0
      %4088 = vmatprep.subr.mxu0 0.0
      %4089 = vmatpush1.msra.mxu0 0.0
      %4090 = vmatprep.subr.mxu0 0.0
      %4091 = vmatpush1.msra.mxu0 0.0
      %4092 = vmatprep.subr.mxu0 0.0
      %4093 = vmatpush1.msra.mxu0 0.0
      %4094 = vmatprep.subr.mxu0 0.0
      %4095 = vmatpush1.msra.mxu0 0.0
      %4096 = vmatprep.subr.mxu0 0.0
      %4097 = vmatpush1.msra.mxu0 0.0
      %4098 = vmatprep.mubr.f32.mxu0 0.0
      %4099 = vmatmul.mubr.f32.gmra.mrb[0].mxu0 %v4029
      %v4100 = vpop.f32.mrb[0].mxu0
      %v4101 = vadd.f32 0.0, %v4100
      %v4102 = vpop.f32.mrb[0].mxu0
      %4103 = vmatprep.mubr.f32.mxu0 0.0
      %4104 = vmatmul.mubr.f32.gmra.mrb[0].mxu0 %v4032
      %v4105 = vpop.f32.mrb[0].mxu0
      %v4106 = vadd.f32 0.0, %v4105
      %v4107 = vpop.f32.mrb[0].mxu0
      %4108 = vdwg.mxu0
      %4109 = vrot.lane.b32.xlu0 %v658, 40
      %v4110 = vpop.permute.xlu0 %4109
      %4111 = vrot.lane.b32.xlu0 %v663, 40
      %v4112 = vpop.permute.xlu0 %4111
      %v4116 = vsel %vm1081, %v4011, 0
      %v4119 = vsel %vm1081, %v4013, 0
      %4121 = vmatprep.subr.mxu0 0.0
      %4122 = vmatpush1.msra.mxu0 %v4110
      %4123 = vmatprep.subr.mxu0 0.0
      %4124 = vmatpush1.msra.mxu0 %v4112
      %4125 = vmatprep.subr.mxu0 0.0
      %4126 = vmatpush1.msra.mxu0 0.0
      %4127 = vmatprep.subr.mxu0 0.0
      %4128 = vmatpush1.msra.mxu0 0.0
      %4129 = vmatprep.subr.mxu0 0.0
      %4130 = vmatpush1.msra.mxu0 0.0
      %4131 = vmatprep.subr.mxu0 0.0
      %4132 = vmatpush1.msra.mxu0 0.0
      %4133 = vmatprep.subr.mxu0 0.0
      %4134 = vmatpush1.msra.mxu0 0.0
      %4135 = vmatprep.subr.mxu0 0.0
      %4136 = vmatpush1.msra.mxu0 0.0
      %4137 = vmatprep.subr.mxu0 0.0
      %4138 = vmatpush1.msra.mxu0 0.0
      %4139 = vmatprep.subr.mxu0 0.0
      %4140 = vmatpush1.msra.mxu0 0.0
      %4141 = vmatprep.subr.mxu0 0.0
      %4142 = vmatpush1.msra.mxu0 0.0
      %4143 = vmatprep.subr.mxu0 0.0
      %4144 = vmatpush1.msra.mxu0 0.0
      %4145 = vmatprep.subr.mxu0 0.0
      %4146 = vmatpush1.msra.mxu0 0.0
      %4147 = vmatprep.subr.mxu0 0.0
      %4148 = vmatpush1.msra.mxu0 0.0
      %4149 = vmatprep.subr.mxu0 0.0
      %4150 = vmatpush1.msra.mxu0 0.0
      %4151 = vmatprep.subr.mxu0 0.0
      %4152 = vmatpush1.msra.mxu0 0.0
      %4153 = vmatprep.subr.mxu0 0.0
      %4154 = vmatpush1.msra.mxu0 0.0
      %4155 = vmatprep.subr.mxu0 0.0
      %4156 = vmatpush1.msra.mxu0 0.0
      %4157 = vmatprep.subr.mxu0 0.0
      %4158 = vmatpush1.msra.mxu0 0.0
      %4159 = vmatprep.subr.mxu0 0.0
      %4160 = vmatpush1.msra.mxu0 0.0
      %4161 = vmatprep.subr.mxu0 0.0
      %4162 = vmatpush1.msra.mxu0 0.0
      %4163 = vmatprep.subr.mxu0 0.0
      %4164 = vmatpush1.msra.mxu0 0.0
      %4165 = vmatprep.subr.mxu0 0.0
      %4166 = vmatpush1.msra.mxu0 0.0
      %4167 = vmatprep.subr.mxu0 0.0
      %4168 = vmatpush1.msra.mxu0 0.0
      %4169 = vmatprep.subr.mxu0 0.0
      %4170 = vmatpush1.msra.mxu0 0.0
      %4171 = vmatprep.subr.mxu0 0.0
      %4172 = vmatpush1.msra.mxu0 0.0
      %4173 = vmatprep.subr.mxu0 0.0
      %4174 = vmatpush1.msra.mxu0 0.0
      %4175 = vmatprep.subr.mxu0 0.0
      %4176 = vmatpush1.msra.mxu0 0.0
      %4177 = vmatprep.subr.mxu0 0.0
      %4178 = vmatpush1.msra.mxu0 0.0
      %4179 = vmatprep.subr.mxu0 0.0
      %4180 = vmatpush1.msra.mxu0 0.0
      %4181 = vmatprep.subr.mxu0 0.0
      %4182 = vmatpush1.msra.mxu0 0.0
      %4183 = vmatprep.subr.mxu0 0.0
      %4184 = vmatpush1.msra.mxu0 0.0
      %4185 = vmatprep.mubr.f32.mxu0 0.0
      %4186 = vmatmul.mubr.f32.gmra.mrb[0].mxu0 %v4116
      %v4187 = vpop.f32.mrb[0].mxu0
      %v4188 = vadd.f32 0.0, %v4187
      %v4189 = vpop.f32.mrb[0].mxu0
      %4190 = vmatprep.mubr.f32.mxu0 0.0
      %4191 = vmatmul.mubr.f32.gmra.mrb[0].mxu0 %v4119
      %v4192 = vpop.f32.mrb[0].mxu0
      %v4193 = vadd.f32 0.0, %v4192
      %v4194 = vpop.f32.mrb[0].mxu0
      %4195 = vdwg.mxu0
      %4196 = vrot.lane.b32.xlu0 %v668, 40
      %v4197 = vpop.permute.xlu0 %4196
      %4198 = vrot.lane.b32.xlu0 %v673, 40
      %v4199 = vpop.permute.xlu0 %4198
      %v4203 = vsel %vm1081, %v4015, 0
      %v4206 = vsel %vm1081, %v4017, 0
      %4208 = vmatprep.subr.mxu0 0.0
      %4209 = vmatpush1.msra.mxu0 %v4197
      %4210 = vmatprep.subr.mxu0 0.0
      %4211 = vmatpush1.msra.mxu0 %v4199
      %4212 = vmatprep.subr.mxu0 0.0
      %4213 = vmatpush1.msra.mxu0 0.0
      %4214 = vmatprep.subr.mxu0 0.0
      %4215 = vmatpush1.msra.mxu0 0.0
      %4216 = vmatprep.subr.mxu0 0.0
      %4217 = vmatpush1.msra.mxu0 0.0
      %4218 = vmatprep.subr.mxu0 0.0
      %4219 = vmatpush1.msra.mxu0 0.0
      %4220 = vmatprep.subr.mxu0 0.0
      %4221 = vmatpush1.msra.mxu0 0.0
      %4222 = vmatprep.subr.mxu0 0.0
      %4223 = vmatpush1.msra.mxu0 0.0
      %4224 = vmatprep.subr.mxu0 0.0
      %4225 = vmatpush1.msra.mxu0 0.0
      %4226 = vmatprep.subr.mxu0 0.0
      %4227 = vmatpush1.msra.mxu0 0.0
      %4228 = vmatprep.subr.mxu0 0.0
      %4229 = vmatpush1.msra.mxu0 0.0
      %4230 = vmatprep.subr.mxu0 0.0
      %4231 = vmatpush1.msra.mxu0 0.0
      %4232 = vmatprep.subr.mxu0 0.0
      %4233 = vmatpush1.msra.mxu0 0.0
      %4234 = vmatprep.subr.mxu0 0.0
      %4235 = vmatpush1.msra.mxu0 0.0
      %4236 = vmatprep.subr.mxu0 0.0
      %4237 = vmatpush1.msra.mxu0 0.0
      %4238 = vmatprep.subr.mxu0 0.0
      %4239 = vmatpush1.msra.mxu0 0.0
      %4240 = vmatprep.subr.mxu0 0.0
      %4241 = vmatpush1.msra.mxu0 0.0
      %4242 = vmatprep.subr.mxu0 0.0
      %4243 = vmatpush1.msra.mxu0 0.0
      %4244 = vmatprep.subr.mxu0 0.0
      %4245 = vmatpush1.msra.mxu0 0.0
      %4246 = vmatprep.subr.mxu0 0.0
      %4247 = vmatpush1.msra.mxu0 0.0
      %4248 = vmatprep.subr.mxu0 0.0
      %4249 = vmatpush1.msra.mxu0 0.0
      %4250 = vmatprep.subr.mxu0 0.0
      %4251 = vmatpush1.msra.mxu0 0.0
      %4252 = vmatprep.subr.mxu0 0.0
      %4253 = vmatpush1.msra.mxu0 0.0
      %4254 = vmatprep.subr.mxu0 0.0
      %4255 = vmatpush1.msra.mxu0 0.0
      %4256 = vmatprep.subr.mxu0 0.0
      %4257 = vmatpush1.msra.mxu0 0.0
      %4258 = vmatprep.subr.mxu0 0.0
      %4259 = vmatpush1.msra.mxu0 0.0
      %4260 = vmatprep.subr.mxu0 0.0
      %4261 = vmatpush1.msra.mxu0 0.0
      %4262 = vmatprep.subr.mxu0 0.0
      %4263 = vmatpush1.msra.mxu0 0.0
      %4264 = vmatprep.subr.mxu0 0.0
      %4265 = vmatpush1.msra.mxu0 0.0
      %4266 = vmatprep.subr.mxu0 0.0
      %4267 = vmatpush1.msra.mxu0 0.0
      %4268 = vmatprep.subr.mxu0 0.0
      %4269 = vmatpush1.msra.mxu0 0.0
      %4270 = vmatprep.subr.mxu0 0.0
      %4271 = vmatpush1.msra.mxu0 0.0
      %4272 = vmatprep.mubr.f32.mxu0 0.0
      %4273 = vmatmul.mubr.f32.gmra.mrb[0].mxu0 %v4203
      %v4274 = vpop.f32.mrb[0].mxu0
      %v4275 = vadd.f32 0.0, %v4274
      %v4276 = vpop.f32.mrb[0].mxu0
      %4277 = vmatprep.mubr.f32.mxu0 0.0
      %4278 = vmatmul.mubr.f32.gmra.mrb[0].mxu0 %v4206
      %v4279 = vpop.f32.mrb[0].mxu0
      %v4280 = vadd.f32 0.0, %v4279
      %v4281 = vpop.f32.mrb[0].mxu0
      %4282 = vdwg.mxu0
      %4283 = vrot.lane.b32.xlu0 %v678, 40
      %v4284 = vpop.permute.xlu0 %4283
      %4285 = vrot.lane.b32.xlu0 %v683, 40
      %v4286 = vpop.permute.xlu0 %4285
      %v4290 = vsel %vm1081, %v4019, 0
      %v4293 = vsel %vm1081, %v4021, 0
      %4295 = vmatprep.subr.mxu0 0.0
      %4296 = vmatpush1.msra.mxu0 %v4284
      %4297 = vmatprep.subr.mxu0 0.0
      %4298 = vmatpush1.msra.mxu0 %v4286
      %4299 = vmatprep.subr.mxu0 0.0
      %4300 = vmatpush1.msra.mxu0 0.0
      %4301 = vmatprep.subr.mxu0 0.0
      %4302 = vmatpush1.msra.mxu0 0.0
      %4303 = vmatprep.subr.mxu0 0.0
      %4304 = vmatpush1.msra.mxu0 0.0
      %4305 = vmatprep.subr.mxu0 0.0
      %4306 = vmatpush1.msra.mxu0 0.0
      %4307 = vmatprep.subr.mxu0 0.0
      %4308 = vmatpush1.msra.mxu0 0.0
      %4309 = vmatprep.subr.mxu0 0.0
      %4310 = vmatpush1.msra.mxu0 0.0
      %4311 = vmatprep.subr.mxu0 0.0
      %4312 = vmatpush1.msra.mxu0 0.0
      %4313 = vmatprep.subr.mxu0 0.0
      %4314 = vmatpush1.msra.mxu0 0.0
      %4315 = vmatprep.subr.mxu0 0.0
      %4316 = vmatpush1.msra.mxu0 0.0
      %4317 = vmatprep.subr.mxu0 0.0
      %4318 = vmatpush1.msra.mxu0 0.0
      %4319 = vmatprep.subr.mxu0 0.0
      %4320 = vmatpush1.msra.mxu0 0.0
      %4321 = vmatprep.subr.mxu0 0.0
      %4322 = vmatpush1.msra.mxu0 0.0
      %4323 = vmatprep.subr.mxu0 0.0
      %4324 = vmatpush1.msra.mxu0 0.0
      %4325 = vmatprep.subr.mxu0 0.0
      %4326 = vmatpush1.msra.mxu0 0.0
      %4327 = vmatprep.subr.mxu0 0.0
      %4328 = vmatpush1.msra.mxu0 0.0
      %4329 = vmatprep.subr.mxu0 0.0
      %4330 = vmatpush1.msra.mxu0 0.0
      %4331 = vmatprep.subr.mxu0 0.0
      %4332 = vmatpush1.msra.mxu0 0.0
      %4333 = vmatprep.subr.mxu0 0.0
      %4334 = vmatpush1.msra.mxu0 0.0
      %4335 = vmatprep.subr.mxu0 0.0
      %4336 = vmatpush1.msra.mxu0 0.0
      %4337 = vmatprep.subr.mxu0 0.0
      %4338 = vmatpush1.msra.mxu0 0.0
      %4339 = vmatprep.subr.mxu0 0.0
      %4340 = vmatpush1.msra.mxu0 0.0
      %4341 = vmatprep.subr.mxu0 0.0
      %4342 = vmatpush1.msra.mxu0 0.0
      %4343 = vmatprep.subr.mxu0 0.0
      %4344 = vmatpush1.msra.mxu0 0.0
      %4345 = vmatprep.subr.mxu0 0.0
      %4346 = vmatpush1.msra.mxu0 0.0
      %4347 = vmatprep.subr.mxu0 0.0
      %4348 = vmatpush1.msra.mxu0 0.0
      %4349 = vmatprep.subr.mxu0 0.0
      %4350 = vmatpush1.msra.mxu0 0.0
      %4351 = vmatprep.subr.mxu0 0.0
      %4352 = vmatpush1.msra.mxu0 0.0
      %4353 = vmatprep.subr.mxu0 0.0
      %4354 = vmatpush1.msra.mxu0 0.0
      %4355 = vmatprep.subr.mxu0 0.0
      %4356 = vmatpush1.msra.mxu0 0.0
      %4357 = vmatprep.subr.mxu0 0.0
      %4358 = vmatpush1.msra.mxu0 0.0
      %4359 = vmatprep.mubr.f32.mxu0 0.0
      %4360 = vmatmul.mubr.f32.gmra.mrb[0].mxu0 %v4290
      %v4361 = vpop.f32.mrb[0].mxu0
      %v4362 = vadd.f32 0.0, %v4361
      %v4363 = vpop.f32.mrb[0].mxu0
      %4364 = vmatprep.mubr.f32.mxu0 0.0
      %4365 = vmatmul.mubr.f32.gmra.mrb[0].mxu0 %v4293
      %v4366 = vpop.f32.mrb[0].mxu0
      %v4367 = vadd.f32 0.0, %v4366
      %v4368 = vpop.f32.mrb[0].mxu0
      %4369 = vdwg.mxu0
      %v4371 = vsel %vm706, %v4101, 0
      %v4374 = vsel %vm706, %v4106, 0
      %v4377 = vsel %vm706, %v4188, 0
      %v4380 = vsel %vm706, %v4193, 0
      %v4383 = vsel %vm706, %v4275, 0
      %v4386 = vsel %vm706, %v4280, 0
      %v4389 = vsel %vm706, %v4362, 0
      %v4392 = vsel %vm706, %v4367, 0
      %4394 = vmatprep.subr.mxu0 0.0
      %4395 = vmatpush1.msra.mxu0 %v689
      %4396 = vmatprep.subr.mxu0 0.0
      %4397 = vmatpush1.msra.mxu0 0.0
      %4398 = vmatprep.subr.mxu0 0.0
      %4399 = vmatpush1.msra.mxu0 0.0
      %4400 = vmatprep.subr.mxu0 0.0
      %4401 = vmatpush1.msra.mxu0 0.0
      %4402 = vmatprep.subr.mxu0 0.0
      %4403 = vmatpush1.msra.mxu0 0.0
      %4404 = vmatprep.subr.mxu0 0.0
      %4405 = vmatpush1.msra.mxu0 0.0
      %4406 = vmatprep.subr.mxu0 0.0
      %4407 = vmatpush1.msra.mxu0 0.0
      %4408 = vmatprep.subr.mxu0 0.0
      %4409 = vmatpush1.msra.mxu0 0.0
      %4410 = vmatprep.subr.mxu0 0.0
      %4411 = vmatpush1.msra.mxu0 0.0
      %4412 = vmatprep.subr.mxu0 0.0
      %4413 = vmatpush1.msra.mxu0 0.0
      %4414 = vmatprep.subr.mxu0 0.0
      %4415 = vmatpush1.msra.mxu0 0.0
      %4416 = vmatprep.subr.mxu0 0.0
      %4417 = vmatpush1.msra.mxu0 0.0
      %4418 = vmatprep.subr.mxu0 0.0
      %4419 = vmatpush1.msra.mxu0 0.0
      %4420 = vmatprep.subr.mxu0 0.0
      %4421 = vmatpush1.msra.mxu0 0.0
      %4422 = vmatprep.subr.mxu0 0.0
      %4423 = vmatpush1.msra.mxu0 0.0
      %4424 = vmatprep.subr.mxu0 0.0
      %4425 = vmatpush1.msra.mxu0 0.0
      %4426 = vmatprep.subr.mxu0 0.0
      %4427 = vmatpush1.msra.mxu0 0.0
      %4428 = vmatprep.subr.mxu0 0.0
      %4429 = vmatpush1.msra.mxu0 0.0
      %4430 = vmatprep.subr.mxu0 0.0
      %4431 = vmatpush1.msra.mxu0 0.0
      %4432 = vmatprep.subr.mxu0 0.0
      %4433 = vmatpush1.msra.mxu0 0.0
      %4434 = vmatprep.subr.mxu0 0.0
      %4435 = vmatpush1.msra.mxu0 0.0
      %4436 = vmatprep.subr.mxu0 0.0
      %4437 = vmatpush1.msra.mxu0 0.0
      %4438 = vmatprep.subr.mxu0 0.0
      %4439 = vmatpush1.msra.mxu0 0.0
      %4440 = vmatprep.subr.mxu0 0.0
      %4441 = vmatpush1.msra.mxu0 0.0
      %4442 = vmatprep.subr.mxu0 0.0
      %4443 = vmatpush1.msra.mxu0 0.0
      %4444 = vmatprep.subr.mxu0 0.0
      %4445 = vmatpush1.msra.mxu0 0.0
      %4446 = vmatprep.subr.mxu0 0.0
      %4447 = vmatpush1.msra.mxu0 0.0
      %4448 = vmatprep.subr.mxu0 0.0
      %4449 = vmatpush1.msra.mxu0 0.0
      %4450 = vmatprep.subr.mxu0 0.0
      %4451 = vmatpush1.msra.mxu0 0.0
      %4452 = vmatprep.subr.mxu0 0.0
      %4453 = vmatpush1.msra.mxu0 0.0
      %4454 = vmatprep.subr.mxu0 0.0
      %4455 = vmatpush1.msra.mxu0 0.0
      %4456 = vmatprep.subr.mxu0 0.0
      %4457 = vmatpush1.msra.mxu0 0.0
      %4458 = vmatprep.mubr.f32.mxu0 0.0
      %4459 = vmatmul.mubr.f32.gmra.mrb[0].mxu0 %v4371
      %v4460 = vpop.f32.mrb[0].mxu0
      %v4461 = vadd.f32 0.0, %v4460
      %v4462 = vpop.f32.mrb[0].mxu0
      %4463 = vmatprep.mubr.f32.mxu0 0.0
      %4464 = vmatmul.mubr.f32.gmra.mrb[0].mxu0 %v4374
      %v4465 = vpop.f32.mrb[0].mxu0
      %v4466 = vadd.f32 0.0, %v4465
      %v4467 = vpop.f32.mrb[0].mxu0
      %4468 = vmatprep.mubr.f32.mxu0 0.0
      %4469 = vmatmul.mubr.f32.gmra.mrb[0].mxu0 %v4377
      %v4470 = vpop.f32.mrb[0].mxu0
      %v4471 = vadd.f32 0.0, %v4470
      %v4472 = vpop.f32.mrb[0].mxu0
      %4473 = vmatprep.mubr.f32.mxu0 0.0
      %4474 = vmatmul.mubr.f32.gmra.mrb[0].mxu0 %v4380
      %v4475 = vpop.f32.mrb[0].mxu0
      %v4476 = vadd.f32 0.0, %v4475
      %v4477 = vpop.f32.mrb[0].mxu0
      %4478 = vmatprep.mubr.f32.mxu0 0.0
      %4479 = vmatmul.mubr.f32.gmra.mrb[0].mxu0 %v4383
      %v4480 = vpop.f32.mrb[0].mxu0
      %v4481 = vadd.f32 0.0, %v4480
      %v4482 = vpop.f32.mrb[0].mxu0
      %4483 = vmatprep.mubr.f32.mxu0 0.0
      %4484 = vmatmul.mubr.f32.gmra.mrb[0].mxu0 %v4386
      %v4485 = vpop.f32.mrb[0].mxu0
      %v4486 = vadd.f32 0.0, %v4485
      %v4487 = vpop.f32.mrb[0].mxu0
      %4488 = vmatprep.mubr.f32.mxu0 0.0
      %4489 = vmatmul.mubr.f32.gmra.mrb[0].mxu0 %v4389
      %v4490 = vpop.f32.mrb[0].mxu0
      %v4491 = vadd.f32 0.0, %v4490
      %v4492 = vpop.f32.mrb[0].mxu0
      %4493 = vmatprep.mubr.f32.mxu0 0.0
      %4494 = vmatmul.mubr.f32.gmra.mrb[0].mxu0 %v4392
      %v4495 = vpop.f32.mrb[0].mxu0
      %v4496 = vadd.f32 0.0, %v4495
      %v4497 = vpop.f32.mrb[0].mxu0
      %4498 = vdwg.mxu0
      %v4499 = vadd.f32 %v3543, %v4461
      %v4500 = vadd.f32 %v3544, %v4466
      %v4501 = vadd.f32 %v3545, %v4471
      %v4502 = vadd.f32 %v3546, %v4476
      %v4503 = vadd.f32 %v3547, %v4481
      %v4504 = vadd.f32 %v3548, %v4486
      %v4505 = vadd.f32 %v3549, %v4491
      %v4506 = vadd.f32 %v3550, %v4496
      %v4507 = vld [vmem:[%s8] sm:$0x1]
      %v4509 = vlaneseq
      %v4510 = vshrl.u32 %v4509, 7
      %v4511 = vsub.s32 0, %v4510
      %v4512 = vrot.slane %v4507, %v4511
      %v4514 = vadd.f32 %v4499, %v4512
      %v4515 = vadd.f32 %v4500, %v4512
      %v4516 = vadd.f32 %v4501, %v4512
      %v4517 = vadd.f32 %v4502, %v4512
      %v4518 = vadd.f32 %v4503, %v4512
      %v4519 = vadd.f32 %v4504, %v4512
      %v4520 = vadd.f32 %v4505, %v4512
      %v4521 = vadd.f32 %v4506, %v4512
      %4522 = vst.msk [vmem:[%s400] sm:$0xff] %vm412, %v4514
      %4523 = vst.msk [vmem:[%s400 + $0x8] sm:$0xff] %vm412, %v4515
      %4524 = vst.msk [vmem:[%s400 + $0x10] sm:$0xff] %vm412, %v4516
      %4525 = vst.msk [vmem:[%s400 + $0x18] sm:$0xff] %vm412, %v4517
      %4526 = vst.msk [vmem:[%s400 + $0x20] sm:$0xff] %vm412, %v4518
      %4527 = vst.msk [vmem:[%s400 + $0x28] sm:$0xff] %vm412, %v4519
      %4528 = vst.msk [vmem:[%s400 + $0x30] sm:$0xff] %vm412, %v4520
      %4529 = vst.msk [vmem:[%s400 + $0x38] sm:$0xff] %vm412, %v4521
      %s4530 = smul.u32 4, %s25
      %p4531 = scmp.lt.s32.totalorder %s24, 1
      %s4532 = scalar_select %p4531, %s24, 1
      %p4533 = scmp.lt.s32.totalorder %s4530, 3
      %s4534 = scalar_select %p4533, %s4530, 3
      %s4535 = smul.addr %s4534, 2
      %s4536 = smul.addr %s4532, 8
      %s4537 = sadd.s32 %s4535, %s4536
      %s4538 = smul.addr %s4537, 8
      %s4539 = scalar_lea.vmem %s9, %s4538
      // Predicated region
      $region57: #{_lambda_.6} parent=55 // pred_check
        %p4540 = pneg %p253
      $region58: #{_lambda_.6} parent=55 // pred_check_branch
        %4542 = sbr.rel (%p4540) target = $region60
      $region59: #{_lambda_.6} parent=55 // pred_region
        %s4543 = smul.u32 4, %s25
      $region60: #{_lambda_.6} parent=55 // pred_fallthru
        _
    $region56: #{_lambda_.6} parent=5 // pred_fallthru
      _
    %p4544 = scmp.le.s32.totalorder 2, %s15
    // Predicated region
    $region61: #{_lambda_.6} parent=5 // pred_check
      %p4545 = pneg %p4544
    $region62: #{_lambda_.6} parent=5 // pred_check_branch
      %4547 = sbr.rel (%p4545) target = $region64
    $region63: #{_lambda_.6} parent=5 // pred_region
      %s4548 = ssub.s32 %s15, 2
      // Predicated region
      $region65: #{_lambda_.6} parent=63 // pred_check
        %p4549 = pneg %p259
      $region66: #{_lambda_.6} parent=63 // pred_check_branch
        %4551 = sbr.rel (%p4549) target = $region68
      $region67: #{_lambda_.6} parent=63 // pred_region
        %s4552 = smul.u32 4, %s27
        %p4553 = scmp.lt.s32.totalorder %s26, 1
        %s4554 = scalar_select %p4553, %s26, 1
        %p4555 = scmp.lt.s32.totalorder %s4552, 3
        %s4556 = scalar_select %p4555, %s4552, 3
        %s4557 = smul.addr %s4556, 2
        %s4558 = smul.addr %s4554, 8
        %s4559 = sadd.s32 %s4557, %s4558
        %s4560 = smul.addr %s4559, 8
        %s4561 = scalar_lea.vmem %s9, %s4560
      $region68: #{_lambda_.6} parent=63 // pred_fallthru
        _
    $region64: #{_lambda_.6} parent=5 // pred_fallthru
      _
  $region6: #{_lambda_.6} parent=0 // loop_footer
    %s19 = sadd.s32 1, %s15
  $region7: #{_lambda_.6} parent=0 // loop_footer_branch
    %14 = sbr.rel target = $region3
  $region8: #{_lambda_.6} parent=0 // loop_exit
    _

</llo_original>
